<compile_context>
chip_gen: v7x
topology: tpu7x:2x2x1
jax: 0.10.0
libtpu: 0.0.40
codegen_flags: <defaults>
</compile_context>

<pallas_src>
import functools

import numpy as np
import jax
import jax.numpy as jnp
from jax.experimental import pallas as pl
from jax.experimental.pallas import tpu as pltpu

NEG_INF = -1e9
LN_EPS = 1e-5
LANE = 128
VMEM_LIMIT = 32 * 1024 * 1024          # safe on v5e/v6e/v7x
ACT_DTYPE = jnp.bfloat16               # inter-kernel activation dtype


def _row_tile(rows, feat_cols, budget_bytes=2 * 1024 * 1024):
    """Largest row tile dividing `rows` whose (tm, feat_cols) f32 intermediate
    fits the byte budget (caps FFN tiles for v7x/v5e VMEM)."""
    cap = max(8, budget_bytes // max(4 * feat_cols, 1))
    for t in (512, 256, 128, 64, 32, 16, 8):
        if t <= cap and rows % t == 0:
            return t
    return rows


def _cparams():
    return pltpu.CompilerParams(dimension_semantics=("parallel",),
                                vmem_limit_bytes=VMEM_LIMIT)


def _layer_norm_f32(y, g, b, eps):
    mean = jnp.mean(y, axis=-1, keepdims=True)
    yc = y - mean
    var = jnp.mean(yc * yc, axis=-1, keepdims=True)
    return yc * jax.lax.rsqrt(var + eps) * g + b


# ----------------------------------------------------------------------------
# Fused attention blocks (QKV proj + attention + out-proj + residual + LN)
# ----------------------------------------------------------------------------
def _mha_heads(q, k, v, valid, num_heads, dh, attn_ref):
    """q:(Tq,D) f32 (already scaled), k,v:(Tk,D) f32, valid:(Tq,Tk) bool.
    Writes per-head outputs into attn_ref (Tq,D) f32 VMEM scratch."""
    for h in range(num_heads):
        sl = slice(h * dh, (h + 1) * dh)
        qh = q[:, sl].astype(jnp.bfloat16)
        kh = k[:, sl].astype(jnp.bfloat16)
        vh = v[:, sl].astype(jnp.bfloat16)
        # contract over dh without materializing k.T
        s = jax.lax.dot_general(qh, kh, (((1,), (1,)), ((), ())),
                                preferred_element_type=jnp.float32)
        s = jnp.where(valid, s, jnp.float32(NEG_INF))
        s = s - jnp.max(s, axis=-1, keepdims=True)
        p = jnp.exp(s)
        p = p * pl.reciprocal(jnp.sum(p, axis=-1, keepdims=True), approx=True)
        attn_ref[:, sl] = jnp.dot(p.astype(jnp.bfloat16), vh,
                                  preferred_element_type=jnp.float32)


def _self_attn_block_kernel(len_ref, x_ref, wqkv_ref, bqkv_ref, wo_ref, bo_ref,
                            g_ref, bt_ref, o_ref, attn_ref,
                            *, num_heads, causal, eps):
    b = pl.program_id(0)
    T = x_ref.shape[1]
    D = x_ref.shape[2]
    dh = D // num_heads
    scale = 1.0 / float(np.sqrt(dh))

    x = x_ref[0]                                        # (T, D) bf16
    x_f32 = x.astype(jnp.float32)

    qkv = jnp.dot(x, wqkv_ref[...], preferred_element_type=jnp.float32)
    qkv = qkv + bqkv_ref[...]                           # (T, 3D) f32
    q = qkv[:, :D] * scale                              # scale folded once
    k = qkv[:, D:2 * D]
    v = qkv[:, 2 * D:]

    kv_len = len_ref[b]
    k_idx = jax.lax.broadcasted_iota(jnp.int32, (T, T), 1)
    valid = k_idx < kv_len
    if causal:
        q_idx = jax.lax.broadcasted_iota(jnp.int32, (T, T), 0)
        valid = jnp.logical_and(valid, q_idx >= k_idx)

    _mha_heads(q, k, v, valid, num_heads, dh, attn_ref)

    a = attn_ref[...].astype(jnp.bfloat16)              # (T, D)
    y = jnp.dot(a, wo_ref[...], preferred_element_type=jnp.float32)
    y = y + bo_ref[...] + x_f32                         # residual in f32
    out = _layer_norm_f32(y, g_ref[...], bt_ref[...], eps)
    o_ref[0] = out.astype(o_ref.dtype)


def self_attn_block_pallas(x, lengths, wqkv, bqkv, wo, bo, gamma, beta,
                           *, num_heads, causal):
    B, T, D = x.shape
    return pl.pallas_call(
        functools.partial(_self_attn_block_kernel, num_heads=num_heads,
                          causal=causal, eps=LN_EPS),
        out_shape=jax.ShapeDtypeStruct((B, T, D), ACT_DTYPE),
        grid_spec=pltpu.PrefetchScalarGridSpec(
            num_scalar_prefetch=1,
            grid=(B,),
            in_specs=[
                pl.BlockSpec((1, T, D), lambda b, lens: (b, 0, 0)),
                pl.BlockSpec((D, 3 * D), lambda b, lens: (0, 0)),
                pl.BlockSpec((1, 3 * D), lambda b, lens: (0, 0)),
                pl.BlockSpec((D, D), lambda b, lens: (0, 0)),
                pl.BlockSpec((1, D), lambda b, lens: (0, 0)),
                pl.BlockSpec((1, D), lambda b, lens: (0, 0)),
                pl.BlockSpec((1, D), lambda b, lens: (0, 0)),
            ],
            out_specs=pl.BlockSpec((1, T, D), lambda b, lens: (b, 0, 0)),
            scratch_shapes=[pltpu.VMEM((T, D), jnp.float32)],
        ),
        compiler_params=_cparams(),
    )(lengths, x, wqkv, bqkv, wo, bo, gamma, beta)


def _cross_attn_block_kernel(len_ref, x_ref, mem_ref, wq_ref, bq_ref,
                             wkv_ref, bkv_ref, wo_ref, bo_ref, g_ref, bt_ref,
                             o_ref, attn_ref, *, num_heads, eps):
    b = pl.program_id(0)
    Tq = x_ref.shape[1]
    Tk = mem_ref.shape[1]
    D = x_ref.shape[2]
    dh = D // num_heads
    scale = 1.0 / float(np.sqrt(dh))

    x = x_ref[0]                                        # (Tq, D) bf16
    x_f32 = x.astype(jnp.float32)
    mem = mem_ref[0]                                    # (Tk, D) bf16

    q = jnp.dot(x, wq_ref[...], preferred_element_type=jnp.float32)
    q = (q + bq_ref[...]) * scale                       # (Tq, D)
    kv = jnp.dot(mem, wkv_ref[...], preferred_element_type=jnp.float32)
    kv = kv + bkv_ref[...]                              # (Tk, 2D)
    k = kv[:, :D]
    v = kv[:, D:]

    kv_len = len_ref[b]
    k_idx = jax.lax.broadcasted_iota(jnp.int32, (Tq, Tk), 1)
    valid = k_idx < kv_len

    _mha_heads(q, k, v, valid, num_heads, dh, attn_ref)

    a = attn_ref[...].astype(jnp.bfloat16)
    y = jnp.dot(a, wo_ref[...], preferred_element_type=jnp.float32)
    y = y + bo_ref[...] + x_f32
    out = _layer_norm_f32(y, g_ref[...], bt_ref[...], eps)
    o_ref[0] = out.astype(o_ref.dtype)


def cross_attn_block_pallas(x, mem, lengths, wq, bq, wkv, bkv, wo, bo,
                            gamma, beta, *, num_heads):
    B, Tq, D = x.shape
    Tk = mem.shape[1]
    return pl.pallas_call(
        functools.partial(_cross_attn_block_kernel, num_heads=num_heads,
                          eps=LN_EPS),
        out_shape=jax.ShapeDtypeStruct((B, Tq, D), ACT_DTYPE),
        grid_spec=pltpu.PrefetchScalarGridSpec(
            num_scalar_prefetch=1,
            grid=(B,),
            in_specs=[
                pl.BlockSpec((1, Tq, D), lambda b, lens: (b, 0, 0)),
                pl.BlockSpec((1, Tk, D), lambda b, lens: (b, 0, 0)),
                pl.BlockSpec((D, D), lambda b, lens: (0, 0)),
                pl.BlockSpec((1, D), lambda b, lens: (0, 0)),
                pl.BlockSpec((D, 2 * D), lambda b, lens: (0, 0)),
                pl.BlockSpec((1, 2 * D), lambda b, lens: (0, 0)),
                pl.BlockSpec((D, D), lambda b, lens: (0, 0)),
                pl.BlockSpec((1, D), lambda b, lens: (0, 0)),
                pl.BlockSpec((1, D), lambda b, lens: (0, 0)),
                pl.BlockSpec((1, D), lambda b, lens: (0, 0)),
            ],
            out_specs=pl.BlockSpec((1, Tq, D), lambda b, lens: (b, 0, 0)),
            scratch_shapes=[pltpu.VMEM((Tq, D), jnp.float32)],
        ),
        compiler_params=_cparams(),
    )(lengths, x, mem, wq, bq, wkv, bkv, wo, bo, gamma, beta)


# ----------------------------------------------------------------------------
# Fused FFN (ff1 + ReLU + ff2 + residual + LN), fused prenet, fused LN+mel-head
# ----------------------------------------------------------------------------
def _ffn_ln_kernel(x_ref, w1_ref, b1_ref, w2_ref, b2_ref, g_ref, bt_ref, o_ref,
                   *, eps):
    x = x_ref[...]                                      # (tm, d) bf16
    x_f32 = x.astype(jnp.float32)
    h = jnp.dot(x, w1_ref[...], preferred_element_type=jnp.float32)
    h = jnp.maximum(h + b1_ref[...], 0.0)
    y = jnp.dot(h.astype(jnp.bfloat16), w2_ref[...],
                preferred_element_type=jnp.float32)
    y = y + b2_ref[...] + x_f32
    out = _layer_norm_f32(y, g_ref[...], bt_ref[...], eps)
    o_ref[...] = out.astype(o_ref.dtype)


def ffn_ln_pallas(x, w1, b1, w2, b2, gamma, beta):
    B, T, d = x.shape
    dff = w1.shape[1]
    rows = B * T
    tm = _row_tile(rows, dff)
    out = pl.pallas_call(
        functools.partial(_ffn_ln_kernel, eps=LN_EPS),
        out_shape=jax.ShapeDtypeStruct((rows, d), ACT_DTYPE),
        grid=(rows // tm,),
        in_specs=[
            pl.BlockSpec((tm, d), lambda i: (i, 0)),
            pl.BlockSpec((d, dff), lambda i: (0, 0)),
            pl.BlockSpec((1, dff), lambda i: (0, 0)),
            pl.BlockSpec((dff, d), lambda i: (0, 0)),
            pl.BlockSpec((1, d), lambda i: (0, 0)),
            pl.BlockSpec((1, d), lambda i: (0, 0)),
            pl.BlockSpec((1, d), lambda i: (0, 0)),
        ],
        out_specs=pl.BlockSpec((tm, d), lambda i: (i, 0)),
        compiler_params=_cparams(),
    )(x.reshape(rows, d), w1, b1, w2, b2, gamma, beta)
    return out.reshape(B, T, d)


def _prenet_kernel(x_ref, w1_ref, b1_ref, w2_ref, b2_ref, o_ref):
    x = x_ref[...].astype(jnp.bfloat16)
    h = jnp.dot(x, w1_ref[...], preferred_element_type=jnp.float32)
    h = jnp.maximum(h + b1_ref[...], 0.0)
    y = jnp.dot(h.astype(jnp.bfloat16), w2_ref[...],
                preferred_element_type=jnp.float32)
    y = jnp.maximum(y + b2_ref[...], 0.0)
    o_ref[...] = y.astype(o_ref.dtype)


def prenet_pallas(x, w1, b1, w2, b2):
    """Fused Linear+ReLU -> Linear+ReLU (Dropouts = identity in eval)."""
    B, T, din = x.shape
    d = w1.shape[1]
    rows = B * T
    tm = _row_tile(rows, max(din, d))
    out = pl.pallas_call(
        _prenet_kernel,
        out_shape=jax.ShapeDtypeStruct((rows, d), ACT_DTYPE),
        grid=(rows // tm,),
        in_specs=[
            pl.BlockSpec((tm, din), lambda i: (i, 0)),
            pl.BlockSpec((din, d), lambda i: (0, 0)),
            pl.BlockSpec((1, d), lambda i: (0, 0)),
            pl.BlockSpec((d, d), lambda i: (0, 0)),
            pl.BlockSpec((1, d), lambda i: (0, 0)),
        ],
        out_specs=pl.BlockSpec((tm, d), lambda i: (i, 0)),
        compiler_params=_cparams(),
    )(x.reshape(rows, din), w1, b1, w2, b2)
    return out.reshape(B, T, d)


def _ln_linear_kernel(x_ref, g_ref, bt_ref, w_ref, b_ref, o_ref, *, eps):
    x = x_ref[...].astype(jnp.float32)
    xn = _layer_norm_f32(x, g_ref[...], bt_ref[...], eps)
    y = jnp.dot(xn.astype(jnp.bfloat16), w_ref[...],
                preferred_element_type=jnp.float32) + b_ref[...]
    o_ref[...] = y.astype(o_ref.dtype)


def ln_linear_pallas(x, gamma, beta, w, b):
    """y = LayerNorm(x) @ w + b  (final_norm fused into the mel head)."""
    B, T, d = x.shape
    dout = w.shape[1]
    rows = B * T
    tm = _row_tile(rows, max(d, dout))
    out = pl.pallas_call(
        functools.partial(_ln_linear_kernel, eps=LN_EPS),
        out_shape=jax.ShapeDtypeStruct((rows, dout), jnp.float32),
        grid=(rows // tm,),
        in_specs=[
            pl.BlockSpec((tm, d), lambda i: (i, 0)),
            pl.BlockSpec((1, d), lambda i: (0, 0)),
            pl.BlockSpec((1, d), lambda i: (0, 0)),
            pl.BlockSpec((d, dout), lambda i: (0, 0)),
            pl.BlockSpec((1, dout), lambda i: (0, 0)),
        ],
        out_specs=pl.BlockSpec((tm, dout), lambda i: (i, 0)),
        compiler_params=_cparams(),
    )(x.reshape(rows, d), gamma, beta, w, b)
    return out.reshape(B, T, dout)


# ----------------------------------------------------------------------------
# Model forward (teacher-forcing branch)
# ----------------------------------------------------------------------------
def encoder_layer(x, p, num_heads, text_lengths):
    # nn.TransformerEncoderLayer (post-LN, ReLU, dropout identity in eval)
    x = self_attn_block_pallas(x, text_lengths, p["attn_wqkv"], p["attn_bqkv"],
                               p["attn_wo"], p["attn_bo"], p["ln1_g"], p["ln1_b"],
                               num_heads=num_heads, causal=False)
    x = ffn_ln_pallas(x, p["ff1_w"], p["ff1_b"], p["ff2_w"], p["ff2_b"],
                      p["ln2_g"], p["ln2_b"])
    return x


def decoder_block(x, mem, p, num_heads, mel_lengths, text_lengths):
    # TODO(synk): LaCTDecoderBlock source unavailable; standard post-LN decoder
    # block (causal self-attn, cross-attn over the text encoding, ReLU FFN).
    x = self_attn_block_pallas(x, mel_lengths, p["self_wqkv"], p["self_bqkv"],
                               p["self_wo"], p["self_bo"], p["ln1_g"], p["ln1_b"],
                               num_heads=num_heads, causal=True)
    x = cross_attn_block_pallas(x, mem, text_lengths,
                                p["cross_wq"], p["cross_bq"],
                                p["cross_wkv"], p["cross_bkv"],
                                p["cross_wo"], p["cross_bo"],
                                p["ln2_g"], p["ln2_b"], num_heads=num_heads)
    x = ffn_ln_pallas(x, p["ff1_w"], p["ff1_b"], p["ff2_w"], p["ff2_b"],
                      p["ln3_g"], p["ln3_b"])
    return x


def tts_forward(params, text, text_lengths, mel, mel_lengths, num_heads):
    """Teacher-forcing forward. Returns pred_mel of shape (B, T_mel, n_mels)."""
    B, _ = text.shape
    T_mel, n_mels = mel.shape[1], mel.shape[2]
    text_lengths = text_lengths.astype(jnp.int32)
    if mel_lengths is None:
        mel_lengths = jnp.full((B,), T_mel, jnp.int32)
    else:
        mel_lengths = mel_lengths.astype(jnp.int32)

    # --- text embedding (gather, bf16 activations) --------------------------
    x = params["embed"][text]                              # (B, T_text, D) bf16

    # --- text encoder --------------------------------------------------------
    for lp in params["encoder"]:
        x = encoder_layer(x, lp, num_heads, text_lengths)
    text_enc = x                                           # (B, T_text, D) bf16

    # --- teacher-forcing decoder input ---------------------------------------
    sos = jnp.zeros((B, 1, n_mels), mel.dtype)
    mel_in = jnp.concatenate([sos, mel[:, :-1, :]], axis=1)
    pad = (-n_mels) % LANE
    mel_in_p = jnp.pad(mel_in, ((0, 0), (0, 0), (0, pad)))  # lane-pad to 128

    out = prenet_pallas(mel_in_p, params["prenet"]["w1"], params["prenet"]["b1"],
                        params["prenet"]["w2"], params["prenet"]["b2"])

    for lp in params["decoder"]:
        out = decoder_block(out, text_enc, lp, num_heads, mel_lengths, text_lengths)

    pred = ln_linear_pallas(out, params["final_ln_g"], params["final_ln_b"],
                            params["mel_w"], params["mel_b"])
    return pred[..., :n_mels]


# ----------------------------------------------------------------------------
# Deterministic parameter initialization (shapes follow TTSModel.__init__)
# ----------------------------------------------------------------------------
def init_params(key, vocab_size, d_model, num_enc, num_dec, n_mels):
    dff = 4 * d_model
    n_mels_pad = n_mels + ((-n_mels) % LANE)
    keys = iter(jax.random.split(key, 512))

    def dense(din, dout):
        # matmul weights stored bf16 (MXU operands); biases / LN params f32
        return (jax.random.normal(next(keys), (din, dout), jnp.float32) * 0.02
                ).astype(jnp.bfloat16)

    def zeros(n):
        return jnp.zeros((1, n), jnp.float32)

    def ones(n):
        return jnp.ones((1, n), jnp.float32)

    def enc_layer():
        return dict(
            attn_wqkv=dense(d_model, 3 * d_model), attn_bqkv=zeros(3 * d_model),
            attn_wo=dense(d_model, d_model), attn_bo=zeros(d_model),
            ln1_g=ones(d_model), ln1_b=zeros(d_model),
            ff1_w=dense(d_model, dff), ff1_b=zeros(dff),
            ff2_w=dense(dff, d_model), ff2_b=zeros(d_model),
            ln2_g=ones(d_model), ln2_b=zeros(d_model),
        )

    def dec_layer():
        return dict(
            self_wqkv=dense(d_model, 3 * d_model), self_bqkv=zeros(3 * d_model),
            self_wo=dense(d_model, d_model), self_bo=zeros(d_model),
            ln1_g=ones(d_model), ln1_b=zeros(d_model),
            cross_wq=dense(d_model, d_model), cross_bq=zeros(d_model),
            cross_wkv=dense(d_model, 2 * d_model), cross_bkv=zeros(2 * d_model),
            cross_wo=dense(d_model, d_model), cross_bo=zeros(d_model),
            ln2_g=ones(d_model), ln2_b=zeros(d_model),
            ff1_w=dense(d_model, dff), ff1_b=zeros(dff),
            ff2_w=dense(dff, d_model), ff2_b=zeros(d_model),
            ln3_g=ones(d_model), ln3_b=zeros(d_model),
        )

    # prenet input padded 80 -> 128 lanes (extra rows multiplied by zero input)
    w1_core = jax.random.normal(next(keys), (n_mels, d_model), jnp.float32) * 0.02
    w1 = jnp.zeros((n_mels_pad, d_model), jnp.float32).at[:n_mels].set(w1_core)
    # mel head padded 80 -> 128 output lanes (extra cols sliced off outside)
    mel_w_core = jax.random.normal(next(keys), (d_model, n_mels), jnp.float32) * 0.02
    mel_w = jnp.zeros((d_model, n_mels_pad), jnp.float32).at[:, :n_mels].set(mel_w_core)

    params = dict(
        embed=(jax.random.normal(next(keys), (vocab_size, d_model), jnp.float32)
               * 0.02).astype(ACT_DTYPE),
        encoder=[enc_layer() for _ in range(num_enc)],
        prenet=dict(w1=w1.astype(jnp.bfloat16), b1=zeros(d_model),
                    w2=dense(d_model, d_model), b2=zeros(d_model)),
        decoder=[dec_layer() for _ in range(num_dec)],
        final_ln_g=ones(d_model), final_ln_b=zeros(d_model),
        mel_w=mel_w.astype(jnp.bfloat16),
        mel_b=zeros(n_mels_pad),
    )
    return params


# ----------------------------------------------------------------------------
if __name__ == "__main__":
    vocab_size = 33
    d_model = 128
    num_heads = 4
    num_encoder_layers = 2
    num_decoder_layers = 2
    n_mels = 80

    B, T_text, T_mel = 2, 8, 16

    root = jax.random.PRNGKey(0)
    k_par, k_txt, k_mel = jax.random.split(root, 3)

    params = init_params(k_par, vocab_size, d_model,
                         num_encoder_layers, num_decoder_layers, n_mels)

    text = jax.random.randint(k_txt, (B, T_text), 0, vocab_size, dtype=jnp.int32)
    text_lengths = jnp.array([8, 5], dtype=jnp.int32)
    mel = jax.random.normal(k_mel, (B, T_mel, n_mels), jnp.float32)
    mel_lengths = jnp.array([16, 12], dtype=jnp.int32)

    fwd = jax.jit(functools.partial(tts_forward, num_heads=num_heads))
    pred_mel = fwd(params, text, text_lengths, mel, mel_lengths)
    pred_mel = jax.block_until_ready(pred_mel)

    assert pred_mel.shape == (B, T_mel, n_mels), pred_mel.shape
    assert bool(jnp.all(jnp.isfinite(pred_mel)))
    print("KERNEL_OK")
</pallas_src>

<mosaic_0001>
module attributes {stable_mosaic.version = 11 : i64} {
  func.func @_prenet_kernel(%arg0: i32, %arg1: memref<32x128xf32, #tpu.memory_space<vmem>>, %arg2: memref<128x128xbf16, #tpu.memory_space<vmem>>, %arg3: memref<1x128xf32, #tpu.memory_space<vmem>>, %arg4: memref<128x128xbf16, #tpu.memory_space<vmem>>, %arg5: memref<1x128xf32, #tpu.memory_space<vmem>>, %arg6: memref<32x128xbf16, #tpu.memory_space<vmem>>) attributes {dimension_semantics = [#tpu.dimension_semantics<parallel>], iteration_bounds = array<i64: 1>, scalar_prefetch = 0 : i64, scratch_operands = 0 : i64, tpu.core_type = #tpu.core_type<tc>, window_params = [{transform_indices = @transform_0, window_bounds = array<i64: 32, 128>}, {pipeline_mode = #tpu.pipeline_mode<synchronous>, transform_indices = @transform_1, window_bounds = array<i64: 128, 128>}, {pipeline_mode = #tpu.pipeline_mode<synchronous>, transform_indices = @transform_2, window_bounds = array<i64: 1, 128>}, {pipeline_mode = #tpu.pipeline_mode<synchronous>, transform_indices = @transform_3, window_bounds = array<i64: 128, 128>}, {pipeline_mode = #tpu.pipeline_mode<synchronous>, transform_indices = @transform_4, window_bounds = array<i64: 1, 128>}, {transform_indices = @transform_5, window_bounds = array<i64: 32, 128>}]} {
    %c0 = arith.constant 0 : index
    %c0_0 = arith.constant 0 : index
    %0 = vector.load %arg1[%c0, %c0_0] : memref<32x128xf32, #tpu.memory_space<vmem>>, vector<32x128xf32>
    %1 = arith.truncf %0 : vector<32x128xf32> to vector<32x128xbf16>
    %c0_1 = arith.constant 0 : index
    %c0_2 = arith.constant 0 : index
    %2 = vector.load %arg2[%c0_1, %c0_2] : memref<128x128xbf16, #tpu.memory_space<vmem>>, vector<128x128xbf16>
    %cst = arith.constant dense<0.000000e+00> : vector<32x128xf32>
    %3 = tpu.matmul %1, %2, %cst {dimension_numbers = #tpu.dot_dimension_numbers<[1], [0], [0], [1], [0, 0, 1, 1], [], []>} : vector<32x128xbf16>, vector<128x128xbf16>, vector<32x128xf32> -> vector<32x128xf32>
    %c0_3 = arith.constant 0 : index
    %c0_4 = arith.constant 0 : index
    %4 = vector.load %arg3[%c0_3, %c0_4] : memref<1x128xf32, #tpu.memory_space<vmem>>, vector<1x128xf32>
    %5 = vector.broadcast %4 : vector<1x128xf32> to vector<32x128xf32>
    %6 = arith.addf %3, %5 : vector<32x128xf32>
    %cst_5 = arith.constant 0.000000e+00 : f32
    %7 = vector.broadcast %cst_5 : f32 to vector<32x128xf32>
    %8 = arith.maximumf %6, %7 : vector<32x128xf32>
    %9 = arith.truncf %8 : vector<32x128xf32> to vector<32x128xbf16>
    %c0_6 = arith.constant 0 : index
    %c0_7 = arith.constant 0 : index
    %10 = vector.load %arg4[%c0_6, %c0_7] : memref<128x128xbf16, #tpu.memory_space<vmem>>, vector<128x128xbf16>
    %cst_8 = arith.constant dense<0.000000e+00> : vector<32x128xf32>
    %11 = tpu.matmul %9, %10, %cst_8 {dimension_numbers = #tpu.dot_dimension_numbers<[1], [0], [0], [1], [0, 0, 1, 1], [], []>} : vector<32x128xbf16>, vector<128x128xbf16>, vector<32x128xf32> -> vector<32x128xf32>
    %c0_9 = arith.constant 0 : index
    %c0_10 = arith.constant 0 : index
    %12 = vector.load %arg5[%c0_9, %c0_10] : memref<1x128xf32, #tpu.memory_space<vmem>>, vector<1x128xf32>
    %13 = vector.broadcast %12 : vector<1x128xf32> to vector<32x128xf32>
    %14 = arith.addf %11, %13 : vector<32x128xf32>
    %cst_11 = arith.constant 0.000000e+00 : f32
    %15 = vector.broadcast %cst_11 : f32 to vector<32x128xf32>
    %16 = arith.maximumf %14, %15 : vector<32x128xf32>
    %17 = arith.truncf %16 : vector<32x128xf32> to vector<32x128xbf16>
    %c0_12 = arith.constant 0 : index
    %c0_13 = arith.constant 0 : index
    %18 = vector.load %arg6[%c0_12, %c0_13] : memref<32x128xbf16, #tpu.memory_space<vmem>>, vector<32x128xbf16>
    tpu.vector_store %arg6[%c0_12, %c0_13], %17 {strides = array<i32>} : memref<32x128xbf16, #tpu.memory_space<vmem>>, vector<32x128xbf16>,
    return
  }
  func.func @transform_0(%arg0: i32) -> (i32, i32) {
    %c0_i32 = arith.constant 0 : i32
    %c0_i32_0 = arith.constant 0 : i32
    return %arg0, %c0_i32 : i32, i32
  }
  func.func @transform_1(%arg0: i32) -> (i32, i32) {
    %c0_i32 = arith.constant 0 : i32
    %c0_i32_0 = arith.constant 0 : i32
    %c0_i32_1 = arith.constant 0 : i32
    return %c0_i32, %c0_i32_0 : i32, i32
  }
  func.func @transform_2(%arg0: i32) -> (i32, i32) {
    %c0_i32 = arith.constant 0 : i32
    %c0_i32_0 = arith.constant 0 : i32
    %c0_i32_1 = arith.constant 0 : i32
    return %c0_i32, %c0_i32_0 : i32, i32
  }
  func.func @transform_3(%arg0: i32) -> (i32, i32) {
    %c0_i32 = arith.constant 0 : i32
    %c0_i32_0 = arith.constant 0 : i32
    %c0_i32_1 = arith.constant 0 : i32
    return %c0_i32, %c0_i32_0 : i32, i32
  }
  func.func @transform_4(%arg0: i32) -> (i32, i32) {
    %c0_i32 = arith.constant 0 : i32
    %c0_i32_0 = arith.constant 0 : i32
    %c0_i32_1 = arith.constant 0 : i32
    return %c0_i32, %c0_i32_0 : i32, i32
  }
  func.func @transform_5(%arg0: i32) -> (i32, i32) {
    %c0_i32 = arith.constant 0 : i32
    %c0_i32_0 = arith.constant 0 : i32
    return %arg0, %c0_i32 : i32, i32
  }
}

module attributes {stable_mosaic.version = 11 : i64} {
  func.func @_self_attn_block_kernel(%arg0: i32, %arg1: memref<2xi32, #tpu.memory_space<smem>>, %arg2: memref<1x16x128xbf16, #tpu.memory_space<vmem>>, %arg3: memref<128x384xbf16, #tpu.memory_space<vmem>>, %arg4: memref<1x384xf32, #tpu.memory_space<vmem>>, %arg5: memref<128x128xbf16, #tpu.memory_space<vmem>>, %arg6: memref<1x128xf32, #tpu.memory_space<vmem>>, %arg7: memref<1x128xf32, #tpu.memory_space<vmem>>, %arg8: memref<1x128xf32, #tpu.memory_space<vmem>>, %arg9: memref<1x16x128xbf16, #tpu.memory_space<vmem>>, %arg10: memref<16x128xf32, #tpu.memory_space<vmem>>) attributes {dimension_semantics = [#tpu.dimension_semantics<parallel>], iteration_bounds = array<i64: 2>, scalar_prefetch = 1 : i64, scratch_operands = 1 : i64, tpu.core_type = #tpu.core_type<tc>, window_params = [{transform_indices = @transform_0, window_bounds = array<i64: 1, 16, 128>}, {pipeline_mode = #tpu.pipeline_mode<synchronous>, transform_indices = @transform_1, window_bounds = array<i64: 128, 384>}, {pipeline_mode = #tpu.pipeline_mode<synchronous>, transform_indices = @transform_2, window_bounds = array<i64: 1, 384>}, {pipeline_mode = #tpu.pipeline_mode<synchronous>, transform_indices = @transform_3, window_bounds = array<i64: 128, 128>}, {pipeline_mode = #tpu.pipeline_mode<synchronous>, transform_indices = @transform_4, window_bounds = array<i64: 1, 128>}, {pipeline_mode = #tpu.pipeline_mode<synchronous>, transform_indices = @transform_5, window_bounds = array<i64: 1, 128>}, {pipeline_mode = #tpu.pipeline_mode<synchronous>, transform_indices = @transform_6, window_bounds = array<i64: 1, 128>}, {transform_indices = @transform_7, window_bounds = array<i64: 1, 16, 128>}]} {
    %c0 = arith.constant 0 : index
    %c0_0 = arith.constant 0 : index
    %c0_1 = arith.constant 0 : index
    %0 = vector.load %arg2[%c0, %c0_0, %c0_1] : memref<1x16x128xbf16, #tpu.memory_space<vmem>>, vector<1x16x128xbf16>
    %1 = vector.shape_cast %0 : vector<1x16x128xbf16> to vector<16x128xbf16>
    %2 = arith.extf %1 : vector<16x128xbf16> to vector<16x128xf32>
    %c0_2 = arith.constant 0 : index
    %c0_3 = arith.constant 0 : index
    %3 = vector.load %arg3[%c0_2, %c0_3] : memref<128x384xbf16, #tpu.memory_space<vmem>>, vector<128x384xbf16>
    %cst = arith.constant dense<0.000000e+00> : vector<16x384xf32>
    %4 = tpu.matmul %1, %3, %cst {dimension_numbers = #tpu.dot_dimension_numbers<[1], [0], [0], [1], [0, 0, 1, 1], [], []>} : vector<16x128xbf16>, vector<128x384xbf16>, vector<16x384xf32> -> vector<16x384xf32>
    %c0_4 = arith.constant 0 : index
    %c0_5 = arith.constant 0 : index
    %5 = vector.load %arg4[%c0_4, %c0_5] : memref<1x384xf32, #tpu.memory_space<vmem>>, vector<1x384xf32>
    %6 = vector.broadcast %5 : vector<1x384xf32> to vector<16x384xf32>
    %7 = arith.addf %4, %6 : vector<16x384xf32>
    %8 = vector.extract_strided_slice %7 {offsets = [0, 0], sizes = [16, 128], strides = [1, 1]} : vector<16x384xf32> to vector<16x128xf32>
    %cst_6 = arith.constant 0.176776692 : f32
    %9 = vector.broadcast %cst_6 : f32 to vector<16x128xf32>
    %10 = arith.mulf %8, %9 : vector<16x128xf32>
    %11 = vector.extract_strided_slice %7 {offsets = [0, 128], sizes = [16, 128], strides = [1, 1]} : vector<16x384xf32> to vector<16x128xf32>
    %12 = vector.extract_strided_slice %7 {offsets = [0, 256], sizes = [16, 128], strides = [1, 1]} : vector<16x384xf32> to vector<16x128xf32>
    %13 = arith.index_cast %arg0 : i32 to index
    %14 = memref.load %arg1[%13] : memref<2xi32, #tpu.memory_space<smem>>
    %15 = tpu.iota {dimensions = array<i32: 1>} : vector<16x16xi32>
    %16 = vector.broadcast %14 : i32 to vector<16x16xi32>
    %17 = arith.cmpi slt, %15, %16 : vector<16x16xi32>
    %18 = tpu.iota {dimensions = array<i32: 0>} : vector<16x16xi32>
    %19 = arith.cmpi sge, %18, %15 : vector<16x16xi32>
    %20 = arith.andi %17, %19 : vector<16x16xi1>
    %21 = vector.extract_strided_slice %10 {offsets = [0, 0], sizes = [16, 32], strides = [1, 1]} : vector<16x128xf32> to vector<16x32xf32>
    %22 = arith.truncf %21 : vector<16x32xf32> to vector<16x32xbf16>
    %23 = vector.extract_strided_slice %11 {offsets = [0, 0], sizes = [16, 32], strides = [1, 1]} : vector<16x128xf32> to vector<16x32xf32>
    %24 = arith.truncf %23 : vector<16x32xf32> to vector<16x32xbf16>
    %25 = vector.extract_strided_slice %12 {offsets = [0, 0], sizes = [16, 32], strides = [1, 1]} : vector<16x128xf32> to vector<16x32xf32>
    %26 = arith.truncf %25 : vector<16x32xf32> to vector<16x32xbf16>
    %cst_7 = arith.constant dense<0.000000e+00> : vector<16x16xf32>
    %27 = tpu.matmul %22, %24, %cst_7 {dimension_numbers = #tpu.dot_dimension_numbers<[1], [1], [0], [0], [0, 0, 1, 0], [], []>} : vector<16x32xbf16>, vector<16x32xbf16>, vector<16x16xf32> -> vector<16x16xf32>
    %cst_8 = arith.constant -1.000000e+09 : f32
    %28 = vector.broadcast %cst_8 : f32 to vector<16x16xf32>
    %29 = arith.select %20, %27, %28 : vector<16x16xi1>, vector<16x16xf32>
    %cst_9 = arith.constant dense<0xFF800000> : vector<16xf32>
    %30 = vector.multi_reduction <maximumf>, %29, %cst_9 [1] : vector<16x16xf32> to vector<16xf32>
    %31 = vector.shape_cast %30 : vector<16xf32> to vector<16x1xf32>
    %32 = vector.broadcast %31 : vector<16x1xf32> to vector<16x16xf32>
    %33 = arith.subf %29, %32 : vector<16x16xf32>
    %34 = math.exp %33 : vector<16x16xf32>
    %cst_10 = arith.constant dense<0.000000e+00> : vector<16xf32>
    %35 = vector.multi_reduction <add>, %34, %cst_10 [1] : vector<16x16xf32> to vector<16xf32>
    %36 = vector.shape_cast %35 : vector<16xf32> to vector<16x1xf32>
    %37 = tpu.reciprocal %36 {approx = true} : vector<16x1xf32> -> vector<16x1xf32>
    %38 = vector.broadcast %37 : vector<16x1xf32> to vector<16x16xf32>
    %39 = arith.mulf %34, %38 : vector<16x16xf32>
    %40 = arith.truncf %39 : vector<16x16xf32> to vector<16x16xbf16>
    %cst_11 = arith.constant dense<0.000000e+00> : vector<16x32xf32>
    %41 = tpu.matmul %40, %26, %cst_11 {dimension_numbers = #tpu.dot_dimension_numbers<[1], [0], [0], [1], [0, 0, 1, 1], [], []>} : vector<16x16xbf16>, vector<16x32xbf16>, vector<16x32xf32> -> vector<16x32xf32>
    %c0_12 = arith.constant 0 : index
    %c0_13 = arith.constant 0 : index
    %42 = vector.load %arg10[%c0_12, %c0_13] : memref<16x128xf32, #tpu.memory_space<vmem>>, vector<16x32xf32>
    tpu.vector_store %arg10[%c0_12, %c0_13], %41 {strides = array<i32>} : memref<16x128xf32, #tpu.memory_space<vmem>>, vector<16x32xf32>,
    %43 = vector.extract_strided_slice %10 {offsets = [0, 32], sizes = [16, 32], strides = [1, 1]} : vector<16x128xf32> to vector<16x32xf32>
    %44 = arith.truncf %43 : vector<16x32xf32> to vector<16x32xbf16>
    %45 = vector.extract_strided_slice %11 {offsets = [0, 32], sizes = [16, 32], strides = [1, 1]} : vector<16x128xf32> to vector<16x32xf32>
    %46 = arith.truncf %45 : vector<16x32xf32> to vector<16x32xbf16>
    %47 = vector.extract_strided_slice %12 {offsets = [0, 32], sizes = [16, 32], strides = [1, 1]} : vector<16x128xf32> to vector<16x32xf32>
    %48 = arith.truncf %47 : vector<16x32xf32> to vector<16x32xbf16>
    %cst_14 = arith.constant dense<0.000000e+00> : vector<16x16xf32>
    %49 = tpu.matmul %44, %46, %cst_14 {dimension_numbers = #tpu.dot_dimension_numbers<[1], [1], [0], [0], [0, 0, 1, 0], [], []>} : vector<16x32xbf16>, vector<16x32xbf16>, vector<16x16xf32> -> vector<16x16xf32>
    %cst_15 = arith.constant -1.000000e+09 : f32
    %50 = vector.broadcast %cst_15 : f32 to vector<16x16xf32>
    %51 = arith.select %20, %49, %50 : vector<16x16xi1>, vector<16x16xf32>
    %cst_16 = arith.constant dense<0xFF800000> : vector<16xf32>
    %52 = vector.multi_reduction <maximumf>, %51, %cst_16 [1] : vector<16x16xf32> to vector<16xf32>
    %53 = vector.shape_cast %52 : vector<16xf32> to vector<16x1xf32>
    %54 = vector.broadcast %53 : vector<16x1xf32> to vector<16x16xf32>
    %55 = arith.subf %51, %54 : vector<16x16xf32>
    %56 = math.exp %55 : vector<16x16xf32>
    %cst_17 = arith.constant dense<0.000000e+00> : vector<16xf32>
    %57 = vector.multi_reduction <add>, %56, %cst_17 [1] : vector<16x16xf32> to vector<16xf32>
    %58 = vector.shape_cast %57 : vector<16xf32> to vector<16x1xf32>
    %59 = tpu.reciprocal %58 {approx = true} : vector<16x1xf32> -> vector<16x1xf32>
    %60 = vector.broadcast %59 : vector<16x1xf32> to vector<16x16xf32>
    %61 = arith.mulf %56, %60 : vector<16x16xf32>
    %62 = arith.truncf %61 : vector<16x16xf32> to vector<16x16xbf16>
    %cst_18 = arith.constant dense<0.000000e+00> : vector<16x32xf32>
    %63 = tpu.matmul %62, %48, %cst_18 {dimension_numbers = #tpu.dot_dimension_numbers<[1], [0], [0], [1], [0, 0, 1, 1], [], []>} : vector<16x16xbf16>, vector<16x32xbf16>, vector<16x32xf32> -> vector<16x32xf32>
    %c0_19 = arith.constant 0 : index
    %c32 = arith.constant 32 : index
    %64 = vector.load %arg10[%c0_19, %c32] : memref<16x128xf32, #tpu.memory_space<vmem>>, vector<16x32xf32>
    tpu.vector_store %arg10[%c0_19, %c32], %63 {strides = array<i32>} : memref<16x128xf32, #tpu.memory_space<vmem>>, vector<16x32xf32>,
    %65 = vector.extract_strided_slice %10 {offsets = [0, 64], sizes = [16, 32], strides = [1, 1]} : vector<16x128xf32> to vector<16x32xf32>
    %66 = arith.truncf %65 : vector<16x32xf32> to vector<16x32xbf16>
    %67 = vector.extract_strided_slice %11 {offsets = [0, 64], sizes = [16, 32], strides = [1, 1]} : vector<16x128xf32> to vector<16x32xf32>
    %68 = arith.truncf %67 : vector<16x32xf32> to vector<16x32xbf16>
    %69 = vector.extract_strided_slice %12 {offsets = [0, 64], sizes = [16, 32], strides = [1, 1]} : vector<16x128xf32> to vector<16x32xf32>
    %70 = arith.truncf %69 : vector<16x32xf32> to vector<16x32xbf16>
    %cst_20 = arith.constant dense<0.000000e+00> : vector<16x16xf32>
    %71 = tpu.matmul %66, %68, %cst_20 {dimension_numbers = #tpu.dot_dimension_numbers<[1], [1], [0], [0], [0, 0, 1, 0], [], []>} : vector<16x32xbf16>, vector<16x32xbf16>, vector<16x16xf32> -> vector<16x16xf32>
    %cst_21 = arith.constant -1.000000e+09 : f32
    %72 = vector.broadcast %cst_21 : f32 to vector<16x16xf32>
    %73 = arith.select %20, %71, %72 : vector<16x16xi1>, vector<16x16xf32>
    %cst_22 = arith.constant dense<0xFF800000> : vector<16xf32>
    %74 = vector.multi_reduction <maximumf>, %73, %cst_22 [1] : vector<16x16xf32> to vector<16xf32>
    %75 = vector.shape_cast %74 : vector<16xf32> to vector<16x1xf32>
    %76 = vector.broadcast %75 : vector<16x1xf32> to vector<16x16xf32>
    %77 = arith.subf %73, %76 : vector<16x16xf32>
    %78 = math.exp %77 : vector<16x16xf32>
    %cst_23 = arith.constant dense<0.000000e+00> : vector<16xf32>
    %79 = vector.multi_reduction <add>, %78, %cst_23 [1] : vector<16x16xf32> to vector<16xf32>
    %80 = vector.shape_cast %79 : vector<16xf32> to vector<16x1xf32>
    %81 = tpu.reciprocal %80 {approx = true} : vector<16x1xf32> -> vector<16x1xf32>
    %82 = vector.broadcast %81 : vector<16x1xf32> to vector<16x16xf32>
    %83 = arith.mulf %78, %82 : vector<16x16xf32>
    %84 = arith.truncf %83 : vector<16x16xf32> to vector<16x16xbf16>
    %cst_24 = arith.constant dense<0.000000e+00> : vector<16x32xf32>
    %85 = tpu.matmul %84, %70, %cst_24 {dimension_numbers = #tpu.dot_dimension_numbers<[1], [0], [0], [1], [0, 0, 1, 1], [], []>} : vector<16x16xbf16>, vector<16x32xbf16>, vector<16x32xf32> -> vector<16x32xf32>
    %c0_25 = arith.constant 0 : index
    %c64 = arith.constant 64 : index
    %86 = vector.load %arg10[%c0_25, %c64] : memref<16x128xf32, #tpu.memory_space<vmem>>, vector<16x32xf32>
    tpu.vector_store %arg10[%c0_25, %c64], %85 {strides = array<i32>} : memref<16x128xf32, #tpu.memory_space<vmem>>, vector<16x32xf32>,
    %87 = vector.extract_strided_slice %10 {offsets = [0, 96], sizes = [16, 32], strides = [1, 1]} : vector<16x128xf32> to vector<16x32xf32>
    %88 = arith.truncf %87 : vector<16x32xf32> to vector<16x32xbf16>
    %89 = vector.extract_strided_slice %11 {offsets = [0, 96], sizes = [16, 32], strides = [1, 1]} : vector<16x128xf32> to vector<16x32xf32>
    %90 = arith.truncf %89 : vector<16x32xf32> to vector<16x32xbf16>
    %91 = vector.extract_strided_slice %12 {offsets = [0, 96], sizes = [16, 32], strides = [1, 1]} : vector<16x128xf32> to vector<16x32xf32>
    %92 = arith.truncf %91 : vector<16x32xf32> to vector<16x32xbf16>
    %cst_26 = arith.constant dense<0.000000e+00> : vector<16x16xf32>
    %93 = tpu.matmul %88, %90, %cst_26 {dimension_numbers = #tpu.dot_dimension_numbers<[1], [1], [0], [0], [0, 0, 1, 0], [], []>} : vector<16x32xbf16>, vector<16x32xbf16>, vector<16x16xf32> -> vector<16x16xf32>
    %cst_27 = arith.constant -1.000000e+09 : f32
    %94 = vector.broadcast %cst_27 : f32 to vector<16x16xf32>
    %95 = arith.select %20, %93, %94 : vector<16x16xi1>, vector<16x16xf32>
    %cst_28 = arith.constant dense<0xFF800000> : vector<16xf32>
    %96 = vector.multi_reduction <maximumf>, %95, %cst_28 [1] : vector<16x16xf32> to vector<16xf32>
    %97 = vector.shape_cast %96 : vector<16xf32> to vector<16x1xf32>
    %98 = vector.broadcast %97 : vector<16x1xf32> to vector<16x16xf32>
    %99 = arith.subf %95, %98 : vector<16x16xf32>
    %100 = math.exp %99 : vector<16x16xf32>
    %cst_29 = arith.constant dense<0.000000e+00> : vector<16xf32>
    %101 = vector.multi_reduction <add>, %100, %cst_29 [1] : vector<16x16xf32> to vector<16xf32>
    %102 = vector.shape_cast %101 : vector<16xf32> to vector<16x1xf32>
    %103 = tpu.reciprocal %102 {approx = true} : vector<16x1xf32> -> vector<16x1xf32>
    %104 = vector.broadcast %103 : vector<16x1xf32> to vector<16x16xf32>
    %105 = arith.mulf %100, %104 : vector<16x16xf32>
    %106 = arith.truncf %105 : vector<16x16xf32> to vector<16x16xbf16>
    %cst_30 = arith.constant dense<0.000000e+00> : vector<16x32xf32>
    %107 = tpu.matmul %106, %92, %cst_30 {dimension_numbers = #tpu.dot_dimension_numbers<[1], [0], [0], [1], [0, 0, 1, 1], [], []>} : vector<16x16xbf16>, vector<16x32xbf16>, vector<16x32xf32> -> vector<16x32xf32>
    %c0_31 = arith.constant 0 : index
    %c96 = arith.constant 96 : index
    %108 = vector.load %arg10[%c0_31, %c96] : memref<16x128xf32, #tpu.memory_space<vmem>>, vector<16x32xf32>
    tpu.vector_store %arg10[%c0_31, %c96], %107 {strides = array<i32>} : memref<16x128xf32, #tpu.memory_space<vmem>>, vector<16x32xf32>,
    %c0_32 = arith.constant 0 : index
    %c0_33 = arith.constant 0 : index
    %109 = vector.load %arg10[%c0_32, %c0_33] : memref<16x128xf32, #tpu.memory_space<vmem>>, vector<16x128xf32>
    %110 = arith.truncf %109 : vector<16x128xf32> to vector<16x128xbf16>
    %c0_34 = arith.constant 0 : index
    %c0_35 = arith.constant 0 : index
    %111 = vector.load %arg5[%c0_34, %c0_35] : memref<128x128xbf16, #tpu.memory_space<vmem>>, vector<128x128xbf16>
    %cst_36 = arith.constant dense<0.000000e+00> : vector<16x128xf32>
    %112 = tpu.matmul %110, %111, %cst_36 {dimension_numbers = #tpu.dot_dimension_numbers<[1], [0], [0], [1], [0, 0, 1, 1], [], []>} : vector<16x128xbf16>, vector<128x128xbf16>, vector<16x128xf32> -> vector<16x128xf32>
    %c0_37 = arith.constant 0 : index
    %c0_38 = arith.constant 0 : index
    %113 = vector.load %arg6[%c0_37, %c0_38] : memref<1x128xf32, #tpu.memory_space<vmem>>, vector<1x128xf32>
    %114 = vector.broadcast %113 : vector<1x128xf32> to vector<16x128xf32>
    %115 = arith.addf %112, %114 : vector<16x128xf32>
    %116 = arith.addf %115, %2 : vector<16x128xf32>
    %c0_39 = arith.constant 0 : index
    %c0_40 = arith.constant 0 : index
    %117 = vector.load %arg7[%c0_39, %c0_40] : memref<1x128xf32, #tpu.memory_space<vmem>>, vector<1x128xf32>
    %c0_41 = arith.constant 0 : index
    %c0_42 = arith.constant 0 : index
    %118 = vector.load %arg8[%c0_41, %c0_42] : memref<1x128xf32, #tpu.memory_space<vmem>>, vector<1x128xf32>
    %cst_43 = arith.constant dense<0.000000e+00> : vector<16xf32>
    %119 = vector.multi_reduction <add>, %116, %cst_43 [1] : vector<16x128xf32> to vector<16xf32>
    %120 = vector.shape_cast %119 : vector<16xf32> to vector<16x1xf32>
    %cst_44 = arith.constant 1.280000e+02 : f32
    %121 = vector.broadcast %cst_44 : f32 to vector<16x1xf32>
    %122 = arith.divf %120, %121 : vector<16x1xf32>
    %123 = vector.broadcast %122 : vector<16x1xf32> to vector<16x128xf32>
    %124 = arith.subf %116, %123 : vector<16x128xf32>
    %125 = arith.mulf %124, %124 : vector<16x128xf32>
    %cst_45 = arith.constant dense<0.000000e+00> : vector<16xf32>
    %126 = vector.multi_reduction <add>, %125, %cst_45 [1] : vector<16x128xf32> to vector<16xf32>
    %127 = vector.shape_cast %126 : vector<16xf32> to vector<16x1xf32>
    %cst_46 = arith.constant 1.280000e+02 : f32
    %128 = vector.broadcast %cst_46 : f32 to vector<16x1xf32>
    %129 = arith.divf %127, %128 : vector<16x1xf32>
    %cst_47 = arith.constant 9.99999974E-6 : f32
    %130 = vector.broadcast %cst_47 : f32 to vector<16x1xf32>
    %131 = arith.addf %129, %130 : vector<16x1xf32>
    %132 = math.rsqrt %131 : vector<16x1xf32>
    %133 = vector.broadcast %132 : vector<16x1xf32> to vector<16x128xf32>
    %134 = arith.mulf %124, %133 : vector<16x128xf32>
    %135 = vector.broadcast %117 : vector<1x128xf32> to vector<16x128xf32>
    %136 = arith.mulf %134, %135 : vector<16x128xf32>
    %137 = vector.broadcast %118 : vector<1x128xf32> to vector<16x128xf32>
    %138 = arith.addf %136, %137 : vector<16x128xf32>
    %139 = arith.truncf %138 : vector<16x128xf32> to vector<16x128xbf16>
    %c0_48 = arith.constant 0 : index
    %c0_49 = arith.constant 0 : index
    %c0_50 = arith.constant 0 : index
    %140 = vector.load %arg9[%c0_48, %c0_49, %c0_50] : memref<1x16x128xbf16, #tpu.memory_space<vmem>>, vector<1x16x128xbf16>
    %141 = vector.shape_cast %140 : vector<1x16x128xbf16> to vector<16x128xbf16>
    %142 = vector.shape_cast %139 : vector<16x128xbf16> to vector<1x16x128xbf16>
    tpu.vector_store %arg9[%c0_48, %c0_49, %c0_50], %142 {strides = array<i32>} : memref<1x16x128xbf16, #tpu.memory_space<vmem>>, vector<1x16x128xbf16>,
    return
  }
  func.func @transform_0(%arg0: i32, %arg1: memref<2xi32, #tpu.memory_space<smem>>) -> (i32, i32, i32) {
    %c0_i32 = arith.constant 0 : i32
    %c0_i32_0 = arith.constant 0 : i32
    %c0_i32_1 = arith.constant 0 : i32
    return %arg0, %c0_i32, %c0_i32_0 : i32, i32, i32
  }
  func.func @transform_1(%arg0: i32, %arg1: memref<2xi32, #tpu.memory_space<smem>>) -> (i32, i32) {
    %c0_i32 = arith.constant 0 : i32
    %c0_i32_0 = arith.constant 0 : i32
    %c0_i32_1 = arith.constant 0 : i32
    return %c0_i32, %c0_i32_0 : i32, i32
  }
  func.func @transform_2(%arg0: i32, %arg1: memref<2xi32, #tpu.memory_space<smem>>) -> (i32, i32) {
    %c0_i32 = arith.constant 0 : i32
    %c0_i32_0 = arith.constant 0 : i32
    %c0_i32_1 = arith.constant 0 : i32
    return %c0_i32, %c0_i32_0 : i32, i32
  }
  func.func @transform_3(%arg0: i32, %arg1: memref<2xi32, #tpu.memory_space<smem>>) -> (i32, i32) {
    %c0_i32 = arith.constant 0 : i32
    %c0_i32_0 = arith.constant 0 : i32
    %c0_i32_1 = arith.constant 0 : i32
    return %c0_i32, %c0_i32_0 : i32, i32
  }
  func.func @transform_4(%arg0: i32, %arg1: memref<2xi32, #tpu.memory_space<smem>>) -> (i32, i32) {
    %c0_i32 = arith.constant 0 : i32
    %c0_i32_0 = arith.constant 0 : i32
    %c0_i32_1 = arith.constant 0 : i32
    return %c0_i32, %c0_i32_0 : i32, i32
  }
  func.func @transform_5(%arg0: i32, %arg1: memref<2xi32, #tpu.memory_space<smem>>) -> (i32, i32) {
    %c0_i32 = arith.constant 0 : i32
    %c0_i32_0 = arith.constant 0 : i32
    %c0_i32_1 = arith.constant 0 : i32
    return %c0_i32, %c0_i32_0 : i32, i32
  }
  func.func @transform_6(%arg0: i32, %arg1: memref<2xi32, #tpu.memory_space<smem>>) -> (i32, i32) {
    %c0_i32 = arith.constant 0 : i32
    %c0_i32_0 = arith.constant 0 : i32
    %c0_i32_1 = arith.constant 0 : i32
    return %c0_i32, %c0_i32_0 : i32, i32
  }
  func.func @transform_7(%arg0: i32, %arg1: memref<2xi32, #tpu.memory_space<smem>>) -> (i32, i32, i32) {
    %c0_i32 = arith.constant 0 : i32
    %c0_i32_0 = arith.constant 0 : i32
    %c0_i32_1 = arith.constant 0 : i32
    return %arg0, %c0_i32, %c0_i32_0 : i32, i32, i32
  }
}

module attributes {stable_mosaic.version = 11 : i64} {
  func.func @_ffn_ln_kernel(%arg0: i32, %arg1: memref<16x128xbf16, #tpu.memory_space<vmem>>, %arg2: memref<128x512xbf16, #tpu.memory_space<vmem>>, %arg3: memref<1x512xf32, #tpu.memory_space<vmem>>, %arg4: memref<512x128xbf16, #tpu.memory_space<vmem>>, %arg5: memref<1x128xf32, #tpu.memory_space<vmem>>, %arg6: memref<1x128xf32, #tpu.memory_space<vmem>>, %arg7: memref<1x128xf32, #tpu.memory_space<vmem>>, %arg8: memref<16x128xbf16, #tpu.memory_space<vmem>>) attributes {dimension_semantics = [#tpu.dimension_semantics<parallel>], iteration_bounds = array<i64: 1>, scalar_prefetch = 0 : i64, scratch_operands = 0 : i64, tpu.core_type = #tpu.core_type<tc>, window_params = [{transform_indices = @transform_0, window_bounds = array<i64: 16, 128>}, {pipeline_mode = #tpu.pipeline_mode<synchronous>, transform_indices = @transform_1, window_bounds = array<i64: 128, 512>}, {pipeline_mode = #tpu.pipeline_mode<synchronous>, transform_indices = @transform_2, window_bounds = array<i64: 1, 512>}, {pipeline_mode = #tpu.pipeline_mode<synchronous>, transform_indices = @transform_3, window_bounds = array<i64: 512, 128>}, {pipeline_mode = #tpu.pipeline_mode<synchronous>, transform_indices = @transform_4, window_bounds = array<i64: 1, 128>}, {pipeline_mode = #tpu.pipeline_mode<synchronous>, transform_indices = @transform_5, window_bounds = array<i64: 1, 128>}, {pipeline_mode = #tpu.pipeline_mode<synchronous>, transform_indices = @transform_6, window_bounds = array<i64: 1, 128>}, {transform_indices = @transform_7, window_bounds = array<i64: 16, 128>}]} {
    %c0 = arith.constant 0 : index
    %c0_0 = arith.constant 0 : index
    %0 = vector.load %arg1[%c0, %c0_0] : memref<16x128xbf16, #tpu.memory_space<vmem>>, vector<16x128xbf16>
    %1 = arith.extf %0 : vector<16x128xbf16> to vector<16x128xf32>
    %c0_1 = arith.constant 0 : index
    %c0_2 = arith.constant 0 : index
    %2 = vector.load %arg2[%c0_1, %c0_2] : memref<128x512xbf16, #tpu.memory_space<vmem>>, vector<128x512xbf16>
    %cst = arith.constant dense<0.000000e+00> : vector<16x512xf32>
    %3 = tpu.matmul %0, %2, %cst {dimension_numbers = #tpu.dot_dimension_numbers<[1], [0], [0], [1], [0, 0, 1, 1], [], []>} : vector<16x128xbf16>, vector<128x512xbf16>, vector<16x512xf32> -> vector<16x512xf32>
    %c0_3 = arith.constant 0 : index
    %c0_4 = arith.constant 0 : index
    %4 = vector.load %arg3[%c0_3, %c0_4] : memref<1x512xf32, #tpu.memory_space<vmem>>, vector<1x512xf32>
    %5 = vector.broadcast %4 : vector<1x512xf32> to vector<16x512xf32>
    %6 = arith.addf %3, %5 : vector<16x512xf32>
    %cst_5 = arith.constant 0.000000e+00 : f32
    %7 = vector.broadcast %cst_5 : f32 to vector<16x512xf32>
    %8 = arith.maximumf %6, %7 : vector<16x512xf32>
    %9 = arith.truncf %8 : vector<16x512xf32> to vector<16x512xbf16>
    %c0_6 = arith.constant 0 : index
    %c0_7 = arith.constant 0 : index
    %10 = vector.load %arg4[%c0_6, %c0_7] : memref<512x128xbf16, #tpu.memory_space<vmem>>, vector<512x128xbf16>
    %cst_8 = arith.constant dense<0.000000e+00> : vector<16x128xf32>
    %11 = tpu.matmul %9, %10, %cst_8 {dimension_numbers = #tpu.dot_dimension_numbers<[1], [0], [0], [1], [0, 0, 1, 1], [], []>} : vector<16x512xbf16>, vector<512x128xbf16>, vector<16x128xf32> -> vector<16x128xf32>
    %c0_9 = arith.constant 0 : index
    %c0_10 = arith.constant 0 : index
    %12 = vector.load %arg5[%c0_9, %c0_10] : memref<1x128xf32, #tpu.memory_space<vmem>>, vector<1x128xf32>
    %13 = vector.broadcast %12 : vector<1x128xf32> to vector<16x128xf32>
    %14 = arith.addf %11, %13 : vector<16x128xf32>
    %15 = arith.addf %14, %1 : vector<16x128xf32>
    %c0_11 = arith.constant 0 : index
    %c0_12 = arith.constant 0 : index
    %16 = vector.load %arg6[%c0_11, %c0_12] : memref<1x128xf32, #tpu.memory_space<vmem>>, vector<1x128xf32>
    %c0_13 = arith.constant 0 : index
    %c0_14 = arith.constant 0 : index
    %17 = vector.load %arg7[%c0_13, %c0_14] : memref<1x128xf32, #tpu.memory_space<vmem>>, vector<1x128xf32>
    %cst_15 = arith.constant dense<0.000000e+00> : vector<16xf32>
    %18 = vector.multi_reduction <add>, %15, %cst_15 [1] : vector<16x128xf32> to vector<16xf32>
    %19 = vector.shape_cast %18 : vector<16xf32> to vector<16x1xf32>
    %cst_16 = arith.constant 1.280000e+02 : f32
    %20 = vector.broadcast %cst_16 : f32 to vector<16x1xf32>
    %21 = arith.divf %19, %20 : vector<16x1xf32>
    %22 = vector.broadcast %21 : vector<16x1xf32> to vector<16x128xf32>
    %23 = arith.subf %15, %22 : vector<16x128xf32>
    %24 = arith.mulf %23, %23 : vector<16x128xf32>
    %cst_17 = arith.constant dense<0.000000e+00> : vector<16xf32>
    %25 = vector.multi_reduction <add>, %24, %cst_17 [1] : vector<16x128xf32> to vector<16xf32>
    %26 = vector.shape_cast %25 : vector<16xf32> to vector<16x1xf32>
    %cst_18 = arith.constant 1.280000e+02 : f32
    %27 = vector.broadcast %cst_18 : f32 to vector<16x1xf32>
    %28 = arith.divf %26, %27 : vector<16x1xf32>
    %cst_19 = arith.constant 9.99999974E-6 : f32
    %29 = vector.broadcast %cst_19 : f32 to vector<16x1xf32>
    %30 = arith.addf %28, %29 : vector<16x1xf32>
    %31 = math.rsqrt %30 : vector<16x1xf32>
    %32 = vector.broadcast %31 : vector<16x1xf32> to vector<16x128xf32>
    %33 = arith.mulf %23, %32 : vector<16x128xf32>
    %34 = vector.broadcast %16 : vector<1x128xf32> to vector<16x128xf32>
    %35 = arith.mulf %33, %34 : vector<16x128xf32>
    %36 = vector.broadcast %17 : vector<1x128xf32> to vector<16x128xf32>
    %37 = arith.addf %35, %36 : vector<16x128xf32>
    %38 = arith.truncf %37 : vector<16x128xf32> to vector<16x128xbf16>
    %c0_20 = arith.constant 0 : index
    %c0_21 = arith.constant 0 : index
    %39 = vector.load %arg8[%c0_20, %c0_21] : memref<16x128xbf16, #tpu.memory_space<vmem>>, vector<16x128xbf16>
    tpu.vector_store %arg8[%c0_20, %c0_21], %38 {strides = array<i32>} : memref<16x128xbf16, #tpu.memory_space<vmem>>, vector<16x128xbf16>,
    return
  }
  func.func @transform_0(%arg0: i32) -> (i32, i32) {
    %c0_i32 = arith.constant 0 : i32
    %c0_i32_0 = arith.constant 0 : i32
    return %arg0, %c0_i32 : i32, i32
  }
  func.func @transform_1(%arg0: i32) -> (i32, i32) {
    %c0_i32 = arith.constant 0 : i32
    %c0_i32_0 = arith.constant 0 : i32
    %c0_i32_1 = arith.constant 0 : i32
    return %c0_i32, %c0_i32_0 : i32, i32
  }
  func.func @transform_2(%arg0: i32) -> (i32, i32) {
    %c0_i32 = arith.constant 0 : i32
    %c0_i32_0 = arith.constant 0 : i32
    %c0_i32_1 = arith.constant 0 : i32
    return %c0_i32, %c0_i32_0 : i32, i32
  }
  func.func @transform_3(%arg0: i32) -> (i32, i32) {
    %c0_i32 = arith.constant 0 : i32
    %c0_i32_0 = arith.constant 0 : i32
    %c0_i32_1 = arith.constant 0 : i32
    return %c0_i32, %c0_i32_0 : i32, i32
  }
  func.func @transform_4(%arg0: i32) -> (i32, i32) {
    %c0_i32 = arith.constant 0 : i32
    %c0_i32_0 = arith.constant 0 : i32
    %c0_i32_1 = arith.constant 0 : i32
    return %c0_i32, %c0_i32_0 : i32, i32
  }
  func.func @transform_5(%arg0: i32) -> (i32, i32) {
    %c0_i32 = arith.constant 0 : i32
    %c0_i32_0 = arith.constant 0 : i32
    %c0_i32_1 = arith.constant 0 : i32
    return %c0_i32, %c0_i32_0 : i32, i32
  }
  func.func @transform_6(%arg0: i32) -> (i32, i32) {
    %c0_i32 = arith.constant 0 : i32
    %c0_i32_0 = arith.constant 0 : i32
    %c0_i32_1 = arith.constant 0 : i32
    return %c0_i32, %c0_i32_0 : i32, i32
  }
  func.func @transform_7(%arg0: i32) -> (i32, i32) {
    %c0_i32 = arith.constant 0 : i32
    %c0_i32_0 = arith.constant 0 : i32
    return %arg0, %c0_i32 : i32, i32
  }
}

module attributes {stable_mosaic.version = 11 : i64} {
  func.func @_self_attn_block_kernel(%arg0: i32, %arg1: memref<2xi32, #tpu.memory_space<smem>>, %arg2: memref<1x8x128xbf16, #tpu.memory_space<vmem>>, %arg3: memref<128x384xbf16, #tpu.memory_space<vmem>>, %arg4: memref<1x384xf32, #tpu.memory_space<vmem>>, %arg5: memref<128x128xbf16, #tpu.memory_space<vmem>>, %arg6: memref<1x128xf32, #tpu.memory_space<vmem>>, %arg7: memref<1x128xf32, #tpu.memory_space<vmem>>, %arg8: memref<1x128xf32, #tpu.memory_space<vmem>>, %arg9: memref<1x8x128xbf16, #tpu.memory_space<vmem>>, %arg10: memref<8x128xf32, #tpu.memory_space<vmem>>) attributes {dimension_semantics = [#tpu.dimension_semantics<parallel>], iteration_bounds = array<i64: 2>, scalar_prefetch = 1 : i64, scratch_operands = 1 : i64, tpu.core_type = #tpu.core_type<tc>, window_params = [{transform_indices = @transform_0, window_bounds = array<i64: 1, 8, 128>}, {pipeline_mode = #tpu.pipeline_mode<synchronous>, transform_indices = @transform_1, window_bounds = array<i64: 128, 384>}, {pipeline_mode = #tpu.pipeline_mode<synchronous>, transform_indices = @transform_2, window_bounds = array<i64: 1, 384>}, {pipeline_mode = #tpu.pipeline_mode<synchronous>, transform_indices = @transform_3, window_bounds = array<i64: 128, 128>}, {pipeline_mode = #tpu.pipeline_mode<synchronous>, transform_indices = @transform_4, window_bounds = array<i64: 1, 128>}, {pipeline_mode = #tpu.pipeline_mode<synchronous>, transform_indices = @transform_5, window_bounds = array<i64: 1, 128>}, {pipeline_mode = #tpu.pipeline_mode<synchronous>, transform_indices = @transform_6, window_bounds = array<i64: 1, 128>}, {transform_indices = @transform_7, window_bounds = array<i64: 1, 8, 128>}]} {
    %c0 = arith.constant 0 : index
    %c0_0 = arith.constant 0 : index
    %c0_1 = arith.constant 0 : index
    %0 = vector.load %arg2[%c0, %c0_0, %c0_1] : memref<1x8x128xbf16, #tpu.memory_space<vmem>>, vector<1x8x128xbf16>
    %1 = vector.shape_cast %0 : vector<1x8x128xbf16> to vector<8x128xbf16>
    %2 = arith.extf %1 : vector<8x128xbf16> to vector<8x128xf32>
    %c0_2 = arith.constant 0 : index
    %c0_3 = arith.constant 0 : index
    %3 = vector.load %arg3[%c0_2, %c0_3] : memref<128x384xbf16, #tpu.memory_space<vmem>>, vector<128x384xbf16>
    %cst = arith.constant dense<0.000000e+00> : vector<8x384xf32>
    %4 = tpu.matmul %1, %3, %cst {dimension_numbers = #tpu.dot_dimension_numbers<[1], [0], [0], [1], [0, 0, 1, 1], [], []>} : vector<8x128xbf16>, vector<128x384xbf16>, vector<8x384xf32> -> vector<8x384xf32>
    %c0_4 = arith.constant 0 : index
    %c0_5 = arith.constant 0 : index
    %5 = vector.load %arg4[%c0_4, %c0_5] : memref<1x384xf32, #tpu.memory_space<vmem>>, vector<1x384xf32>
    %6 = vector.broadcast %5 : vector<1x384xf32> to vector<8x384xf32>
    %7 = arith.addf %4, %6 : vector<8x384xf32>
    %8 = vector.extract_strided_slice %7 {offsets = [0, 0], sizes = [8, 128], strides = [1, 1]} : vector<8x384xf32> to vector<8x128xf32>
    %cst_6 = arith.constant 0.176776692 : f32
    %9 = vector.broadcast %cst_6 : f32 to vector<8x128xf32>
    %10 = arith.mulf %8, %9 : vector<8x128xf32>
    %11 = vector.extract_strided_slice %7 {offsets = [0, 128], sizes = [8, 128], strides = [1, 1]} : vector<8x384xf32> to vector<8x128xf32>
    %12 = vector.extract_strided_slice %7 {offsets = [0, 256], sizes = [8, 128], strides = [1, 1]} : vector<8x384xf32> to vector<8x128xf32>
    %13 = arith.index_cast %arg0 : i32 to index
    %14 = memref.load %arg1[%13] : memref<2xi32, #tpu.memory_space<smem>>
    %15 = tpu.iota {dimensions = array<i32: 1>} : vector<8x8xi32>
    %16 = vector.broadcast %14 : i32 to vector<8x8xi32>
    %17 = arith.cmpi slt, %15, %16 : vector<8x8xi32>
    %18 = vector.extract_strided_slice %10 {offsets = [0, 0], sizes = [8, 32], strides = [1, 1]} : vector<8x128xf32> to vector<8x32xf32>
    %19 = arith.truncf %18 : vector<8x32xf32> to vector<8x32xbf16>
    %20 = vector.extract_strided_slice %11 {offsets = [0, 0], sizes = [8, 32], strides = [1, 1]} : vector<8x128xf32> to vector<8x32xf32>
    %21 = arith.truncf %20 : vector<8x32xf32> to vector<8x32xbf16>
    %22 = vector.extract_strided_slice %12 {offsets = [0, 0], sizes = [8, 32], strides = [1, 1]} : vector<8x128xf32> to vector<8x32xf32>
    %23 = arith.truncf %22 : vector<8x32xf32> to vector<8x32xbf16>
    %cst_7 = arith.constant dense<0.000000e+00> : vector<8x8xf32>
    %24 = tpu.matmul %19, %21, %cst_7 {dimension_numbers = #tpu.dot_dimension_numbers<[1], [1], [0], [0], [0, 0, 1, 0], [], []>} : vector<8x32xbf16>, vector<8x32xbf16>, vector<8x8xf32> -> vector<8x8xf32>
    %cst_8 = arith.constant -1.000000e+09 : f32
    %25 = vector.broadcast %cst_8 : f32 to vector<8x8xf32>
    %26 = arith.select %17, %24, %25 : vector<8x8xi1>, vector<8x8xf32>
    %cst_9 = arith.constant dense<0xFF800000> : vector<8xf32>
    %27 = vector.multi_reduction <maximumf>, %26, %cst_9 [1] : vector<8x8xf32> to vector<8xf32>
    %28 = vector.shape_cast %27 : vector<8xf32> to vector<8x1xf32>
    %29 = vector.broadcast %28 : vector<8x1xf32> to vector<8x8xf32>
    %30 = arith.subf %26, %29 : vector<8x8xf32>
    %31 = math.exp %30 : vector<8x8xf32>
    %cst_10 = arith.constant dense<0.000000e+00> : vector<8xf32>
    %32 = vector.multi_reduction <add>, %31, %cst_10 [1] : vector<8x8xf32> to vector<8xf32>
    %33 = vector.shape_cast %32 : vector<8xf32> to vector<8x1xf32>
    %34 = tpu.reciprocal %33 {approx = true} : vector<8x1xf32> -> vector<8x1xf32>
    %35 = vector.broadcast %34 : vector<8x1xf32> to vector<8x8xf32>
    %36 = arith.mulf %31, %35 : vector<8x8xf32>
    %37 = arith.truncf %36 : vector<8x8xf32> to vector<8x8xbf16>
    %cst_11 = arith.constant dense<0.000000e+00> : vector<8x32xf32>
    %38 = tpu.matmul %37, %23, %cst_11 {dimension_numbers = #tpu.dot_dimension_numbers<[1], [0], [0], [1], [0, 0, 1, 1], [], []>} : vector<8x8xbf16>, vector<8x32xbf16>, vector<8x32xf32> -> vector<8x32xf32>
    %c0_12 = arith.constant 0 : index
    %c0_13 = arith.constant 0 : index
    %39 = vector.load %arg10[%c0_12, %c0_13] : memref<8x128xf32, #tpu.memory_space<vmem>>, vector<8x32xf32>
    tpu.vector_store %arg10[%c0_12, %c0_13], %38 {strides = array<i32>} : memref<8x128xf32, #tpu.memory_space<vmem>>, vector<8x32xf32>,
    %40 = vector.extract_strided_slice %10 {offsets = [0, 32], sizes = [8, 32], strides = [1, 1]} : vector<8x128xf32> to vector<8x32xf32>
    %41 = arith.truncf %40 : vector<8x32xf32> to vector<8x32xbf16>
    %42 = vector.extract_strided_slice %11 {offsets = [0, 32], sizes = [8, 32], strides = [1, 1]} : vector<8x128xf32> to vector<8x32xf32>
    %43 = arith.truncf %42 : vector<8x32xf32> to vector<8x32xbf16>
    %44 = vector.extract_strided_slice %12 {offsets = [0, 32], sizes = [8, 32], strides = [1, 1]} : vector<8x128xf32> to vector<8x32xf32>
    %45 = arith.truncf %44 : vector<8x32xf32> to vector<8x32xbf16>
    %cst_14 = arith.constant dense<0.000000e+00> : vector<8x8xf32>
    %46 = tpu.matmul %41, %43, %cst_14 {dimension_numbers = #tpu.dot_dimension_numbers<[1], [1], [0], [0], [0, 0, 1, 0], [], []>} : vector<8x32xbf16>, vector<8x32xbf16>, vector<8x8xf32> -> vector<8x8xf32>
    %cst_15 = arith.constant -1.000000e+09 : f32
    %47 = vector.broadcast %cst_15 : f32 to vector<8x8xf32>
    %48 = arith.select %17, %46, %47 : vector<8x8xi1>, vector<8x8xf32>
    %cst_16 = arith.constant dense<0xFF800000> : vector<8xf32>
    %49 = vector.multi_reduction <maximumf>, %48, %cst_16 [1] : vector<8x8xf32> to vector<8xf32>
    %50 = vector.shape_cast %49 : vector<8xf32> to vector<8x1xf32>
    %51 = vector.broadcast %50 : vector<8x1xf32> to vector<8x8xf32>
    %52 = arith.subf %48, %51 : vector<8x8xf32>
    %53 = math.exp %52 : vector<8x8xf32>
    %cst_17 = arith.constant dense<0.000000e+00> : vector<8xf32>
    %54 = vector.multi_reduction <add>, %53, %cst_17 [1] : vector<8x8xf32> to vector<8xf32>
    %55 = vector.shape_cast %54 : vector<8xf32> to vector<8x1xf32>
    %56 = tpu.reciprocal %55 {approx = true} : vector<8x1xf32> -> vector<8x1xf32>
    %57 = vector.broadcast %56 : vector<8x1xf32> to vector<8x8xf32>
    %58 = arith.mulf %53, %57 : vector<8x8xf32>
    %59 = arith.truncf %58 : vector<8x8xf32> to vector<8x8xbf16>
    %cst_18 = arith.constant dense<0.000000e+00> : vector<8x32xf32>
    %60 = tpu.matmul %59, %45, %cst_18 {dimension_numbers = #tpu.dot_dimension_numbers<[1], [0], [0], [1], [0, 0, 1, 1], [], []>} : vector<8x8xbf16>, vector<8x32xbf16>, vector<8x32xf32> -> vector<8x32xf32>
    %c0_19 = arith.constant 0 : index
    %c32 = arith.constant 32 : index
    %61 = vector.load %arg10[%c0_19, %c32] : memref<8x128xf32, #tpu.memory_space<vmem>>, vector<8x32xf32>
    tpu.vector_store %arg10[%c0_19, %c32], %60 {strides = array<i32>} : memref<8x128xf32, #tpu.memory_space<vmem>>, vector<8x32xf32>,
    %62 = vector.extract_strided_slice %10 {offsets = [0, 64], sizes = [8, 32], strides = [1, 1]} : vector<8x128xf32> to vector<8x32xf32>
    %63 = arith.truncf %62 : vector<8x32xf32> to vector<8x32xbf16>
    %64 = vector.extract_strided_slice %11 {offsets = [0, 64], sizes = [8, 32], strides = [1, 1]} : vector<8x128xf32> to vector<8x32xf32>
    %65 = arith.truncf %64 : vector<8x32xf32> to vector<8x32xbf16>
    %66 = vector.extract_strided_slice %12 {offsets = [0, 64], sizes = [8, 32], strides = [1, 1]} : vector<8x128xf32> to vector<8x32xf32>
    %67 = arith.truncf %66 : vector<8x32xf32> to vector<8x32xbf16>
    %cst_20 = arith.constant dense<0.000000e+00> : vector<8x8xf32>
    %68 = tpu.matmul %63, %65, %cst_20 {dimension_numbers = #tpu.dot_dimension_numbers<[1], [1], [0], [0], [0, 0, 1, 0], [], []>} : vector<8x32xbf16>, vector<8x32xbf16>, vector<8x8xf32> -> vector<8x8xf32>
    %cst_21 = arith.constant -1.000000e+09 : f32
    %69 = vector.broadcast %cst_21 : f32 to vector<8x8xf32>
    %70 = arith.select %17, %68, %69 : vector<8x8xi1>, vector<8x8xf32>
    %cst_22 = arith.constant dense<0xFF800000> : vector<8xf32>
    %71 = vector.multi_reduction <maximumf>, %70, %cst_22 [1] : vector<8x8xf32> to vector<8xf32>
    %72 = vector.shape_cast %71 : vector<8xf32> to vector<8x1xf32>
    %73 = vector.broadcast %72 : vector<8x1xf32> to vector<8x8xf32>
    %74 = arith.subf %70, %73 : vector<8x8xf32>
    %75 = math.exp %74 : vector<8x8xf32>
    %cst_23 = arith.constant dense<0.000000e+00> : vector<8xf32>
    %76 = vector.multi_reduction <add>, %75, %cst_23 [1] : vector<8x8xf32> to vector<8xf32>
    %77 = vector.shape_cast %76 : vector<8xf32> to vector<8x1xf32>
    %78 = tpu.reciprocal %77 {approx = true} : vector<8x1xf32> -> vector<8x1xf32>
    %79 = vector.broadcast %78 : vector<8x1xf32> to vector<8x8xf32>
    %80 = arith.mulf %75, %79 : vector<8x8xf32>
    %81 = arith.truncf %80 : vector<8x8xf32> to vector<8x8xbf16>
    %cst_24 = arith.constant dense<0.000000e+00> : vector<8x32xf32>
    %82 = tpu.matmul %81, %67, %cst_24 {dimension_numbers = #tpu.dot_dimension_numbers<[1], [0], [0], [1], [0, 0, 1, 1], [], []>} : vector<8x8xbf16>, vector<8x32xbf16>, vector<8x32xf32> -> vector<8x32xf32>
    %c0_25 = arith.constant 0 : index
    %c64 = arith.constant 64 : index
    %83 = vector.load %arg10[%c0_25, %c64] : memref<8x128xf32, #tpu.memory_space<vmem>>, vector<8x32xf32>
    tpu.vector_store %arg10[%c0_25, %c64], %82 {strides = array<i32>} : memref<8x128xf32, #tpu.memory_space<vmem>>, vector<8x32xf32>,
    %84 = vector.extract_strided_slice %10 {offsets = [0, 96], sizes = [8, 32], strides = [1, 1]} : vector<8x128xf32> to vector<8x32xf32>
    %85 = arith.truncf %84 : vector<8x32xf32> to vector<8x32xbf16>
    %86 = vector.extract_strided_slice %11 {offsets = [0, 96], sizes = [8, 32], strides = [1, 1]} : vector<8x128xf32> to vector<8x32xf32>
    %87 = arith.truncf %86 : vector<8x32xf32> to vector<8x32xbf16>
    %88 = vector.extract_strided_slice %12 {offsets = [0, 96], sizes = [8, 32], strides = [1, 1]} : vector<8x128xf32> to vector<8x32xf32>
    %89 = arith.truncf %88 : vector<8x32xf32> to vector<8x32xbf16>
    %cst_26 = arith.constant dense<0.000000e+00> : vector<8x8xf32>
    %90 = tpu.matmul %85, %87, %cst_26 {dimension_numbers = #tpu.dot_dimension_numbers<[1], [1], [0], [0], [0, 0, 1, 0], [], []>} : vector<8x32xbf16>, vector<8x32xbf16>, vector<8x8xf32> -> vector<8x8xf32>
    %cst_27 = arith.constant -1.000000e+09 : f32
    %91 = vector.broadcast %cst_27 : f32 to vector<8x8xf32>
    %92 = arith.select %17, %90, %91 : vector<8x8xi1>, vector<8x8xf32>
    %cst_28 = arith.constant dense<0xFF800000> : vector<8xf32>
    %93 = vector.multi_reduction <maximumf>, %92, %cst_28 [1] : vector<8x8xf32> to vector<8xf32>
    %94 = vector.shape_cast %93 : vector<8xf32> to vector<8x1xf32>
    %95 = vector.broadcast %94 : vector<8x1xf32> to vector<8x8xf32>
    %96 = arith.subf %92, %95 : vector<8x8xf32>
    %97 = math.exp %96 : vector<8x8xf32>
    %cst_29 = arith.constant dense<0.000000e+00> : vector<8xf32>
    %98 = vector.multi_reduction <add>, %97, %cst_29 [1] : vector<8x8xf32> to vector<8xf32>
    %99 = vector.shape_cast %98 : vector<8xf32> to vector<8x1xf32>
    %100 = tpu.reciprocal %99 {approx = true} : vector<8x1xf32> -> vector<8x1xf32>
    %101 = vector.broadcast %100 : vector<8x1xf32> to vector<8x8xf32>
    %102 = arith.mulf %97, %101 : vector<8x8xf32>
    %103 = arith.truncf %102 : vector<8x8xf32> to vector<8x8xbf16>
    %cst_30 = arith.constant dense<0.000000e+00> : vector<8x32xf32>
    %104 = tpu.matmul %103, %89, %cst_30 {dimension_numbers = #tpu.dot_dimension_numbers<[1], [0], [0], [1], [0, 0, 1, 1], [], []>} : vector<8x8xbf16>, vector<8x32xbf16>, vector<8x32xf32> -> vector<8x32xf32>
    %c0_31 = arith.constant 0 : index
    %c96 = arith.constant 96 : index
    %105 = vector.load %arg10[%c0_31, %c96] : memref<8x128xf32, #tpu.memory_space<vmem>>, vector<8x32xf32>
    tpu.vector_store %arg10[%c0_31, %c96], %104 {strides = array<i32>} : memref<8x128xf32, #tpu.memory_space<vmem>>, vector<8x32xf32>,
    %c0_32 = arith.constant 0 : index
    %c0_33 = arith.constant 0 : index
    %106 = vector.load %arg10[%c0_32, %c0_33] : memref<8x128xf32, #tpu.memory_space<vmem>>, vector<8x128xf32>
    %107 = arith.truncf %106 : vector<8x128xf32> to vector<8x128xbf16>
    %c0_34 = arith.constant 0 : index
    %c0_35 = arith.constant 0 : index
    %108 = vector.load %arg5[%c0_34, %c0_35] : memref<128x128xbf16, #tpu.memory_space<vmem>>, vector<128x128xbf16>
    %cst_36 = arith.constant dense<0.000000e+00> : vector<8x128xf32>
    %109 = tpu.matmul %107, %108, %cst_36 {dimension_numbers = #tpu.dot_dimension_numbers<[1], [0], [0], [1], [0, 0, 1, 1], [], []>} : vector<8x128xbf16>, vector<128x128xbf16>, vector<8x128xf32> -> vector<8x128xf32>
    %c0_37 = arith.constant 0 : index
    %c0_38 = arith.constant 0 : index
    %110 = vector.load %arg6[%c0_37, %c0_38] : memref<1x128xf32, #tpu.memory_space<vmem>>, vector<1x128xf32>
    %111 = vector.broadcast %110 : vector<1x128xf32> to vector<8x128xf32>
    %112 = arith.addf %109, %111 : vector<8x128xf32>
    %113 = arith.addf %112, %2 : vector<8x128xf32>
    %c0_39 = arith.constant 0 : index
    %c0_40 = arith.constant 0 : index
    %114 = vector.load %arg7[%c0_39, %c0_40] : memref<1x128xf32, #tpu.memory_space<vmem>>, vector<1x128xf32>
    %c0_41 = arith.constant 0 : index
    %c0_42 = arith.constant 0 : index
    %115 = vector.load %arg8[%c0_41, %c0_42] : memref<1x128xf32, #tpu.memory_space<vmem>>, vector<1x128xf32>
    %cst_43 = arith.constant dense<0.000000e+00> : vector<8xf32>
    %116 = vector.multi_reduction <add>, %113, %cst_43 [1] : vector<8x128xf32> to vector<8xf32>
    %117 = vector.shape_cast %116 : vector<8xf32> to vector<8x1xf32>
    %cst_44 = arith.constant 1.280000e+02 : f32
    %118 = vector.broadcast %cst_44 : f32 to vector<8x1xf32>
    %119 = arith.divf %117, %118 : vector<8x1xf32>
    %120 = vector.broadcast %119 : vector<8x1xf32> to vector<8x128xf32>
    %121 = arith.subf %113, %120 : vector<8x128xf32>
    %122 = arith.mulf %121, %121 : vector<8x128xf32>
    %cst_45 = arith.constant dense<0.000000e+00> : vector<8xf32>
    %123 = vector.multi_reduction <add>, %122, %cst_45 [1] : vector<8x128xf32> to vector<8xf32>
    %124 = vector.shape_cast %123 : vector<8xf32> to vector<8x1xf32>
    %cst_46 = arith.constant 1.280000e+02 : f32
    %125 = vector.broadcast %cst_46 : f32 to vector<8x1xf32>
    %126 = arith.divf %124, %125 : vector<8x1xf32>
    %cst_47 = arith.constant 9.99999974E-6 : f32
    %127 = vector.broadcast %cst_47 : f32 to vector<8x1xf32>
    %128 = arith.addf %126, %127 : vector<8x1xf32>
    %129 = math.rsqrt %128 : vector<8x1xf32>
    %130 = vector.broadcast %129 : vector<8x1xf32> to vector<8x128xf32>
    %131 = arith.mulf %121, %130 : vector<8x128xf32>
    %132 = vector.broadcast %114 : vector<1x128xf32> to vector<8x128xf32>
    %133 = arith.mulf %131, %132 : vector<8x128xf32>
    %134 = vector.broadcast %115 : vector<1x128xf32> to vector<8x128xf32>
    %135 = arith.addf %133, %134 : vector<8x128xf32>
    %136 = arith.truncf %135 : vector<8x128xf32> to vector<8x128xbf16>
    %c0_48 = arith.constant 0 : index
    %c0_49 = arith.constant 0 : index
    %c0_50 = arith.constant 0 : index
    %137 = vector.load %arg9[%c0_48, %c0_49, %c0_50] : memref<1x8x128xbf16, #tpu.memory_space<vmem>>, vector<1x8x128xbf16>
    %138 = vector.shape_cast %137 : vector<1x8x128xbf16> to vector<8x128xbf16>
    %139 = vector.shape_cast %136 : vector<8x128xbf16> to vector<1x8x128xbf16>
    tpu.vector_store %arg9[%c0_48, %c0_49, %c0_50], %139 {strides = array<i32>} : memref<1x8x128xbf16, #tpu.memory_space<vmem>>, vector<1x8x128xbf16>,
    return
  }
  func.func @transform_0(%arg0: i32, %arg1: memref<2xi32, #tpu.memory_space<smem>>) -> (i32, i32, i32) {
    %c0_i32 = arith.constant 0 : i32
    %c0_i32_0 = arith.constant 0 : i32
    %c0_i32_1 = arith.constant 0 : i32
    return %arg0, %c0_i32, %c0_i32_0 : i32, i32, i32
  }
  func.func @transform_1(%arg0: i32, %arg1: memref<2xi32, #tpu.memory_space<smem>>) -> (i32, i32) {
    %c0_i32 = arith.constant 0 : i32
    %c0_i32_0 = arith.constant 0 : i32
    %c0_i32_1 = arith.constant 0 : i32
    return %c0_i32, %c0_i32_0 : i32, i32
  }
  func.func @transform_2(%arg0: i32, %arg1: memref<2xi32, #tpu.memory_space<smem>>) -> (i32, i32) {
    %c0_i32 = arith.constant 0 : i32
    %c0_i32_0 = arith.constant 0 : i32
    %c0_i32_1 = arith.constant 0 : i32
    return %c0_i32, %c0_i32_0 : i32, i32
  }
  func.func @transform_3(%arg0: i32, %arg1: memref<2xi32, #tpu.memory_space<smem>>) -> (i32, i32) {
    %c0_i32 = arith.constant 0 : i32
    %c0_i32_0 = arith.constant 0 : i32
    %c0_i32_1 = arith.constant 0 : i32
    return %c0_i32, %c0_i32_0 : i32, i32
  }
  func.func @transform_4(%arg0: i32, %arg1: memref<2xi32, #tpu.memory_space<smem>>) -> (i32, i32) {
    %c0_i32 = arith.constant 0 : i32
    %c0_i32_0 = arith.constant 0 : i32
    %c0_i32_1 = arith.constant 0 : i32
    return %c0_i32, %c0_i32_0 : i32, i32
  }
  func.func @transform_5(%arg0: i32, %arg1: memref<2xi32, #tpu.memory_space<smem>>) -> (i32, i32) {
    %c0_i32 = arith.constant 0 : i32
    %c0_i32_0 = arith.constant 0 : i32
    %c0_i32_1 = arith.constant 0 : i32
    return %c0_i32, %c0_i32_0 : i32, i32
  }
  func.func @transform_6(%arg0: i32, %arg1: memref<2xi32, #tpu.memory_space<smem>>) -> (i32, i32) {
    %c0_i32 = arith.constant 0 : i32
    %c0_i32_0 = arith.constant 0 : i32
    %c0_i32_1 = arith.constant 0 : i32
    return %c0_i32, %c0_i32_0 : i32, i32
  }
  func.func @transform_7(%arg0: i32, %arg1: memref<2xi32, #tpu.memory_space<smem>>) -> (i32, i32, i32) {
    %c0_i32 = arith.constant 0 : i32
    %c0_i32_0 = arith.constant 0 : i32
    %c0_i32_1 = arith.constant 0 : i32
    return %arg0, %c0_i32, %c0_i32_0 : i32, i32, i32
  }
}

module attributes {stable_mosaic.version = 11 : i64} {
  func.func @_self_attn_block_kernel(%arg0: i32, %arg1: memref<2xi32, #tpu.memory_space<smem>>, %arg2: memref<1x8x128xbf16, #tpu.memory_space<vmem>>, %arg3: memref<128x384xbf16, #tpu.memory_space<vmem>>, %arg4: memref<1x384xf32, #tpu.memory_space<vmem>>, %arg5: memref<128x128xbf16, #tpu.memory_space<vmem>>, %arg6: memref<1x128xf32, #tpu.memory_space<vmem>>, %arg7: memref<1x128xf32, #tpu.memory_space<vmem>>, %arg8: memref<1x128xf32, #tpu.memory_space<vmem>>, %arg9: memref<1x8x128xbf16, #tpu.memory_space<vmem>>, %arg10: memref<8x128xf32, #tpu.memory_space<vmem>>) attributes {dimension_semantics = [#tpu.dimension_semantics<parallel>], iteration_bounds = array<i64: 2>, scalar_prefetch = 1 : i64, scratch_operands = 1 : i64, tpu.core_type = #tpu.core_type<tc>, window_params = [{transform_indices = @transform_0, window_bounds = array<i64: 1, 8, 128>}, {pipeline_mode = #tpu.pipeline_mode<synchronous>, transform_indices = @transform_1, window_bounds = array<i64: 128, 384>}, {pipeline_mode = #tpu.pipeline_mode<synchronous>, transform_indices = @transform_2, window_bounds = array<i64: 1, 384>}, {pipeline_mode = #tpu.pipeline_mode<synchronous>, transform_indices = @transform_3, window_bounds = array<i64: 128, 128>}, {pipeline_mode = #tpu.pipeline_mode<synchronous>, transform_indices = @transform_4, window_bounds = array<i64: 1, 128>}, {pipeline_mode = #tpu.pipeline_mode<synchronous>, transform_indices = @transform_5, window_bounds = array<i64: 1, 128>}, {pipeline_mode = #tpu.pipeline_mode<synchronous>, transform_indices = @transform_6, window_bounds = array<i64: 1, 128>}, {transform_indices = @transform_7, window_bounds = array<i64: 1, 8, 128>}]} {
    %c0 = arith.constant 0 : index
    %c0_0 = arith.constant 0 : index
    %c0_1 = arith.constant 0 : index
    %0 = vector.load %arg2[%c0, %c0_0, %c0_1] : memref<1x8x128xbf16, #tpu.memory_space<vmem>>, vector<1x8x128xbf16>
    %1 = vector.shape_cast %0 : vector<1x8x128xbf16> to vector<8x128xbf16>
    %2 = arith.extf %1 : vector<8x128xbf16> to vector<8x128xf32>
    %c0_2 = arith.constant 0 : index
    %c0_3 = arith.constant 0 : index
    %3 = vector.load %arg3[%c0_2, %c0_3] : memref<128x384xbf16, #tpu.memory_space<vmem>>, vector<128x384xbf16>
    %cst = arith.constant dense<0.000000e+00> : vector<8x384xf32>
    %4 = tpu.matmul %1, %3, %cst {dimension_numbers = #tpu.dot_dimension_numbers<[1], [0], [0], [1], [0, 0, 1, 1], [], []>} : vector<8x128xbf16>, vector<128x384xbf16>, vector<8x384xf32> -> vector<8x384xf32>
    %c0_4 = arith.constant 0 : index
    %c0_5 = arith.constant 0 : index
    %5 = vector.load %arg4[%c0_4, %c0_5] : memref<1x384xf32, #tpu.memory_space<vmem>>, vector<1x384xf32>
    %6 = vector.broadcast %5 : vector<1x384xf32> to vector<8x384xf32>
    %7 = arith.addf %4, %6 : vector<8x384xf32>
    %8 = vector.extract_strided_slice %7 {offsets = [0, 0], sizes = [8, 128], strides = [1, 1]} : vector<8x384xf32> to vector<8x128xf32>
    %cst_6 = arith.constant 0.176776692 : f32
    %9 = vector.broadcast %cst_6 : f32 to vector<8x128xf32>
    %10 = arith.mulf %8, %9 : vector<8x128xf32>
    %11 = vector.extract_strided_slice %7 {offsets = [0, 128], sizes = [8, 128], strides = [1, 1]} : vector<8x384xf32> to vector<8x128xf32>
    %12 = vector.extract_strided_slice %7 {offsets = [0, 256], sizes = [8, 128], strides = [1, 1]} : vector<8x384xf32> to vector<8x128xf32>
    %13 = arith.index_cast %arg0 : i32 to index
    %14 = memref.load %arg1[%13] : memref<2xi32, #tpu.memory_space<smem>>
    %15 = tpu.iota {dimensions = array<i32: 1>} : vector<8x8xi32>
    %16 = vector.broadcast %14 : i32 to vector<8x8xi32>
    %17 = arith.cmpi slt, %15, %16 : vector<8x8xi32>
    %18 = vector.extract_strided_slice %10 {offsets = [0, 0], sizes = [8, 32], strides = [1, 1]} : vector<8x128xf32> to vector<8x32xf32>
    %19 = arith.truncf %18 : vector<8x32xf32> to vector<8x32xbf16>
    %20 = vector.extract_strided_slice %11 {offsets = [0, 0], sizes = [8, 32], strides = [1, 1]} : vector<8x128xf32> to vector<8x32xf32>
    %21 = arith.truncf %20 : vector<8x32xf32> to vector<8x32xbf16>
    %22 = vector.extract_strided_slice %12 {offsets = [0, 0], sizes = [8, 32], strides = [1, 1]} : vector<8x128xf32> to vector<8x32xf32>
    %23 = arith.truncf %22 : vector<8x32xf32> to vector<8x32xbf16>
    %cst_7 = arith.constant dense<0.000000e+00> : vector<8x8xf32>
    %24 = tpu.matmul %19, %21, %cst_7 {dimension_numbers = #tpu.dot_dimension_numbers<[1], [1], [0], [0], [0, 0, 1, 0], [], []>} : vector<8x32xbf16>, vector<8x32xbf16>, vector<8x8xf32> -> vector<8x8xf32>
    %cst_8 = arith.constant -1.000000e+09 : f32
    %25 = vector.broadcast %cst_8 : f32 to vector<8x8xf32>
    %26 = arith.select %17, %24, %25 : vector<8x8xi1>, vector<8x8xf32>
    %cst_9 = arith.constant dense<0xFF800000> : vector<8xf32>
    %27 = vector.multi_reduction <maximumf>, %26, %cst_9 [1] : vector<8x8xf32> to vector<8xf32>
    %28 = vector.shape_cast %27 : vector<8xf32> to vector<8x1xf32>
    %29 = vector.broadcast %28 : vector<8x1xf32> to vector<8x8xf32>
    %30 = arith.subf %26, %29 : vector<8x8xf32>
    %31 = math.exp %30 : vector<8x8xf32>
    %cst_10 = arith.constant dense<0.000000e+00> : vector<8xf32>
    %32 = vector.multi_reduction <add>, %31, %cst_10 [1] : vector<8x8xf32> to vector<8xf32>
    %33 = vector.shape_cast %32 : vector<8xf32> to vector<8x1xf32>
    %34 = tpu.reciprocal %33 {approx = true} : vector<8x1xf32> -> vector<8x1xf32>
    %35 = vector.broadcast %34 : vector<8x1xf32> to vector<8x8xf32>
    %36 = arith.mulf %31, %35 : vector<8x8xf32>
    %37 = arith.truncf %36 : vector<8x8xf32> to vector<8x8xbf16>
    %cst_11 = arith.constant dense<0.000000e+00> : vector<8x32xf32>
    %38 = tpu.matmul %37, %23, %cst_11 {dimension_numbers = #tpu.dot_dimension_numbers<[1], [0], [0], [1], [0, 0, 1, 1], [], []>} : vector<8x8xbf16>, vector<8x32xbf16>, vector<8x32xf32> -> vector<8x32xf32>
    %c0_12 = arith.constant 0 : index
    %c0_13 = arith.constant 0 : index
    %39 = vector.load %arg10[%c0_12, %c0_13] : memref<8x128xf32, #tpu.memory_space<vmem>>, vector<8x32xf32>
    tpu.vector_store %arg10[%c0_12, %c0_13], %38 {strides = array<i32>} : memref<8x128xf32, #tpu.memory_space<vmem>>, vector<8x32xf32>,
    %40 = vector.extract_strided_slice %10 {offsets = [0, 32], sizes = [8, 32], strides = [1, 1]} : vector<8x128xf32> to vector<8x32xf32>
    %41 = arith.truncf %40 : vector<8x32xf32> to vector<8x32xbf16>
    %42 = vector.extract_strided_slice %11 {offsets = [0, 32], sizes = [8, 32], strides = [1, 1]} : vector<8x128xf32> to vector<8x32xf32>
    %43 = arith.truncf %42 : vector<8x32xf32> to vector<8x32xbf16>
    %44 = vector.extract_strided_slice %12 {offsets = [0, 32], sizes = [8, 32], strides = [1, 1]} : vector<8x128xf32> to vector<8x32xf32>
    %45 = arith.truncf %44 : vector<8x32xf32> to vector<8x32xbf16>
    %cst_14 = arith.constant dense<0.000000e+00> : vector<8x8xf32>
    %46 = tpu.matmul %41, %43, %cst_14 {dimension_numbers = #tpu.dot_dimension_numbers<[1], [1], [0], [0], [0, 0, 1, 0], [], []>} : vector<8x32xbf16>, vector<8x32xbf16>, vector<8x8xf32> -> vector<8x8xf32>
    %cst_15 = arith.constant -1.000000e+09 : f32
    %47 = vector.broadcast %cst_15 : f32 to vector<8x8xf32>
    %48 = arith.select %17, %46, %47 : vector<8x8xi1>, vector<8x8xf32>
    %cst_16 = arith.constant dense<0xFF800000> : vector<8xf32>
    %49 = vector.multi_reduction <maximumf>, %48, %cst_16 [1] : vector<8x8xf32> to vector<8xf32>
    %50 = vector.shape_cast %49 : vector<8xf32> to vector<8x1xf32>
    %51 = vector.broadcast %50 : vector<8x1xf32> to vector<8x8xf32>
    %52 = arith.subf %48, %51 : vector<8x8xf32>
    %53 = math.exp %52 : vector<8x8xf32>
    %cst_17 = arith.constant dense<0.000000e+00> : vector<8xf32>
    %54 = vector.multi_reduction <add>, %53, %cst_17 [1] : vector<8x8xf32> to vector<8xf32>
    %55 = vector.shape_cast %54 : vector<8xf32> to vector<8x1xf32>
    %56 = tpu.reciprocal %55 {approx = true} : vector<8x1xf32> -> vector<8x1xf32>
    %57 = vector.broadcast %56 : vector<8x1xf32> to vector<8x8xf32>
    %58 = arith.mulf %53, %57 : vector<8x8xf32>
    %59 = arith.truncf %58 : vector<8x8xf32> to vector<8x8xbf16>
    %cst_18 = arith.constant dense<0.000000e+00> : vector<8x32xf32>
    %60 = tpu.matmul %59, %45, %cst_18 {dimension_numbers = #tpu.dot_dimension_numbers<[1], [0], [0], [1], [0, 0, 1, 1], [], []>} : vector<8x8xbf16>, vector<8x32xbf16>, vector<8x32xf32> -> vector<8x32xf32>
    %c0_19 = arith.constant 0 : index
    %c32 = arith.constant 32 : index
    %61 = vector.load %arg10[%c0_19, %c32] : memref<8x128xf32, #tpu.memory_space<vmem>>, vector<8x32xf32>
    tpu.vector_store %arg10[%c0_19, %c32], %60 {strides = array<i32>} : memref<8x128xf32, #tpu.memory_space<vmem>>, vector<8x32xf32>,
    %62 = vector.extract_strided_slice %10 {offsets = [0, 64], sizes = [8, 32], strides = [1, 1]} : vector<8x128xf32> to vector<8x32xf32>
    %63 = arith.truncf %62 : vector<8x32xf32> to vector<8x32xbf16>
    %64 = vector.extract_strided_slice %11 {offsets = [0, 64], sizes = [8, 32], strides = [1, 1]} : vector<8x128xf32> to vector<8x32xf32>
    %65 = arith.truncf %64 : vector<8x32xf32> to vector<8x32xbf16>
    %66 = vector.extract_strided_slice %12 {offsets = [0, 64], sizes = [8, 32], strides = [1, 1]} : vector<8x128xf32> to vector<8x32xf32>
    %67 = arith.truncf %66 : vector<8x32xf32> to vector<8x32xbf16>
    %cst_20 = arith.constant dense<0.000000e+00> : vector<8x8xf32>
    %68 = tpu.matmul %63, %65, %cst_20 {dimension_numbers = #tpu.dot_dimension_numbers<[1], [1], [0], [0], [0, 0, 1, 0], [], []>} : vector<8x32xbf16>, vector<8x32xbf16>, vector<8x8xf32> -> vector<8x8xf32>
    %cst_21 = arith.constant -1.000000e+09 : f32
    %69 = vector.broadcast %cst_21 : f32 to vector<8x8xf32>
    %70 = arith.select %17, %68, %69 : vector<8x8xi1>, vector<8x8xf32>
    %cst_22 = arith.constant dense<0xFF800000> : vector<8xf32>
    %71 = vector.multi_reduction <maximumf>, %70, %cst_22 [1] : vector<8x8xf32> to vector<8xf32>
    %72 = vector.shape_cast %71 : vector<8xf32> to vector<8x1xf32>
    %73 = vector.broadcast %72 : vector<8x1xf32> to vector<8x8xf32>
    %74 = arith.subf %70, %73 : vector<8x8xf32>
    %75 = math.exp %74 : vector<8x8xf32>
    %cst_23 = arith.constant dense<0.000000e+00> : vector<8xf32>
    %76 = vector.multi_reduction <add>, %75, %cst_23 [1] : vector<8x8xf32> to vector<8xf32>
    %77 = vector.shape_cast %76 : vector<8xf32> to vector<8x1xf32>
    %78 = tpu.reciprocal %77 {approx = true} : vector<8x1xf32> -> vector<8x1xf32>
    %79 = vector.broadcast %78 : vector<8x1xf32> to vector<8x8xf32>
    %80 = arith.mulf %75, %79 : vector<8x8xf32>
    %81 = arith.truncf %80 : vector<8x8xf32> to vector<8x8xbf16>
    %cst_24 = arith.constant dense<0.000000e+00> : vector<8x32xf32>
    %82 = tpu.matmul %81, %67, %cst_24 {dimension_numbers = #tpu.dot_dimension_numbers<[1], [0], [0], [1], [0, 0, 1, 1], [], []>} : vector<8x8xbf16>, vector<8x32xbf16>, vector<8x32xf32> -> vector<8x32xf32>
    %c0_25 = arith.constant 0 : index
    %c64 = arith.constant 64 : index
    %83 = vector.load %arg10[%c0_25, %c64] : memref<8x128xf32, #tpu.memory_space<vmem>>, vector<8x32xf32>
    tpu.vector_store %arg10[%c0_25, %c64], %82 {strides = array<i32>} : memref<8x128xf32, #tpu.memory_space<vmem>>, vector<8x32xf32>,
    %84 = vector.extract_strided_slice %10 {offsets = [0, 96], sizes = [8, 32], strides = [1, 1]} : vector<8x128xf32> to vector<8x32xf32>
    %85 = arith.truncf %84 : vector<8x32xf32> to vector<8x32xbf16>
    %86 = vector.extract_strided_slice %11 {offsets = [0, 96], sizes = [8, 32], strides = [1, 1]} : vector<8x128xf32> to vector<8x32xf32>
    %87 = arith.truncf %86 : vector<8x32xf32> to vector<8x32xbf16>
    %88 = vector.extract_strided_slice %12 {offsets = [0, 96], sizes = [8, 32], strides = [1, 1]} : vector<8x128xf32> to vector<8x32xf32>
    %89 = arith.truncf %88 : vector<8x32xf32> to vector<8x32xbf16>
    %cst_26 = arith.constant dense<0.000000e+00> : vector<8x8xf32>
    %90 = tpu.matmul %85, %87, %cst_26 {dimension_numbers = #tpu.dot_dimension_numbers<[1], [1], [0], [0], [0, 0, 1, 0], [], []>} : vector<8x32xbf16>, vector<8x32xbf16>, vector<8x8xf32> -> vector<8x8xf32>
    %cst_27 = arith.constant -1.000000e+09 : f32
    %91 = vector.broadcast %cst_27 : f32 to vector<8x8xf32>
    %92 = arith.select %17, %90, %91 : vector<8x8xi1>, vector<8x8xf32>
    %cst_28 = arith.constant dense<0xFF800000> : vector<8xf32>
    %93 = vector.multi_reduction <maximumf>, %92, %cst_28 [1] : vector<8x8xf32> to vector<8xf32>
    %94 = vector.shape_cast %93 : vector<8xf32> to vector<8x1xf32>
    %95 = vector.broadcast %94 : vector<8x1xf32> to vector<8x8xf32>
    %96 = arith.subf %92, %95 : vector<8x8xf32>
    %97 = math.exp %96 : vector<8x8xf32>
    %cst_29 = arith.constant dense<0.000000e+00> : vector<8xf32>
    %98 = vector.multi_reduction <add>, %97, %cst_29 [1] : vector<8x8xf32> to vector<8xf32>
    %99 = vector.shape_cast %98 : vector<8xf32> to vector<8x1xf32>
    %100 = tpu.reciprocal %99 {approx = true} : vector<8x1xf32> -> vector<8x1xf32>
    %101 = vector.broadcast %100 : vector<8x1xf32> to vector<8x8xf32>
    %102 = arith.mulf %97, %101 : vector<8x8xf32>
    %103 = arith.truncf %102 : vector<8x8xf32> to vector<8x8xbf16>
    %cst_30 = arith.constant dense<0.000000e+00> : vector<8x32xf32>
    %104 = tpu.matmul %103, %89, %cst_30 {dimension_numbers = #tpu.dot_dimension_numbers<[1], [0], [0], [1], [0, 0, 1, 1], [], []>} : vector<8x8xbf16>, vector<8x32xbf16>, vector<8x32xf32> -> vector<8x32xf32>
    %c0_31 = arith.constant 0 : index
    %c96 = arith.constant 96 : index
    %105 = vector.load %arg10[%c0_31, %c96] : memref<8x128xf32, #tpu.memory_space<vmem>>, vector<8x32xf32>
    tpu.vector_store %arg10[%c0_31, %c96], %104 {strides = array<i32>} : memref<8x128xf32, #tpu.memory_space<vmem>>, vector<8x32xf32>,
    %c0_32 = arith.constant 0 : index
    %c0_33 = arith.constant 0 : index
    %106 = vector.load %arg10[%c0_32, %c0_33] : memref<8x128xf32, #tpu.memory_space<vmem>>, vector<8x128xf32>
    %107 = arith.truncf %106 : vector<8x128xf32> to vector<8x128xbf16>
    %c0_34 = arith.constant 0 : index
    %c0_35 = arith.constant 0 : index
    %108 = vector.load %arg5[%c0_34, %c0_35] : memref<128x128xbf16, #tpu.memory_space<vmem>>, vector<128x128xbf16>
    %cst_36 = arith.constant dense<0.000000e+00> : vector<8x128xf32>
    %109 = tpu.matmul %107, %108, %cst_36 {dimension_numbers = #tpu.dot_dimension_numbers<[1], [0], [0], [1], [0, 0, 1, 1], [], []>} : vector<8x128xbf16>, vector<128x128xbf16>, vector<8x128xf32> -> vector<8x128xf32>
    %c0_37 = arith.constant 0 : index
    %c0_38 = arith.constant 0 : index
    %110 = vector.load %arg6[%c0_37, %c0_38] : memref<1x128xf32, #tpu.memory_space<vmem>>, vector<1x128xf32>
    %111 = vector.broadcast %110 : vector<1x128xf32> to vector<8x128xf32>
    %112 = arith.addf %109, %111 : vector<8x128xf32>
    %113 = arith.addf %112, %2 : vector<8x128xf32>
    %c0_39 = arith.constant 0 : index
    %c0_40 = arith.constant 0 : index
    %114 = vector.load %arg7[%c0_39, %c0_40] : memref<1x128xf32, #tpu.memory_space<vmem>>, vector<1x128xf32>
    %c0_41 = arith.constant 0 : index
    %c0_42 = arith.constant 0 : index
    %115 = vector.load %arg8[%c0_41, %c0_42] : memref<1x128xf32, #tpu.memory_space<vmem>>, vector<1x128xf32>
    %cst_43 = arith.constant dense<0.000000e+00> : vector<8xf32>
    %116 = vector.multi_reduction <add>, %113, %cst_43 [1] : vector<8x128xf32> to vector<8xf32>
    %117 = vector.shape_cast %116 : vector<8xf32> to vector<8x1xf32>
    %cst_44 = arith.constant 1.280000e+02 : f32
    %118 = vector.broadcast %cst_44 : f32 to vector<8x1xf32>
    %119 = arith.divf %117, %118 : vector<8x1xf32>
    %120 = vector.broadcast %119 : vector<8x1xf32> to vector<8x128xf32>
    %121 = arith.subf %113, %120 : vector<8x128xf32>
    %122 = arith.mulf %121, %121 : vector<8x128xf32>
    %cst_45 = arith.constant dense<0.000000e+00> : vector<8xf32>
    %123 = vector.multi_reduction <add>, %122, %cst_45 [1] : vector<8x128xf32> to vector<8xf32>
    %124 = vector.shape_cast %123 : vector<8xf32> to vector<8x1xf32>
    %cst_46 = arith.constant 1.280000e+02 : f32
    %125 = vector.broadcast %cst_46 : f32 to vector<8x1xf32>
    %126 = arith.divf %124, %125 : vector<8x1xf32>
    %cst_47 = arith.constant 9.99999974E-6 : f32
    %127 = vector.broadcast %cst_47 : f32 to vector<8x1xf32>
    %128 = arith.addf %126, %127 : vector<8x1xf32>
    %129 = math.rsqrt %128 : vector<8x1xf32>
    %130 = vector.broadcast %129 : vector<8x1xf32> to vector<8x128xf32>
    %131 = arith.mulf %121, %130 : vector<8x128xf32>
    %132 = vector.broadcast %114 : vector<1x128xf32> to vector<8x128xf32>
    %133 = arith.mulf %131, %132 : vector<8x128xf32>
    %134 = vector.broadcast %115 : vector<1x128xf32> to vector<8x128xf32>
    %135 = arith.addf %133, %134 : vector<8x128xf32>
    %136 = arith.truncf %135 : vector<8x128xf32> to vector<8x128xbf16>
    %c0_48 = arith.constant 0 : index
    %c0_49 = arith.constant 0 : index
    %c0_50 = arith.constant 0 : index
    %137 = vector.load %arg9[%c0_48, %c0_49, %c0_50] : memref<1x8x128xbf16, #tpu.memory_space<vmem>>, vector<1x8x128xbf16>
    %138 = vector.shape_cast %137 : vector<1x8x128xbf16> to vector<8x128xbf16>
    %139 = vector.shape_cast %136 : vector<8x128xbf16> to vector<1x8x128xbf16>
    tpu.vector_store %arg9[%c0_48, %c0_49, %c0_50], %139 {strides = array<i32>} : memref<1x8x128xbf16, #tpu.memory_space<vmem>>, vector<1x8x128xbf16>,
    return
  }
  func.func @transform_0(%arg0: i32, %arg1: memref<2xi32, #tpu.memory_space<smem>>) -> (i32, i32, i32) {
    %c0_i32 = arith.constant 0 : i32
    %c0_i32_0 = arith.constant 0 : i32
    %c0_i32_1 = arith.constant 0 : i32
    return %arg0, %c0_i32, %c0_i32_0 : i32, i32, i32
  }
  func.func @transform_1(%arg0: i32, %arg1: memref<2xi32, #tpu.memory_space<smem>>) -> (i32, i32) {
    %c0_i32 = arith.constant 0 : i32
    %c0_i32_0 = arith.constant 0 : i32
    %c0_i32_1 = arith.constant 0 : i32
    return %c0_i32, %c0_i32_0 : i32, i32
  }
  func.func @transform_2(%arg0: i32, %arg1: memref<2xi32, #tpu.memory_space<smem>>) -> (i32, i32) {
    %c0_i32 = arith.constant 0 : i32
    %c0_i32_0 = arith.constant 0 : i32
    %c0_i32_1 = arith.constant 0 : i32
    return %c0_i32, %c0_i32_0 : i32, i32
  }
  func.func @transform_3(%arg0: i32, %arg1: memref<2xi32, #tpu.memory_space<smem>>) -> (i32, i32) {
    %c0_i32 = arith.constant 0 : i32
    %c0_i32_0 = arith.constant 0 : i32
    %c0_i32_1 = arith.constant 0 : i32
    return %c0_i32, %c0_i32_0 : i32, i32
  }
  func.func @transform_4(%arg0: i32, %arg1: memref<2xi32, #tpu.memory_space<smem>>) -> (i32, i32) {
    %c0_i32 = arith.constant 0 : i32
    %c0_i32_0 = arith.constant 0 : i32
    %c0_i32_1 = arith.constant 0 : i32
    return %c0_i32, %c0_i32_0 : i32, i32
  }
  func.func @transform_5(%arg0: i32, %arg1: memref<2xi32, #tpu.memory_space<smem>>) -> (i32, i32) {
    %c0_i32 = arith.constant 0 : i32
    %c0_i32_0 = arith.constant 0 : i32
    %c0_i32_1 = arith.constant 0 : i32
    return %c0_i32, %c0_i32_0 : i32, i32
  }
  func.func @transform_6(%arg0: i32, %arg1: memref<2xi32, #tpu.memory_space<smem>>) -> (i32, i32) {
    %c0_i32 = arith.constant 0 : i32
    %c0_i32_0 = arith.constant 0 : i32
    %c0_i32_1 = arith.constant 0 : i32
    return %c0_i32, %c0_i32_0 : i32, i32
  }
  func.func @transform_7(%arg0: i32, %arg1: memref<2xi32, #tpu.memory_space<smem>>) -> (i32, i32, i32) {
    %c0_i32 = arith.constant 0 : i32
    %c0_i32_0 = arith.constant 0 : i32
    %c0_i32_1 = arith.constant 0 : i32
    return %arg0, %c0_i32, %c0_i32_0 : i32, i32, i32
  }
}

module attributes {stable_mosaic.version = 11 : i64} {
  func.func @_ffn_ln_kernel(%arg0: i32, %arg1: memref<16x128xbf16, #tpu.memory_space<vmem>>, %arg2: memref<128x512xbf16, #tpu.memory_space<vmem>>, %arg3: memref<1x512xf32, #tpu.memory_space<vmem>>, %arg4: memref<512x128xbf16, #tpu.memory_space<vmem>>, %arg5: memref<1x128xf32, #tpu.memory_space<vmem>>, %arg6: memref<1x128xf32, #tpu.memory_space<vmem>>, %arg7: memref<1x128xf32, #tpu.memory_space<vmem>>, %arg8: memref<16x128xbf16, #tpu.memory_space<vmem>>) attributes {dimension_semantics = [#tpu.dimension_semantics<parallel>], iteration_bounds = array<i64: 1>, scalar_prefetch = 0 : i64, scratch_operands = 0 : i64, tpu.core_type = #tpu.core_type<tc>, window_params = [{transform_indices = @transform_0, window_bounds = array<i64: 16, 128>}, {pipeline_mode = #tpu.pipeline_mode<synchronous>, transform_indices = @transform_1, window_bounds = array<i64: 128, 512>}, {pipeline_mode = #tpu.pipeline_mode<synchronous>, transform_indices = @transform_2, window_bounds = array<i64: 1, 512>}, {pipeline_mode = #tpu.pipeline_mode<synchronous>, transform_indices = @transform_3, window_bounds = array<i64: 512, 128>}, {pipeline_mode = #tpu.pipeline_mode<synchronous>, transform_indices = @transform_4, window_bounds = array<i64: 1, 128>}, {pipeline_mode = #tpu.pipeline_mode<synchronous>, transform_indices = @transform_5, window_bounds = array<i64: 1, 128>}, {pipeline_mode = #tpu.pipeline_mode<synchronous>, transform_indices = @transform_6, window_bounds = array<i64: 1, 128>}, {transform_indices = @transform_7, window_bounds = array<i64: 16, 128>}]} {
    %c0 = arith.constant 0 : index
    %c0_0 = arith.constant 0 : index
    %0 = vector.load %arg1[%c0, %c0_0] : memref<16x128xbf16, #tpu.memory_space<vmem>>, vector<16x128xbf16>
    %1 = arith.extf %0 : vector<16x128xbf16> to vector<16x128xf32>
    %c0_1 = arith.constant 0 : index
    %c0_2 = arith.constant 0 : index
    %2 = vector.load %arg2[%c0_1, %c0_2] : memref<128x512xbf16, #tpu.memory_space<vmem>>, vector<128x512xbf16>
    %cst = arith.constant dense<0.000000e+00> : vector<16x512xf32>
    %3 = tpu.matmul %0, %2, %cst {dimension_numbers = #tpu.dot_dimension_numbers<[1], [0], [0], [1], [0, 0, 1, 1], [], []>} : vector<16x128xbf16>, vector<128x512xbf16>, vector<16x512xf32> -> vector<16x512xf32>
    %c0_3 = arith.constant 0 : index
    %c0_4 = arith.constant 0 : index
    %4 = vector.load %arg3[%c0_3, %c0_4] : memref<1x512xf32, #tpu.memory_space<vmem>>, vector<1x512xf32>
    %5 = vector.broadcast %4 : vector<1x512xf32> to vector<16x512xf32>
    %6 = arith.addf %3, %5 : vector<16x512xf32>
    %cst_5 = arith.constant 0.000000e+00 : f32
    %7 = vector.broadcast %cst_5 : f32 to vector<16x512xf32>
    %8 = arith.maximumf %6, %7 : vector<16x512xf32>
    %9 = arith.truncf %8 : vector<16x512xf32> to vector<16x512xbf16>
    %c0_6 = arith.constant 0 : index
    %c0_7 = arith.constant 0 : index
    %10 = vector.load %arg4[%c0_6, %c0_7] : memref<512x128xbf16, #tpu.memory_space<vmem>>, vector<512x128xbf16>
    %cst_8 = arith.constant dense<0.000000e+00> : vector<16x128xf32>
    %11 = tpu.matmul %9, %10, %cst_8 {dimension_numbers = #tpu.dot_dimension_numbers<[1], [0], [0], [1], [0, 0, 1, 1], [], []>} : vector<16x512xbf16>, vector<512x128xbf16>, vector<16x128xf32> -> vector<16x128xf32>
    %c0_9 = arith.constant 0 : index
    %c0_10 = arith.constant 0 : index
    %12 = vector.load %arg5[%c0_9, %c0_10] : memref<1x128xf32, #tpu.memory_space<vmem>>, vector<1x128xf32>
    %13 = vector.broadcast %12 : vector<1x128xf32> to vector<16x128xf32>
    %14 = arith.addf %11, %13 : vector<16x128xf32>
    %15 = arith.addf %14, %1 : vector<16x128xf32>
    %c0_11 = arith.constant 0 : index
    %c0_12 = arith.constant 0 : index
    %16 = vector.load %arg6[%c0_11, %c0_12] : memref<1x128xf32, #tpu.memory_space<vmem>>, vector<1x128xf32>
    %c0_13 = arith.constant 0 : index
    %c0_14 = arith.constant 0 : index
    %17 = vector.load %arg7[%c0_13, %c0_14] : memref<1x128xf32, #tpu.memory_space<vmem>>, vector<1x128xf32>
    %cst_15 = arith.constant dense<0.000000e+00> : vector<16xf32>
    %18 = vector.multi_reduction <add>, %15, %cst_15 [1] : vector<16x128xf32> to vector<16xf32>
    %19 = vector.shape_cast %18 : vector<16xf32> to vector<16x1xf32>
    %cst_16 = arith.constant 1.280000e+02 : f32
    %20 = vector.broadcast %cst_16 : f32 to vector<16x1xf32>
    %21 = arith.divf %19, %20 : vector<16x1xf32>
    %22 = vector.broadcast %21 : vector<16x1xf32> to vector<16x128xf32>
    %23 = arith.subf %15, %22 : vector<16x128xf32>
    %24 = arith.mulf %23, %23 : vector<16x128xf32>
    %cst_17 = arith.constant dense<0.000000e+00> : vector<16xf32>
    %25 = vector.multi_reduction <add>, %24, %cst_17 [1] : vector<16x128xf32> to vector<16xf32>
    %26 = vector.shape_cast %25 : vector<16xf32> to vector<16x1xf32>
    %cst_18 = arith.constant 1.280000e+02 : f32
    %27 = vector.broadcast %cst_18 : f32 to vector<16x1xf32>
    %28 = arith.divf %26, %27 : vector<16x1xf32>
    %cst_19 = arith.constant 9.99999974E-6 : f32
    %29 = vector.broadcast %cst_19 : f32 to vector<16x1xf32>
    %30 = arith.addf %28, %29 : vector<16x1xf32>
    %31 = math.rsqrt %30 : vector<16x1xf32>
    %32 = vector.broadcast %31 : vector<16x1xf32> to vector<16x128xf32>
    %33 = arith.mulf %23, %32 : vector<16x128xf32>
    %34 = vector.broadcast %16 : vector<1x128xf32> to vector<16x128xf32>
    %35 = arith.mulf %33, %34 : vector<16x128xf32>
    %36 = vector.broadcast %17 : vector<1x128xf32> to vector<16x128xf32>
    %37 = arith.addf %35, %36 : vector<16x128xf32>
    %38 = arith.truncf %37 : vector<16x128xf32> to vector<16x128xbf16>
    %c0_20 = arith.constant 0 : index
    %c0_21 = arith.constant 0 : index
    %39 = vector.load %arg8[%c0_20, %c0_21] : memref<16x128xbf16, #tpu.memory_space<vmem>>, vector<16x128xbf16>
    tpu.vector_store %arg8[%c0_20, %c0_21], %38 {strides = array<i32>} : memref<16x128xbf16, #tpu.memory_space<vmem>>, vector<16x128xbf16>,
    return
  }
  func.func @transform_0(%arg0: i32) -> (i32, i32) {
    %c0_i32 = arith.constant 0 : i32
    %c0_i32_0 = arith.constant 0 : i32
    return %arg0, %c0_i32 : i32, i32
  }
  func.func @transform_1(%arg0: i32) -> (i32, i32) {
    %c0_i32 = arith.constant 0 : i32
    %c0_i32_0 = arith.constant 0 : i32
    %c0_i32_1 = arith.constant 0 : i32
    return %c0_i32, %c0_i32_0 : i32, i32
  }
  func.func @transform_2(%arg0: i32) -> (i32, i32) {
    %c0_i32 = arith.constant 0 : i32
    %c0_i32_0 = arith.constant 0 : i32
    %c0_i32_1 = arith.constant 0 : i32
    return %c0_i32, %c0_i32_0 : i32, i32
  }
  func.func @transform_3(%arg0: i32) -> (i32, i32) {
    %c0_i32 = arith.constant 0 : i32
    %c0_i32_0 = arith.constant 0 : i32
    %c0_i32_1 = arith.constant 0 : i32
    return %c0_i32, %c0_i32_0 : i32, i32
  }
  func.func @transform_4(%arg0: i32) -> (i32, i32) {
    %c0_i32 = arith.constant 0 : i32
    %c0_i32_0 = arith.constant 0 : i32
    %c0_i32_1 = arith.constant 0 : i32
    return %c0_i32, %c0_i32_0 : i32, i32
  }
  func.func @transform_5(%arg0: i32) -> (i32, i32) {
    %c0_i32 = arith.constant 0 : i32
    %c0_i32_0 = arith.constant 0 : i32
    %c0_i32_1 = arith.constant 0 : i32
    return %c0_i32, %c0_i32_0 : i32, i32
  }
  func.func @transform_6(%arg0: i32) -> (i32, i32) {
    %c0_i32 = arith.constant 0 : i32
    %c0_i32_0 = arith.constant 0 : i32
    %c0_i32_1 = arith.constant 0 : i32
    return %c0_i32, %c0_i32_0 : i32, i32
  }
  func.func @transform_7(%arg0: i32) -> (i32, i32) {
    %c0_i32 = arith.constant 0 : i32
    %c0_i32_0 = arith.constant 0 : i32
    return %arg0, %c0_i32 : i32, i32
  }
}

module attributes {stable_mosaic.version = 11 : i64} {
  func.func @_ffn_ln_kernel(%arg0: i32, %arg1: memref<32x128xbf16, #tpu.memory_space<vmem>>, %arg2: memref<128x512xbf16, #tpu.memory_space<vmem>>, %arg3: memref<1x512xf32, #tpu.memory_space<vmem>>, %arg4: memref<512x128xbf16, #tpu.memory_space<vmem>>, %arg5: memref<1x128xf32, #tpu.memory_space<vmem>>, %arg6: memref<1x128xf32, #tpu.memory_space<vmem>>, %arg7: memref<1x128xf32, #tpu.memory_space<vmem>>, %arg8: memref<32x128xbf16, #tpu.memory_space<vmem>>) attributes {dimension_semantics = [#tpu.dimension_semantics<parallel>], iteration_bounds = array<i64: 1>, scalar_prefetch = 0 : i64, scratch_operands = 0 : i64, tpu.core_type = #tpu.core_type<tc>, window_params = [{transform_indices = @transform_0, window_bounds = array<i64: 32, 128>}, {pipeline_mode = #tpu.pipeline_mode<synchronous>, transform_indices = @transform_1, window_bounds = array<i64: 128, 512>}, {pipeline_mode = #tpu.pipeline_mode<synchronous>, transform_indices = @transform_2, window_bounds = array<i64: 1, 512>}, {pipeline_mode = #tpu.pipeline_mode<synchronous>, transform_indices = @transform_3, window_bounds = array<i64: 512, 128>}, {pipeline_mode = #tpu.pipeline_mode<synchronous>, transform_indices = @transform_4, window_bounds = array<i64: 1, 128>}, {pipeline_mode = #tpu.pipeline_mode<synchronous>, transform_indices = @transform_5, window_bounds = array<i64: 1, 128>}, {pipeline_mode = #tpu.pipeline_mode<synchronous>, transform_indices = @transform_6, window_bounds = array<i64: 1, 128>}, {transform_indices = @transform_7, window_bounds = array<i64: 32, 128>}]} {
    %c0 = arith.constant 0 : index
    %c0_0 = arith.constant 0 : index
    %0 = vector.load %arg1[%c0, %c0_0] : memref<32x128xbf16, #tpu.memory_space<vmem>>, vector<32x128xbf16>
    %1 = arith.extf %0 : vector<32x128xbf16> to vector<32x128xf32>
    %c0_1 = arith.constant 0 : index
    %c0_2 = arith.constant 0 : index
    %2 = vector.load %arg2[%c0_1, %c0_2] : memref<128x512xbf16, #tpu.memory_space<vmem>>, vector<128x512xbf16>
    %cst = arith.constant dense<0.000000e+00> : vector<32x512xf32>
    %3 = tpu.matmul %0, %2, %cst {dimension_numbers = #tpu.dot_dimension_numbers<[1], [0], [0], [1], [0, 0, 1, 1], [], []>} : vector<32x128xbf16>, vector<128x512xbf16>, vector<32x512xf32> -> vector<32x512xf32>
    %c0_3 = arith.constant 0 : index
    %c0_4 = arith.constant 0 : index
    %4 = vector.load %arg3[%c0_3, %c0_4] : memref<1x512xf32, #tpu.memory_space<vmem>>, vector<1x512xf32>
    %5 = vector.broadcast %4 : vector<1x512xf32> to vector<32x512xf32>
    %6 = arith.addf %3, %5 : vector<32x512xf32>
    %cst_5 = arith.constant 0.000000e+00 : f32
    %7 = vector.broadcast %cst_5 : f32 to vector<32x512xf32>
    %8 = arith.maximumf %6, %7 : vector<32x512xf32>
    %9 = arith.truncf %8 : vector<32x512xf32> to vector<32x512xbf16>
    %c0_6 = arith.constant 0 : index
    %c0_7 = arith.constant 0 : index
    %10 = vector.load %arg4[%c0_6, %c0_7] : memref<512x128xbf16, #tpu.memory_space<vmem>>, vector<512x128xbf16>
    %cst_8 = arith.constant dense<0.000000e+00> : vector<32x128xf32>
    %11 = tpu.matmul %9, %10, %cst_8 {dimension_numbers = #tpu.dot_dimension_numbers<[1], [0], [0], [1], [0, 0, 1, 1], [], []>} : vector<32x512xbf16>, vector<512x128xbf16>, vector<32x128xf32> -> vector<32x128xf32>
    %c0_9 = arith.constant 0 : index
    %c0_10 = arith.constant 0 : index
    %12 = vector.load %arg5[%c0_9, %c0_10] : memref<1x128xf32, #tpu.memory_space<vmem>>, vector<1x128xf32>
    %13 = vector.broadcast %12 : vector<1x128xf32> to vector<32x128xf32>
    %14 = arith.addf %11, %13 : vector<32x128xf32>
    %15 = arith.addf %14, %1 : vector<32x128xf32>
    %c0_11 = arith.constant 0 : index
    %c0_12 = arith.constant 0 : index
    %16 = vector.load %arg6[%c0_11, %c0_12] : memref<1x128xf32, #tpu.memory_space<vmem>>, vector<1x128xf32>
    %c0_13 = arith.constant 0 : index
    %c0_14 = arith.constant 0 : index
    %17 = vector.load %arg7[%c0_13, %c0_14] : memref<1x128xf32, #tpu.memory_space<vmem>>, vector<1x128xf32>
    %cst_15 = arith.constant dense<0.000000e+00> : vector<32xf32>
    %18 = vector.multi_reduction <add>, %15, %cst_15 [1] : vector<32x128xf32> to vector<32xf32>
    %19 = vector.shape_cast %18 : vector<32xf32> to vector<32x1xf32>
    %cst_16 = arith.constant 1.280000e+02 : f32
    %20 = vector.broadcast %cst_16 : f32 to vector<32x1xf32>
    %21 = arith.divf %19, %20 : vector<32x1xf32>
    %22 = vector.broadcast %21 : vector<32x1xf32> to vector<32x128xf32>
    %23 = arith.subf %15, %22 : vector<32x128xf32>
    %24 = arith.mulf %23, %23 : vector<32x128xf32>
    %cst_17 = arith.constant dense<0.000000e+00> : vector<32xf32>
    %25 = vector.multi_reduction <add>, %24, %cst_17 [1] : vector<32x128xf32> to vector<32xf32>
    %26 = vector.shape_cast %25 : vector<32xf32> to vector<32x1xf32>
    %cst_18 = arith.constant 1.280000e+02 : f32
    %27 = vector.broadcast %cst_18 : f32 to vector<32x1xf32>
    %28 = arith.divf %26, %27 : vector<32x1xf32>
    %cst_19 = arith.constant 9.99999974E-6 : f32
    %29 = vector.broadcast %cst_19 : f32 to vector<32x1xf32>
    %30 = arith.addf %28, %29 : vector<32x1xf32>
    %31 = math.rsqrt %30 : vector<32x1xf32>
    %32 = vector.broadcast %31 : vector<32x1xf32> to vector<32x128xf32>
    %33 = arith.mulf %23, %32 : vector<32x128xf32>
    %34 = vector.broadcast %16 : vector<1x128xf32> to vector<32x128xf32>
    %35 = arith.mulf %33, %34 : vector<32x128xf32>
    %36 = vector.broadcast %17 : vector<1x128xf32> to vector<32x128xf32>
    %37 = arith.addf %35, %36 : vector<32x128xf32>
    %38 = arith.truncf %37 : vector<32x128xf32> to vector<32x128xbf16>
    %c0_20 = arith.constant 0 : index
    %c0_21 = arith.constant 0 : index
    %39 = vector.load %arg8[%c0_20, %c0_21] : memref<32x128xbf16, #tpu.memory_space<vmem>>, vector<32x128xbf16>
    tpu.vector_store %arg8[%c0_20, %c0_21], %38 {strides = array<i32>} : memref<32x128xbf16, #tpu.memory_space<vmem>>, vector<32x128xbf16>,
    return
  }
  func.func @transform_0(%arg0: i32) -> (i32, i32) {
    %c0_i32 = arith.constant 0 : i32
    %c0_i32_0 = arith.constant 0 : i32
    return %arg0, %c0_i32 : i32, i32
  }
  func.func @transform_1(%arg0: i32) -> (i32, i32) {
    %c0_i32 = arith.constant 0 : i32
    %c0_i32_0 = arith.constant 0 : i32
    %c0_i32_1 = arith.constant 0 : i32
    return %c0_i32, %c0_i32_0 : i32, i32
  }
  func.func @transform_2(%arg0: i32) -> (i32, i32) {
    %c0_i32 = arith.constant 0 : i32
    %c0_i32_0 = arith.constant 0 : i32
    %c0_i32_1 = arith.constant 0 : i32
    return %c0_i32, %c0_i32_0 : i32, i32
  }
  func.func @transform_3(%arg0: i32) -> (i32, i32) {
    %c0_i32 = arith.constant 0 : i32
    %c0_i32_0 = arith.constant 0 : i32
    %c0_i32_1 = arith.constant 0 : i32
    return %c0_i32, %c0_i32_0 : i32, i32
  }
  func.func @transform_4(%arg0: i32) -> (i32, i32) {
    %c0_i32 = arith.constant 0 : i32
    %c0_i32_0 = arith.constant 0 : i32
    %c0_i32_1 = arith.constant 0 : i32
    return %c0_i32, %c0_i32_0 : i32, i32
  }
  func.func @transform_5(%arg0: i32) -> (i32, i32) {
    %c0_i32 = arith.constant 0 : i32
    %c0_i32_0 = arith.constant 0 : i32
    %c0_i32_1 = arith.constant 0 : i32
    return %c0_i32, %c0_i32_0 : i32, i32
  }
  func.func @transform_6(%arg0: i32) -> (i32, i32) {
    %c0_i32 = arith.constant 0 : i32
    %c0_i32_0 = arith.constant 0 : i32
    %c0_i32_1 = arith.constant 0 : i32
    return %c0_i32, %c0_i32_0 : i32, i32
  }
  func.func @transform_7(%arg0: i32) -> (i32, i32) {
    %c0_i32 = arith.constant 0 : i32
    %c0_i32_0 = arith.constant 0 : i32
    return %arg0, %c0_i32 : i32, i32
  }
}

module attributes {stable_mosaic.version = 11 : i64} {
  func.func @_cross_attn_block_kernel(%arg0: i32, %arg1: memref<2xi32, #tpu.memory_space<smem>>, %arg2: memref<1x16x128xbf16, #tpu.memory_space<vmem>>, %arg3: memref<1x8x128xbf16, #tpu.memory_space<vmem>>, %arg4: memref<128x128xbf16, #tpu.memory_space<vmem>>, %arg5: memref<1x128xf32, #tpu.memory_space<vmem>>, %arg6: memref<128x256xbf16, #tpu.memory_space<vmem>>, %arg7: memref<1x256xf32, #tpu.memory_space<vmem>>, %arg8: memref<128x128xbf16, #tpu.memory_space<vmem>>, %arg9: memref<1x128xf32, #tpu.memory_space<vmem>>, %arg10: memref<1x128xf32, #tpu.memory_space<vmem>>, %arg11: memref<1x128xf32, #tpu.memory_space<vmem>>, %arg12: memref<1x16x128xbf16, #tpu.memory_space<vmem>>, %arg13: memref<16x128xf32, #tpu.memory_space<vmem>>) attributes {dimension_semantics = [#tpu.dimension_semantics<parallel>], iteration_bounds = array<i64: 2>, scalar_prefetch = 1 : i64, scratch_operands = 1 : i64, tpu.core_type = #tpu.core_type<tc>, window_params = [{transform_indices = @transform_0, window_bounds = array<i64: 1, 16, 128>}, {transform_indices = @transform_1, window_bounds = array<i64: 1, 8, 128>}, {pipeline_mode = #tpu.pipeline_mode<synchronous>, transform_indices = @transform_2, window_bounds = array<i64: 128, 128>}, {pipeline_mode = #tpu.pipeline_mode<synchronous>, transform_indices = @transform_3, window_bounds = array<i64: 1, 128>}, {pipeline_mode = #tpu.pipeline_mode<synchronous>, transform_indices = @transform_4, window_bounds = array<i64: 128, 256>}, {pipeline_mode = #tpu.pipeline_mode<synchronous>, transform_indices = @transform_5, window_bounds = array<i64: 1, 256>}, {pipeline_mode = #tpu.pipeline_mode<synchronous>, transform_indices = @transform_6, window_bounds = array<i64: 128, 128>}, {pipeline_mode = #tpu.pipeline_mode<synchronous>, transform_indices = @transform_7, window_bounds = array<i64: 1, 128>}, {pipeline_mode = #tpu.pipeline_mode<synchronous>, transform_indices = @transform_8, window_bounds = array<i64: 1, 128>}, {pipeline_mode = #tpu.pipeline_mode<synchronous>, transform_indices = @transform_9, window_bounds = array<i64: 1, 128>}, {transform_indices = @transform_10, window_bounds = array<i64: 1, 16, 128>}]} {
    %c0 = arith.constant 0 : index
    %c0_0 = arith.constant 0 : index
    %c0_1 = arith.constant 0 : index
    %0 = vector.load %arg2[%c0, %c0_0, %c0_1] : memref<1x16x128xbf16, #tpu.memory_space<vmem>>, vector<1x16x128xbf16>
    %1 = vector.shape_cast %0 : vector<1x16x128xbf16> to vector<16x128xbf16>
    %2 = arith.extf %1 : vector<16x128xbf16> to vector<16x128xf32>
    %c0_2 = arith.constant 0 : index
    %c0_3 = arith.constant 0 : index
    %c0_4 = arith.constant 0 : index
    %3 = vector.load %arg3[%c0_2, %c0_3, %c0_4] : memref<1x8x128xbf16, #tpu.memory_space<vmem>>, vector<1x8x128xbf16>
    %4 = vector.shape_cast %3 : vector<1x8x128xbf16> to vector<8x128xbf16>
    %c0_5 = arith.constant 0 : index
    %c0_6 = arith.constant 0 : index
    %5 = vector.load %arg4[%c0_5, %c0_6] : memref<128x128xbf16, #tpu.memory_space<vmem>>, vector<128x128xbf16>
    %cst = arith.constant dense<0.000000e+00> : vector<16x128xf32>
    %6 = tpu.matmul %1, %5, %cst {dimension_numbers = #tpu.dot_dimension_numbers<[1], [0], [0], [1], [0, 0, 1, 1], [], []>} : vector<16x128xbf16>, vector<128x128xbf16>, vector<16x128xf32> -> vector<16x128xf32>
    %c0_7 = arith.constant 0 : index
    %c0_8 = arith.constant 0 : index
    %7 = vector.load %arg5[%c0_7, %c0_8] : memref<1x128xf32, #tpu.memory_space<vmem>>, vector<1x128xf32>
    %8 = vector.broadcast %7 : vector<1x128xf32> to vector<16x128xf32>
    %9 = arith.addf %6, %8 : vector<16x128xf32>
    %cst_9 = arith.constant 0.176776692 : f32
    %10 = vector.broadcast %cst_9 : f32 to vector<16x128xf32>
    %11 = arith.mulf %9, %10 : vector<16x128xf32>
    %c0_10 = arith.constant 0 : index
    %c0_11 = arith.constant 0 : index
    %12 = vector.load %arg6[%c0_10, %c0_11] : memref<128x256xbf16, #tpu.memory_space<vmem>>, vector<128x256xbf16>
    %cst_12 = arith.constant dense<0.000000e+00> : vector<8x256xf32>
    %13 = tpu.matmul %4, %12, %cst_12 {dimension_numbers = #tpu.dot_dimension_numbers<[1], [0], [0], [1], [0, 0, 1, 1], [], []>} : vector<8x128xbf16>, vector<128x256xbf16>, vector<8x256xf32> -> vector<8x256xf32>
    %c0_13 = arith.constant 0 : index
    %c0_14 = arith.constant 0 : index
    %14 = vector.load %arg7[%c0_13, %c0_14] : memref<1x256xf32, #tpu.memory_space<vmem>>, vector<1x256xf32>
    %15 = vector.broadcast %14 : vector<1x256xf32> to vector<8x256xf32>
    %16 = arith.addf %13, %15 : vector<8x256xf32>
    %17 = vector.extract_strided_slice %16 {offsets = [0, 0], sizes = [8, 128], strides = [1, 1]} : vector<8x256xf32> to vector<8x128xf32>
    %18 = vector.extract_strided_slice %16 {offsets = [0, 128], sizes = [8, 128], strides = [1, 1]} : vector<8x256xf32> to vector<8x128xf32>
    %19 = arith.index_cast %arg0 : i32 to index
    %20 = memref.load %arg1[%19] : memref<2xi32, #tpu.memory_space<smem>>
    %21 = tpu.iota {dimensions = array<i32: 1>} : vector<16x8xi32>
    %22 = vector.broadcast %20 : i32 to vector<16x8xi32>
    %23 = arith.cmpi slt, %21, %22 : vector<16x8xi32>
    %24 = vector.extract_strided_slice %11 {offsets = [0, 0], sizes = [16, 32], strides = [1, 1]} : vector<16x128xf32> to vector<16x32xf32>
    %25 = arith.truncf %24 : vector<16x32xf32> to vector<16x32xbf16>
    %26 = vector.extract_strided_slice %17 {offsets = [0, 0], sizes = [8, 32], strides = [1, 1]} : vector<8x128xf32> to vector<8x32xf32>
    %27 = arith.truncf %26 : vector<8x32xf32> to vector<8x32xbf16>
    %28 = vector.extract_strided_slice %18 {offsets = [0, 0], sizes = [8, 32], strides = [1, 1]} : vector<8x128xf32> to vector<8x32xf32>
    %29 = arith.truncf %28 : vector<8x32xf32> to vector<8x32xbf16>
    %cst_15 = arith.constant dense<0.000000e+00> : vector<16x8xf32>
    %30 = tpu.matmul %25, %27, %cst_15 {dimension_numbers = #tpu.dot_dimension_numbers<[1], [1], [0], [0], [0, 0, 1, 0], [], []>} : vector<16x32xbf16>, vector<8x32xbf16>, vector<16x8xf32> -> vector<16x8xf32>
    %cst_16 = arith.constant -1.000000e+09 : f32
    %31 = vector.broadcast %cst_16 : f32 to vector<16x8xf32>
    %32 = arith.select %23, %30, %31 : vector<16x8xi1>, vector<16x8xf32>
    %cst_17 = arith.constant dense<0xFF800000> : vector<16xf32>
    %33 = vector.multi_reduction <maximumf>, %32, %cst_17 [1] : vector<16x8xf32> to vector<16xf32>
    %34 = vector.shape_cast %33 : vector<16xf32> to vector<16x1xf32>
    %35 = vector.broadcast %34 : vector<16x1xf32> to vector<16x8xf32>
    %36 = arith.subf %32, %35 : vector<16x8xf32>
    %37 = math.exp %36 : vector<16x8xf32>
    %cst_18 = arith.constant dense<0.000000e+00> : vector<16xf32>
    %38 = vector.multi_reduction <add>, %37, %cst_18 [1] : vector<16x8xf32> to vector<16xf32>
    %39 = vector.shape_cast %38 : vector<16xf32> to vector<16x1xf32>
    %40 = tpu.reciprocal %39 {approx = true} : vector<16x1xf32> -> vector<16x1xf32>
    %41 = vector.broadcast %40 : vector<16x1xf32> to vector<16x8xf32>
    %42 = arith.mulf %37, %41 : vector<16x8xf32>
    %43 = arith.truncf %42 : vector<16x8xf32> to vector<16x8xbf16>
    %cst_19 = arith.constant dense<0.000000e+00> : vector<16x32xf32>
    %44 = tpu.matmul %43, %29, %cst_19 {dimension_numbers = #tpu.dot_dimension_numbers<[1], [0], [0], [1], [0, 0, 1, 1], [], []>} : vector<16x8xbf16>, vector<8x32xbf16>, vector<16x32xf32> -> vector<16x32xf32>
    %c0_20 = arith.constant 0 : index
    %c0_21 = arith.constant 0 : index
    %45 = vector.load %arg13[%c0_20, %c0_21] : memref<16x128xf32, #tpu.memory_space<vmem>>, vector<16x32xf32>
    tpu.vector_store %arg13[%c0_20, %c0_21], %44 {strides = array<i32>} : memref<16x128xf32, #tpu.memory_space<vmem>>, vector<16x32xf32>,
    %46 = vector.extract_strided_slice %11 {offsets = [0, 32], sizes = [16, 32], strides = [1, 1]} : vector<16x128xf32> to vector<16x32xf32>
    %47 = arith.truncf %46 : vector<16x32xf32> to vector<16x32xbf16>
    %48 = vector.extract_strided_slice %17 {offsets = [0, 32], sizes = [8, 32], strides = [1, 1]} : vector<8x128xf32> to vector<8x32xf32>
    %49 = arith.truncf %48 : vector<8x32xf32> to vector<8x32xbf16>
    %50 = vector.extract_strided_slice %18 {offsets = [0, 32], sizes = [8, 32], strides = [1, 1]} : vector<8x128xf32> to vector<8x32xf32>
    %51 = arith.truncf %50 : vector<8x32xf32> to vector<8x32xbf16>
    %cst_22 = arith.constant dense<0.000000e+00> : vector<16x8xf32>
    %52 = tpu.matmul %47, %49, %cst_22 {dimension_numbers = #tpu.dot_dimension_numbers<[1], [1], [0], [0], [0, 0, 1, 0], [], []>} : vector<16x32xbf16>, vector<8x32xbf16>, vector<16x8xf32> -> vector<16x8xf32>
    %cst_23 = arith.constant -1.000000e+09 : f32
    %53 = vector.broadcast %cst_23 : f32 to vector<16x8xf32>
    %54 = arith.select %23, %52, %53 : vector<16x8xi1>, vector<16x8xf32>
    %cst_24 = arith.constant dense<0xFF800000> : vector<16xf32>
    %55 = vector.multi_reduction <maximumf>, %54, %cst_24 [1] : vector<16x8xf32> to vector<16xf32>
    %56 = vector.shape_cast %55 : vector<16xf32> to vector<16x1xf32>
    %57 = vector.broadcast %56 : vector<16x1xf32> to vector<16x8xf32>
    %58 = arith.subf %54, %57 : vector<16x8xf32>
    %59 = math.exp %58 : vector<16x8xf32>
    %cst_25 = arith.constant dense<0.000000e+00> : vector<16xf32>
    %60 = vector.multi_reduction <add>, %59, %cst_25 [1] : vector<16x8xf32> to vector<16xf32>
    %61 = vector.shape_cast %60 : vector<16xf32> to vector<16x1xf32>
    %62 = tpu.reciprocal %61 {approx = true} : vector<16x1xf32> -> vector<16x1xf32>
    %63 = vector.broadcast %62 : vector<16x1xf32> to vector<16x8xf32>
    %64 = arith.mulf %59, %63 : vector<16x8xf32>
    %65 = arith.truncf %64 : vector<16x8xf32> to vector<16x8xbf16>
    %cst_26 = arith.constant dense<0.000000e+00> : vector<16x32xf32>
    %66 = tpu.matmul %65, %51, %cst_26 {dimension_numbers = #tpu.dot_dimension_numbers<[1], [0], [0], [1], [0, 0, 1, 1], [], []>} : vector<16x8xbf16>, vector<8x32xbf16>, vector<16x32xf32> -> vector<16x32xf32>
    %c0_27 = arith.constant 0 : index
    %c32 = arith.constant 32 : index
    %67 = vector.load %arg13[%c0_27, %c32] : memref<16x128xf32, #tpu.memory_space<vmem>>, vector<16x32xf32>
    tpu.vector_store %arg13[%c0_27, %c32], %66 {strides = array<i32>} : memref<16x128xf32, #tpu.memory_space<vmem>>, vector<16x32xf32>,
    %68 = vector.extract_strided_slice %11 {offsets = [0, 64], sizes = [16, 32], strides = [1, 1]} : vector<16x128xf32> to vector<16x32xf32>
    %69 = arith.truncf %68 : vector<16x32xf32> to vector<16x32xbf16>
    %70 = vector.extract_strided_slice %17 {offsets = [0, 64], sizes = [8, 32], strides = [1, 1]} : vector<8x128xf32> to vector<8x32xf32>
    %71 = arith.truncf %70 : vector<8x32xf32> to vector<8x32xbf16>
    %72 = vector.extract_strided_slice %18 {offsets = [0, 64], sizes = [8, 32], strides = [1, 1]} : vector<8x128xf32> to vector<8x32xf32>
    %73 = arith.truncf %72 : vector<8x32xf32> to vector<8x32xbf16>
    %cst_28 = arith.constant dense<0.000000e+00> : vector<16x8xf32>
    %74 = tpu.matmul %69, %71, %cst_28 {dimension_numbers = #tpu.dot_dimension_numbers<[1], [1], [0], [0], [0, 0, 1, 0], [], []>} : vector<16x32xbf16>, vector<8x32xbf16>, vector<16x8xf32> -> vector<16x8xf32>
    %cst_29 = arith.constant -1.000000e+09 : f32
    %75 = vector.broadcast %cst_29 : f32 to vector<16x8xf32>
    %76 = arith.select %23, %74, %75 : vector<16x8xi1>, vector<16x8xf32>
    %cst_30 = arith.constant dense<0xFF800000> : vector<16xf32>
    %77 = vector.multi_reduction <maximumf>, %76, %cst_30 [1] : vector<16x8xf32> to vector<16xf32>
    %78 = vector.shape_cast %77 : vector<16xf32> to vector<16x1xf32>
    %79 = vector.broadcast %78 : vector<16x1xf32> to vector<16x8xf32>
    %80 = arith.subf %76, %79 : vector<16x8xf32>
    %81 = math.exp %80 : vector<16x8xf32>
    %cst_31 = arith.constant dense<0.000000e+00> : vector<16xf32>
    %82 = vector.multi_reduction <add>, %81, %cst_31 [1] : vector<16x8xf32> to vector<16xf32>
    %83 = vector.shape_cast %82 : vector<16xf32> to vector<16x1xf32>
    %84 = tpu.reciprocal %83 {approx = true} : vector<16x1xf32> -> vector<16x1xf32>
    %85 = vector.broadcast %84 : vector<16x1xf32> to vector<16x8xf32>
    %86 = arith.mulf %81, %85 : vector<16x8xf32>
    %87 = arith.truncf %86 : vector<16x8xf32> to vector<16x8xbf16>
    %cst_32 = arith.constant dense<0.000000e+00> : vector<16x32xf32>
    %88 = tpu.matmul %87, %73, %cst_32 {dimension_numbers = #tpu.dot_dimension_numbers<[1], [0], [0], [1], [0, 0, 1, 1], [], []>} : vector<16x8xbf16>, vector<8x32xbf16>, vector<16x32xf32> -> vector<16x32xf32>
    %c0_33 = arith.constant 0 : index
    %c64 = arith.constant 64 : index
    %89 = vector.load %arg13[%c0_33, %c64] : memref<16x128xf32, #tpu.memory_space<vmem>>, vector<16x32xf32>
    tpu.vector_store %arg13[%c0_33, %c64], %88 {strides = array<i32>} : memref<16x128xf32, #tpu.memory_space<vmem>>, vector<16x32xf32>,
    %90 = vector.extract_strided_slice %11 {offsets = [0, 96], sizes = [16, 32], strides = [1, 1]} : vector<16x128xf32> to vector<16x32xf32>
    %91 = arith.truncf %90 : vector<16x32xf32> to vector<16x32xbf16>
    %92 = vector.extract_strided_slice %17 {offsets = [0, 96], sizes = [8, 32], strides = [1, 1]} : vector<8x128xf32> to vector<8x32xf32>
    %93 = arith.truncf %92 : vector<8x32xf32> to vector<8x32xbf16>
    %94 = vector.extract_strided_slice %18 {offsets = [0, 96], sizes = [8, 32], strides = [1, 1]} : vector<8x128xf32> to vector<8x32xf32>
    %95 = arith.truncf %94 : vector<8x32xf32> to vector<8x32xbf16>
    %cst_34 = arith.constant dense<0.000000e+00> : vector<16x8xf32>
    %96 = tpu.matmul %91, %93, %cst_34 {dimension_numbers = #tpu.dot_dimension_numbers<[1], [1], [0], [0], [0, 0, 1, 0], [], []>} : vector<16x32xbf16>, vector<8x32xbf16>, vector<16x8xf32> -> vector<16x8xf32>
    %cst_35 = arith.constant -1.000000e+09 : f32
    %97 = vector.broadcast %cst_35 : f32 to vector<16x8xf32>
    %98 = arith.select %23, %96, %97 : vector<16x8xi1>, vector<16x8xf32>
    %cst_36 = arith.constant dense<0xFF800000> : vector<16xf32>
    %99 = vector.multi_reduction <maximumf>, %98, %cst_36 [1] : vector<16x8xf32> to vector<16xf32>
    %100 = vector.shape_cast %99 : vector<16xf32> to vector<16x1xf32>
    %101 = vector.broadcast %100 : vector<16x1xf32> to vector<16x8xf32>
    %102 = arith.subf %98, %101 : vector<16x8xf32>
    %103 = math.exp %102 : vector<16x8xf32>
    %cst_37 = arith.constant dense<0.000000e+00> : vector<16xf32>
    %104 = vector.multi_reduction <add>, %103, %cst_37 [1] : vector<16x8xf32> to vector<16xf32>
    %105 = vector.shape_cast %104 : vector<16xf32> to vector<16x1xf32>
    %106 = tpu.reciprocal %105 {approx = true} : vector<16x1xf32> -> vector<16x1xf32>
    %107 = vector.broadcast %106 : vector<16x1xf32> to vector<16x8xf32>
    %108 = arith.mulf %103, %107 : vector<16x8xf32>
    %109 = arith.truncf %108 : vector<16x8xf32> to vector<16x8xbf16>
    %cst_38 = arith.constant dense<0.000000e+00> : vector<16x32xf32>
    %110 = tpu.matmul %109, %95, %cst_38 {dimension_numbers = #tpu.dot_dimension_numbers<[1], [0], [0], [1], [0, 0, 1, 1], [], []>} : vector<16x8xbf16>, vector<8x32xbf16>, vector<16x32xf32> -> vector<16x32xf32>
    %c0_39 = arith.constant 0 : index
    %c96 = arith.constant 96 : index
    %111 = vector.load %arg13[%c0_39, %c96] : memref<16x128xf32, #tpu.memory_space<vmem>>, vector<16x32xf32>
    tpu.vector_store %arg13[%c0_39, %c96], %110 {strides = array<i32>} : memref<16x128xf32, #tpu.memory_space<vmem>>, vector<16x32xf32>,
    %c0_40 = arith.constant 0 : index
    %c0_41 = arith.constant 0 : index
    %112 = vector.load %arg13[%c0_40, %c0_41] : memref<16x128xf32, #tpu.memory_space<vmem>>, vector<16x128xf32>
    %113 = arith.truncf %112 : vector<16x128xf32> to vector<16x128xbf16>
    %c0_42 = arith.constant 0 : index
    %c0_43 = arith.constant 0 : index
    %114 = vector.load %arg8[%c0_42, %c0_43] : memref<128x128xbf16, #tpu.memory_space<vmem>>, vector<128x128xbf16>
    %cst_44 = arith.constant dense<0.000000e+00> : vector<16x128xf32>
    %115 = tpu.matmul %113, %114, %cst_44 {dimension_numbers = #tpu.dot_dimension_numbers<[1], [0], [0], [1], [0, 0, 1, 1], [], []>} : vector<16x128xbf16>, vector<128x128xbf16>, vector<16x128xf32> -> vector<16x128xf32>
    %c0_45 = arith.constant 0 : index
    %c0_46 = arith.constant 0 : index
    %116 = vector.load %arg9[%c0_45, %c0_46] : memref<1x128xf32, #tpu.memory_space<vmem>>, vector<1x128xf32>
    %117 = vector.broadcast %116 : vector<1x128xf32> to vector<16x128xf32>
    %118 = arith.addf %115, %117 : vector<16x128xf32>
    %119 = arith.addf %118, %2 : vector<16x128xf32>
    %c0_47 = arith.constant 0 : index
    %c0_48 = arith.constant 0 : index
    %120 = vector.load %arg10[%c0_47, %c0_48] : memref<1x128xf32, #tpu.memory_space<vmem>>, vector<1x128xf32>
    %c0_49 = arith.constant 0 : index
    %c0_50 = arith.constant 0 : index
    %121 = vector.load %arg11[%c0_49, %c0_50] : memref<1x128xf32, #tpu.memory_space<vmem>>, vector<1x128xf32>
    %cst_51 = arith.constant dense<0.000000e+00> : vector<16xf32>
    %122 = vector.multi_reduction <add>, %119, %cst_51 [1] : vector<16x128xf32> to vector<16xf32>
    %123 = vector.shape_cast %122 : vector<16xf32> to vector<16x1xf32>
    %cst_52 = arith.constant 1.280000e+02 : f32
    %124 = vector.broadcast %cst_52 : f32 to vector<16x1xf32>
    %125 = arith.divf %123, %124 : vector<16x1xf32>
    %126 = vector.broadcast %125 : vector<16x1xf32> to vector<16x128xf32>
    %127 = arith.subf %119, %126 : vector<16x128xf32>
    %128 = arith.mulf %127, %127 : vector<16x128xf32>
    %cst_53 = arith.constant dense<0.000000e+00> : vector<16xf32>
    %129 = vector.multi_reduction <add>, %128, %cst_53 [1] : vector<16x128xf32> to vector<16xf32>
    %130 = vector.shape_cast %129 : vector<16xf32> to vector<16x1xf32>
    %cst_54 = arith.constant 1.280000e+02 : f32
    %131 = vector.broadcast %cst_54 : f32 to vector<16x1xf32>
    %132 = arith.divf %130, %131 : vector<16x1xf32>
    %cst_55 = arith.constant 9.99999974E-6 : f32
    %133 = vector.broadcast %cst_55 : f32 to vector<16x1xf32>
    %134 = arith.addf %132, %133 : vector<16x1xf32>
    %135 = math.rsqrt %134 : vector<16x1xf32>
    %136 = vector.broadcast %135 : vector<16x1xf32> to vector<16x128xf32>
    %137 = arith.mulf %127, %136 : vector<16x128xf32>
    %138 = vector.broadcast %120 : vector<1x128xf32> to vector<16x128xf32>
    %139 = arith.mulf %137, %138 : vector<16x128xf32>
    %140 = vector.broadcast %121 : vector<1x128xf32> to vector<16x128xf32>
    %141 = arith.addf %139, %140 : vector<16x128xf32>
    %142 = arith.truncf %141 : vector<16x128xf32> to vector<16x128xbf16>
    %c0_56 = arith.constant 0 : index
    %c0_57 = arith.constant 0 : index
    %c0_58 = arith.constant 0 : index
    %143 = vector.load %arg12[%c0_56, %c0_57, %c0_58] : memref<1x16x128xbf16, #tpu.memory_space<vmem>>, vector<1x16x128xbf16>
    %144 = vector.shape_cast %143 : vector<1x16x128xbf16> to vector<16x128xbf16>
    %145 = vector.shape_cast %142 : vector<16x128xbf16> to vector<1x16x128xbf16>
    tpu.vector_store %arg12[%c0_56, %c0_57, %c0_58], %145 {strides = array<i32>} : memref<1x16x128xbf16, #tpu.memory_space<vmem>>, vector<1x16x128xbf16>,
    return
  }
  func.func @transform_0(%arg0: i32, %arg1: memref<2xi32, #tpu.memory_space<smem>>) -> (i32, i32, i32) {
    %c0_i32 = arith.constant 0 : i32
    %c0_i32_0 = arith.constant 0 : i32
    %c0_i32_1 = arith.constant 0 : i32
    return %arg0, %c0_i32, %c0_i32_0 : i32, i32, i32
  }
  func.func @transform_1(%arg0: i32, %arg1: memref<2xi32, #tpu.memory_space<smem>>) -> (i32, i32, i32) {
    %c0_i32 = arith.constant 0 : i32
    %c0_i32_0 = arith.constant 0 : i32
    %c0_i32_1 = arith.constant 0 : i32
    return %arg0, %c0_i32, %c0_i32_0 : i32, i32, i32
  }
  func.func @transform_2(%arg0: i32, %arg1: memref<2xi32, #tpu.memory_space<smem>>) -> (i32, i32) {
    %c0_i32 = arith.constant 0 : i32
    %c0_i32_0 = arith.constant 0 : i32
    %c0_i32_1 = arith.constant 0 : i32
    return %c0_i32, %c0_i32_0 : i32, i32
  }
  func.func @transform_3(%arg0: i32, %arg1: memref<2xi32, #tpu.memory_space<smem>>) -> (i32, i32) {
    %c0_i32 = arith.constant 0 : i32
    %c0_i32_0 = arith.constant 0 : i32
    %c0_i32_1 = arith.constant 0 : i32
    return %c0_i32, %c0_i32_0 : i32, i32
  }
  func.func @transform_4(%arg0: i32, %arg1: memref<2xi32, #tpu.memory_space<smem>>) -> (i32, i32) {
    %c0_i32 = arith.constant 0 : i32
    %c0_i32_0 = arith.constant 0 : i32
    %c0_i32_1 = arith.constant 0 : i32
    return %c0_i32, %c0_i32_0 : i32, i32
  }
  func.func @transform_5(%arg0: i32, %arg1: memref<2xi32, #tpu.memory_space<smem>>) -> (i32, i32) {
    %c0_i32 = arith.constant 0 : i32
    %c0_i32_0 = arith.constant 0 : i32
    %c0_i32_1 = arith.constant 0 : i32
    return %c0_i32, %c0_i32_0 : i32, i32
  }
  func.func @transform_6(%arg0: i32, %arg1: memref<2xi32, #tpu.memory_space<smem>>) -> (i32, i32) {
    %c0_i32 = arith.constant 0 : i32
    %c0_i32_0 = arith.constant 0 : i32
    %c0_i32_1 = arith.constant 0 : i32
    return %c0_i32, %c0_i32_0 : i32, i32
  }
  func.func @transform_7(%arg0: i32, %arg1: memref<2xi32, #tpu.memory_space<smem>>) -> (i32, i32) {
    %c0_i32 = arith.constant 0 : i32
    %c0_i32_0 = arith.constant 0 : i32
    %c0_i32_1 = arith.constant 0 : i32
    return %c0_i32, %c0_i32_0 : i32, i32
  }
  func.func @transform_8(%arg0: i32, %arg1: memref<2xi32, #tpu.memory_space<smem>>) -> (i32, i32) {
    %c0_i32 = arith.constant 0 : i32
    %c0_i32_0 = arith.constant 0 : i32
    %c0_i32_1 = arith.constant 0 : i32
    return %c0_i32, %c0_i32_0 : i32, i32
  }
  func.func @transform_9(%arg0: i32, %arg1: memref<2xi32, #tpu.memory_space<smem>>) -> (i32, i32) {
    %c0_i32 = arith.constant 0 : i32
    %c0_i32_0 = arith.constant 0 : i32
    %c0_i32_1 = arith.constant 0 : i32
    return %c0_i32, %c0_i32_0 : i32, i32
  }
  func.func @transform_10(%arg0: i32, %arg1: memref<2xi32, #tpu.memory_space<smem>>) -> (i32, i32, i32) {
    %c0_i32 = arith.constant 0 : i32
    %c0_i32_0 = arith.constant 0 : i32
    %c0_i32_1 = arith.constant 0 : i32
    return %arg0, %c0_i32, %c0_i32_0 : i32, i32, i32
  }
}

module attributes {stable_mosaic.version = 11 : i64} {
  func.func @_ln_linear_kernel(%arg0: i32, %arg1: memref<32x128xbf16, #tpu.memory_space<vmem>>, %arg2: memref<1x128xf32, #tpu.memory_space<vmem>>, %arg3: memref<1x128xf32, #tpu.memory_space<vmem>>, %arg4: memref<128x128xbf16, #tpu.memory_space<vmem>>, %arg5: memref<1x128xf32, #tpu.memory_space<vmem>>, %arg6: memref<32x128xf32, #tpu.memory_space<vmem>>) attributes {dimension_semantics = [#tpu.dimension_semantics<parallel>], iteration_bounds = array<i64: 1>, scalar_prefetch = 0 : i64, scratch_operands = 0 : i64, tpu.core_type = #tpu.core_type<tc>, window_params = [{transform_indices = @transform_0, window_bounds = array<i64: 32, 128>}, {pipeline_mode = #tpu.pipeline_mode<synchronous>, transform_indices = @transform_1, window_bounds = array<i64: 1, 128>}, {pipeline_mode = #tpu.pipeline_mode<synchronous>, transform_indices = @transform_2, window_bounds = array<i64: 1, 128>}, {pipeline_mode = #tpu.pipeline_mode<synchronous>, transform_indices = @transform_3, window_bounds = array<i64: 128, 128>}, {pipeline_mode = #tpu.pipeline_mode<synchronous>, transform_indices = @transform_4, window_bounds = array<i64: 1, 128>}, {transform_indices = @transform_5, window_bounds = array<i64: 32, 128>}]} {
    %c0 = arith.constant 0 : index
    %c0_0 = arith.constant 0 : index
    %0 = vector.load %arg1[%c0, %c0_0] : memref<32x128xbf16, #tpu.memory_space<vmem>>, vector<32x128xbf16>
    %1 = arith.extf %0 : vector<32x128xbf16> to vector<32x128xf32>
    %c0_1 = arith.constant 0 : index
    %c0_2 = arith.constant 0 : index
    %2 = vector.load %arg2[%c0_1, %c0_2] : memref<1x128xf32, #tpu.memory_space<vmem>>, vector<1x128xf32>
    %c0_3 = arith.constant 0 : index
    %c0_4 = arith.constant 0 : index
    %3 = vector.load %arg3[%c0_3, %c0_4] : memref<1x128xf32, #tpu.memory_space<vmem>>, vector<1x128xf32>
    %cst = arith.constant dense<0.000000e+00> : vector<32xf32>
    %4 = vector.multi_reduction <add>, %1, %cst [1] : vector<32x128xf32> to vector<32xf32>
    %5 = vector.shape_cast %4 : vector<32xf32> to vector<32x1xf32>
    %cst_5 = arith.constant 1.280000e+02 : f32
    %6 = vector.broadcast %cst_5 : f32 to vector<32x1xf32>
    %7 = arith.divf %5, %6 : vector<32x1xf32>
    %8 = vector.broadcast %7 : vector<32x1xf32> to vector<32x128xf32>
    %9 = arith.subf %1, %8 : vector<32x128xf32>
    %10 = arith.mulf %9, %9 : vector<32x128xf32>
    %cst_6 = arith.constant dense<0.000000e+00> : vector<32xf32>
    %11 = vector.multi_reduction <add>, %10, %cst_6 [1] : vector<32x128xf32> to vector<32xf32>
    %12 = vector.shape_cast %11 : vector<32xf32> to vector<32x1xf32>
    %cst_7 = arith.constant 1.280000e+02 : f32
    %13 = vector.broadcast %cst_7 : f32 to vector<32x1xf32>
    %14 = arith.divf %12, %13 : vector<32x1xf32>
    %cst_8 = arith.constant 9.99999974E-6 : f32
    %15 = vector.broadcast %cst_8 : f32 to vector<32x1xf32>
    %16 = arith.addf %14, %15 : vector<32x1xf32>
    %17 = math.rsqrt %16 : vector<32x1xf32>
    %18 = vector.broadcast %17 : vector<32x1xf32> to vector<32x128xf32>
    %19 = arith.mulf %9, %18 : vector<32x128xf32>
    %20 = vector.broadcast %2 : vector<1x128xf32> to vector<32x128xf32>
    %21 = arith.mulf %19, %20 : vector<32x128xf32>
    %22 = vector.broadcast %3 : vector<1x128xf32> to vector<32x128xf32>
    %23 = arith.addf %21, %22 : vector<32x128xf32>
    %24 = arith.truncf %23 : vector<32x128xf32> to vector<32x128xbf16>
    %c0_9 = arith.constant 0 : index
    %c0_10 = arith.constant 0 : index
    %25 = vector.load %arg4[%c0_9, %c0_10] : memref<128x128xbf16, #tpu.memory_space<vmem>>, vector<128x128xbf16>
    %cst_11 = arith.constant dense<0.000000e+00> : vector<32x128xf32>
    %26 = tpu.matmul %24, %25, %cst_11 {dimension_numbers = #tpu.dot_dimension_numbers<[1], [0], [0], [1], [0, 0, 1, 1], [], []>} : vector<32x128xbf16>, vector<128x128xbf16>, vector<32x128xf32> -> vector<32x128xf32>
    %c0_12 = arith.constant 0 : index
    %c0_13 = arith.constant 0 : index
    %27 = vector.load %arg5[%c0_12, %c0_13] : memref<1x128xf32, #tpu.memory_space<vmem>>, vector<1x128xf32>
    %28 = vector.broadcast %27 : vector<1x128xf32> to vector<32x128xf32>
    %29 = arith.addf %26, %28 : vector<32x128xf32>
    %c0_14 = arith.constant 0 : index
    %c0_15 = arith.constant 0 : index
    %30 = vector.load %arg6[%c0_14, %c0_15] : memref<32x128xf32, #tpu.memory_space<vmem>>, vector<32x128xf32>
    tpu.vector_store %arg6[%c0_14, %c0_15], %29 {strides = array<i32>} : memref<32x128xf32, #tpu.memory_space<vmem>>, vector<32x128xf32>,
    return
  }
  func.func @transform_0(%arg0: i32) -> (i32, i32) {
    %c0_i32 = arith.constant 0 : i32
    %c0_i32_0 = arith.constant 0 : i32
    return %arg0, %c0_i32 : i32, i32
  }
  func.func @transform_1(%arg0: i32) -> (i32, i32) {
    %c0_i32 = arith.constant 0 : i32
    %c0_i32_0 = arith.constant 0 : i32
    %c0_i32_1 = arith.constant 0 : i32
    return %c0_i32, %c0_i32_0 : i32, i32
  }
  func.func @transform_2(%arg0: i32) -> (i32, i32) {
    %c0_i32 = arith.constant 0 : i32
    %c0_i32_0 = arith.constant 0 : i32
    %c0_i32_1 = arith.constant 0 : i32
    return %c0_i32, %c0_i32_0 : i32, i32
  }
  func.func @transform_3(%arg0: i32) -> (i32, i32) {
    %c0_i32 = arith.constant 0 : i32
    %c0_i32_0 = arith.constant 0 : i32
    %c0_i32_1 = arith.constant 0 : i32
    return %c0_i32, %c0_i32_0 : i32, i32
  }
  func.func @transform_4(%arg0: i32) -> (i32, i32) {
    %c0_i32 = arith.constant 0 : i32
    %c0_i32_0 = arith.constant 0 : i32
    %c0_i32_1 = arith.constant 0 : i32
    return %c0_i32, %c0_i32_0 : i32, i32
  }
  func.func @transform_5(%arg0: i32) -> (i32, i32) {
    %c0_i32 = arith.constant 0 : i32
    %c0_i32_0 = arith.constant 0 : i32
    return %arg0, %c0_i32 : i32, i32
  }
}

</mosaic_0001>

<llo_original>
// kernel: tts_forward.16
$region0: #{tts_forward.16}
  #allocation0 [shape = 'u32[]', space=smem, size = 0x4, offset = 0x4, fixed_abs, tag = 'smem constant byte address 0x4 - core index']
  #allocation1 [shape = 'u32[144,128]{1,0:T(1,128)}', space=vmem, size = 0x12000, scoped, tag = 'internal scratch']
  %s0 = inlined_call_operand.vmem [shape: f32[32,128], index: 0, kind: input, shape index: {}]
  %s1 = inlined_call_operand.vmem [shape: bf16[128,128], index: 1, kind: input, shape index: {}]
  %s2 = inlined_call_operand.vmem [shape: f32[1,128], index: 2, kind: input, shape index: {}]
  %s3 = inlined_call_operand.vmem [shape: bf16[128,128], index: 3, kind: input, shape index: {}]
  %s4 = inlined_call_operand.vmem [shape: f32[1,128], index: 4, kind: input, shape index: {}]
  %s5 = inlined_call_operand.vmem [shape: bf16[32,128], index: 5, kind: output, shape index: {}]
  %s6 = sld [smem:[#allocation0]]
  $region30: #{tts_forward.16} parent=0
    _
  %s8 = ssub.s32 1, %s6
  %s9 = scalar_select 0, %s8, %s6
  // Predicated region
  $region2: #{tts_forward.16} parent=0 // pred_check
    _
  $region3: #{tts_forward.16} parent=0 // pred_check_branch
    %11 = sbr.rel (0) target = $region5
  $region4: #{tts_forward.16} parent=0 // pred_region
    _
  $region5: #{tts_forward.16} parent=0 // pred_fallthru
    _
  // Predicated region
  $region6: #{tts_forward.16} parent=0 // pred_check
    _
  $region7: #{tts_forward.16} parent=0 // pred_check_branch
    %13 = sbr.rel (0) target = $region9
  $region8: #{tts_forward.16} parent=0 // pred_region
    _
  $region9: #{tts_forward.16} parent=0 // pred_fallthru
    _
  // Predicated region
  $region10: #{tts_forward.16} parent=0 // pred_check
    _
  $region11: #{tts_forward.16} parent=0 // pred_check_branch
    %15 = sbr.rel (0) target = $region13
  $region12: #{tts_forward.16} parent=0 // pred_region
    _
  $region13: #{tts_forward.16} parent=0 // pred_fallthru
    _
  // Predicated region
  $region14: #{tts_forward.16} parent=0 // pred_check
    _
  $region15: #{tts_forward.16} parent=0 // pred_check_branch
    %17 = sbr.rel (0) target = $region17
  $region16: #{tts_forward.16} parent=0 // pred_region
    _
  $region17: #{tts_forward.16} parent=0 // pred_fallthru
    _
  // Predicated region
  $region18: #{tts_forward.16} parent=0 // pred_check
    _
  $region19: #{tts_forward.16} parent=0 // pred_check_branch
    %19 = sbr.rel (0) target = $region21
  $region20: #{tts_forward.16} parent=0 // pred_region
    _
  $region21: #{tts_forward.16} parent=0 // pred_fallthru
    _
  %v21 = vld [vmem:[%s0] sm:$0xff]
  %v22 = vld [vmem:[%s0 + $0x8] sm:$0xff]
  %v23 = vld [vmem:[%s0 + $0x10] sm:$0xff]
  %v24 = vld [vmem:[%s0 + $0x18] sm:$0xff]
  %v25 = vpack.c.bf16 %v22, %v21
  %v26 = vpack.c.bf16 %v24, %v23
  %v27 = vld [vmem:[%s1] sm:$0xf]
  %v28 = vld [vmem:[%s1 + $0x4] sm:$0xf]
  %v29 = vld [vmem:[%s1 + $0x8] sm:$0xf]
  %v30 = vld [vmem:[%s1 + $0xc] sm:$0xf]
  %v31 = vld [vmem:[%s1 + $0x10] sm:$0xf]
  %v32 = vld [vmem:[%s1 + $0x14] sm:$0xf]
  %v33 = vld [vmem:[%s1 + $0x18] sm:$0xf]
  %v34 = vld [vmem:[%s1 + $0x1c] sm:$0xf]
  %v35 = vld [vmem:[%s1 + $0x20] sm:$0xf]
  %v36 = vld [vmem:[%s1 + $0x24] sm:$0xf]
  %v37 = vld [vmem:[%s1 + $0x28] sm:$0xf]
  %v38 = vld [vmem:[%s1 + $0x2c] sm:$0xf]
  %v39 = vld [vmem:[%s1 + $0x30] sm:$0xf]
  %v40 = vld [vmem:[%s1 + $0x34] sm:$0xf]
  %v41 = vld [vmem:[%s1 + $0x38] sm:$0xf]
  %v42 = vld [vmem:[%s1 + $0x3c] sm:$0xf]
  %v43 = vld [vmem:[%s2] sm:$0x1]
  %v45 = vlaneseq
  %v46 = vshrl.u32 %v45, 7
  %v47 = vsub.s32 0, %v46
  %v48 = vrot.slane %v43, %v47
  %v66 = vunpack.c.l.b16 %v27
  %v67 = vunpack.c.l.b16 %v28
  %v68 = vunpack.c.l.b16 %v29
  %v69 = vunpack.c.l.b16 %v30
  %v70 = vunpack.c.l.b16 %v31
  %v71 = vunpack.c.l.b16 %v32
  %v72 = vunpack.c.l.b16 %v33
  %v73 = vunpack.c.l.b16 %v34
  %v74 = vunpack.c.l.b16 %v35
  %v75 = vunpack.c.l.b16 %v36
  %v76 = vunpack.c.l.b16 %v37
  %v77 = vunpack.c.l.b16 %v38
  %v78 = vunpack.c.l.b16 %v39
  %v79 = vunpack.c.l.b16 %v40
  %v80 = vunpack.c.l.b16 %v41
  %v81 = vunpack.c.l.b16 %v42
  %v82 = vpack.c.b16 %v67, %v66
  %v83 = vpack.c.b16 %v69, %v68
  %v84 = vpack.c.b16 %v71, %v70
  %v85 = vpack.c.b16 %v73, %v72
  %v86 = vpack.c.b16 %v75, %v74
  %v87 = vpack.c.b16 %v77, %v76
  %v88 = vpack.c.b16 %v79, %v78
  %v89 = vpack.c.b16 %v81, %v80
  %98 = vmatprep.subr.bf16.mxu0 0
  %99 = vmatpush1.bf16.msra.mxu0 %v82
  %100 = vmatprep.subr.bf16.mxu0 0
  %101 = vmatpush1.bf16.msra.mxu0 %v83
  %102 = vmatprep.subr.bf16.mxu0 0
  %103 = vmatpush1.bf16.msra.mxu0 %v84
  %104 = vmatprep.subr.bf16.mxu0 0
  %105 = vmatpush1.bf16.msra.mxu0 %v85
  %106 = vmatprep.subr.bf16.mxu0 0
  %107 = vmatpush1.bf16.msra.mxu0 %v86
  %108 = vmatprep.subr.bf16.mxu0 0
  %109 = vmatpush1.bf16.msra.mxu0 %v87
  %110 = vmatprep.subr.bf16.mxu0 0
  %111 = vmatpush1.bf16.msra.mxu0 %v88
  %112 = vmatprep.subr.bf16.mxu0 0
  %113 = vmatpush1.bf16.msra.mxu0 %v89
  %114 = vmatprep.subr.bf16.mxu0 0
  %115 = vmatpush1.bf16.msra.mxu0 0
  %116 = vmatprep.subr.bf16.mxu0 0
  %117 = vmatpush1.bf16.msra.mxu0 0
  %118 = vmatprep.subr.bf16.mxu0 0
  %119 = vmatpush1.bf16.msra.mxu0 0
  %120 = vmatprep.subr.bf16.mxu0 0
  %121 = vmatpush1.bf16.msra.mxu0 0
  %122 = vmatprep.subr.bf16.mxu0 0
  %123 = vmatpush1.bf16.msra.mxu0 0
  %124 = vmatprep.subr.bf16.mxu0 0
  %125 = vmatpush1.bf16.msra.mxu0 0
  %126 = vmatprep.subr.bf16.mxu0 0
  %127 = vmatpush1.bf16.msra.mxu0 0
  %128 = vmatprep.subr.bf16.mxu0 0
  %129 = vmatpush1.bf16.msra.mxu0 0
  %130 = vmatprep.mubr.bf16.mxu0 0
  %131 = vmatmul.mubr.bf16.gmra.mrb[0].mxu0 %v25
  %v132 = vpop.f32.mrb[0].mxu0
  %v133 = vadd.f32 %v48, %v132
  %v134 = vpop.f32.mrb[0].mxu0
  %v135 = vpop.f32.mrb[0].mxu0
  %v136 = vadd.f32 %v48, %v135
  %v137 = vpop.f32.mrb[0].mxu0
  %138 = vmatprep.mubr.bf16.mxu0 0
  %139 = vmatmul.mubr.bf16.gmra.mrb[0].mxu0 %v26
  %v140 = vpop.f32.mrb[0].mxu0
  %v141 = vadd.f32 %v48, %v140
  %v142 = vpop.f32.mrb[0].mxu0
  %v143 = vpop.f32.mrb[0].mxu0
  %v144 = vadd.f32 %v48, %v143
  %v145 = vpop.f32.mrb[0].mxu0
  %146 = vdwg.mxu0
  %v147 = vmax.f32 %v133, 0.0
  %v148 = vmax.f32 %v136, 0.0
  %v149 = vmax.f32 %v141, 0.0
  %v150 = vmax.f32 %v144, 0.0
  %v151 = vpack.c.bf16 %v148, %v147
  %v152 = vpack.c.bf16 %v150, %v149
  %v153 = vld [vmem:[%s3] sm:$0xf]
  %v154 = vld [vmem:[%s3 + $0x4] sm:$0xf]
  %v155 = vld [vmem:[%s3 + $0x8] sm:$0xf]
  %v156 = vld [vmem:[%s3 + $0xc] sm:$0xf]
  %v157 = vld [vmem:[%s3 + $0x10] sm:$0xf]
  %v158 = vld [vmem:[%s3 + $0x14] sm:$0xf]
  %v159 = vld [vmem:[%s3 + $0x18] sm:$0xf]
  %v160 = vld [vmem:[%s3 + $0x1c] sm:$0xf]
  %v161 = vld [vmem:[%s3 + $0x20] sm:$0xf]
  %v162 = vld [vmem:[%s3 + $0x24] sm:$0xf]
  %v163 = vld [vmem:[%s3 + $0x28] sm:$0xf]
  %v164 = vld [vmem:[%s3 + $0x2c] sm:$0xf]
  %v165 = vld [vmem:[%s3 + $0x30] sm:$0xf]
  %v166 = vld [vmem:[%s3 + $0x34] sm:$0xf]
  %v167 = vld [vmem:[%s3 + $0x38] sm:$0xf]
  %v168 = vld [vmem:[%s3 + $0x3c] sm:$0xf]
  %v169 = vld [vmem:[%s4] sm:$0x1]
  %v171 = vlaneseq
  %v172 = vshrl.u32 %v171, 7
  %v173 = vsub.s32 0, %v172
  %v174 = vrot.slane %v169, %v173
  %v192 = vunpack.c.l.b16 %v153
  %v193 = vunpack.c.l.b16 %v154
  %v194 = vunpack.c.l.b16 %v155
  %v195 = vunpack.c.l.b16 %v156
  %v196 = vunpack.c.l.b16 %v157
  %v197 = vunpack.c.l.b16 %v158
  %v198 = vunpack.c.l.b16 %v159
  %v199 = vunpack.c.l.b16 %v160
  %v200 = vunpack.c.l.b16 %v161
  %v201 = vunpack.c.l.b16 %v162
  %v202 = vunpack.c.l.b16 %v163
  %v203 = vunpack.c.l.b16 %v164
  %v204 = vunpack.c.l.b16 %v165
  %v205 = vunpack.c.l.b16 %v166
  %v206 = vunpack.c.l.b16 %v167
  %v207 = vunpack.c.l.b16 %v168
  %v208 = vpack.c.b16 %v193, %v192
  %v209 = vpack.c.b16 %v195, %v194
  %v210 = vpack.c.b16 %v197, %v196
  %v211 = vpack.c.b16 %v199, %v198
  %v212 = vpack.c.b16 %v201, %v200
  %v213 = vpack.c.b16 %v203, %v202
  %v214 = vpack.c.b16 %v205, %v204
  %v215 = vpack.c.b16 %v207, %v206
  %224 = vmatprep.subr.bf16.mxu0 0
  %225 = vmatpush1.bf16.msra.mxu0 %v208
  %226 = vmatprep.subr.bf16.mxu0 0
  %227 = vmatpush1.bf16.msra.mxu0 %v209
  %228 = vmatprep.subr.bf16.mxu0 0
  %229 = vmatpush1.bf16.msra.mxu0 %v210
  %230 = vmatprep.subr.bf16.mxu0 0
  %231 = vmatpush1.bf16.msra.mxu0 %v211
  %232 = vmatprep.subr.bf16.mxu0 0
  %233 = vmatpush1.bf16.msra.mxu0 %v212
  %234 = vmatprep.subr.bf16.mxu0 0
  %235 = vmatpush1.bf16.msra.mxu0 %v213
  %236 = vmatprep.subr.bf16.mxu0 0
  %237 = vmatpush1.bf16.msra.mxu0 %v214
  %238 = vmatprep.subr.bf16.mxu0 0
  %239 = vmatpush1.bf16.msra.mxu0 %v215
  %240 = vmatprep.subr.bf16.mxu0 0
  %241 = vmatpush1.bf16.msra.mxu0 0
  %242 = vmatprep.subr.bf16.mxu0 0
  %243 = vmatpush1.bf16.msra.mxu0 0
  %244 = vmatprep.subr.bf16.mxu0 0
  %245 = vmatpush1.bf16.msra.mxu0 0
  %246 = vmatprep.subr.bf16.mxu0 0
  %247 = vmatpush1.bf16.msra.mxu0 0
  %248 = vmatprep.subr.bf16.mxu0 0
  %249 = vmatpush1.bf16.msra.mxu0 0
  %250 = vmatprep.subr.bf16.mxu0 0
  %251 = vmatpush1.bf16.msra.mxu0 0
  %252 = vmatprep.subr.bf16.mxu0 0
  %253 = vmatpush1.bf16.msra.mxu0 0
  %254 = vmatprep.subr.bf16.mxu0 0
  %255 = vmatpush1.bf16.msra.mxu0 0
  %256 = vmatprep.mubr.bf16.mxu0 0
  %257 = vmatmul.mubr.bf16.gmra.mrb[0].mxu0 %v151
  %v258 = vpop.f32.mrb[0].mxu0
  %v259 = vadd.f32 %v174, %v258
  %v260 = vpop.f32.mrb[0].mxu0
  %v261 = vpop.f32.mrb[0].mxu0
  %v262 = vadd.f32 %v174, %v261
  %v263 = vpop.f32.mrb[0].mxu0
  %264 = vmatprep.mubr.bf16.mxu0 0
  %265 = vmatmul.mubr.bf16.gmra.mrb[0].mxu0 %v152
  %v266 = vpop.f32.mrb[0].mxu0
  %v267 = vadd.f32 %v174, %v266
  %v268 = vpop.f32.mrb[0].mxu0
  %v269 = vpop.f32.mrb[0].mxu0
  %v270 = vadd.f32 %v174, %v269
  %v271 = vpop.f32.mrb[0].mxu0
  %272 = vdwg.mxu0
  %v273 = vmax.f32 %v259, 0.0
  %v274 = vmax.f32 %v262, 0.0
  %v275 = vmax.f32 %v267, 0.0
  %v276 = vmax.f32 %v270, 0.0
  %v277 = vpack.c.bf16 %v274, %v273
  %v278 = vpack.c.bf16 %v276, %v275
  %v281 = vunpack.c.l.b16 %v277
  %v282 = vunpack.c.h.b16 %v277
  %v283 = vunpack.c.l.b16 %v278
  %v284 = vunpack.c.h.b16 %v278
  %v285 = vpack.c.b16 %v281, %v281
  %v286 = vpack.c.b16 %v282, %v282
  %v287 = vpack.c.b16 %v283, %v283
  %v288 = vpack.c.b16 %v284, %v284
  %293 = vst [vmem:[%s5] sm:$0xf] %v285
  %294 = vst [vmem:[%s5 + $0x4] sm:$0xf] %v286
  %295 = vst [vmem:[%s5 + $0x8] sm:$0xf] %v287
  %296 = vst [vmem:[%s5 + $0xc] sm:$0xf] %v288
  // Predicated region
  $region22: #{tts_forward.16} parent=0 // pred_check
    _
  $region23: #{tts_forward.16} parent=0 // pred_check_branch
    %298 = sbr.rel (0) target = $region25
  $region24: #{tts_forward.16} parent=0 // pred_region
    _
  $region25: #{tts_forward.16} parent=0 // pred_fallthru
    _
  // Predicated region
  $region26: #{tts_forward.16} parent=0 // pred_check
    _
  $region27: #{tts_forward.16} parent=0 // pred_check_branch
    %300 = sbr.rel (0) target = $region29
  $region28: #{tts_forward.16} parent=0 // pred_region
    _
  $region29: #{tts_forward.16} parent=0 // pred_fallthru
    _

// kernel: tts_forward.17
$region0: #{tts_forward.17}
  #allocation0 [shape = 'u32[]', space=smem, size = 0x4, offset = 0x4, fixed_abs, tag = 'smem constant byte address 0x4 - core index']
  #allocation1 [shape = 'u32[144,128]{1,0:T(1,128)}', space=vmem, size = 0x12000, scoped, tag = 'internal scratch']
  #allocation2 [shape = 'f32[16,128]{1,0:T(8,128)}', space=vmem, size = 0x2000, scoped, tag = 'scratch operand']
  #allocation3 [shape = 's32[1]{0}', space=sflag, size = 0x4, scoped, tag = 'scoped memory for tts_forward.17']
  #allocation4 [shape = 'u8[512]{0}', space=smem, size = 0x200, scoped, tag = 'prefetched SMEM operand 0']
  %s0 = inlined_call_operand.vmem [shape: s32[2], index: 0, kind: input, shape index: {}]
  %s1 = inlined_call_operand.vmem [shape: bf16[2,16,128], index: 1, kind: input, shape index: {}]
  %s2 = inlined_call_operand.vmem [shape: bf16[128,384], index: 2, kind: input, shape index: {}]
  %s3 = inlined_call_operand.vmem [shape: f32[1,384], index: 3, kind: input, shape index: {}]
  %s4 = inlined_call_operand.vmem [shape: bf16[128,128], index: 4, kind: input, shape index: {}]
  %s5 = inlined_call_operand.vmem [shape: f32[1,128], index: 5, kind: input, shape index: {}]
  %s6 = inlined_call_operand.vmem [shape: f32[1,128], index: 6, kind: input, shape index: {}]
  %s7 = inlined_call_operand.vmem [shape: f32[1,128], index: 7, kind: input, shape index: {}]
  %s8 = inlined_call_operand.vmem [shape: bf16[2,16,128], index: 8, kind: output, shape index: {}]
  %s9 = sld [smem:[#allocation0]]
  $region61: #{tts_forward.17} parent=0
    _
  %s11 = ssub.s32 1, %s9
  %s12 = scalar_select 0, %s11, %s9
  %s13 = sshll.u32 %s0, 4
  %s14 = int_to_ptr.vmem [resolvable:$true] %s13
  %16 = dma.vmem_to_smem %s14, 16, [#allocation4], [#allocation3]
  %17 = dma.done [#allocation3], 16
  %18 = sfence
  loop: start=0, step=1, limit=4
  $region2: #{tts_forward.17} parent=0 // loop_pre_header
    _
  $region3: #{tts_forward.17} parent=0 // loop_header
    %s20 = sphi 0, %s24
    %p21 = scmp.ge.s32.totalorder %s20, 4
    %s30 = sphi 0, %s32
    %s33 = sphi 0, %s30
    %s34 = sphi 0, %s33
    %s50 = sphi 0, %s34
    %s54 = sphi 0, %s54
    %s56 = sphi 0, %s54
    %s57 = sphi 0, %s56
    %s71 = sphi 0, %s57
    %s75 = sphi 0, %s75
    %s77 = sphi 0, %s75
    %s78 = sphi 0, %s77
    %s92 = sphi 0, %s78
    %s96 = sphi 0, %s96
    %s98 = sphi 0, %s96
    %s99 = sphi 0, %s98
    %s113 = sphi 0, %s99
    %s117 = sphi 0, %s117
    %s119 = sphi 0, %s117
    %s120 = sphi 0, %s119
    %s134 = sphi 0, %s120
    %s138 = sphi 0, %s138
    %s140 = sphi 0, %s138
    %s141 = sphi 0, %s140
    %s155 = sphi 0, %s141
    %s159 = sphi 0, %s159
    %s161 = sphi 0, %s159
    %s162 = sphi 0, %s161
    %s176 = sphi 0, %s162
    %s182 = sphi 0, %s184
    %s185 = sphi 0, %s182
    %s186 = sphi 0, %s185
    %s202 = sphi 0, %s186
  $region4: #{tts_forward.17} parent=0 // loop_header_branch
    %23 = sbr.rel (%p21) target = $region8
  $region5: #{tts_forward.17} parent=0 // loop_body
    %s25 = ssub.s32 %s20, 1
    %s26 = ssub.s32 %s20, 2
    %s27 = sadd.s32 %s20, 1
    %s28 = ssub.s32 %s20, %s27
    %p29 = scmp.eq.s32.totalorder %s28, 0
    %s31 = sadd.s32 %s30, 1
    %s32 = scalar_select %p29, %s30, %s31
    %p35 = pneg %p29
    %p36 = scmp.eq.s32.totalorder %s20, 1
    %p37 = por %p35, %p36
    %p38 = scmp.ne.s32.totalorder %s30, %s33
    %p39 = scmp.eq.s32.totalorder %s20, 0
    %p40 = por %p38, %p39
    %p41 = scmp.ne.s32.totalorder %s30, %s33
    %p42 = scmp.eq.s32.totalorder %s25, 1
    %p43 = por %p41, %p42
    %p44 = scmp.ne.s32.totalorder %s33, %s34
    %p45 = scmp.eq.s32.totalorder %s25, 0
    %p46 = por %p44, %p45
    %p47 = scmp.ne.s32.totalorder %s33, %s34
    %p48 = scmp.eq.s32.totalorder %s26, 1
    %p49 = por %p47, %p48
    %p51 = scmp.ne.s32.totalorder %s34, %s50
    %p52 = scmp.eq.s32.totalorder %s26, 0
    %p53 = por %p51, %p52
    %s55 = sadd.s32 %s54, 1
    %p58 = scmp.eq.s32.totalorder %s20, 1
    %p59 = scmp.ne.s32.totalorder %s54, %s56
    %p60 = scmp.eq.s32.totalorder %s20, 0
    %p61 = por %p59, %p60
    %p62 = scmp.ne.s32.totalorder %s54, %s56
    %p63 = scmp.eq.s32.totalorder %s25, 1
    %p64 = por %p62, %p63
    %p65 = scmp.ne.s32.totalorder %s56, %s57
    %p66 = scmp.eq.s32.totalorder %s25, 0
    %p67 = por %p65, %p66
    %p68 = scmp.ne.s32.totalorder %s56, %s57
    %p69 = scmp.eq.s32.totalorder %s26, 1
    %p70 = por %p68, %p69
    %p72 = scmp.ne.s32.totalorder %s57, %s71
    %p73 = scmp.eq.s32.totalorder %s26, 0
    %p74 = por %p72, %p73
    %s76 = sadd.s32 %s75, 1
    %p79 = scmp.eq.s32.totalorder %s20, 1
    %p80 = scmp.ne.s32.totalorder %s75, %s77
    %p81 = scmp.eq.s32.totalorder %s20, 0
    %p82 = por %p80, %p81
    %p83 = scmp.ne.s32.totalorder %s75, %s77
    %p84 = scmp.eq.s32.totalorder %s25, 1
    %p85 = por %p83, %p84
    %p86 = scmp.ne.s32.totalorder %s77, %s78
    %p87 = scmp.eq.s32.totalorder %s25, 0
    %p88 = por %p86, %p87
    %p89 = scmp.ne.s32.totalorder %s77, %s78
    %p90 = scmp.eq.s32.totalorder %s26, 1
    %p91 = por %p89, %p90
    %p93 = scmp.ne.s32.totalorder %s78, %s92
    %p94 = scmp.eq.s32.totalorder %s26, 0
    %p95 = por %p93, %p94
    %s97 = sadd.s32 %s96, 1
    %p100 = scmp.eq.s32.totalorder %s20, 1
    %p101 = scmp.ne.s32.totalorder %s96, %s98
    %p102 = scmp.eq.s32.totalorder %s20, 0
    %p103 = por %p101, %p102
    %p104 = scmp.ne.s32.totalorder %s96, %s98
    %p105 = scmp.eq.s32.totalorder %s25, 1
    %p106 = por %p104, %p105
    %p107 = scmp.ne.s32.totalorder %s98, %s99
    %p108 = scmp.eq.s32.totalorder %s25, 0
    %p109 = por %p107, %p108
    %p110 = scmp.ne.s32.totalorder %s98, %s99
    %p111 = scmp.eq.s32.totalorder %s26, 1
    %p112 = por %p110, %p111
    %p114 = scmp.ne.s32.totalorder %s99, %s113
    %p115 = scmp.eq.s32.totalorder %s26, 0
    %p116 = por %p114, %p115
    %s118 = sadd.s32 %s117, 1
    %p121 = scmp.eq.s32.totalorder %s20, 1
    %p122 = scmp.ne.s32.totalorder %s117, %s119
    %p123 = scmp.eq.s32.totalorder %s20, 0
    %p124 = por %p122, %p123
    %p125 = scmp.ne.s32.totalorder %s117, %s119
    %p126 = scmp.eq.s32.totalorder %s25, 1
    %p127 = por %p125, %p126
    %p128 = scmp.ne.s32.totalorder %s119, %s120
    %p129 = scmp.eq.s32.totalorder %s25, 0
    %p130 = por %p128, %p129
    %p131 = scmp.ne.s32.totalorder %s119, %s120
    %p132 = scmp.eq.s32.totalorder %s26, 1
    %p133 = por %p131, %p132
    %p135 = scmp.ne.s32.totalorder %s120, %s134
    %p136 = scmp.eq.s32.totalorder %s26, 0
    %p137 = por %p135, %p136
    %s139 = sadd.s32 %s138, 1
    %p142 = scmp.eq.s32.totalorder %s20, 1
    %p143 = scmp.ne.s32.totalorder %s138, %s140
    %p144 = scmp.eq.s32.totalorder %s20, 0
    %p145 = por %p143, %p144
    %p146 = scmp.ne.s32.totalorder %s138, %s140
    %p147 = scmp.eq.s32.totalorder %s25, 1
    %p148 = por %p146, %p147
    %p149 = scmp.ne.s32.totalorder %s140, %s141
    %p150 = scmp.eq.s32.totalorder %s25, 0
    %p151 = por %p149, %p150
    %p152 = scmp.ne.s32.totalorder %s140, %s141
    %p153 = scmp.eq.s32.totalorder %s26, 1
    %p154 = por %p152, %p153
    %p156 = scmp.ne.s32.totalorder %s141, %s155
    %p157 = scmp.eq.s32.totalorder %s26, 0
    %p158 = por %p156, %p157
    %s160 = sadd.s32 %s159, 1
    %p163 = scmp.eq.s32.totalorder %s20, 1
    %p164 = scmp.ne.s32.totalorder %s159, %s161
    %p165 = scmp.eq.s32.totalorder %s20, 0
    %p166 = por %p164, %p165
    %p167 = scmp.ne.s32.totalorder %s159, %s161
    %p168 = scmp.eq.s32.totalorder %s25, 1
    %p169 = por %p167, %p168
    %p170 = scmp.ne.s32.totalorder %s161, %s162
    %p171 = scmp.eq.s32.totalorder %s25, 0
    %p172 = por %p170, %p171
    %p173 = scmp.ne.s32.totalorder %s161, %s162
    %p174 = scmp.eq.s32.totalorder %s26, 1
    %p175 = por %p173, %p174
    %p177 = scmp.ne.s32.totalorder %s162, %s176
    %p178 = scmp.eq.s32.totalorder %s26, 0
    %p179 = por %p177, %p178
    %s180 = ssub.s32 %s20, %s27
    %p181 = scmp.eq.s32.totalorder %s180, 0
    %s183 = sadd.s32 %s182, 1
    %s184 = scalar_select %p181, %s182, %s183
    %p187 = pneg %p181
    %p188 = scmp.eq.s32.totalorder %s20, 1
    %p189 = por %p187, %p188
    %p190 = scmp.ne.s32.totalorder %s182, %s185
    %p191 = scmp.eq.s32.totalorder %s20, 0
    %p192 = por %p190, %p191
    %p193 = scmp.ne.s32.totalorder %s182, %s185
    %p194 = scmp.eq.s32.totalorder %s25, 1
    %p195 = por %p193, %p194
    %p196 = scmp.ne.s32.totalorder %s185, %s186
    %p197 = scmp.eq.s32.totalorder %s25, 0
    %p198 = por %p196, %p197
    %p199 = scmp.ne.s32.totalorder %s185, %s186
    %p200 = scmp.eq.s32.totalorder %s26, 1
    %p201 = por %p199, %p200
    %p203 = scmp.ne.s32.totalorder %s186, %s202
    %p204 = scmp.eq.s32.totalorder %s26, 0
    %p205 = por %p203, %p204
    %p206 = scmp.le.s32.totalorder 1, %s20
    %p207 = scmp.lt.s32.totalorder %s20, 3
    %p208 = pnand %p206, %p207
    %p209 = pneg %p208
    // Predicated region
    $region9: #{tts_forward.17} parent=5 // pred_check
      _
    $region10: #{tts_forward.17} parent=5 // pred_check_branch
      %211 = sbr.rel (%p208) target = $region12
    $region11: #{tts_forward.17} parent=5 // pred_region
      %s212 = ssub.s32 %s20, 1
      // Predicated region
      $region13: #{tts_forward.17} parent=11 // pred_check
        %p213 = pneg %p67
      $region14: #{tts_forward.17} parent=11 // pred_check_branch
        %215 = sbr.rel (%p213) target = $region16
      $region15: #{tts_forward.17} parent=11 // pred_region
        _
      $region16: #{tts_forward.17} parent=11 // pred_fallthru
        _
      // Predicated region
      $region17: #{tts_forward.17} parent=11 // pred_check
        %p216 = pneg %p88
      $region18: #{tts_forward.17} parent=11 // pred_check_branch
        %218 = sbr.rel (%p216) target = $region20
      $region19: #{tts_forward.17} parent=11 // pred_region
        _
      $region20: #{tts_forward.17} parent=11 // pred_fallthru
        _
      // Predicated region
      $region21: #{tts_forward.17} parent=11 // pred_check
        %p219 = pneg %p109
      $region22: #{tts_forward.17} parent=11 // pred_check_branch
        %221 = sbr.rel (%p219) target = $region24
      $region23: #{tts_forward.17} parent=11 // pred_region
        _
      $region24: #{tts_forward.17} parent=11 // pred_fallthru
        _
      // Predicated region
      $region25: #{tts_forward.17} parent=11 // pred_check
        %p222 = pneg %p130
      $region26: #{tts_forward.17} parent=11 // pred_check_branch
        %224 = sbr.rel (%p222) target = $region28
      $region27: #{tts_forward.17} parent=11 // pred_region
        _
      $region28: #{tts_forward.17} parent=11 // pred_fallthru
        _
      // Predicated region
      $region29: #{tts_forward.17} parent=11 // pred_check
        %p225 = pneg %p151
      $region30: #{tts_forward.17} parent=11 // pred_check_branch
        %227 = sbr.rel (%p225) target = $region32
      $region31: #{tts_forward.17} parent=11 // pred_region
        _
      $region32: #{tts_forward.17} parent=11 // pred_fallthru
        _
      // Predicated region
      $region33: #{tts_forward.17} parent=11 // pred_check
        %p228 = pneg %p172
      $region34: #{tts_forward.17} parent=11 // pred_check_branch
        %230 = sbr.rel (%p228) target = $region36
      $region35: #{tts_forward.17} parent=11 // pred_region
        _
      $region36: #{tts_forward.17} parent=11 // pred_fallthru
        _
    $region12: #{tts_forward.17} parent=5 // pred_fallthru
      _
    %p231 = scmp.lt.s32.totalorder %s20, 2
    // Predicated region
    $region37: #{tts_forward.17} parent=5 // pred_check
      %p232 = pneg %p231
    $region38: #{tts_forward.17} parent=5 // pred_check_branch
      %234 = sbr.rel (%p232) target = $region40
    $region39: #{tts_forward.17} parent=5 // pred_region
      // Predicated region
      $region41: #{tts_forward.17} parent=39 // pred_check
        %p235 = pneg %p40
      $region42: #{tts_forward.17} parent=39 // pred_check_branch
        %237 = sbr.rel (%p235) target = $region44
      $region43: #{tts_forward.17} parent=39 // pred_region
        %p238 = scmp.lt.s32.totalorder %s20, 1
        %s239 = scalar_select %p238, %s20, 1
        %s240 = smul.addr %s239, 2
        %s241 = smul.addr %s240, 4
        %s242 = scalar_lea.vmem %s1, %s241
      $region44: #{tts_forward.17} parent=39 // pred_fallthru
        _
    $region40: #{tts_forward.17} parent=5 // pred_fallthru
      _
    %p243 = scmp.le.s32.totalorder 1, %s20
    %p244 = scmp.lt.s32.totalorder %s20, 3
    %p245 = pnand %p243, %p244
    %p246 = pneg %p245
    // Predicated region
    $region45: #{tts_forward.17} parent=5 // pred_check
      _
    $region46: #{tts_forward.17} parent=5 // pred_check_branch
      %248 = sbr.rel (%p245) target = $region48
    $region47: #{tts_forward.17} parent=5 // pred_region
      %s249 = ssub.s32 %s20, 1
      %p250 = scmp.lt.s32.totalorder %s25, 1
      %s251 = scalar_select %p250, %s25, 1
      %s252 = smul.addr %s251, 2
      %s253 = smul.addr %s252, 4
      %s254 = scalar_lea.vmem %s1, %s253
      %p255 = pneg %p46
      %p256 = pneg %p43
      %p257 = pneg %p67
      %p258 = pneg %p64
      %p259 = pneg %p88
      %p260 = pneg %p85
      %p261 = pneg %p109
      %p262 = pneg %p106
      %p263 = pneg %p130
      %p264 = pneg %p127
      %p265 = pneg %p151
      %p266 = pneg %p148
      %p267 = pneg %p172
      %p268 = pneg %p169
      %p269 = pneg %p198
      %p270 = pneg %p195
      %p271 = scmp.lt.s32.totalorder %s25, 1
      %s272 = scalar_select %p271, %s25, 1
      %s273 = smul.addr %s272, 2
      %s274 = smul.addr %s273, 4
      %s275 = scalar_lea.vmem %s8, %s274
      %p276 = scmp.lt.s32.totalorder %s25, 1
      %s277 = scalar_select %p276, %s25, 1
      %s278 = smul.addr %s277, 2
      %s279 = smul.addr %s278, 4
      %s280 = scalar_lea.vmem %s1, %s279
      %p281 = scmp.lt.s32.totalorder %s25, 1
      %s282 = scalar_select %p281, %s25, 1
      %s283 = smul.addr %s282, 2
      %s284 = smul.addr %s283, 4
      %s285 = scalar_lea.vmem %s8, %s284
      %v287 = vld [vmem:[%s280] sm:$0xf]
      %v288 = vld [vmem:[%s280 + $0x4] sm:$0xf]
      %v289 = vunpack.c.l.bf16 %v287
      %v290 = vunpack.c.l.bf16 %v288
      %v291 = vld [vmem:[%s2] sm:$0xff]
      %v292 = vld [vmem:[%s2 + $0x8] sm:$0xf]
      %v293 = vld [vmem:[%s2 + $0xc] sm:$0xff]
      %v294 = vld [vmem:[%s2 + $0x14] sm:$0xf]
      %v295 = vld [vmem:[%s2 + $0x18] sm:$0xff]
      %v296 = vld [vmem:[%s2 + $0x20] sm:$0xf]
      %v297 = vld [vmem:[%s2 + $0x24] sm:$0xff]
      %v298 = vld [vmem:[%s2 + $0x2c] sm:$0xf]
      %v299 = vld [vmem:[%s2 + $0x30] sm:$0xff]
      %v300 = vld [vmem:[%s2 + $0x38] sm:$0xf]
      %v301 = vld [vmem:[%s2 + $0x3c] sm:$0xff]
      %v302 = vld [vmem:[%s2 + $0x44] sm:$0xf]
      %v303 = vld [vmem:[%s2 + $0x48] sm:$0xff]
      %v304 = vld [vmem:[%s2 + $0x50] sm:$0xf]
      %v305 = vld [vmem:[%s2 + $0x54] sm:$0xff]
      %v306 = vld [vmem:[%s2 + $0x5c] sm:$0xf]
      %v307 = vld [vmem:[%s2 + $0x60] sm:$0xff]
      %v308 = vld [vmem:[%s2 + $0x68] sm:$0xf]
      %v309 = vld [vmem:[%s2 + $0x6c] sm:$0xff]
      %v310 = vld [vmem:[%s2 + $0x74] sm:$0xf]
      %v311 = vld [vmem:[%s2 + $0x78] sm:$0xff]
      %v312 = vld [vmem:[%s2 + $0x80] sm:$0xf]
      %v313 = vld [vmem:[%s2 + $0x84] sm:$0xff]
      %v314 = vld [vmem:[%s2 + $0x8c] sm:$0xf]
      %v315 = vld [vmem:[%s2 + $0x90] sm:$0xff]
      %v316 = vld [vmem:[%s2 + $0x98] sm:$0xf]
      %v317 = vld [vmem:[%s2 + $0x9c] sm:$0xff]
      %v318 = vld [vmem:[%s2 + $0xa4] sm:$0xf]
      %v319 = vld [vmem:[%s2 + $0xa8] sm:$0xff]
      %v320 = vld [vmem:[%s2 + $0xb0] sm:$0xf]
      %v321 = vld [vmem:[%s2 + $0xb4] sm:$0xff]
      %v322 = vld [vmem:[%s2 + $0xbc] sm:$0xf]
      %v323 = vld [vmem:[%s3] sm:$0x7]
      %v325 = vlaneseq
      %v326 = vshrl.u32 %v325, 7
      %v327 = vsub.s32 0, %v326
      %v328 = vrot.slane %v323, %v327
      %v329 = vlaneseq
      %v330 = vshrl.u32 %v329, 7
      %v331 = vsub.s32 1, %v330
      %v332 = vrot.slane %v323, %v331
      %v333 = vlaneseq
      %v334 = vshrl.u32 %v333, 7
      %v335 = vsub.s32 2, %v334
      %v336 = vrot.slane %v323, %v335
      %v342 = vunpack.c.l.b16 %v287
      %v343 = vunpack.c.l.b16 %v288
      %v344 = vpack.c.b16 %v343, %v342
      %v378 = vunpack.c.l.b16 %v291
      %v379 = vunpack.c.h.b16 %v291
      %v380 = vunpack.c.l.b16 %v292
      %v381 = vunpack.c.l.b16 %v293
      %v382 = vunpack.c.h.b16 %v293
      %v383 = vunpack.c.l.b16 %v294
      %v384 = vunpack.c.l.b16 %v295
      %v385 = vunpack.c.h.b16 %v295
      %v386 = vunpack.c.l.b16 %v296
      %v387 = vunpack.c.l.b16 %v297
      %v388 = vunpack.c.h.b16 %v297
      %v389 = vunpack.c.l.b16 %v298
      %v390 = vunpack.c.l.b16 %v299
      %v391 = vunpack.c.h.b16 %v299
      %v392 = vunpack.c.l.b16 %v300
      %v393 = vunpack.c.l.b16 %v301
      %v394 = vunpack.c.h.b16 %v301
      %v395 = vunpack.c.l.b16 %v302
      %v396 = vunpack.c.l.b16 %v303
      %v397 = vunpack.c.h.b16 %v303
      %v398 = vunpack.c.l.b16 %v304
      %v399 = vunpack.c.l.b16 %v305
      %v400 = vunpack.c.h.b16 %v305
      %v401 = vunpack.c.l.b16 %v306
      %v402 = vunpack.c.l.b16 %v307
      %v403 = vunpack.c.h.b16 %v307
      %v404 = vunpack.c.l.b16 %v308
      %v405 = vunpack.c.l.b16 %v309
      %v406 = vunpack.c.h.b16 %v309
      %v407 = vunpack.c.l.b16 %v310
      %v408 = vunpack.c.l.b16 %v311
      %v409 = vunpack.c.h.b16 %v311
      %v410 = vunpack.c.l.b16 %v312
      %v411 = vunpack.c.l.b16 %v313
      %v412 = vunpack.c.h.b16 %v313
      %v413 = vunpack.c.l.b16 %v314
      %v414 = vunpack.c.l.b16 %v315
      %v415 = vunpack.c.h.b16 %v315
      %v416 = vunpack.c.l.b16 %v316
      %v417 = vunpack.c.l.b16 %v317
      %v418 = vunpack.c.h.b16 %v317
      %v419 = vunpack.c.l.b16 %v318
      %v420 = vunpack.c.l.b16 %v319
      %v421 = vunpack.c.h.b16 %v319
      %v422 = vunpack.c.l.b16 %v320
      %v423 = vunpack.c.l.b16 %v321
      %v424 = vunpack.c.h.b16 %v321
      %v425 = vunpack.c.l.b16 %v322
      %v426 = vpack.c.b16 %v381, %v378
      %v427 = vpack.c.b16 %v382, %v379
      %v428 = vpack.c.b16 %v383, %v380
      %v429 = vpack.c.b16 %v387, %v384
      %v430 = vpack.c.b16 %v388, %v385
      %v431 = vpack.c.b16 %v389, %v386
      %v432 = vpack.c.b16 %v393, %v390
      %v433 = vpack.c.b16 %v394, %v391
      %v434 = vpack.c.b16 %v395, %v392
      %v435 = vpack.c.b16 %v399, %v396
      %v436 = vpack.c.b16 %v400, %v397
      %v437 = vpack.c.b16 %v401, %v398
      %v438 = vpack.c.b16 %v405, %v402
      %v439 = vpack.c.b16 %v406, %v403
      %v440 = vpack.c.b16 %v407, %v404
      %v441 = vpack.c.b16 %v411, %v408
      %v442 = vpack.c.b16 %v412, %v409
      %v443 = vpack.c.b16 %v413, %v410
      %v444 = vpack.c.b16 %v417, %v414
      %v445 = vpack.c.b16 %v418, %v415
      %v446 = vpack.c.b16 %v419, %v416
      %v447 = vpack.c.b16 %v423, %v420
      %v448 = vpack.c.b16 %v424, %v421
      %v449 = vpack.c.b16 %v425, %v422
      %474 = vmatprep.subr.bf16.mxu0 %v427
      %475 = vmatpush1.bf16.msra.mxu0 %v426
      %476 = vmatprep.subr.bf16.mxu0 %v430
      %477 = vmatpush1.bf16.msra.mxu0 %v429
      %478 = vmatprep.subr.bf16.mxu0 %v433
      %479 = vmatpush1.bf16.msra.mxu0 %v432
      %480 = vmatprep.subr.bf16.mxu0 %v436
      %481 = vmatpush1.bf16.msra.mxu0 %v435
      %482 = vmatprep.subr.bf16.mxu0 %v439
      %483 = vmatpush1.bf16.msra.mxu0 %v438
      %484 = vmatprep.subr.bf16.mxu0 %v442
      %485 = vmatpush1.bf16.msra.mxu0 %v441
      %486 = vmatprep.subr.bf16.mxu0 %v445
      %487 = vmatpush1.bf16.msra.mxu0 %v444
      %488 = vmatprep.subr.bf16.mxu0 %v448
      %489 = vmatpush1.bf16.msra.mxu0 %v447
      %490 = vmatprep.subr.bf16.mxu0 0
      %491 = vmatpush1.bf16.msra.mxu0 0
      %492 = vmatprep.subr.bf16.mxu0 0
      %493 = vmatpush1.bf16.msra.mxu0 0
      %494 = vmatprep.subr.bf16.mxu0 0
      %495 = vmatpush1.bf16.msra.mxu0 0
      %496 = vmatprep.subr.bf16.mxu0 0
      %497 = vmatpush1.bf16.msra.mxu0 0
      %498 = vmatprep.subr.bf16.mxu0 0
      %499 = vmatpush1.bf16.msra.mxu0 0
      %500 = vmatprep.subr.bf16.mxu0 0
      %501 = vmatpush1.bf16.msra.mxu0 0
      %502 = vmatprep.subr.bf16.mxu0 0
      %503 = vmatpush1.bf16.msra.mxu0 0
      %504 = vmatprep.subr.bf16.mxu0 0
      %505 = vmatpush1.bf16.msra.mxu0 0
      %506 = vmatprep.mubr.bf16.mxu0 0
      %507 = vmatmul.mubr.bf16.gmra.mrb[0].mxu0 %v344
      %v508 = vpop.f32.mrb[0].mxu0
      %v509 = vadd.f32 %v328, %v508
      %v510 = vpop.f32.mrb[0].mxu0
      %v511 = vadd.f32 %v332, %v510
      %v512 = vpop.f32.mrb[0].mxu0
      %v513 = vadd.f32 %v328, %v512
      %v514 = vpop.f32.mrb[0].mxu0
      %v515 = vadd.f32 %v332, %v514
      %516 = vdwg.mxu0
      %517 = vmatprep.subr.bf16.mxu0 0
      %518 = vmatpush1.bf16.msra.mxu0 %v428
      %519 = vmatprep.subr.bf16.mxu0 0
      %520 = vmatpush1.bf16.msra.mxu0 %v431
      %521 = vmatprep.subr.bf16.mxu0 0
      %522 = vmatpush1.bf16.msra.mxu0 %v434
      %523 = vmatprep.subr.bf16.mxu0 0
      %524 = vmatpush1.bf16.msra.mxu0 %v437
      %525 = vmatprep.subr.bf16.mxu0 0
      %526 = vmatpush1.bf16.msra.mxu0 %v440
      %527 = vmatprep.subr.bf16.mxu0 0
      %528 = vmatpush1.bf16.msra.mxu0 %v443
      %529 = vmatprep.subr.bf16.mxu0 0
      %530 = vmatpush1.bf16.msra.mxu0 %v446
      %531 = vmatprep.subr.bf16.mxu0 0
      %532 = vmatpush1.bf16.msra.mxu0 %v449
      %533 = vmatprep.subr.bf16.mxu0 0
      %534 = vmatpush1.bf16.msra.mxu0 0
      %535 = vmatprep.subr.bf16.mxu0 0
      %536 = vmatpush1.bf16.msra.mxu0 0
      %537 = vmatprep.subr.bf16.mxu0 0
      %538 = vmatpush1.bf16.msra.mxu0 0
      %539 = vmatprep.subr.bf16.mxu0 0
      %540 = vmatpush1.bf16.msra.mxu0 0
      %541 = vmatprep.subr.bf16.mxu0 0
      %542 = vmatpush1.bf16.msra.mxu0 0
      %543 = vmatprep.subr.bf16.mxu0 0
      %544 = vmatpush1.bf16.msra.mxu0 0
      %545 = vmatprep.subr.bf16.mxu0 0
      %546 = vmatpush1.bf16.msra.mxu0 0
      %547 = vmatprep.subr.bf16.mxu0 0
      %548 = vmatpush1.bf16.msra.mxu0 0
      %549 = vmatprep.mubr.bf16.mxu0 0
      %550 = vmatmul.mubr.bf16.gmra.mrb[0].mxu0 %v344
      %v551 = vpop.f32.mrb[0].mxu0
      %v552 = vadd.f32 %v336, %v551
      %v553 = vpop.f32.mrb[0].mxu0
      %v554 = vpop.f32.mrb[0].mxu0
      %v555 = vadd.f32 %v336, %v554
      %v556 = vpop.f32.mrb[0].mxu0
      %557 = vdwg.mxu0
      %v558 = vmul.f32 %v509, 0.17677669
      %v559 = vmul.f32 %v513, 0.17677669
      %s560 = sld [smem:[#allocation4 + %s25]]
      %v561 = vlaneseq
      %v562 = vand.u32 %v561, 127
      %v563 = vstv %s560
      %vm564 = vcmp.lt.s32.totalorder %v562, %v563
      %v565 = vlaneseq
      %v566 = vshrl.u32 %v565, 7
      %v567 = vadd.s32 %v566, 8
      %vm568 = vcmp.ge.s32.totalorder %v566, %v562
      %vm569 = vcmp.ge.s32.totalorder %v567, %v562
      %vm570 = vmand %vm564, %vm568
      %vm571 = vmand %vm564, %vm569
      %v572 = vpack.c.bf16 %v559, %v558
      %v573 = vpack.c.bf16 %v515, %v511
      %v574 = vpack.c.bf16 %v555, %v552
      %vm575 = vcmask 261120
      %v577 = vsel %vm575, %v572, 0
      %v580 = vsel %vm575, %v573, 0
      %582 = vmatprep.subr.bf16.mxu0 0
      %583 = vmatpush1.bf16.xpose.msra.mxu0 %v580
      %584 = vmatprep.subr.bf16.mxu0 0
      %585 = vmatpush1.bf16.xpose.msra.mxu0 0
      %586 = vmatprep.subr.bf16.mxu0 0
      %587 = vmatpush1.bf16.xpose.msra.mxu0 0
      %588 = vmatprep.subr.bf16.mxu0 0
      %589 = vmatpush1.bf16.xpose.msra.mxu0 0
      %590 = vmatprep.subr.bf16.mxu0 0
      %591 = vmatpush1.bf16.xpose.msra.mxu0 0
      %592 = vmatprep.subr.bf16.mxu0 0
      %593 = vmatpush1.bf16.xpose.msra.mxu0 0
      %594 = vmatprep.subr.bf16.mxu0 0
      %595 = vmatpush1.bf16.xpose.msra.mxu0 0
      %596 = vmatprep.subr.bf16.mxu0 0
      %597 = vmatpush1.bf16.xpose.msra.mxu0 0
      %598 = vmatprep.subr.bf16.mxu0 0
      %599 = vmatpush1.bf16.xpose.msra.mxu0 0
      %600 = vmatprep.subr.bf16.mxu0 0
      %601 = vmatpush1.bf16.xpose.msra.mxu0 0
      %602 = vmatprep.subr.bf16.mxu0 0
      %603 = vmatpush1.bf16.xpose.msra.mxu0 0
      %604 = vmatprep.subr.bf16.mxu0 0
      %605 = vmatpush1.bf16.xpose.msra.mxu0 0
      %606 = vmatprep.subr.bf16.mxu0 0
      %607 = vmatpush1.bf16.xpose.msra.mxu0 0
      %608 = vmatprep.subr.bf16.mxu0 0
      %609 = vmatpush1.bf16.xpose.msra.mxu0 0
      %610 = vmatprep.subr.bf16.mxu0 0
      %611 = vmatpush1.bf16.xpose.msra.mxu0 0
      %612 = vmatprep.subr.bf16.mxu0 0
      %613 = vmatpush1.bf16.xpose.msra.mxu0 0
      %614 = vmatprep.mubr.bf16.mxu0 0
      %615 = vmatmul.mubr.bf16.gmra.mrb[0].mxu0 %v577
      %v616 = vpop.f32.mrb[0].mxu0
      %v617 = vadd.f32 0.0, %v616
      %v618 = vpop.f32.mrb[0].mxu0
      %v619 = vpop.f32.mrb[0].mxu0
      %v620 = vadd.f32 0.0, %v619
      %v621 = vpop.f32.mrb[0].mxu0
      %622 = vdwg.mxu0
      %v623 = vsel %vm570, %v617, -1e+09
      %v624 = vsel %vm571, %v620, -1e+09
      %vm625 = vcmask 130048
      %v626 = vsel %vm625, %v623, -inf
      %627 = vmax.xlane.f32.xlu0 %v626
      %v628 = vpop.xlane.xlu0 %627
      %v629 = vsel %vm625, %v624, -inf
      %630 = vmax.xlane.f32.xlu0 %v629
      %v631 = vpop.xlane.xlu0 %630
      %v632 = vsub.f32 %v623, %v628
      %v633 = vsub.f32 %v624, %v631
      %v634 = vmul.f32 %v632, 1.442695
      %v635 = vpow.pop %v634
      %v636 = vmul.f32 %v633, 1.442695
      %v637 = vpow.pop %v636
      %v638 = vsel %vm625, %v635, 0.0
      %639 = vadd.xlane.f32.xlu0 %v638
      %v640 = vpop.xlane.xlu0 %639
      %v641 = vsel %vm625, %v637, 0.0
      %642 = vadd.xlane.f32.xlu0 %v641
      %v643 = vpop.xlane.xlu0 %642
      %v644 = vrcp.pop %v640
      %v645 = vrcp.pop %v643
      %v646 = vmul.f32 %v635, %v644
      %v647 = vmul.f32 %v637, %v645
      %v648 = vpack.c.bf16 %v647, %v646
      %v650 = vsel %vm625, %v648, 0
      %652 = vmatprep.subr.bf16.mxu0 0
      %653 = vmatpush1.bf16.msra.mxu0 %v574
      %654 = vmatprep.subr.bf16.mxu0 0
      %655 = vmatpush1.bf16.msra.mxu0 0
      %656 = vmatprep.subr.bf16.mxu0 0
      %657 = vmatpush1.bf16.msra.mxu0 0
      %658 = vmatprep.subr.bf16.mxu0 0
      %659 = vmatpush1.bf16.msra.mxu0 0
      %660 = vmatprep.subr.bf16.mxu0 0
      %661 = vmatpush1.bf16.msra.mxu0 0
      %662 = vmatprep.subr.bf16.mxu0 0
      %663 = vmatpush1.bf16.msra.mxu0 0
      %664 = vmatprep.subr.bf16.mxu0 0
      %665 = vmatpush1.bf16.msra.mxu0 0
      %666 = vmatprep.subr.bf16.mxu0 0
      %667 = vmatpush1.bf16.msra.mxu0 0
      %668 = vmatprep.subr.bf16.mxu0 0
      %669 = vmatpush1.bf16.msra.mxu0 0
      %670 = vmatprep.subr.bf16.mxu0 0
      %671 = vmatpush1.bf16.msra.mxu0 0
      %672 = vmatprep.subr.bf16.mxu0 0
      %673 = vmatpush1.bf16.msra.mxu0 0
      %674 = vmatprep.subr.bf16.mxu0 0
      %675 = vmatpush1.bf16.msra.mxu0 0
      %676 = vmatprep.subr.bf16.mxu0 0
      %677 = vmatpush1.bf16.msra.mxu0 0
      %678 = vmatprep.subr.bf16.mxu0 0
      %679 = vmatpush1.bf16.msra.mxu0 0
      %680 = vmatprep.subr.bf16.mxu0 0
      %681 = vmatpush1.bf16.msra.mxu0 0
      %682 = vmatprep.subr.bf16.mxu0 0
      %683 = vmatpush1.bf16.msra.mxu0 0
      %684 = vmatprep.mubr.bf16.mxu0 0
      %685 = vmatmul.mubr.bf16.gmra.mrb[0].mxu0 %v650
      %v686 = vpop.f32.mrb[0].mxu0
      %v687 = vadd.f32 0.0, %v686
      %v688 = vpop.f32.mrb[0].mxu0
      %v689 = vpop.f32.mrb[0].mxu0
      %v690 = vadd.f32 0.0, %v689
      %v691 = vpop.f32.mrb[0].mxu0
      %692 = vdwg.mxu0
      %693 = vst.msk [vmem:[#allocation2] sm:$0xff] %vm575, %v687
      %694 = vst.msk [vmem:[#allocation2 + $0x8] sm:$0xff] %vm575, %v690
      %696 = vrot.lane.b32.xlu0 %v572, 96
      %v697 = vpop.permute.xlu0 %696
      %699 = vrot.lane.b32.xlu0 %v573, 96
      %v700 = vpop.permute.xlu0 %699
      %v702 = vsel %vm575, %v697, 0
      %v705 = vsel %vm575, %v700, 0
      %707 = vmatprep.subr.bf16.mxu0 0
      %708 = vmatpush1.bf16.xpose.msra.mxu0 %v705
      %709 = vmatprep.subr.bf16.mxu0 0
      %710 = vmatpush1.bf16.xpose.msra.mxu0 0
      %711 = vmatprep.subr.bf16.mxu0 0
      %712 = vmatpush1.bf16.xpose.msra.mxu0 0
      %713 = vmatprep.subr.bf16.mxu0 0
      %714 = vmatpush1.bf16.xpose.msra.mxu0 0
      %715 = vmatprep.subr.bf16.mxu0 0
      %716 = vmatpush1.bf16.xpose.msra.mxu0 0
      %717 = vmatprep.subr.bf16.mxu0 0
      %718 = vmatpush1.bf16.xpose.msra.mxu0 0
      %719 = vmatprep.subr.bf16.mxu0 0
      %720 = vmatpush1.bf16.xpose.msra.mxu0 0
      %721 = vmatprep.subr.bf16.mxu0 0
      %722 = vmatpush1.bf16.xpose.msra.mxu0 0
      %723 = vmatprep.subr.bf16.mxu0 0
      %724 = vmatpush1.bf16.xpose.msra.mxu0 0
      %725 = vmatprep.subr.bf16.mxu0 0
      %726 = vmatpush1.bf16.xpose.msra.mxu0 0
      %727 = vmatprep.subr.bf16.mxu0 0
      %728 = vmatpush1.bf16.xpose.msra.mxu0 0
      %729 = vmatprep.subr.bf16.mxu0 0
      %730 = vmatpush1.bf16.xpose.msra.mxu0 0
      %731 = vmatprep.subr.bf16.mxu0 0
      %732 = vmatpush1.bf16.xpose.msra.mxu0 0
      %733 = vmatprep.subr.bf16.mxu0 0
      %734 = vmatpush1.bf16.xpose.msra.mxu0 0
      %735 = vmatprep.subr.bf16.mxu0 0
      %736 = vmatpush1.bf16.xpose.msra.mxu0 0
      %737 = vmatprep.subr.bf16.mxu0 0
      %738 = vmatpush1.bf16.xpose.msra.mxu0 0
      %739 = vmatprep.mubr.bf16.mxu0 0
      %740 = vmatmul.mubr.bf16.gmra.mrb[0].mxu0 %v702
      %v741 = vpop.f32.mrb[0].mxu0
      %v742 = vadd.f32 0.0, %v741
      %v743 = vpop.f32.mrb[0].mxu0
      %v744 = vpop.f32.mrb[0].mxu0
      %v745 = vadd.f32 0.0, %v744
      %v746 = vpop.f32.mrb[0].mxu0
      %747 = vdwg.mxu0
      %v748 = vsel %vm570, %v742, -1e+09
      %v749 = vsel %vm571, %v745, -1e+09
      %v750 = vsel %vm625, %v748, -inf
      %751 = vmax.xlane.f32.xlu0 %v750
      %v752 = vpop.xlane.xlu0 %751
      %v753 = vsel %vm625, %v749, -inf
      %754 = vmax.xlane.f32.xlu0 %v753
      %v755 = vpop.xlane.xlu0 %754
      %v756 = vsub.f32 %v748, %v752
      %v757 = vsub.f32 %v749, %v755
      %v758 = vmul.f32 %v756, 1.442695
      %v759 = vpow.pop %v758
      %v760 = vmul.f32 %v757, 1.442695
      %v761 = vpow.pop %v760
      %v762 = vsel %vm625, %v759, 0.0
      %763 = vadd.xlane.f32.xlu0 %v762
      %v764 = vpop.xlane.xlu0 %763
      %v765 = vsel %vm625, %v761, 0.0
      %766 = vadd.xlane.f32.xlu0 %v765
      %v767 = vpop.xlane.xlu0 %766
      %v768 = vrcp.pop %v764
      %v769 = vrcp.pop %v767
      %v770 = vmul.f32 %v759, %v768
      %v771 = vmul.f32 %v761, %v769
      %v772 = vpack.c.bf16 %v771, %v770
      %774 = vrot.lane.b32.xlu0 %v574, 96
      %v775 = vpop.permute.xlu0 %774
      %v778 = vsel %vm625, %v772, 0
      %780 = vmatprep.subr.bf16.mxu0 0
      %781 = vmatpush1.bf16.msra.mxu0 %v775
      %782 = vmatprep.subr.bf16.mxu0 0
      %783 = vmatpush1.bf16.msra.mxu0 0
      %784 = vmatprep.subr.bf16.mxu0 0
      %785 = vmatpush1.bf16.msra.mxu0 0
      %786 = vmatprep.subr.bf16.mxu0 0
      %787 = vmatpush1.bf16.msra.mxu0 0
      %788 = vmatprep.subr.bf16.mxu0 0
      %789 = vmatpush1.bf16.msra.mxu0 0
      %790 = vmatprep.subr.bf16.mxu0 0
      %791 = vmatpush1.bf16.msra.mxu0 0
      %792 = vmatprep.subr.bf16.mxu0 0
      %793 = vmatpush1.bf16.msra.mxu0 0
      %794 = vmatprep.subr.bf16.mxu0 0
      %795 = vmatpush1.bf16.msra.mxu0 0
      %796 = vmatprep.subr.bf16.mxu0 0
      %797 = vmatpush1.bf16.msra.mxu0 0
      %798 = vmatprep.subr.bf16.mxu0 0
      %799 = vmatpush1.bf16.msra.mxu0 0
      %800 = vmatprep.subr.bf16.mxu0 0
      %801 = vmatpush1.bf16.msra.mxu0 0
      %802 = vmatprep.subr.bf16.mxu0 0
      %803 = vmatpush1.bf16.msra.mxu0 0
      %804 = vmatprep.subr.bf16.mxu0 0
      %805 = vmatpush1.bf16.msra.mxu0 0
      %806 = vmatprep.subr.bf16.mxu0 0
      %807 = vmatpush1.bf16.msra.mxu0 0
      %808 = vmatprep.subr.bf16.mxu0 0
      %809 = vmatpush1.bf16.msra.mxu0 0
      %810 = vmatprep.subr.bf16.mxu0 0
      %811 = vmatpush1.bf16.msra.mxu0 0
      %812 = vmatprep.mubr.bf16.mxu0 0
      %813 = vmatmul.mubr.bf16.gmra.mrb[0].mxu0 %v778
      %v814 = vpop.f32.mrb[0].mxu0
      %v815 = vadd.f32 0.0, %v814
      %v816 = vpop.f32.mrb[0].mxu0
      %v817 = vpop.f32.mrb[0].mxu0
      %v818 = vadd.f32 0.0, %v817
      %v819 = vpop.f32.mrb[0].mxu0
      %820 = vdwg.mxu0
      %823 = vrot.lane.b32.xlu0 %v815, 32
      %v824 = vpop.permute.xlu0 %823
      %825 = vrot.lane.b32.xlu0 %v818, 32
      %v826 = vpop.permute.xlu0 %825
      %vm829 = vcmask 523520
      %830 = vst.msk [vmem:[#allocation2] sm:$0xff] %vm829, %v824
      %831 = vst.msk [vmem:[#allocation2 + $0x8] sm:$0xff] %vm829, %v826
      %832 = vrot.lane.b32.xlu0 %v572, 64
      %v833 = vpop.permute.xlu0 %832
      %834 = vrot.lane.b32.xlu0 %v573, 64
      %v835 = vpop.permute.xlu0 %834
      %v837 = vsel %vm575, %v833, 0
      %v840 = vsel %vm575, %v835, 0
      %842 = vmatprep.subr.bf16.mxu0 0
      %843 = vmatpush1.bf16.xpose.msra.mxu0 %v840
      %844 = vmatprep.subr.bf16.mxu0 0
      %845 = vmatpush1.bf16.xpose.msra.mxu0 0
      %846 = vmatprep.subr.bf16.mxu0 0
      %847 = vmatpush1.bf16.xpose.msra.mxu0 0
      %848 = vmatprep.subr.bf16.mxu0 0
      %849 = vmatpush1.bf16.xpose.msra.mxu0 0
      %850 = vmatprep.subr.bf16.mxu0 0
      %851 = vmatpush1.bf16.xpose.msra.mxu0 0
      %852 = vmatprep.subr.bf16.mxu0 0
      %853 = vmatpush1.bf16.xpose.msra.mxu0 0
      %854 = vmatprep.subr.bf16.mxu0 0
      %855 = vmatpush1.bf16.xpose.msra.mxu0 0
      %856 = vmatprep.subr.bf16.mxu0 0
      %857 = vmatpush1.bf16.xpose.msra.mxu0 0
      %858 = vmatprep.subr.bf16.mxu0 0
      %859 = vmatpush1.bf16.xpose.msra.mxu0 0
      %860 = vmatprep.subr.bf16.mxu0 0
      %861 = vmatpush1.bf16.xpose.msra.mxu0 0
      %862 = vmatprep.subr.bf16.mxu0 0
      %863 = vmatpush1.bf16.xpose.msra.mxu0 0
      %864 = vmatprep.subr.bf16.mxu0 0
      %865 = vmatpush1.bf16.xpose.msra.mxu0 0
      %866 = vmatprep.subr.bf16.mxu0 0
      %867 = vmatpush1.bf16.xpose.msra.mxu0 0
      %868 = vmatprep.subr.bf16.mxu0 0
      %869 = vmatpush1.bf16.xpose.msra.mxu0 0
      %870 = vmatprep.subr.bf16.mxu0 0
      %871 = vmatpush1.bf16.xpose.msra.mxu0 0
      %872 = vmatprep.subr.bf16.mxu0 0
      %873 = vmatpush1.bf16.xpose.msra.mxu0 0
      %874 = vmatprep.mubr.bf16.mxu0 0
      %875 = vmatmul.mubr.bf16.gmra.mrb[0].mxu0 %v837
      %v876 = vpop.f32.mrb[0].mxu0
      %v877 = vadd.f32 0.0, %v876
      %v878 = vpop.f32.mrb[0].mxu0
      %v879 = vpop.f32.mrb[0].mxu0
      %v880 = vadd.f32 0.0, %v879
      %v881 = vpop.f32.mrb[0].mxu0
      %882 = vdwg.mxu0
      %v883 = vsel %vm570, %v877, -1e+09
      %v884 = vsel %vm571, %v880, -1e+09
      %v885 = vsel %vm625, %v883, -inf
      %886 = vmax.xlane.f32.xlu0 %v885
      %v887 = vpop.xlane.xlu0 %886
      %v888 = vsel %vm625, %v884, -inf
      %889 = vmax.xlane.f32.xlu0 %v888
      %v890 = vpop.xlane.xlu0 %889
      %v891 = vsub.f32 %v883, %v887
      %v892 = vsub.f32 %v884, %v890
      %v893 = vmul.f32 %v891, 1.442695
      %v894 = vpow.pop %v893
      %v895 = vmul.f32 %v892, 1.442695
      %v896 = vpow.pop %v895
      %v897 = vsel %vm625, %v894, 0.0
      %898 = vadd.xlane.f32.xlu0 %v897
      %v899 = vpop.xlane.xlu0 %898
      %v900 = vsel %vm625, %v896, 0.0
      %901 = vadd.xlane.f32.xlu0 %v900
      %v902 = vpop.xlane.xlu0 %901
      %v903 = vrcp.pop %v899
      %v904 = vrcp.pop %v902
      %v905 = vmul.f32 %v894, %v903
      %v906 = vmul.f32 %v896, %v904
      %v907 = vpack.c.bf16 %v906, %v905
      %908 = vrot.lane.b32.xlu0 %v574, 64
      %v909 = vpop.permute.xlu0 %908
      %v912 = vsel %vm625, %v907, 0
      %914 = vmatprep.subr.bf16.mxu0 0
      %915 = vmatpush1.bf16.msra.mxu0 %v909
      %916 = vmatprep.subr.bf16.mxu0 0
      %917 = vmatpush1.bf16.msra.mxu0 0
      %918 = vmatprep.subr.bf16.mxu0 0
      %919 = vmatpush1.bf16.msra.mxu0 0
      %920 = vmatprep.subr.bf16.mxu0 0
      %921 = vmatpush1.bf16.msra.mxu0 0
      %922 = vmatprep.subr.bf16.mxu0 0
      %923 = vmatpush1.bf16.msra.mxu0 0
      %924 = vmatprep.subr.bf16.mxu0 0
      %925 = vmatpush1.bf16.msra.mxu0 0
      %926 = vmatprep.subr.bf16.mxu0 0
      %927 = vmatpush1.bf16.msra.mxu0 0
      %928 = vmatprep.subr.bf16.mxu0 0
      %929 = vmatpush1.bf16.msra.mxu0 0
      %930 = vmatprep.subr.bf16.mxu0 0
      %931 = vmatpush1.bf16.msra.mxu0 0
      %932 = vmatprep.subr.bf16.mxu0 0
      %933 = vmatpush1.bf16.msra.mxu0 0
      %934 = vmatprep.subr.bf16.mxu0 0
      %935 = vmatpush1.bf16.msra.mxu0 0
      %936 = vmatprep.subr.bf16.mxu0 0
      %937 = vmatpush1.bf16.msra.mxu0 0
      %938 = vmatprep.subr.bf16.mxu0 0
      %939 = vmatpush1.bf16.msra.mxu0 0
      %940 = vmatprep.subr.bf16.mxu0 0
      %941 = vmatpush1.bf16.msra.mxu0 0
      %942 = vmatprep.subr.bf16.mxu0 0
      %943 = vmatpush1.bf16.msra.mxu0 0
      %944 = vmatprep.subr.bf16.mxu0 0
      %945 = vmatpush1.bf16.msra.mxu0 0
      %946 = vmatprep.mubr.bf16.mxu0 0
      %947 = vmatmul.mubr.bf16.gmra.mrb[0].mxu0 %v912
      %v948 = vpop.f32.mrb[0].mxu0
      %v949 = vadd.f32 0.0, %v948
      %v950 = vpop.f32.mrb[0].mxu0
      %v951 = vpop.f32.mrb[0].mxu0
      %v952 = vadd.f32 0.0, %v951
      %v953 = vpop.f32.mrb[0].mxu0
      %954 = vdwg.mxu0
      %957 = vrot.lane.b32.xlu0 %v949, 64
      %v958 = vpop.permute.xlu0 %957
      %959 = vrot.lane.b32.xlu0 %v952, 64
      %v960 = vpop.permute.xlu0 %959
      %vm963 = vcmask 785920
      %964 = vst.msk [vmem:[#allocation2] sm:$0xff] %vm963, %v958
      %965 = vst.msk [vmem:[#allocation2 + $0x8] sm:$0xff] %vm963, %v960
      %966 = vrot.lane.b32.xlu0 %v572, 32
      %v967 = vpop.permute.xlu0 %966
      %968 = vrot.lane.b32.xlu0 %v573, 32
      %v969 = vpop.permute.xlu0 %968
      %v971 = vsel %vm575, %v967, 0
      %v974 = vsel %vm575, %v969, 0
      %976 = vmatprep.subr.bf16.mxu0 0
      %977 = vmatpush1.bf16.xpose.msra.mxu0 %v974
      %978 = vmatprep.subr.bf16.mxu0 0
      %979 = vmatpush1.bf16.xpose.msra.mxu0 0
      %980 = vmatprep.subr.bf16.mxu0 0
      %981 = vmatpush1.bf16.xpose.msra.mxu0 0
      %982 = vmatprep.subr.bf16.mxu0 0
      %983 = vmatpush1.bf16.xpose.msra.mxu0 0
      %984 = vmatprep.subr.bf16.mxu0 0
      %985 = vmatpush1.bf16.xpose.msra.mxu0 0
      %986 = vmatprep.subr.bf16.mxu0 0
      %987 = vmatpush1.bf16.xpose.msra.mxu0 0
      %988 = vmatprep.subr.bf16.mxu0 0
      %989 = vmatpush1.bf16.xpose.msra.mxu0 0
      %990 = vmatprep.subr.bf16.mxu0 0
      %991 = vmatpush1.bf16.xpose.msra.mxu0 0
      %992 = vmatprep.subr.bf16.mxu0 0
      %993 = vmatpush1.bf16.xpose.msra.mxu0 0
      %994 = vmatprep.subr.bf16.mxu0 0
      %995 = vmatpush1.bf16.xpose.msra.mxu0 0
      %996 = vmatprep.subr.bf16.mxu0 0
      %997 = vmatpush1.bf16.xpose.msra.mxu0 0
      %998 = vmatprep.subr.bf16.mxu0 0
      %999 = vmatpush1.bf16.xpose.msra.mxu0 0
      %1000 = vmatprep.subr.bf16.mxu0 0
      %1001 = vmatpush1.bf16.xpose.msra.mxu0 0
      %1002 = vmatprep.subr.bf16.mxu0 0
      %1003 = vmatpush1.bf16.xpose.msra.mxu0 0
      %1004 = vmatprep.subr.bf16.mxu0 0
      %1005 = vmatpush1.bf16.xpose.msra.mxu0 0
      %1006 = vmatprep.subr.bf16.mxu0 0
      %1007 = vmatpush1.bf16.xpose.msra.mxu0 0
      %1008 = vmatprep.mubr.bf16.mxu0 0
      %1009 = vmatmul.mubr.bf16.gmra.mrb[0].mxu0 %v971
      %v1010 = vpop.f32.mrb[0].mxu0
      %v1011 = vadd.f32 0.0, %v1010
      %v1012 = vpop.f32.mrb[0].mxu0
      %v1013 = vpop.f32.mrb[0].mxu0
      %v1014 = vadd.f32 0.0, %v1013
      %v1015 = vpop.f32.mrb[0].mxu0
      %1016 = vdwg.mxu0
      %v1017 = vsel %vm570, %v1011, -1e+09
      %v1018 = vsel %vm571, %v1014, -1e+09
      %v1019 = vsel %vm625, %v1017, -inf
      %1020 = vmax.xlane.f32.xlu0 %v1019
      %v1021 = vpop.xlane.xlu0 %1020
      %v1022 = vsel %vm625, %v1018, -inf
      %1023 = vmax.xlane.f32.xlu0 %v1022
      %v1024 = vpop.xlane.xlu0 %1023
      %v1025 = vsub.f32 %v1017, %v1021
      %v1026 = vsub.f32 %v1018, %v1024
      %v1027 = vmul.f32 %v1025, 1.442695
      %v1028 = vpow.pop %v1027
      %v1029 = vmul.f32 %v1026, 1.442695
      %v1030 = vpow.pop %v1029
      %v1031 = vsel %vm625, %v1028, 0.0
      %1032 = vadd.xlane.f32.xlu0 %v1031
      %v1033 = vpop.xlane.xlu0 %1032
      %v1034 = vsel %vm625, %v1030, 0.0
      %1035 = vadd.xlane.f32.xlu0 %v1034
      %v1036 = vpop.xlane.xlu0 %1035
      %v1037 = vrcp.pop %v1033
      %v1038 = vrcp.pop %v1036
      %v1039 = vmul.f32 %v1028, %v1037
      %v1040 = vmul.f32 %v1030, %v1038
      %v1041 = vpack.c.bf16 %v1040, %v1039
      %1042 = vrot.lane.b32.xlu0 %v574, 32
      %v1043 = vpop.permute.xlu0 %1042
      %v1046 = vsel %vm625, %v1041, 0
      %1048 = vmatprep.subr.bf16.mxu0 0
      %1049 = vmatpush1.bf16.msra.mxu0 %v1043
      %1050 = vmatprep.subr.bf16.mxu0 0
      %1051 = vmatpush1.bf16.msra.mxu0 0
      %1052 = vmatprep.subr.bf16.mxu0 0
      %1053 = vmatpush1.bf16.msra.mxu0 0
      %1054 = vmatprep.subr.bf16.mxu0 0
      %1055 = vmatpush1.bf16.msra.mxu0 0
      %1056 = vmatprep.subr.bf16.mxu0 0
      %1057 = vmatpush1.bf16.msra.mxu0 0
      %1058 = vmatprep.subr.bf16.mxu0 0
      %1059 = vmatpush1.bf16.msra.mxu0 0
      %1060 = vmatprep.subr.bf16.mxu0 0
      %1061 = vmatpush1.bf16.msra.mxu0 0
      %1062 = vmatprep.subr.bf16.mxu0 0
      %1063 = vmatpush1.bf16.msra.mxu0 0
      %1064 = vmatprep.subr.bf16.mxu0 0
      %1065 = vmatpush1.bf16.msra.mxu0 0
      %1066 = vmatprep.subr.bf16.mxu0 0
      %1067 = vmatpush1.bf16.msra.mxu0 0
      %1068 = vmatprep.subr.bf16.mxu0 0
      %1069 = vmatpush1.bf16.msra.mxu0 0
      %1070 = vmatprep.subr.bf16.mxu0 0
      %1071 = vmatpush1.bf16.msra.mxu0 0
      %1072 = vmatprep.subr.bf16.mxu0 0
      %1073 = vmatpush1.bf16.msra.mxu0 0
      %1074 = vmatprep.subr.bf16.mxu0 0
      %1075 = vmatpush1.bf16.msra.mxu0 0
      %1076 = vmatprep.subr.bf16.mxu0 0
      %1077 = vmatpush1.bf16.msra.mxu0 0
      %1078 = vmatprep.subr.bf16.mxu0 0
      %1079 = vmatpush1.bf16.msra.mxu0 0
      %1080 = vmatprep.mubr.bf16.mxu0 0
      %1081 = vmatmul.mubr.bf16.gmra.mrb[0].mxu0 %v1046
      %v1082 = vpop.f32.mrb[0].mxu0
      %v1083 = vadd.f32 0.0, %v1082
      %v1084 = vpop.f32.mrb[0].mxu0
      %v1085 = vpop.f32.mrb[0].mxu0
      %v1086 = vadd.f32 0.0, %v1085
      %v1087 = vpop.f32.mrb[0].mxu0
      %1088 = vdwg.mxu0
      %1091 = vrot.lane.b32.xlu0 %v1083, 96
      %v1092 = vpop.permute.xlu0 %1091
      %1093 = vrot.lane.b32.xlu0 %v1086, 96
      %v1094 = vpop.permute.xlu0 %1093
      %vm1097 = vcmask 1048320
      %1098 = vst.msk [vmem:[#allocation2] sm:$0xff] %vm1097, %v1092
      %1099 = vst.msk [vmem:[#allocation2 + $0x8] sm:$0xff] %vm1097, %v1094
      %v1100 = vld [vmem:[#allocation2] sm:$0xff]
      %v1101 = vld [vmem:[#allocation2 + $0x8] sm:$0xff]
      %v1102 = vpack.c.bf16 %v1101, %v1100
      %v1103 = vld [vmem:[%s4] sm:$0xf]
      %v1104 = vld [vmem:[%s4 + $0x4] sm:$0xf]
      %v1105 = vld [vmem:[%s4 + $0x8] sm:$0xf]
      %v1106 = vld [vmem:[%s4 + $0xc] sm:$0xf]
      %v1107 = vld [vmem:[%s4 + $0x10] sm:$0xf]
      %v1108 = vld [vmem:[%s4 + $0x14] sm:$0xf]
      %v1109 = vld [vmem:[%s4 + $0x18] sm:$0xf]
      %v1110 = vld [vmem:[%s4 + $0x1c] sm:$0xf]
      %v1111 = vld [vmem:[%s4 + $0x20] sm:$0xf]
      %v1112 = vld [vmem:[%s4 + $0x24] sm:$0xf]
      %v1113 = vld [vmem:[%s4 + $0x28] sm:$0xf]
      %v1114 = vld [vmem:[%s4 + $0x2c] sm:$0xf]
      %v1115 = vld [vmem:[%s4 + $0x30] sm:$0xf]
      %v1116 = vld [vmem:[%s4 + $0x34] sm:$0xf]
      %v1117 = vld [vmem:[%s4 + $0x38] sm:$0xf]
      %v1118 = vld [vmem:[%s4 + $0x3c] sm:$0xf]
      %v1119 = vld [vmem:[%s5] sm:$0x1]
      %v1121 = vlaneseq
      %v1122 = vshrl.u32 %v1121, 7
      %v1123 = vsub.s32 0, %v1122
      %v1124 = vrot.slane %v1119, %v1123
      %v1142 = vunpack.c.l.b16 %v1103
      %v1143 = vunpack.c.l.b16 %v1104
      %v1144 = vunpack.c.l.b16 %v1105
      %v1145 = vunpack.c.l.b16 %v1106
      %v1146 = vunpack.c.l.b16 %v1107
      %v1147 = vunpack.c.l.b16 %v1108
      %v1148 = vunpack.c.l.b16 %v1109
      %v1149 = vunpack.c.l.b16 %v1110
      %v1150 = vunpack.c.l.b16 %v1111
      %v1151 = vunpack.c.l.b16 %v1112
      %v1152 = vunpack.c.l.b16 %v1113
      %v1153 = vunpack.c.l.b16 %v1114
      %v1154 = vunpack.c.l.b16 %v1115
      %v1155 = vunpack.c.l.b16 %v1116
      %v1156 = vunpack.c.l.b16 %v1117
      %v1157 = vunpack.c.l.b16 %v1118
      %v1158 = vpack.c.b16 %v1143, %v1142
      %v1159 = vpack.c.b16 %v1145, %v1144
      %v1160 = vpack.c.b16 %v1147, %v1146
      %v1161 = vpack.c.b16 %v1149, %v1148
      %v1162 = vpack.c.b16 %v1151, %v1150
      %v1163 = vpack.c.b16 %v1153, %v1152
      %v1164 = vpack.c.b16 %v1155, %v1154
      %v1165 = vpack.c.b16 %v1157, %v1156
      %1174 = vmatprep.subr.bf16.mxu0 0
      %1175 = vmatpush1.bf16.msra.mxu0 %v1158
      %1176 = vmatprep.subr.bf16.mxu0 0
      %1177 = vmatpush1.bf16.msra.mxu0 %v1159
      %1178 = vmatprep.subr.bf16.mxu0 0
      %1179 = vmatpush1.bf16.msra.mxu0 %v1160
      %1180 = vmatprep.subr.bf16.mxu0 0
      %1181 = vmatpush1.bf16.msra.mxu0 %v1161
      %1182 = vmatprep.subr.bf16.mxu0 0
      %1183 = vmatpush1.bf16.msra.mxu0 %v1162
      %1184 = vmatprep.subr.bf16.mxu0 0
      %1185 = vmatpush1.bf16.msra.mxu0 %v1163
      %1186 = vmatprep.subr.bf16.mxu0 0
      %1187 = vmatpush1.bf16.msra.mxu0 %v1164
      %1188 = vmatprep.subr.bf16.mxu0 0
      %1189 = vmatpush1.bf16.msra.mxu0 %v1165
      %1190 = vmatprep.subr.bf16.mxu0 0
      %1191 = vmatpush1.bf16.msra.mxu0 0
      %1192 = vmatprep.subr.bf16.mxu0 0
      %1193 = vmatpush1.bf16.msra.mxu0 0
      %1194 = vmatprep.subr.bf16.mxu0 0
      %1195 = vmatpush1.bf16.msra.mxu0 0
      %1196 = vmatprep.subr.bf16.mxu0 0
      %1197 = vmatpush1.bf16.msra.mxu0 0
      %1198 = vmatprep.subr.bf16.mxu0 0
      %1199 = vmatpush1.bf16.msra.mxu0 0
      %1200 = vmatprep.subr.bf16.mxu0 0
      %1201 = vmatpush1.bf16.msra.mxu0 0
      %1202 = vmatprep.subr.bf16.mxu0 0
      %1203 = vmatpush1.bf16.msra.mxu0 0
      %1204 = vmatprep.subr.bf16.mxu0 0
      %1205 = vmatpush1.bf16.msra.mxu0 0
      %1206 = vmatprep.mubr.bf16.mxu0 0
      %1207 = vmatmul.mubr.bf16.gmra.mrb[0].mxu0 %v1102
      %v1208 = vpop.f32.mrb[0].mxu0
      %v1209 = vadd.f32 %v1124, %v1208
      %v1210 = vpop.f32.mrb[0].mxu0
      %v1211 = vpop.f32.mrb[0].mxu0
      %v1212 = vadd.f32 %v1124, %v1211
      %v1213 = vpop.f32.mrb[0].mxu0
      %1214 = vdwg.mxu0
      %v1215 = vadd.f32 %v1209, %v289
      %v1216 = vadd.f32 %v1212, %v290
      %v1217 = vld [vmem:[%s6] sm:$0x1]
      %v1218 = vld [vmem:[%s7] sm:$0x1]
      %1219 = vadd.xlane.f32.xlu0 %v1215
      %v1220 = vpop.xlane.xlu0 %1219
      %1221 = vadd.xlane.f32.xlu0 %v1216
      %v1222 = vpop.xlane.xlu0 %1221
      %v1223 = vrcp.pop 128.0
      %v1224 = vmul.f32 %v1220, %v1223
      %v1225 = vmul.f32 %v1222, %v1223
      %v1226 = vsub.f32 %v1215, %v1224
      %v1227 = vsub.f32 %v1216, %v1225
      %v1228 = vmul.f32 %v1226, %v1226
      %v1229 = vmul.f32 %v1227, %v1227
      %1230 = vadd.xlane.f32.xlu0 %v1228
      %v1231 = vpop.xlane.xlu0 %1230
      %1232 = vadd.xlane.f32.xlu0 %v1229
      %v1233 = vpop.xlane.xlu0 %1232
      %v1234 = vmul.f32 %v1231, %v1223
      %v1235 = vmul.f32 %v1233, %v1223
      %v1236 = vadd.f32 %v1234, 1e-05
      %v1237 = vadd.f32 %v1235, 1e-05
      %v1238 = vrsqrt.pop %v1236
      %v1239 = vrsqrt.pop %v1237
      %v1240 = vmul.f32 %v1226, %v1238
      %v1241 = vmul.f32 %v1227, %v1239
      %v1243 = vlaneseq
      %v1244 = vshrl.u32 %v1243, 7
      %v1245 = vsub.s32 0, %v1244
      %v1246 = vrot.slane %v1217, %v1245
      %v1248 = vmul.f32 %v1240, %v1246
      %v1249 = vmul.f32 %v1241, %v1246
      %v1251 = vlaneseq
      %v1252 = vshrl.u32 %v1251, 7
      %v1253 = vsub.s32 0, %v1252
      %v1254 = vrot.slane %v1218, %v1253
      %v1256 = vadd.f32 %v1248, %v1254
      %v1257 = vadd.f32 %v1249, %v1254
      %v1258 = vpack.c.bf16 %v1257, %v1256
      %v1260 = vunpack.c.l.b16 %v1258
      %v1261 = vunpack.c.h.b16 %v1258
      %v1262 = vpack.c.b16 %v1260, %v1260
      %v1263 = vpack.c.b16 %v1261, %v1261
      %1266 = vst [vmem:[%s285] sm:$0xf] %v1262
      %1267 = vst [vmem:[%s285 + $0x4] sm:$0xf] %v1263
      %p1268 = scmp.lt.s32.totalorder %s25, 1
      %s1269 = scalar_select %p1268, %s25, 1
      %s1270 = smul.addr %s1269, 2
      %s1271 = smul.addr %s1270, 4
      %s1272 = scalar_lea.vmem %s8, %s1271
      // Predicated region
      $region49: #{tts_forward.17} parent=47 // pred_check
        %p1273 = pneg %p195
      $region50: #{tts_forward.17} parent=47 // pred_check_branch
        %1275 = sbr.rel (%p1273) target = $region52
      $region51: #{tts_forward.17} parent=47 // pred_region
        _
      $region52: #{tts_forward.17} parent=47 // pred_fallthru
        _
    $region48: #{tts_forward.17} parent=5 // pred_fallthru
      _
    %p1276 = scmp.le.s32.totalorder 2, %s20
    // Predicated region
    $region53: #{tts_forward.17} parent=5 // pred_check
      %p1277 = pneg %p1276
    $region54: #{tts_forward.17} parent=5 // pred_check_branch
      %1279 = sbr.rel (%p1277) target = $region56
    $region55: #{tts_forward.17} parent=5 // pred_region
      %s1280 = ssub.s32 %s20, 2
      // Predicated region
      $region57: #{tts_forward.17} parent=55 // pred_check
        %p1281 = pneg %p201
      $region58: #{tts_forward.17} parent=55 // pred_check_branch
        %1283 = sbr.rel (%p1281) target = $region60
      $region59: #{tts_forward.17} parent=55 // pred_region
        %p1284 = scmp.lt.s32.totalorder %s26, 1
        %s1285 = scalar_select %p1284, %s26, 1
        %s1286 = smul.addr %s1285, 2
        %s1287 = smul.addr %s1286, 4
        %s1288 = scalar_lea.vmem %s8, %s1287
      $region60: #{tts_forward.17} parent=55 // pred_fallthru
        _
    $region56: #{tts_forward.17} parent=5 // pred_fallthru
      _
  $region6: #{tts_forward.17} parent=0 // loop_footer
    %s24 = sadd.s32 1, %s20
  $region7: #{tts_forward.17} parent=0 // loop_footer_branch
    %19 = sbr.rel target = $region3
  $region8: #{tts_forward.17} parent=0 // loop_exit
    _

// kernel: tts_forward.13
$region0: #{tts_forward.13}
  #allocation0 [shape = 'u32[]', space=smem, size = 0x4, offset = 0x4, fixed_abs, tag = 'smem constant byte address 0x4 - core index']
  #allocation1 [shape = 'u32[144,128]{1,0:T(1,128)}', space=vmem, size = 0x12000, scoped, tag = 'internal scratch']
  %s0 = inlined_call_operand.vmem [shape: bf16[16,128], index: 0, kind: input, shape index: {}]
  %s1 = inlined_call_operand.vmem [shape: bf16[128,512], index: 1, kind: input, shape index: {}]
  %s2 = inlined_call_operand.vmem [shape: f32[1,512], index: 2, kind: input, shape index: {}]
  %s3 = inlined_call_operand.vmem [shape: bf16[512,128], index: 3, kind: input, shape index: {}]
  %s4 = inlined_call_operand.hbm [shape: f32[1,128], index: 4, kind: input, shape index: {}]
  %s5 = inlined_call_operand.hbm [shape: f32[1,128], index: 5, kind: input, shape index: {}]
  %s6 = inlined_call_operand.hbm [shape: f32[1,128], index: 6, kind: input, shape index: {}]
  %s7 = inlined_call_operand.vmem [shape: bf16[16,128], index: 7, kind: output, shape index: {}]
  %s8 = sld [smem:[#allocation0]]
  $region50: #{tts_forward.13} parent=0
    _
  %s10 = ssub.s32 1, %s8
  %s11 = scalar_select 0, %s10, %s8
  $region1: #{tts_forward.13} parent=0
    #allocation2 [shape = 'u8[512]{0}', space=vmem, size = 0x400, scoped, tag = 'input window, operand 4, single buffered']
    #allocation3 [shape = 's32[1]{0}', space=sflag, size = 0x4, scoped, tag = 'scoped memory for tts_forward.13']
    #allocation4 [shape = 'u8[512]{0}', space=vmem, size = 0x400, scoped, tag = 'input window, operand 5, single buffered']
    #allocation5 [shape = 's32[1]{0}', space=sflag, size = 0x4, scoped, tag = 'scoped memory for tts_forward.13']
    #allocation6 [shape = 'u8[512]{0}', space=vmem, size = 0x400, scoped, tag = 'input window, operand 6, single buffered']
    %12 = vsyncpa [#allocation3], 0
    %13 = vsyncpa [#allocation5], 0
    // Predicated region
    $region2: #{tts_forward.13} parent=1 // pred_check
      _
    $region3: #{tts_forward.13} parent=1 // pred_check_branch
      %15 = sbr.rel (0) target = $region5
    $region4: #{tts_forward.13} parent=1 // pred_region
      _
    $region5: #{tts_forward.13} parent=1 // pred_fallthru
      _
    // Predicated region
    $region6: #{tts_forward.13} parent=1 // pred_check
      _
    $region7: #{tts_forward.13} parent=1 // pred_check_branch
      %17 = sbr.rel (0) target = $region9
    $region8: #{tts_forward.13} parent=1 // pred_region
      _
    $region9: #{tts_forward.13} parent=1 // pred_fallthru
      _
    // Predicated region
    $region10: #{tts_forward.13} parent=1 // pred_check
      _
    $region11: #{tts_forward.13} parent=1 // pred_check_branch
      %19 = sbr.rel (0) target = $region13
    $region12: #{tts_forward.13} parent=1 // pred_region
      _
    $region13: #{tts_forward.13} parent=1 // pred_fallthru
      _
    // Predicated region
    $region14: #{tts_forward.13} parent=1 // pred_check
      _
    $region15: #{tts_forward.13} parent=1 // pred_check_branch
      %21 = sbr.rel (0) target = $region17
    $region16: #{tts_forward.13} parent=1 // pred_region
      _
    $region17: #{tts_forward.13} parent=1 // pred_fallthru
      _
    // Predicated region
    $region18: #{tts_forward.13} parent=1 // pred_check
      _
    $region19: #{tts_forward.13} parent=1 // pred_check_branch
      %23 = sbr.rel (0) target = $region21
    $region20: #{tts_forward.13} parent=1 // pred_region
      %s25 = ssub.s32 16, 16
      %26 = vsyncadd [#allocation3], %s25
      %s28 = sshll.u32 [#allocation2], 4
      %s29 = int_to_ptr.vmem [resolvable:$true] %s28
      %31 = dma.hbm_to_vmem [thread:$0]  %s4, 16, %s29, [#allocation3]
    $region21: #{tts_forward.13} parent=1 // pred_fallthru
      _
    // Predicated region
    $region22: #{tts_forward.13} parent=1 // pred_check
      _
    $region23: #{tts_forward.13} parent=1 // pred_check_branch
      %33 = sbr.rel (0) target = $region25
    $region24: #{tts_forward.13} parent=1 // pred_region
      %s35 = ssub.s32 16, 16
      %36 = vsyncadd [#allocation5], %s35
      %s38 = sshll.u32 [#allocation4], 4
      %s39 = int_to_ptr.vmem [resolvable:$true] %s38
      %41 = dma.hbm_to_vmem [thread:$0]  %s5, 16, %s39, [#allocation5]
    $region25: #{tts_forward.13} parent=1 // pred_fallthru
      _
    // Predicated region
    $region26: #{tts_forward.13} parent=1 // pred_check
      _
    $region27: #{tts_forward.13} parent=1 // pred_check_branch
      %43 = sbr.rel (0) target = $region29
    $region28: #{tts_forward.13} parent=1 // pred_region
      %s45 = ssub.s32 16, 16
      %46 = vsyncadd [#allocation5], %s45
      %s48 = sshll.u32 [#allocation6], 4
      %s49 = int_to_ptr.vmem [resolvable:$true] %s48
      %51 = dma.hbm_to_vmem [thread:$0]  %s6, 16, %s49, [#allocation5]
    $region29: #{tts_forward.13} parent=1 // pred_fallthru
      _
    // Predicated region
    $region30: #{tts_forward.13} parent=1 // pred_check
      _
    $region31: #{tts_forward.13} parent=1 // pred_check_branch
      %53 = sbr.rel (0) target = $region33
    $region32: #{tts_forward.13} parent=1 // pred_region
      %54 = dma.done [#allocation3], 16
    $region33: #{tts_forward.13} parent=1 // pred_fallthru
      _
    // Predicated region
    $region34: #{tts_forward.13} parent=1 // pred_check
      _
    $region35: #{tts_forward.13} parent=1 // pred_check_branch
      %56 = sbr.rel (0) target = $region37
    $region36: #{tts_forward.13} parent=1 // pred_region
      %57 = dma.done [#allocation5], 16
    $region37: #{tts_forward.13} parent=1 // pred_fallthru
      _
    // Predicated region
    $region38: #{tts_forward.13} parent=1 // pred_check
      _
    $region39: #{tts_forward.13} parent=1 // pred_check_branch
      %59 = sbr.rel (0) target = $region41
    $region40: #{tts_forward.13} parent=1 // pred_region
      %60 = dma.done [#allocation5], 16
    $region41: #{tts_forward.13} parent=1 // pred_fallthru
      _
    %v62 = vld [vmem:[%s0] sm:$0xf]
    %v63 = vld [vmem:[%s0 + $0x4] sm:$0xf]
    %v64 = vunpack.c.l.bf16 %v62
    %v65 = vunpack.c.l.bf16 %v63
    %v66 = vld [vmem:[%s1] sm:$0xff]
    %v67 = vld [vmem:[%s1 + $0x8] sm:$0xff]
    %v68 = vld [vmem:[%s1 + $0x10] sm:$0xff]
    %v69 = vld [vmem:[%s1 + $0x18] sm:$0xff]
    %v70 = vld [vmem:[%s1 + $0x20] sm:$0xff]
    %v71 = vld [vmem:[%s1 + $0x28] sm:$0xff]
    %v72 = vld [vmem:[%s1 + $0x30] sm:$0xff]
    %v73 = vld [vmem:[%s1 + $0x38] sm:$0xff]
    %v74 = vld [vmem:[%s1 + $0x40] sm:$0xff]
    %v75 = vld [vmem:[%s1 + $0x48] sm:$0xff]
    %v76 = vld [vmem:[%s1 + $0x50] sm:$0xff]
    %v77 = vld [vmem:[%s1 + $0x58] sm:$0xff]
    %v78 = vld [vmem:[%s1 + $0x60] sm:$0xff]
    %v79 = vld [vmem:[%s1 + $0x68] sm:$0xff]
    %v80 = vld [vmem:[%s1 + $0x70] sm:$0xff]
    %v81 = vld [vmem:[%s1 + $0x78] sm:$0xff]
    %v82 = vld [vmem:[%s1 + $0x80] sm:$0xff]
    %v83 = vld [vmem:[%s1 + $0x88] sm:$0xff]
    %v84 = vld [vmem:[%s1 + $0x90] sm:$0xff]
    %v85 = vld [vmem:[%s1 + $0x98] sm:$0xff]
    %v86 = vld [vmem:[%s1 + $0xa0] sm:$0xff]
    %v87 = vld [vmem:[%s1 + $0xa8] sm:$0xff]
    %v88 = vld [vmem:[%s1 + $0xb0] sm:$0xff]
    %v89 = vld [vmem:[%s1 + $0xb8] sm:$0xff]
    %v90 = vld [vmem:[%s1 + $0xc0] sm:$0xff]
    %v91 = vld [vmem:[%s1 + $0xc8] sm:$0xff]
    %v92 = vld [vmem:[%s1 + $0xd0] sm:$0xff]
    %v93 = vld [vmem:[%s1 + $0xd8] sm:$0xff]
    %v94 = vld [vmem:[%s1 + $0xe0] sm:$0xff]
    %v95 = vld [vmem:[%s1 + $0xe8] sm:$0xff]
    %v96 = vld [vmem:[%s1 + $0xf0] sm:$0xff]
    %v97 = vld [vmem:[%s1 + $0xf8] sm:$0xff]
    %v98 = vld [vmem:[%s2] sm:$0xf]
    %v100 = vlaneseq
    %v101 = vshrl.u32 %v100, 7
    %v102 = vsub.s32 0, %v101
    %v103 = vrot.slane %v98, %v102
    %v104 = vlaneseq
    %v105 = vshrl.u32 %v104, 7
    %v106 = vsub.s32 1, %v105
    %v107 = vrot.slane %v98, %v106
    %v108 = vlaneseq
    %v109 = vshrl.u32 %v108, 7
    %v110 = vsub.s32 2, %v109
    %v111 = vrot.slane %v98, %v110
    %v112 = vlaneseq
    %v113 = vshrl.u32 %v112, 7
    %v114 = vsub.s32 3, %v113
    %v115 = vrot.slane %v98, %v114
    %v122 = vunpack.c.l.b16 %v62
    %v123 = vunpack.c.l.b16 %v63
    %v124 = vpack.c.b16 %v123, %v122
    %v158 = vunpack.c.l.b16 %v66
    %v159 = vunpack.c.h.b16 %v66
    %v160 = vunpack.c.l.b16 %v67
    %v161 = vunpack.c.h.b16 %v67
    %v162 = vunpack.c.l.b16 %v68
    %v163 = vunpack.c.h.b16 %v68
    %v164 = vunpack.c.l.b16 %v69
    %v165 = vunpack.c.h.b16 %v69
    %v166 = vunpack.c.l.b16 %v70
    %v167 = vunpack.c.h.b16 %v70
    %v168 = vunpack.c.l.b16 %v71
    %v169 = vunpack.c.h.b16 %v71
    %v170 = vunpack.c.l.b16 %v72
    %v171 = vunpack.c.h.b16 %v72
    %v172 = vunpack.c.l.b16 %v73
    %v173 = vunpack.c.h.b16 %v73
    %v174 = vunpack.c.l.b16 %v74
    %v175 = vunpack.c.h.b16 %v74
    %v176 = vunpack.c.l.b16 %v75
    %v177 = vunpack.c.h.b16 %v75
    %v178 = vunpack.c.l.b16 %v76
    %v179 = vunpack.c.h.b16 %v76
    %v180 = vunpack.c.l.b16 %v77
    %v181 = vunpack.c.h.b16 %v77
    %v182 = vunpack.c.l.b16 %v78
    %v183 = vunpack.c.h.b16 %v78
    %v184 = vunpack.c.l.b16 %v79
    %v185 = vunpack.c.h.b16 %v79
    %v186 = vunpack.c.l.b16 %v80
    %v187 = vunpack.c.h.b16 %v80
    %v188 = vunpack.c.l.b16 %v81
    %v189 = vunpack.c.h.b16 %v81
    %v190 = vunpack.c.l.b16 %v82
    %v191 = vunpack.c.h.b16 %v82
    %v192 = vunpack.c.l.b16 %v83
    %v193 = vunpack.c.h.b16 %v83
    %v194 = vunpack.c.l.b16 %v84
    %v195 = vunpack.c.h.b16 %v84
    %v196 = vunpack.c.l.b16 %v85
    %v197 = vunpack.c.h.b16 %v85
    %v198 = vunpack.c.l.b16 %v86
    %v199 = vunpack.c.h.b16 %v86
    %v200 = vunpack.c.l.b16 %v87
    %v201 = vunpack.c.h.b16 %v87
    %v202 = vunpack.c.l.b16 %v88
    %v203 = vunpack.c.h.b16 %v88
    %v204 = vunpack.c.l.b16 %v89
    %v205 = vunpack.c.h.b16 %v89
    %v206 = vunpack.c.l.b16 %v90
    %v207 = vunpack.c.h.b16 %v90
    %v208 = vunpack.c.l.b16 %v91
    %v209 = vunpack.c.h.b16 %v91
    %v210 = vunpack.c.l.b16 %v92
    %v211 = vunpack.c.h.b16 %v92
    %v212 = vunpack.c.l.b16 %v93
    %v213 = vunpack.c.h.b16 %v93
    %v214 = vunpack.c.l.b16 %v94
    %v215 = vunpack.c.h.b16 %v94
    %v216 = vunpack.c.l.b16 %v95
    %v217 = vunpack.c.h.b16 %v95
    %v218 = vunpack.c.l.b16 %v96
    %v219 = vunpack.c.h.b16 %v96
    %v220 = vunpack.c.l.b16 %v97
    %v221 = vunpack.c.h.b16 %v97
    %v222 = vpack.c.b16 %v162, %v158
    %v223 = vpack.c.b16 %v163, %v159
    %v224 = vpack.c.b16 %v164, %v160
    %v225 = vpack.c.b16 %v165, %v161
    %v226 = vpack.c.b16 %v170, %v166
    %v227 = vpack.c.b16 %v171, %v167
    %v228 = vpack.c.b16 %v172, %v168
    %v229 = vpack.c.b16 %v173, %v169
    %v230 = vpack.c.b16 %v178, %v174
    %v231 = vpack.c.b16 %v179, %v175
    %v232 = vpack.c.b16 %v180, %v176
    %v233 = vpack.c.b16 %v181, %v177
    %v234 = vpack.c.b16 %v186, %v182
    %v235 = vpack.c.b16 %v187, %v183
    %v236 = vpack.c.b16 %v188, %v184
    %v237 = vpack.c.b16 %v189, %v185
    %v238 = vpack.c.b16 %v194, %v190
    %v239 = vpack.c.b16 %v195, %v191
    %v240 = vpack.c.b16 %v196, %v192
    %v241 = vpack.c.b16 %v197, %v193
    %v242 = vpack.c.b16 %v202, %v198
    %v243 = vpack.c.b16 %v203, %v199
    %v244 = vpack.c.b16 %v204, %v200
    %v245 = vpack.c.b16 %v205, %v201
    %v246 = vpack.c.b16 %v210, %v206
    %v247 = vpack.c.b16 %v211, %v207
    %v248 = vpack.c.b16 %v212, %v208
    %v249 = vpack.c.b16 %v213, %v209
    %v250 = vpack.c.b16 %v218, %v214
    %v251 = vpack.c.b16 %v219, %v215
    %v252 = vpack.c.b16 %v220, %v216
    %v253 = vpack.c.b16 %v221, %v217
    %286 = vmatprep.subr.bf16.mxu0 %v223
    %287 = vmatpush1.bf16.msra.mxu0 %v222
    %288 = vmatprep.subr.bf16.mxu0 %v227
    %289 = vmatpush1.bf16.msra.mxu0 %v226
    %290 = vmatprep.subr.bf16.mxu0 %v231
    %291 = vmatpush1.bf16.msra.mxu0 %v230
    %292 = vmatprep.subr.bf16.mxu0 %v235
    %293 = vmatpush1.bf16.msra.mxu0 %v234
    %294 = vmatprep.subr.bf16.mxu0 %v239
    %295 = vmatpush1.bf16.msra.mxu0 %v238
    %296 = vmatprep.subr.bf16.mxu0 %v243
    %297 = vmatpush1.bf16.msra.mxu0 %v242
    %298 = vmatprep.subr.bf16.mxu0 %v247
    %299 = vmatpush1.bf16.msra.mxu0 %v246
    %300 = vmatprep.subr.bf16.mxu0 %v251
    %301 = vmatpush1.bf16.msra.mxu0 %v250
    %302 = vmatprep.subr.bf16.mxu0 0
    %303 = vmatpush1.bf16.msra.mxu0 0
    %304 = vmatprep.subr.bf16.mxu0 0
    %305 = vmatpush1.bf16.msra.mxu0 0
    %306 = vmatprep.subr.bf16.mxu0 0
    %307 = vmatpush1.bf16.msra.mxu0 0
    %308 = vmatprep.subr.bf16.mxu0 0
    %309 = vmatpush1.bf16.msra.mxu0 0
    %310 = vmatprep.subr.bf16.mxu0 0
    %311 = vmatpush1.bf16.msra.mxu0 0
    %312 = vmatprep.subr.bf16.mxu0 0
    %313 = vmatpush1.bf16.msra.mxu0 0
    %314 = vmatprep.subr.bf16.mxu0 0
    %315 = vmatpush1.bf16.msra.mxu0 0
    %316 = vmatprep.subr.bf16.mxu0 0
    %317 = vmatpush1.bf16.msra.mxu0 0
    %318 = vmatprep.mubr.bf16.mxu0 0
    %319 = vmatmul.mubr.bf16.gmra.mrb[0].mxu0 %v124
    %v320 = vpop.f32.mrb[0].mxu0
    %v321 = vadd.f32 %v103, %v320
    %v322 = vpop.f32.mrb[0].mxu0
    %v323 = vadd.f32 %v107, %v322
    %v324 = vpop.f32.mrb[0].mxu0
    %v325 = vadd.f32 %v103, %v324
    %v326 = vpop.f32.mrb[0].mxu0
    %v327 = vadd.f32 %v107, %v326
    %328 = vdwg.mxu0
    %329 = vmatprep.subr.bf16.mxu0 %v225
    %330 = vmatpush1.bf16.msra.mxu0 %v224
    %331 = vmatprep.subr.bf16.mxu0 %v229
    %332 = vmatpush1.bf16.msra.mxu0 %v228
    %333 = vmatprep.subr.bf16.mxu0 %v233
    %334 = vmatpush1.bf16.msra.mxu0 %v232
    %335 = vmatprep.subr.bf16.mxu0 %v237
    %336 = vmatpush1.bf16.msra.mxu0 %v236
    %337 = vmatprep.subr.bf16.mxu0 %v241
    %338 = vmatpush1.bf16.msra.mxu0 %v240
    %339 = vmatprep.subr.bf16.mxu0 %v245
    %340 = vmatpush1.bf16.msra.mxu0 %v244
    %341 = vmatprep.subr.bf16.mxu0 %v249
    %342 = vmatpush1.bf16.msra.mxu0 %v248
    %343 = vmatprep.subr.bf16.mxu0 %v253
    %344 = vmatpush1.bf16.msra.mxu0 %v252
    %345 = vmatprep.subr.bf16.mxu0 0
    %346 = vmatpush1.bf16.msra.mxu0 0
    %347 = vmatprep.subr.bf16.mxu0 0
    %348 = vmatpush1.bf16.msra.mxu0 0
    %349 = vmatprep.subr.bf16.mxu0 0
    %350 = vmatpush1.bf16.msra.mxu0 0
    %351 = vmatprep.subr.bf16.mxu0 0
    %352 = vmatpush1.bf16.msra.mxu0 0
    %353 = vmatprep.subr.bf16.mxu0 0
    %354 = vmatpush1.bf16.msra.mxu0 0
    %355 = vmatprep.subr.bf16.mxu0 0
    %356 = vmatpush1.bf16.msra.mxu0 0
    %357 = vmatprep.subr.bf16.mxu0 0
    %358 = vmatpush1.bf16.msra.mxu0 0
    %359 = vmatprep.subr.bf16.mxu0 0
    %360 = vmatpush1.bf16.msra.mxu0 0
    %361 = vmatprep.mubr.bf16.mxu0 0
    %362 = vmatmul.mubr.bf16.gmra.mrb[0].mxu0 %v124
    %v363 = vpop.f32.mrb[0].mxu0
    %v364 = vadd.f32 %v111, %v363
    %v365 = vpop.f32.mrb[0].mxu0
    %v366 = vadd.f32 %v115, %v365
    %v367 = vpop.f32.mrb[0].mxu0
    %v368 = vadd.f32 %v111, %v367
    %v369 = vpop.f32.mrb[0].mxu0
    %v370 = vadd.f32 %v115, %v369
    %371 = vdwg.mxu0
    %v372 = vmax.f32 %v321, 0.0
    %v373 = vmax.f32 %v323, 0.0
    %v374 = vmax.f32 %v364, 0.0
    %v375 = vmax.f32 %v366, 0.0
    %v376 = vmax.f32 %v325, 0.0
    %v377 = vmax.f32 %v327, 0.0
    %v378 = vmax.f32 %v368, 0.0
    %v379 = vmax.f32 %v370, 0.0
    %v380 = vpack.c.bf16 %v376, %v372
    %v381 = vpack.c.bf16 %v377, %v373
    %v382 = vpack.c.bf16 %v378, %v374
    %v383 = vpack.c.bf16 %v379, %v375
    %v384 = vld [vmem:[%s3] sm:$0xf]
    %v385 = vld [vmem:[%s3 + $0x4] sm:$0xf]
    %v386 = vld [vmem:[%s3 + $0x8] sm:$0xf]
    %v387 = vld [vmem:[%s3 + $0xc] sm:$0xf]
    %v388 = vld [vmem:[%s3 + $0x10] sm:$0xf]
    %v389 = vld [vmem:[%s3 + $0x14] sm:$0xf]
    %v390 = vld [vmem:[%s3 + $0x18] sm:$0xf]
    %v391 = vld [vmem:[%s3 + $0x1c] sm:$0xf]
    %v392 = vld [vmem:[%s3 + $0x20] sm:$0xf]
    %v393 = vld [vmem:[%s3 + $0x24] sm:$0xf]
    %v394 = vld [vmem:[%s3 + $0x28] sm:$0xf]
    %v395 = vld [vmem:[%s3 + $0x2c] sm:$0xf]
    %v396 = vld [vmem:[%s3 + $0x30] sm:$0xf]
    %v397 = vld [vmem:[%s3 + $0x34] sm:$0xf]
    %v398 = vld [vmem:[%s3 + $0x38] sm:$0xf]
    %v399 = vld [vmem:[%s3 + $0x3c] sm:$0xf]
    %v400 = vld [vmem:[%s3 + $0x40] sm:$0xf]
    %v401 = vld [vmem:[%s3 + $0x44] sm:$0xf]
    %v402 = vld [vmem:[%s3 + $0x48] sm:$0xf]
    %v403 = vld [vmem:[%s3 + $0x4c] sm:$0xf]
    %v404 = vld [vmem:[%s3 + $0x50] sm:$0xf]
    %v405 = vld [vmem:[%s3 + $0x54] sm:$0xf]
    %v406 = vld [vmem:[%s3 + $0x58] sm:$0xf]
    %v407 = vld [vmem:[%s3 + $0x5c] sm:$0xf]
    %v408 = vld [vmem:[%s3 + $0x60] sm:$0xf]
    %v409 = vld [vmem:[%s3 + $0x64] sm:$0xf]
    %v410 = vld [vmem:[%s3 + $0x68] sm:$0xf]
    %v411 = vld [vmem:[%s3 + $0x6c] sm:$0xf]
    %v412 = vld [vmem:[%s3 + $0x70] sm:$0xf]
    %v413 = vld [vmem:[%s3 + $0x74] sm:$0xf]
    %v414 = vld [vmem:[%s3 + $0x78] sm:$0xf]
    %v415 = vld [vmem:[%s3 + $0x7c] sm:$0xf]
    %v416 = vld [vmem:[%s3 + $0x80] sm:$0xf]
    %v417 = vld [vmem:[%s3 + $0x84] sm:$0xf]
    %v418 = vld [vmem:[%s3 + $0x88] sm:$0xf]
    %v419 = vld [vmem:[%s3 + $0x8c] sm:$0xf]
    %v420 = vld [vmem:[%s3 + $0x90] sm:$0xf]
    %v421 = vld [vmem:[%s3 + $0x94] sm:$0xf]
    %v422 = vld [vmem:[%s3 + $0x98] sm:$0xf]
    %v423 = vld [vmem:[%s3 + $0x9c] sm:$0xf]
    %v424 = vld [vmem:[%s3 + $0xa0] sm:$0xf]
    %v425 = vld [vmem:[%s3 + $0xa4] sm:$0xf]
    %v426 = vld [vmem:[%s3 + $0xa8] sm:$0xf]
    %v427 = vld [vmem:[%s3 + $0xac] sm:$0xf]
    %v428 = vld [vmem:[%s3 + $0xb0] sm:$0xf]
    %v429 = vld [vmem:[%s3 + $0xb4] sm:$0xf]
    %v430 = vld [vmem:[%s3 + $0xb8] sm:$0xf]
    %v431 = vld [vmem:[%s3 + $0xbc] sm:$0xf]
    %v432 = vld [vmem:[%s3 + $0xc0] sm:$0xf]
    %v433 = vld [vmem:[%s3 + $0xc4] sm:$0xf]
    %v434 = vld [vmem:[%s3 + $0xc8] sm:$0xf]
    %v435 = vld [vmem:[%s3 + $0xcc] sm:$0xf]
    %v436 = vld [vmem:[%s3 + $0xd0] sm:$0xf]
    %v437 = vld [vmem:[%s3 + $0xd4] sm:$0xf]
    %v438 = vld [vmem:[%s3 + $0xd8] sm:$0xf]
    %v439 = vld [vmem:[%s3 + $0xdc] sm:$0xf]
    %v440 = vld [vmem:[%s3 + $0xe0] sm:$0xf]
    %v441 = vld [vmem:[%s3 + $0xe4] sm:$0xf]
    %v442 = vld [vmem:[%s3 + $0xe8] sm:$0xf]
    %v443 = vld [vmem:[%s3 + $0xec] sm:$0xf]
    %v444 = vld [vmem:[%s3 + $0xf0] sm:$0xf]
    %v445 = vld [vmem:[%s3 + $0xf4] sm:$0xf]
    %v446 = vld [vmem:[%s3 + $0xf8] sm:$0xf]
    %v447 = vld [vmem:[%s3 + $0xfc] sm:$0xf]
    %v448 = vld [vmem:[#allocation2] sm:$0x1]
    %v450 = vlaneseq
    %v451 = vshrl.u32 %v450, 7
    %v452 = vsub.s32 0, %v451
    %v453 = vrot.slane %v448, %v452
    %v519 = vunpack.c.l.b16 %v384
    %v520 = vunpack.c.l.b16 %v385
    %v521 = vunpack.c.l.b16 %v386
    %v522 = vunpack.c.l.b16 %v387
    %v523 = vunpack.c.l.b16 %v388
    %v524 = vunpack.c.l.b16 %v389
    %v525 = vunpack.c.l.b16 %v390
    %v526 = vunpack.c.l.b16 %v391
    %v527 = vunpack.c.l.b16 %v392
    %v528 = vunpack.c.l.b16 %v393
    %v529 = vunpack.c.l.b16 %v394
    %v530 = vunpack.c.l.b16 %v395
    %v531 = vunpack.c.l.b16 %v396
    %v532 = vunpack.c.l.b16 %v397
    %v533 = vunpack.c.l.b16 %v398
    %v534 = vunpack.c.l.b16 %v399
    %v535 = vunpack.c.l.b16 %v400
    %v536 = vunpack.c.l.b16 %v401
    %v537 = vunpack.c.l.b16 %v402
    %v538 = vunpack.c.l.b16 %v403
    %v539 = vunpack.c.l.b16 %v404
    %v540 = vunpack.c.l.b16 %v405
    %v541 = vunpack.c.l.b16 %v406
    %v542 = vunpack.c.l.b16 %v407
    %v543 = vunpack.c.l.b16 %v408
    %v544 = vunpack.c.l.b16 %v409
    %v545 = vunpack.c.l.b16 %v410
    %v546 = vunpack.c.l.b16 %v411
    %v547 = vunpack.c.l.b16 %v412
    %v548 = vunpack.c.l.b16 %v413
    %v549 = vunpack.c.l.b16 %v414
    %v550 = vunpack.c.l.b16 %v415
    %v551 = vunpack.c.l.b16 %v416
    %v552 = vunpack.c.l.b16 %v417
    %v553 = vunpack.c.l.b16 %v418
    %v554 = vunpack.c.l.b16 %v419
    %v555 = vunpack.c.l.b16 %v420
    %v556 = vunpack.c.l.b16 %v421
    %v557 = vunpack.c.l.b16 %v422
    %v558 = vunpack.c.l.b16 %v423
    %v559 = vunpack.c.l.b16 %v424
    %v560 = vunpack.c.l.b16 %v425
    %v561 = vunpack.c.l.b16 %v426
    %v562 = vunpack.c.l.b16 %v427
    %v563 = vunpack.c.l.b16 %v428
    %v564 = vunpack.c.l.b16 %v429
    %v565 = vunpack.c.l.b16 %v430
    %v566 = vunpack.c.l.b16 %v431
    %v567 = vunpack.c.l.b16 %v432
    %v568 = vunpack.c.l.b16 %v433
    %v569 = vunpack.c.l.b16 %v434
    %v570 = vunpack.c.l.b16 %v435
    %v571 = vunpack.c.l.b16 %v436
    %v572 = vunpack.c.l.b16 %v437
    %v573 = vunpack.c.l.b16 %v438
    %v574 = vunpack.c.l.b16 %v439
    %v575 = vunpack.c.l.b16 %v440
    %v576 = vunpack.c.l.b16 %v441
    %v577 = vunpack.c.l.b16 %v442
    %v578 = vunpack.c.l.b16 %v443
    %v579 = vunpack.c.l.b16 %v444
    %v580 = vunpack.c.l.b16 %v445
    %v581 = vunpack.c.l.b16 %v446
    %v582 = vunpack.c.l.b16 %v447
    %v583 = vpack.c.b16 %v520, %v519
    %v584 = vpack.c.b16 %v522, %v521
    %v585 = vpack.c.b16 %v524, %v523
    %v586 = vpack.c.b16 %v526, %v525
    %v587 = vpack.c.b16 %v528, %v527
    %v588 = vpack.c.b16 %v530, %v529
    %v589 = vpack.c.b16 %v532, %v531
    %v590 = vpack.c.b16 %v534, %v533
    %v591 = vpack.c.b16 %v536, %v535
    %v592 = vpack.c.b16 %v538, %v537
    %v593 = vpack.c.b16 %v540, %v539
    %v594 = vpack.c.b16 %v542, %v541
    %v595 = vpack.c.b16 %v544, %v543
    %v596 = vpack.c.b16 %v546, %v545
    %v597 = vpack.c.b16 %v548, %v547
    %v598 = vpack.c.b16 %v550, %v549
    %v599 = vpack.c.b16 %v552, %v551
    %v600 = vpack.c.b16 %v554, %v553
    %v601 = vpack.c.b16 %v556, %v555
    %v602 = vpack.c.b16 %v558, %v557
    %v603 = vpack.c.b16 %v560, %v559
    %v604 = vpack.c.b16 %v562, %v561
    %v605 = vpack.c.b16 %v564, %v563
    %v606 = vpack.c.b16 %v566, %v565
    %v607 = vpack.c.b16 %v568, %v567
    %v608 = vpack.c.b16 %v570, %v569
    %v609 = vpack.c.b16 %v572, %v571
    %v610 = vpack.c.b16 %v574, %v573
    %v611 = vpack.c.b16 %v576, %v575
    %v612 = vpack.c.b16 %v578, %v577
    %v613 = vpack.c.b16 %v580, %v579
    %v614 = vpack.c.b16 %v582, %v581
    %647 = vmatprep.subr.bf16.mxu0 0
    %648 = vmatpush1.bf16.msra.mxu0 %v583
    %649 = vmatprep.subr.bf16.mxu0 0
    %650 = vmatpush1.bf16.msra.mxu0 %v584
    %651 = vmatprep.subr.bf16.mxu0 0
    %652 = vmatpush1.bf16.msra.mxu0 %v585
    %653 = vmatprep.subr.bf16.mxu0 0
    %654 = vmatpush1.bf16.msra.mxu0 %v586
    %655 = vmatprep.subr.bf16.mxu0 0
    %656 = vmatpush1.bf16.msra.mxu0 %v587
    %657 = vmatprep.subr.bf16.mxu0 0
    %658 = vmatpush1.bf16.msra.mxu0 %v588
    %659 = vmatprep.subr.bf16.mxu0 0
    %660 = vmatpush1.bf16.msra.mxu0 %v589
    %661 = vmatprep.subr.bf16.mxu0 0
    %662 = vmatpush1.bf16.msra.mxu0 %v590
    %663 = vmatprep.subr.bf16.mxu0 0
    %664 = vmatpush1.bf16.msra.mxu0 %v591
    %665 = vmatprep.subr.bf16.mxu0 0
    %666 = vmatpush1.bf16.msra.mxu0 %v592
    %667 = vmatprep.subr.bf16.mxu0 0
    %668 = vmatpush1.bf16.msra.mxu0 %v593
    %669 = vmatprep.subr.bf16.mxu0 0
    %670 = vmatpush1.bf16.msra.mxu0 %v594
    %671 = vmatprep.subr.bf16.mxu0 0
    %672 = vmatpush1.bf16.msra.mxu0 %v595
    %673 = vmatprep.subr.bf16.mxu0 0
    %674 = vmatpush1.bf16.msra.mxu0 %v596
    %675 = vmatprep.subr.bf16.mxu0 0
    %676 = vmatpush1.bf16.msra.mxu0 %v597
    %677 = vmatprep.subr.bf16.mxu0 0
    %678 = vmatpush1.bf16.msra.mxu0 %v598
    %679 = vmatprep.mubr.bf16.mxu0 %v381
    %680 = vmatmul.mubr.bf16.gmra.mrb[0].mxu0 %v380
    %v681 = vpop.f32.mrb[0].mxu0
    %v682 = vadd.f32 %v453, %v681
    %v683 = vpop.f32.mrb[0].mxu0
    %v684 = vpop.f32.mrb[0].mxu0
    %v685 = vadd.f32 %v453, %v684
    %v686 = vpop.f32.mrb[0].mxu0
    %687 = vdwg.mxu0
    %688 = vmatprep.subr.bf16.mxu0 0
    %689 = vmatpush1.bf16.msra.mxu0 %v599
    %690 = vmatprep.subr.bf16.mxu0 0
    %691 = vmatpush1.bf16.msra.mxu0 %v600
    %692 = vmatprep.subr.bf16.mxu0 0
    %693 = vmatpush1.bf16.msra.mxu0 %v601
    %694 = vmatprep.subr.bf16.mxu0 0
    %695 = vmatpush1.bf16.msra.mxu0 %v602
    %696 = vmatprep.subr.bf16.mxu0 0
    %697 = vmatpush1.bf16.msra.mxu0 %v603
    %698 = vmatprep.subr.bf16.mxu0 0
    %699 = vmatpush1.bf16.msra.mxu0 %v604
    %700 = vmatprep.subr.bf16.mxu0 0
    %701 = vmatpush1.bf16.msra.mxu0 %v605
    %702 = vmatprep.subr.bf16.mxu0 0
    %703 = vmatpush1.bf16.msra.mxu0 %v606
    %704 = vmatprep.subr.bf16.mxu0 0
    %705 = vmatpush1.bf16.msra.mxu0 %v607
    %706 = vmatprep.subr.bf16.mxu0 0
    %707 = vmatpush1.bf16.msra.mxu0 %v608
    %708 = vmatprep.subr.bf16.mxu0 0
    %709 = vmatpush1.bf16.msra.mxu0 %v609
    %710 = vmatprep.subr.bf16.mxu0 0
    %711 = vmatpush1.bf16.msra.mxu0 %v610
    %712 = vmatprep.subr.bf16.mxu0 0
    %713 = vmatpush1.bf16.msra.mxu0 %v611
    %714 = vmatprep.subr.bf16.mxu0 0
    %715 = vmatpush1.bf16.msra.mxu0 %v612
    %716 = vmatprep.subr.bf16.mxu0 0
    %717 = vmatpush1.bf16.msra.mxu0 %v613
    %718 = vmatprep.subr.bf16.mxu0 0
    %719 = vmatpush1.bf16.msra.mxu0 %v614
    %720 = vmatprep.mubr.bf16.mxu0 %v383
    %721 = vmatmul.mubr.bf16.gmra.mrb[0].mxu0 %v382
    %v722 = vpop.f32.mrb[0].mxu0
    %v723 = vadd.f32 %v682, %v722
    %v724 = vpop.f32.mrb[0].mxu0
    %v725 = vpop.f32.mrb[0].mxu0
    %v726 = vadd.f32 %v685, %v725
    %v727 = vpop.f32.mrb[0].mxu0
    %728 = vdwg.mxu0
    %v729 = vadd.f32 %v723, %v64
    %v730 = vadd.f32 %v726, %v65
    %v731 = vld [vmem:[#allocation4] sm:$0x1]
    %v732 = vld [vmem:[#allocation6] sm:$0x1]
    %733 = vadd.xlane.f32.xlu0 %v729
    %v734 = vpop.xlane.xlu0 %733
    %735 = vadd.xlane.f32.xlu0 %v730
    %v736 = vpop.xlane.xlu0 %735
    %v737 = vrcp.pop 128.0
    %v738 = vmul.f32 %v734, %v737
    %v739 = vmul.f32 %v736, %v737
    %v740 = vsub.f32 %v729, %v738
    %v741 = vsub.f32 %v730, %v739
    %v742 = vmul.f32 %v740, %v740
    %v743 = vmul.f32 %v741, %v741
    %744 = vadd.xlane.f32.xlu0 %v742
    %v745 = vpop.xlane.xlu0 %744
    %746 = vadd.xlane.f32.xlu0 %v743
    %v747 = vpop.xlane.xlu0 %746
    %v748 = vmul.f32 %v745, %v737
    %v749 = vmul.f32 %v747, %v737
    %v750 = vadd.f32 %v748, 1e-05
    %v751 = vadd.f32 %v749, 1e-05
    %v752 = vrsqrt.pop %v750
    %v753 = vrsqrt.pop %v751
    %v754 = vmul.f32 %v740, %v752
    %v755 = vmul.f32 %v741, %v753
    %v757 = vlaneseq
    %v758 = vshrl.u32 %v757, 7
    %v759 = vsub.s32 0, %v758
    %v760 = vrot.slane %v731, %v759
    %v762 = vmul.f32 %v754, %v760
    %v763 = vmul.f32 %v755, %v760
    %v765 = vlaneseq
    %v766 = vshrl.u32 %v765, 7
    %v767 = vsub.s32 0, %v766
    %v768 = vrot.slane %v732, %v767
    %v770 = vadd.f32 %v762, %v768
    %v771 = vadd.f32 %v763, %v768
    %v772 = vpack.c.bf16 %v771, %v770
    %v774 = vunpack.c.l.b16 %v772
    %v775 = vunpack.c.h.b16 %v772
    %v776 = vpack.c.b16 %v774, %v774
    %v777 = vpack.c.b16 %v775, %v775
    %780 = vst [vmem:[%s7] sm:$0xf] %v776
    %781 = vst [vmem:[%s7 + $0x4] sm:$0xf] %v777
    // Predicated region
    $region42: #{tts_forward.13} parent=1 // pred_check
      _
    $region43: #{tts_forward.13} parent=1 // pred_check_branch
      %783 = sbr.rel (0) target = $region45
    $region44: #{tts_forward.13} parent=1 // pred_region
      _
    $region45: #{tts_forward.13} parent=1 // pred_fallthru
      _
    // Predicated region
    $region46: #{tts_forward.13} parent=1 // pred_check
      _
    $region47: #{tts_forward.13} parent=1 // pred_check_branch
      %785 = sbr.rel (0) target = $region49
    $region48: #{tts_forward.13} parent=1 // pred_region
      _
    $region49: #{tts_forward.13} parent=1 // pred_fallthru
      _
    %786 = vsyncpa [#allocation3], 1
    %787 = vsyncpa [#allocation5], 1

// kernel: tts_forward.12
$region0: #{tts_forward.12}
  #allocation0 [shape = 'u32[]', space=smem, size = 0x4, offset = 0x4, fixed_abs, tag = 'smem constant byte address 0x4 - core index']
  #allocation1 [shape = 'u32[144,128]{1,0:T(1,128)}', space=vmem, size = 0x12000, scoped, tag = 'internal scratch']
  #allocation2 [shape = 'f32[8,128]{1,0:T(8,128)}', space=vmem, size = 0x1000, scoped, tag = 'scratch operand']
  #allocation3 [shape = 's32[1]{0}', space=sflag, size = 0x4, scoped, tag = 'scoped memory for tts_forward.12']
  #allocation4 [shape = 'u8[512]{0}', space=smem, size = 0x200, scoped, tag = 'prefetched SMEM operand 0']
  %s0 = inlined_call_operand.vmem [shape: s32[2], index: 0, kind: input, shape index: {}]
  %s1 = inlined_call_operand.vmem [shape: bf16[2,8,128], index: 1, kind: input, shape index: {}]
  %s2 = inlined_call_operand.vmem [shape: bf16[128,384], index: 2, kind: input, shape index: {}]
  %s3 = inlined_call_operand.vmem [shape: f32[1,384], index: 3, kind: input, shape index: {}]
  %s4 = inlined_call_operand.hbm [shape: bf16[128,128], index: 4, kind: input, shape index: {}]
  %s5 = inlined_call_operand.hbm [shape: f32[1,128], index: 5, kind: input, shape index: {}]
  %s6 = inlined_call_operand.hbm [shape: f32[1,128], index: 6, kind: input, shape index: {}]
  %s7 = inlined_call_operand.hbm [shape: f32[1,128], index: 7, kind: input, shape index: {}]
  %s8 = inlined_call_operand.vmem [shape: bf16[2,8,128], index: 8, kind: output, shape index: {}]
  %s9 = sld [smem:[#allocation0]]
  $region77: #{tts_forward.12} parent=0
    _
  %s11 = ssub.s32 1, %s9
  %s12 = scalar_select 0, %s11, %s9
  %s13 = sshll.u32 %s0, 4
  %s14 = int_to_ptr.vmem [resolvable:$true] %s13
  %16 = dma.vmem_to_smem %s14, 16, [#allocation4], [#allocation3]
  %17 = dma.done [#allocation3], 16
  %18 = sfence
  $region1: #{tts_forward.12} parent=0
    #allocation5 [shape = 'u8[32768]{0}', space=vmem, size = 0x8000, scoped, tag = 'input window, operand 4, single buffered']
    #allocation6 [shape = 's32[2]{0}', space=sflag, size = 0x8, scoped, tag = 'scoped memory for tts_forward.12']
    #allocation7 [shape = 'u8[512]{0}', space=vmem, size = 0x400, scoped, tag = 'input window, operand 5, single buffered']
    #allocation8 [shape = 's32[1]{0}', space=sflag, size = 0x4, scoped, tag = 'scoped memory for tts_forward.12']
    #allocation9 [shape = 'u8[512]{0}', space=vmem, size = 0x400, scoped, tag = 'input window, operand 6, single buffered']
    #allocation10 [shape = 'u8[512]{0}', space=vmem, size = 0x400, scoped, tag = 'input window, operand 7, single buffered']
    #allocation11 [shape = 's32[1]{0}', space=sflag, size = 0x4, scoped, tag = 'scoped memory for tts_forward.12']
    %19 = vsyncpa [#allocation6], 0
    %20 = vsyncpa [#allocation8], 0
    %21 = vsyncpa [#allocation11], 0
    loop: start=0, step=1, limit=4
    $region2: #{tts_forward.12} parent=1 // loop_pre_header
      _
    $region3: #{tts_forward.12} parent=1 // loop_header
      %s23 = sphi 0, %s27
      %p24 = scmp.ge.s32.totalorder %s23, 4
      %s33 = sphi 0, %s35
      %s36 = sphi 0, %s33
      %s37 = sphi 0, %s36
      %s53 = sphi 0, %s37
      %s57 = sphi 0, %s57
      %s59 = sphi 0, %s57
      %s60 = sphi 0, %s59
      %s74 = sphi 0, %s60
      %s78 = sphi 0, %s78
      %s80 = sphi 0, %s78
      %s81 = sphi 0, %s80
      %s95 = sphi 0, %s81
      %s99 = sphi 0, %s99
      %s101 = sphi 0, %s99
      %s102 = sphi 0, %s101
      %s116 = sphi 0, %s102
      %s120 = sphi 0, %s120
      %s122 = sphi 0, %s120
      %s123 = sphi 0, %s122
      %s137 = sphi 0, %s123
      %s141 = sphi 0, %s141
      %s143 = sphi 0, %s141
      %s144 = sphi 0, %s143
      %s158 = sphi 0, %s144
      %s162 = sphi 0, %s162
      %s164 = sphi 0, %s162
      %s165 = sphi 0, %s164
      %s179 = sphi 0, %s165
      %s185 = sphi 0, %s187
      %s188 = sphi 0, %s185
      %s189 = sphi 0, %s188
      %s205 = sphi 0, %s189
    $region4: #{tts_forward.12} parent=1 // loop_header_branch
      %26 = sbr.rel (%p24) target = $region8
    $region5: #{tts_forward.12} parent=1 // loop_body
      %s28 = ssub.s32 %s23, 1
      %s29 = ssub.s32 %s23, 2
      %s30 = sadd.s32 %s23, 1
      %s31 = ssub.s32 %s23, %s30
      %p32 = scmp.eq.s32.totalorder %s31, 0
      %s34 = sadd.s32 %s33, 1
      %s35 = scalar_select %p32, %s33, %s34
      %p38 = pneg %p32
      %p39 = scmp.eq.s32.totalorder %s23, 1
      %p40 = por %p38, %p39
      %p41 = scmp.ne.s32.totalorder %s33, %s36
      %p42 = scmp.eq.s32.totalorder %s23, 0
      %p43 = por %p41, %p42
      %p44 = scmp.ne.s32.totalorder %s33, %s36
      %p45 = scmp.eq.s32.totalorder %s28, 1
      %p46 = por %p44, %p45
      %p47 = scmp.ne.s32.totalorder %s36, %s37
      %p48 = scmp.eq.s32.totalorder %s28, 0
      %p49 = por %p47, %p48
      %p50 = scmp.ne.s32.totalorder %s36, %s37
      %p51 = scmp.eq.s32.totalorder %s29, 1
      %p52 = por %p50, %p51
      %p54 = scmp.ne.s32.totalorder %s37, %s53
      %p55 = scmp.eq.s32.totalorder %s29, 0
      %p56 = por %p54, %p55
      %s58 = sadd.s32 %s57, 1
      %p61 = scmp.eq.s32.totalorder %s23, 1
      %p62 = scmp.ne.s32.totalorder %s57, %s59
      %p63 = scmp.eq.s32.totalorder %s23, 0
      %p64 = por %p62, %p63
      %p65 = scmp.ne.s32.totalorder %s57, %s59
      %p66 = scmp.eq.s32.totalorder %s28, 1
      %p67 = por %p65, %p66
      %p68 = scmp.ne.s32.totalorder %s59, %s60
      %p69 = scmp.eq.s32.totalorder %s28, 0
      %p70 = por %p68, %p69
      %p71 = scmp.ne.s32.totalorder %s59, %s60
      %p72 = scmp.eq.s32.totalorder %s29, 1
      %p73 = por %p71, %p72
      %p75 = scmp.ne.s32.totalorder %s60, %s74
      %p76 = scmp.eq.s32.totalorder %s29, 0
      %p77 = por %p75, %p76
      %s79 = sadd.s32 %s78, 1
      %p82 = scmp.eq.s32.totalorder %s23, 1
      %p83 = scmp.ne.s32.totalorder %s78, %s80
      %p84 = scmp.eq.s32.totalorder %s23, 0
      %p85 = por %p83, %p84
      %p86 = scmp.ne.s32.totalorder %s78, %s80
      %p87 = scmp.eq.s32.totalorder %s28, 1
      %p88 = por %p86, %p87
      %p89 = scmp.ne.s32.totalorder %s80, %s81
      %p90 = scmp.eq.s32.totalorder %s28, 0
      %p91 = por %p89, %p90
      %p92 = scmp.ne.s32.totalorder %s80, %s81
      %p93 = scmp.eq.s32.totalorder %s29, 1
      %p94 = por %p92, %p93
      %p96 = scmp.ne.s32.totalorder %s81, %s95
      %p97 = scmp.eq.s32.totalorder %s29, 0
      %p98 = por %p96, %p97
      %s100 = sadd.s32 %s99, 1
      %p103 = scmp.eq.s32.totalorder %s23, 1
      %p104 = scmp.ne.s32.totalorder %s99, %s101
      %p105 = scmp.eq.s32.totalorder %s23, 0
      %p106 = por %p104, %p105
      %p107 = scmp.ne.s32.totalorder %s99, %s101
      %p108 = scmp.eq.s32.totalorder %s28, 1
      %p109 = por %p107, %p108
      %p110 = scmp.ne.s32.totalorder %s101, %s102
      %p111 = scmp.eq.s32.totalorder %s28, 0
      %p112 = por %p110, %p111
      %p113 = scmp.ne.s32.totalorder %s101, %s102
      %p114 = scmp.eq.s32.totalorder %s29, 1
      %p115 = por %p113, %p114
      %p117 = scmp.ne.s32.totalorder %s102, %s116
      %p118 = scmp.eq.s32.totalorder %s29, 0
      %p119 = por %p117, %p118
      %s121 = sadd.s32 %s120, 1
      %p124 = scmp.eq.s32.totalorder %s23, 1
      %p125 = scmp.ne.s32.totalorder %s120, %s122
      %p126 = scmp.eq.s32.totalorder %s23, 0
      %p127 = por %p125, %p126
      %p128 = scmp.ne.s32.totalorder %s120, %s122
      %p129 = scmp.eq.s32.totalorder %s28, 1
      %p130 = por %p128, %p129
      %p131 = scmp.ne.s32.totalorder %s122, %s123
      %p132 = scmp.eq.s32.totalorder %s28, 0
      %p133 = por %p131, %p132
      %p134 = scmp.ne.s32.totalorder %s122, %s123
      %p135 = scmp.eq.s32.totalorder %s29, 1
      %p136 = por %p134, %p135
      %p138 = scmp.ne.s32.totalorder %s123, %s137
      %p139 = scmp.eq.s32.totalorder %s29, 0
      %p140 = por %p138, %p139
      %s142 = sadd.s32 %s141, 1
      %p145 = scmp.eq.s32.totalorder %s23, 1
      %p146 = scmp.ne.s32.totalorder %s141, %s143
      %p147 = scmp.eq.s32.totalorder %s23, 0
      %p148 = por %p146, %p147
      %p149 = scmp.ne.s32.totalorder %s141, %s143
      %p150 = scmp.eq.s32.totalorder %s28, 1
      %p151 = por %p149, %p150
      %p152 = scmp.ne.s32.totalorder %s143, %s144
      %p153 = scmp.eq.s32.totalorder %s28, 0
      %p154 = por %p152, %p153
      %p155 = scmp.ne.s32.totalorder %s143, %s144
      %p156 = scmp.eq.s32.totalorder %s29, 1
      %p157 = por %p155, %p156
      %p159 = scmp.ne.s32.totalorder %s144, %s158
      %p160 = scmp.eq.s32.totalorder %s29, 0
      %p161 = por %p159, %p160
      %s163 = sadd.s32 %s162, 1
      %p166 = scmp.eq.s32.totalorder %s23, 1
      %p167 = scmp.ne.s32.totalorder %s162, %s164
      %p168 = scmp.eq.s32.totalorder %s23, 0
      %p169 = por %p167, %p168
      %p170 = scmp.ne.s32.totalorder %s162, %s164
      %p171 = scmp.eq.s32.totalorder %s28, 1
      %p172 = por %p170, %p171
      %p173 = scmp.ne.s32.totalorder %s164, %s165
      %p174 = scmp.eq.s32.totalorder %s28, 0
      %p175 = por %p173, %p174
      %p176 = scmp.ne.s32.totalorder %s164, %s165
      %p177 = scmp.eq.s32.totalorder %s29, 1
      %p178 = por %p176, %p177
      %p180 = scmp.ne.s32.totalorder %s165, %s179
      %p181 = scmp.eq.s32.totalorder %s29, 0
      %p182 = por %p180, %p181
      %s183 = ssub.s32 %s23, %s30
      %p184 = scmp.eq.s32.totalorder %s183, 0
      %s186 = sadd.s32 %s185, 1
      %s187 = scalar_select %p184, %s185, %s186
      %p190 = pneg %p184
      %p191 = scmp.eq.s32.totalorder %s23, 1
      %p192 = por %p190, %p191
      %p193 = scmp.ne.s32.totalorder %s185, %s188
      %p194 = scmp.eq.s32.totalorder %s23, 0
      %p195 = por %p193, %p194
      %p196 = scmp.ne.s32.totalorder %s185, %s188
      %p197 = scmp.eq.s32.totalorder %s28, 1
      %p198 = por %p196, %p197
      %p199 = scmp.ne.s32.totalorder %s188, %s189
      %p200 = scmp.eq.s32.totalorder %s28, 0
      %p201 = por %p199, %p200
      %p202 = scmp.ne.s32.totalorder %s188, %s189
      %p203 = scmp.eq.s32.totalorder %s29, 1
      %p204 = por %p202, %p203
      %p206 = scmp.ne.s32.totalorder %s189, %s205
      %p207 = scmp.eq.s32.totalorder %s29, 0
      %p208 = por %p206, %p207
      %p209 = scmp.le.s32.totalorder 1, %s23
      %p210 = scmp.lt.s32.totalorder %s23, 3
      %p211 = pnand %p209, %p210
      %p212 = pneg %p211
      // Predicated region
      $region9: #{tts_forward.12} parent=5 // pred_check
        _
      $region10: #{tts_forward.12} parent=5 // pred_check_branch
        %214 = sbr.rel (%p211) target = $region12
      $region11: #{tts_forward.12} parent=5 // pred_region
        %s215 = ssub.s32 %s23, 1
        // Predicated region
        $region13: #{tts_forward.12} parent=11 // pred_check
          %p216 = pneg %p70
        $region14: #{tts_forward.12} parent=11 // pred_check_branch
          %218 = sbr.rel (%p216) target = $region16
        $region15: #{tts_forward.12} parent=11 // pred_region
          _
        $region16: #{tts_forward.12} parent=11 // pred_fallthru
          _
        // Predicated region
        $region17: #{tts_forward.12} parent=11 // pred_check
          %p219 = pneg %p91
        $region18: #{tts_forward.12} parent=11 // pred_check_branch
          %221 = sbr.rel (%p219) target = $region20
        $region19: #{tts_forward.12} parent=11 // pred_region
          _
        $region20: #{tts_forward.12} parent=11 // pred_fallthru
          _
        // Predicated region
        $region21: #{tts_forward.12} parent=11 // pred_check
          %p222 = pneg %p112
        $region22: #{tts_forward.12} parent=11 // pred_check_branch
          %224 = sbr.rel (%p222) target = $region24
        $region23: #{tts_forward.12} parent=11 // pred_region
          %s226 = ssub.s32 1024, 1024
          %227 = vsyncadd [#allocation6], %s226
          %s228 = sshll.u32 [#allocation5], 4
          %s229 = int_to_ptr.vmem [resolvable:$true] %s228
          %234 = dma.hbm_to_vmem [thread:$0]  %s4, 1024, %s229, [#allocation6], 64, 64, 4
        $region24: #{tts_forward.12} parent=11 // pred_fallthru
          _
        // Predicated region
        $region25: #{tts_forward.12} parent=11 // pred_check
          %p235 = pneg %p133
        $region26: #{tts_forward.12} parent=11 // pred_check_branch
          %237 = sbr.rel (%p235) target = $region28
        $region27: #{tts_forward.12} parent=11 // pred_region
          %s239 = ssub.s32 16, 16
          %240 = vsyncadd [#allocation8], %s239
          %s242 = sshll.u32 [#allocation7], 4
          %s243 = int_to_ptr.vmem [resolvable:$true] %s242
          %245 = dma.hbm_to_vmem [thread:$0]  %s5, 16, %s243, [#allocation8]
        $region28: #{tts_forward.12} parent=11 // pred_fallthru
          _
        // Predicated region
        $region29: #{tts_forward.12} parent=11 // pred_check
          %p246 = pneg %p154
        $region30: #{tts_forward.12} parent=11 // pred_check_branch
          %248 = sbr.rel (%p246) target = $region32
        $region31: #{tts_forward.12} parent=11 // pred_region
          %s250 = ssub.s32 16, 16
          %251 = vsyncadd [#allocation8], %s250
          %s253 = sshll.u32 [#allocation9], 4
          %s254 = int_to_ptr.vmem [resolvable:$true] %s253
          %256 = dma.hbm_to_vmem [thread:$0]  %s6, 16, %s254, [#allocation8]
        $region32: #{tts_forward.12} parent=11 // pred_fallthru
          _
        // Predicated region
        $region33: #{tts_forward.12} parent=11 // pred_check
          %p257 = pneg %p175
        $region34: #{tts_forward.12} parent=11 // pred_check_branch
          %259 = sbr.rel (%p257) target = $region36
        $region35: #{tts_forward.12} parent=11 // pred_region
          %s261 = ssub.s32 16, 16
          %262 = vsyncadd [#allocation11], %s261
          %s264 = sshll.u32 [#allocation10], 4
          %s265 = int_to_ptr.vmem [resolvable:$true] %s264
          %267 = dma.hbm_to_vmem [thread:$0]  %s7, 16, %s265, [#allocation11]
        $region36: #{tts_forward.12} parent=11 // pred_fallthru
          _
      $region12: #{tts_forward.12} parent=5 // pred_fallthru
        _
      %p268 = scmp.lt.s32.totalorder %s23, 2
      // Predicated region
      $region37: #{tts_forward.12} parent=5 // pred_check
        %p269 = pneg %p268
      $region38: #{tts_forward.12} parent=5 // pred_check_branch
        %271 = sbr.rel (%p269) target = $region40
      $region39: #{tts_forward.12} parent=5 // pred_region
        // Predicated region
        $region41: #{tts_forward.12} parent=39 // pred_check
          %p272 = pneg %p43
        $region42: #{tts_forward.12} parent=39 // pred_check_branch
          %274 = sbr.rel (%p272) target = $region44
        $region43: #{tts_forward.12} parent=39 // pred_region
          %p275 = scmp.lt.s32.totalorder %s23, 1
          %s276 = scalar_select %p275, %s23, 1
          %s277 = smul.addr %s276, 4
          %s278 = scalar_lea.vmem %s1, %s277
        $region44: #{tts_forward.12} parent=39 // pred_fallthru
          _
      $region40: #{tts_forward.12} parent=5 // pred_fallthru
        _
      %p279 = scmp.le.s32.totalorder 1, %s23
      %p280 = scmp.lt.s32.totalorder %s23, 3
      %p281 = pnand %p279, %p280
      %p282 = pneg %p281
      // Predicated region
      $region45: #{tts_forward.12} parent=5 // pred_check
        _
      $region46: #{tts_forward.12} parent=5 // pred_check_branch
        %284 = sbr.rel (%p281) target = $region48
      $region47: #{tts_forward.12} parent=5 // pred_region
        %s285 = ssub.s32 %s23, 1
        // Predicated region
        $region49: #{tts_forward.12} parent=47 // pred_check
          %p286 = pneg %p112
        $region50: #{tts_forward.12} parent=47 // pred_check_branch
          %288 = sbr.rel (%p286) target = $region52
        $region51: #{tts_forward.12} parent=47 // pred_region
          %289 = dma.done [#allocation6], 1024
        $region52: #{tts_forward.12} parent=47 // pred_fallthru
          _
        // Predicated region
        $region53: #{tts_forward.12} parent=47 // pred_check
          %p290 = pneg %p133
        $region54: #{tts_forward.12} parent=47 // pred_check_branch
          %292 = sbr.rel (%p290) target = $region56
        $region55: #{tts_forward.12} parent=47 // pred_region
          %293 = dma.done [#allocation8], 16
        $region56: #{tts_forward.12} parent=47 // pred_fallthru
          _
        // Predicated region
        $region57: #{tts_forward.12} parent=47 // pred_check
          %p294 = pneg %p154
        $region58: #{tts_forward.12} parent=47 // pred_check_branch
          %296 = sbr.rel (%p294) target = $region60
        $region59: #{tts_forward.12} parent=47 // pred_region
          %297 = dma.done [#allocation8], 16
        $region60: #{tts_forward.12} parent=47 // pred_fallthru
          _
        // Predicated region
        $region61: #{tts_forward.12} parent=47 // pred_check
          %p298 = pneg %p175
        $region62: #{tts_forward.12} parent=47 // pred_check_branch
          %300 = sbr.rel (%p298) target = $region64
        $region63: #{tts_forward.12} parent=47 // pred_region
          %301 = dma.done [#allocation11], 16
        $region64: #{tts_forward.12} parent=47 // pred_fallthru
          _
        %p302 = scmp.lt.s32.totalorder %s28, 1
        %s303 = scalar_select %p302, %s28, 1
        %s304 = smul.addr %s303, 4
        %s305 = scalar_lea.vmem %s1, %s304
        %p306 = pneg %p49
        %p307 = pneg %p46
        %p308 = pneg %p70
        %p309 = pneg %p67
        %p310 = pneg %p91
        %p311 = pneg %p88
        %p312 = pneg %p112
        %p313 = pneg %p109
        %p314 = pneg %p133
        %p315 = pneg %p130
        %p316 = pneg %p154
        %p317 = pneg %p151
        %p318 = pneg %p175
        %p319 = pneg %p172
        %p320 = pneg %p201
        %p321 = pneg %p198
        %p322 = scmp.lt.s32.totalorder %s28, 1
        %s323 = scalar_select %p322, %s28, 1
        %s324 = smul.addr %s323, 4
        %s325 = scalar_lea.vmem %s8, %s324
        %p326 = scmp.lt.s32.totalorder %s28, 1
        %s327 = scalar_select %p326, %s28, 1
        %s328 = smul.addr %s327, 4
        %s329 = scalar_lea.vmem %s1, %s328
        %p330 = scmp.lt.s32.totalorder %s28, 1
        %s331 = scalar_select %p330, %s28, 1
        %s332 = smul.addr %s331, 4
        %s333 = scalar_lea.vmem %s8, %s332
        %v335 = vld [vmem:[%s329] sm:$0xf]
        %v336 = vunpack.c.l.bf16 %v335
        %v337 = vld [vmem:[%s2] sm:$0xff]
        %v338 = vld [vmem:[%s2 + $0x8] sm:$0xf]
        %v339 = vld [vmem:[%s2 + $0xc] sm:$0xff]
        %v340 = vld [vmem:[%s2 + $0x14] sm:$0xf]
        %v341 = vld [vmem:[%s2 + $0x18] sm:$0xff]
        %v342 = vld [vmem:[%s2 + $0x20] sm:$0xf]
        %v343 = vld [vmem:[%s2 + $0x24] sm:$0xff]
        %v344 = vld [vmem:[%s2 + $0x2c] sm:$0xf]
        %v345 = vld [vmem:[%s2 + $0x30] sm:$0xff]
        %v346 = vld [vmem:[%s2 + $0x38] sm:$0xf]
        %v347 = vld [vmem:[%s2 + $0x3c] sm:$0xff]
        %v348 = vld [vmem:[%s2 + $0x44] sm:$0xf]
        %v349 = vld [vmem:[%s2 + $0x48] sm:$0xff]
        %v350 = vld [vmem:[%s2 + $0x50] sm:$0xf]
        %v351 = vld [vmem:[%s2 + $0x54] sm:$0xff]
        %v352 = vld [vmem:[%s2 + $0x5c] sm:$0xf]
        %v353 = vld [vmem:[%s2 + $0x60] sm:$0xff]
        %v354 = vld [vmem:[%s2 + $0x68] sm:$0xf]
        %v355 = vld [vmem:[%s2 + $0x6c] sm:$0xff]
        %v356 = vld [vmem:[%s2 + $0x74] sm:$0xf]
        %v357 = vld [vmem:[%s2 + $0x78] sm:$0xff]
        %v358 = vld [vmem:[%s2 + $0x80] sm:$0xf]
        %v359 = vld [vmem:[%s2 + $0x84] sm:$0xff]
        %v360 = vld [vmem:[%s2 + $0x8c] sm:$0xf]
        %v361 = vld [vmem:[%s2 + $0x90] sm:$0xff]
        %v362 = vld [vmem:[%s2 + $0x98] sm:$0xf]
        %v363 = vld [vmem:[%s2 + $0x9c] sm:$0xff]
        %v364 = vld [vmem:[%s2 + $0xa4] sm:$0xf]
        %v365 = vld [vmem:[%s2 + $0xa8] sm:$0xff]
        %v366 = vld [vmem:[%s2 + $0xb0] sm:$0xf]
        %v367 = vld [vmem:[%s2 + $0xb4] sm:$0xff]
        %v368 = vld [vmem:[%s2 + $0xbc] sm:$0xf]
        %v369 = vld [vmem:[%s3] sm:$0x7]
        %v371 = vlaneseq
        %v372 = vshrl.u32 %v371, 7
        %v373 = vsub.s32 0, %v372
        %v374 = vrot.slane %v369, %v373
        %v375 = vlaneseq
        %v376 = vshrl.u32 %v375, 7
        %v377 = vsub.s32 1, %v376
        %v378 = vrot.slane %v369, %v377
        %v379 = vlaneseq
        %v380 = vshrl.u32 %v379, 7
        %v381 = vsub.s32 2, %v380
        %v382 = vrot.slane %v369, %v381
        %v418 = vunpack.c.l.b16 %v337
        %v419 = vunpack.c.h.b16 %v337
        %v420 = vunpack.c.l.b16 %v338
        %v421 = vunpack.c.l.b16 %v339
        %v422 = vunpack.c.h.b16 %v339
        %v423 = vunpack.c.l.b16 %v340
        %v424 = vunpack.c.l.b16 %v341
        %v425 = vunpack.c.h.b16 %v341
        %v426 = vunpack.c.l.b16 %v342
        %v427 = vunpack.c.l.b16 %v343
        %v428 = vunpack.c.h.b16 %v343
        %v429 = vunpack.c.l.b16 %v344
        %v430 = vunpack.c.l.b16 %v345
        %v431 = vunpack.c.h.b16 %v345
        %v432 = vunpack.c.l.b16 %v346
        %v433 = vunpack.c.l.b16 %v347
        %v434 = vunpack.c.h.b16 %v347
        %v435 = vunpack.c.l.b16 %v348
        %v436 = vunpack.c.l.b16 %v349
        %v437 = vunpack.c.h.b16 %v349
        %v438 = vunpack.c.l.b16 %v350
        %v439 = vunpack.c.l.b16 %v351
        %v440 = vunpack.c.h.b16 %v351
        %v441 = vunpack.c.l.b16 %v352
        %v442 = vunpack.c.l.b16 %v353
        %v443 = vunpack.c.h.b16 %v353
        %v444 = vunpack.c.l.b16 %v354
        %v445 = vunpack.c.l.b16 %v355
        %v446 = vunpack.c.h.b16 %v355
        %v447 = vunpack.c.l.b16 %v356
        %v448 = vunpack.c.l.b16 %v357
        %v449 = vunpack.c.h.b16 %v357
        %v450 = vunpack.c.l.b16 %v358
        %v451 = vunpack.c.l.b16 %v359
        %v452 = vunpack.c.h.b16 %v359
        %v453 = vunpack.c.l.b16 %v360
        %v454 = vunpack.c.l.b16 %v361
        %v455 = vunpack.c.h.b16 %v361
        %v456 = vunpack.c.l.b16 %v362
        %v457 = vunpack.c.l.b16 %v363
        %v458 = vunpack.c.h.b16 %v363
        %v459 = vunpack.c.l.b16 %v364
        %v460 = vunpack.c.l.b16 %v365
        %v461 = vunpack.c.h.b16 %v365
        %v462 = vunpack.c.l.b16 %v366
        %v463 = vunpack.c.l.b16 %v367
        %v464 = vunpack.c.h.b16 %v367
        %v465 = vunpack.c.l.b16 %v368
        %v466 = vpack.c.b16 %v421, %v418
        %v467 = vpack.c.b16 %v422, %v419
        %v468 = vpack.c.b16 %v423, %v420
        %v469 = vpack.c.b16 %v427, %v424
        %v470 = vpack.c.b16 %v428, %v425
        %v471 = vpack.c.b16 %v429, %v426
        %v472 = vpack.c.b16 %v433, %v430
        %v473 = vpack.c.b16 %v434, %v431
        %v474 = vpack.c.b16 %v435, %v432
        %v475 = vpack.c.b16 %v439, %v436
        %v476 = vpack.c.b16 %v440, %v437
        %v477 = vpack.c.b16 %v441, %v438
        %v478 = vpack.c.b16 %v445, %v442
        %v479 = vpack.c.b16 %v446, %v443
        %v480 = vpack.c.b16 %v447, %v444
        %v481 = vpack.c.b16 %v451, %v448
        %v482 = vpack.c.b16 %v452, %v449
        %v483 = vpack.c.b16 %v453, %v450
        %v484 = vpack.c.b16 %v457, %v454
        %v485 = vpack.c.b16 %v458, %v455
        %v486 = vpack.c.b16 %v459, %v456
        %v487 = vpack.c.b16 %v463, %v460
        %v488 = vpack.c.b16 %v464, %v461
        %v489 = vpack.c.b16 %v465, %v462
        %514 = vmatprep.subr.bf16.mxu0 %v467
        %515 = vmatpush1.bf16.msra.mxu0 %v466
        %516 = vmatprep.subr.bf16.mxu0 %v470
        %517 = vmatpush1.bf16.msra.mxu0 %v469
        %518 = vmatprep.subr.bf16.mxu0 %v473
        %519 = vmatpush1.bf16.msra.mxu0 %v472
        %520 = vmatprep.subr.bf16.mxu0 %v476
        %521 = vmatpush1.bf16.msra.mxu0 %v475
        %522 = vmatprep.subr.bf16.mxu0 %v479
        %523 = vmatpush1.bf16.msra.mxu0 %v478
        %524 = vmatprep.subr.bf16.mxu0 %v482
        %525 = vmatpush1.bf16.msra.mxu0 %v481
        %526 = vmatprep.subr.bf16.mxu0 %v485
        %527 = vmatpush1.bf16.msra.mxu0 %v484
        %528 = vmatprep.subr.bf16.mxu0 %v488
        %529 = vmatpush1.bf16.msra.mxu0 %v487
        %530 = vmatprep.subr.bf16.mxu0 0
        %531 = vmatpush1.bf16.msra.mxu0 0
        %532 = vmatprep.subr.bf16.mxu0 0
        %533 = vmatpush1.bf16.msra.mxu0 0
        %534 = vmatprep.subr.bf16.mxu0 0
        %535 = vmatpush1.bf16.msra.mxu0 0
        %536 = vmatprep.subr.bf16.mxu0 0
        %537 = vmatpush1.bf16.msra.mxu0 0
        %538 = vmatprep.subr.bf16.mxu0 0
        %539 = vmatpush1.bf16.msra.mxu0 0
        %540 = vmatprep.subr.bf16.mxu0 0
        %541 = vmatpush1.bf16.msra.mxu0 0
        %542 = vmatprep.subr.bf16.mxu0 0
        %543 = vmatpush1.bf16.msra.mxu0 0
        %544 = vmatprep.subr.bf16.mxu0 0
        %545 = vmatpush1.bf16.msra.mxu0 0
        %546 = vmatprep.mubr.bf16.mxu0 0
        %547 = vmatmul.mubr.bf16.gmra.mrb[0].mxu0 %v335
        %v548 = vpop.f32.mrb[0].mxu0
        %v549 = vadd.f32 %v374, %v548
        %v550 = vpop.f32.mrb[0].mxu0
        %v551 = vadd.f32 %v378, %v550
        %v552 = vpop.f32.mrb[0].mxu0
        %v553 = vpop.f32.mrb[0].mxu0
        %554 = vdwg.mxu0
        %555 = vmatprep.subr.bf16.mxu0 0
        %556 = vmatpush1.bf16.msra.mxu0 %v468
        %557 = vmatprep.subr.bf16.mxu0 0
        %558 = vmatpush1.bf16.msra.mxu0 %v471
        %559 = vmatprep.subr.bf16.mxu0 0
        %560 = vmatpush1.bf16.msra.mxu0 %v474
        %561 = vmatprep.subr.bf16.mxu0 0
        %562 = vmatpush1.bf16.msra.mxu0 %v477
        %563 = vmatprep.subr.bf16.mxu0 0
        %564 = vmatpush1.bf16.msra.mxu0 %v480
        %565 = vmatprep.subr.bf16.mxu0 0
        %566 = vmatpush1.bf16.msra.mxu0 %v483
        %567 = vmatprep.subr.bf16.mxu0 0
        %568 = vmatpush1.bf16.msra.mxu0 %v486
        %569 = vmatprep.subr.bf16.mxu0 0
        %570 = vmatpush1.bf16.msra.mxu0 %v489
        %571 = vmatprep.subr.bf16.mxu0 0
        %572 = vmatpush1.bf16.msra.mxu0 0
        %573 = vmatprep.subr.bf16.mxu0 0
        %574 = vmatpush1.bf16.msra.mxu0 0
        %575 = vmatprep.subr.bf16.mxu0 0
        %576 = vmatpush1.bf16.msra.mxu0 0
        %577 = vmatprep.subr.bf16.mxu0 0
        %578 = vmatpush1.bf16.msra.mxu0 0
        %579 = vmatprep.subr.bf16.mxu0 0
        %580 = vmatpush1.bf16.msra.mxu0 0
        %581 = vmatprep.subr.bf16.mxu0 0
        %582 = vmatpush1.bf16.msra.mxu0 0
        %583 = vmatprep.subr.bf16.mxu0 0
        %584 = vmatpush1.bf16.msra.mxu0 0
        %585 = vmatprep.subr.bf16.mxu0 0
        %586 = vmatpush1.bf16.msra.mxu0 0
        %587 = vmatprep.mubr.bf16.mxu0 0
        %588 = vmatmul.mubr.bf16.gmra.mrb[0].mxu0 %v335
        %v589 = vpop.f32.mrb[0].mxu0
        %v590 = vadd.f32 %v382, %v589
        %v591 = vpop.f32.mrb[0].mxu0
        %v592 = vpop.f32.mrb[0].mxu0
        %v593 = vpop.f32.mrb[0].mxu0
        %594 = vdwg.mxu0
        %v595 = vmul.f32 %v549, 0.17677669
        %s596 = sld [smem:[#allocation4 + %s28]]
        %v597 = vlaneseq
        %v598 = vand.u32 %v597, 127
        %v599 = vstv %s596
        %vm600 = vcmp.lt.s32.totalorder %v598, %v599
        %v601 = vpack.c.bf16 %v595, %v595
        %v602 = vpack.c.bf16 %v551, %v551
        %v603 = vpack.c.bf16 %v590, %v590
        %vm604 = vcmask 261120
        %v606 = vsel %vm604, %v601, 0
        %v609 = vsel %vm604, %v602, 0
        %611 = vmatprep.subr.bf16.mxu0 0
        %612 = vmatpush1.bf16.xpose.msra.mxu0 %v609
        %613 = vmatprep.subr.bf16.mxu0 0
        %614 = vmatpush1.bf16.xpose.msra.mxu0 0
        %615 = vmatprep.subr.bf16.mxu0 0
        %616 = vmatpush1.bf16.xpose.msra.mxu0 0
        %617 = vmatprep.subr.bf16.mxu0 0
        %618 = vmatpush1.bf16.xpose.msra.mxu0 0
        %619 = vmatprep.subr.bf16.mxu0 0
        %620 = vmatpush1.bf16.xpose.msra.mxu0 0
        %621 = vmatprep.subr.bf16.mxu0 0
        %622 = vmatpush1.bf16.xpose.msra.mxu0 0
        %623 = vmatprep.subr.bf16.mxu0 0
        %624 = vmatpush1.bf16.xpose.msra.mxu0 0
        %625 = vmatprep.subr.bf16.mxu0 0
        %626 = vmatpush1.bf16.xpose.msra.mxu0 0
        %627 = vmatprep.subr.bf16.mxu0 0
        %628 = vmatpush1.bf16.xpose.msra.mxu0 0
        %629 = vmatprep.subr.bf16.mxu0 0
        %630 = vmatpush1.bf16.xpose.msra.mxu0 0
        %631 = vmatprep.subr.bf16.mxu0 0
        %632 = vmatpush1.bf16.xpose.msra.mxu0 0
        %633 = vmatprep.subr.bf16.mxu0 0
        %634 = vmatpush1.bf16.xpose.msra.mxu0 0
        %635 = vmatprep.subr.bf16.mxu0 0
        %636 = vmatpush1.bf16.xpose.msra.mxu0 0
        %637 = vmatprep.subr.bf16.mxu0 0
        %638 = vmatpush1.bf16.xpose.msra.mxu0 0
        %639 = vmatprep.subr.bf16.mxu0 0
        %640 = vmatpush1.bf16.xpose.msra.mxu0 0
        %641 = vmatprep.subr.bf16.mxu0 0
        %642 = vmatpush1.bf16.xpose.msra.mxu0 0
        %643 = vmatprep.mubr.bf16.mxu0 0
        %644 = vmatmul.mubr.bf16.gmra.mrb[0].mxu0 %v606
        %v645 = vpop.f32.mrb[0].mxu0
        %v646 = vadd.f32 0.0, %v645
        %v647 = vpop.f32.mrb[0].mxu0
        %v648 = vpop.f32.mrb[0].mxu0
        %v649 = vpop.f32.mrb[0].mxu0
        %650 = vdwg.mxu0
        %v651 = vsel %vm600, %v646, -1e+09
        %vm652 = vcmask 64512
        %v653 = vsel %vm652, %v651, -inf
        %654 = vmax.xlane.f32.xlu0 %v653
        %v655 = vpop.xlane.xlu0 %654
        %v656 = vsub.f32 %v651, %v655
        %v657 = vmul.f32 %v656, 1.442695
        %v658 = vpow.pop %v657
        %v659 = vsel %vm652, %v658, 0.0
        %660 = vadd.xlane.f32.xlu0 %v659
        %v661 = vpop.xlane.xlu0 %660
        %v662 = vrcp.pop %v661
        %v663 = vmul.f32 %v658, %v662
        %v664 = vpack.c.bf16 %v663, %v663
        %v666 = vsel %vm652, %v664, 0
        %vm668 = vcmask 1043456
        %v670 = vsel %vm668, %v603, 0
        %672 = vmatprep.subr.bf16.mxu0 0
        %673 = vmatpush1.bf16.msra.mxu0 %v670
        %674 = vmatprep.subr.bf16.mxu0 0
        %675 = vmatpush1.bf16.msra.mxu0 0
        %676 = vmatprep.subr.bf16.mxu0 0
        %677 = vmatpush1.bf16.msra.mxu0 0
        %678 = vmatprep.subr.bf16.mxu0 0
        %679 = vmatpush1.bf16.msra.mxu0 0
        %680 = vmatprep.subr.bf16.mxu0 0
        %681 = vmatpush1.bf16.msra.mxu0 0
        %682 = vmatprep.subr.bf16.mxu0 0
        %683 = vmatpush1.bf16.msra.mxu0 0
        %684 = vmatprep.subr.bf16.mxu0 0
        %685 = vmatpush1.bf16.msra.mxu0 0
        %686 = vmatprep.subr.bf16.mxu0 0
        %687 = vmatpush1.bf16.msra.mxu0 0
        %688 = vmatprep.subr.bf16.mxu0 0
        %689 = vmatpush1.bf16.msra.mxu0 0
        %690 = vmatprep.subr.bf16.mxu0 0
        %691 = vmatpush1.bf16.msra.mxu0 0
        %692 = vmatprep.subr.bf16.mxu0 0
        %693 = vmatpush1.bf16.msra.mxu0 0
        %694 = vmatprep.subr.bf16.mxu0 0
        %695 = vmatpush1.bf16.msra.mxu0 0
        %696 = vmatprep.subr.bf16.mxu0 0
        %697 = vmatpush1.bf16.msra.mxu0 0
        %698 = vmatprep.subr.bf16.mxu0 0
        %699 = vmatpush1.bf16.msra.mxu0 0
        %700 = vmatprep.subr.bf16.mxu0 0
        %701 = vmatpush1.bf16.msra.mxu0 0
        %702 = vmatprep.subr.bf16.mxu0 0
        %703 = vmatpush1.bf16.msra.mxu0 0
        %704 = vmatprep.mubr.bf16.mxu0 0
        %705 = vmatmul.mubr.bf16.gmra.mrb[0].mxu0 %v666
        %v706 = vpop.f32.mrb[0].mxu0
        %v707 = vadd.f32 0.0, %v706
        %v708 = vpop.f32.mrb[0].mxu0
        %v709 = vpop.f32.mrb[0].mxu0
        %v710 = vpop.f32.mrb[0].mxu0
        %711 = vdwg.mxu0
        %712 = vst.msk [vmem:[#allocation2] sm:$0xff] %vm604, %v707
        %714 = vrot.lane.b32.xlu0 %v601, 96
        %v715 = vpop.permute.xlu0 %714
        %717 = vrot.lane.b32.xlu0 %v602, 96
        %v718 = vpop.permute.xlu0 %717
        %v720 = vsel %vm604, %v715, 0
        %v723 = vsel %vm604, %v718, 0
        %725 = vmatprep.subr.bf16.mxu0 0
        %726 = vmatpush1.bf16.xpose.msra.mxu0 %v723
        %727 = vmatprep.subr.bf16.mxu0 0
        %728 = vmatpush1.bf16.xpose.msra.mxu0 0
        %729 = vmatprep.subr.bf16.mxu0 0
        %730 = vmatpush1.bf16.xpose.msra.mxu0 0
        %731 = vmatprep.subr.bf16.mxu0 0
        %732 = vmatpush1.bf16.xpose.msra.mxu0 0
        %733 = vmatprep.subr.bf16.mxu0 0
        %734 = vmatpush1.bf16.xpose.msra.mxu0 0
        %735 = vmatprep.subr.bf16.mxu0 0
        %736 = vmatpush1.bf16.xpose.msra.mxu0 0
        %737 = vmatprep.subr.bf16.mxu0 0
        %738 = vmatpush1.bf16.xpose.msra.mxu0 0
        %739 = vmatprep.subr.bf16.mxu0 0
        %740 = vmatpush1.bf16.xpose.msra.mxu0 0
        %741 = vmatprep.subr.bf16.mxu0 0
        %742 = vmatpush1.bf16.xpose.msra.mxu0 0
        %743 = vmatprep.subr.bf16.mxu0 0
        %744 = vmatpush1.bf16.xpose.msra.mxu0 0
        %745 = vmatprep.subr.bf16.mxu0 0
        %746 = vmatpush1.bf16.xpose.msra.mxu0 0
        %747 = vmatprep.subr.bf16.mxu0 0
        %748 = vmatpush1.bf16.xpose.msra.mxu0 0
        %749 = vmatprep.subr.bf16.mxu0 0
        %750 = vmatpush1.bf16.xpose.msra.mxu0 0
        %751 = vmatprep.subr.bf16.mxu0 0
        %752 = vmatpush1.bf16.xpose.msra.mxu0 0
        %753 = vmatprep.subr.bf16.mxu0 0
        %754 = vmatpush1.bf16.xpose.msra.mxu0 0
        %755 = vmatprep.subr.bf16.mxu0 0
        %756 = vmatpush1.bf16.xpose.msra.mxu0 0
        %757 = vmatprep.mubr.bf16.mxu0 0
        %758 = vmatmul.mubr.bf16.gmra.mrb[0].mxu0 %v720
        %v759 = vpop.f32.mrb[0].mxu0
        %v760 = vadd.f32 0.0, %v759
        %v761 = vpop.f32.mrb[0].mxu0
        %v762 = vpop.f32.mrb[0].mxu0
        %v763 = vpop.f32.mrb[0].mxu0
        %764 = vdwg.mxu0
        %v765 = vsel %vm600, %v760, -1e+09
        %v766 = vsel %vm652, %v765, -inf
        %767 = vmax.xlane.f32.xlu0 %v766
        %v768 = vpop.xlane.xlu0 %767
        %v769 = vsub.f32 %v765, %v768
        %v770 = vmul.f32 %v769, 1.442695
        %v771 = vpow.pop %v770
        %v772 = vsel %vm652, %v771, 0.0
        %773 = vadd.xlane.f32.xlu0 %v772
        %v774 = vpop.xlane.xlu0 %773
        %v775 = vrcp.pop %v774
        %v776 = vmul.f32 %v771, %v775
        %v777 = vpack.c.bf16 %v776, %v776
        %779 = vrot.lane.b32.xlu0 %v603, 96
        %v780 = vpop.permute.xlu0 %779
        %v782 = vsel %vm652, %v777, 0
        %v785 = vsel %vm668, %v780, 0
        %787 = vmatprep.subr.bf16.mxu0 0
        %788 = vmatpush1.bf16.msra.mxu0 %v785
        %789 = vmatprep.subr.bf16.mxu0 0
        %790 = vmatpush1.bf16.msra.mxu0 0
        %791 = vmatprep.subr.bf16.mxu0 0
        %792 = vmatpush1.bf16.msra.mxu0 0
        %793 = vmatprep.subr.bf16.mxu0 0
        %794 = vmatpush1.bf16.msra.mxu0 0
        %795 = vmatprep.subr.bf16.mxu0 0
        %796 = vmatpush1.bf16.msra.mxu0 0
        %797 = vmatprep.subr.bf16.mxu0 0
        %798 = vmatpush1.bf16.msra.mxu0 0
        %799 = vmatprep.subr.bf16.mxu0 0
        %800 = vmatpush1.bf16.msra.mxu0 0
        %801 = vmatprep.subr.bf16.mxu0 0
        %802 = vmatpush1.bf16.msra.mxu0 0
        %803 = vmatprep.subr.bf16.mxu0 0
        %804 = vmatpush1.bf16.msra.mxu0 0
        %805 = vmatprep.subr.bf16.mxu0 0
        %806 = vmatpush1.bf16.msra.mxu0 0
        %807 = vmatprep.subr.bf16.mxu0 0
        %808 = vmatpush1.bf16.msra.mxu0 0
        %809 = vmatprep.subr.bf16.mxu0 0
        %810 = vmatpush1.bf16.msra.mxu0 0
        %811 = vmatprep.subr.bf16.mxu0 0
        %812 = vmatpush1.bf16.msra.mxu0 0
        %813 = vmatprep.subr.bf16.mxu0 0
        %814 = vmatpush1.bf16.msra.mxu0 0
        %815 = vmatprep.subr.bf16.mxu0 0
        %816 = vmatpush1.bf16.msra.mxu0 0
        %817 = vmatprep.subr.bf16.mxu0 0
        %818 = vmatpush1.bf16.msra.mxu0 0
        %819 = vmatprep.mubr.bf16.mxu0 0
        %820 = vmatmul.mubr.bf16.gmra.mrb[0].mxu0 %v782
        %v821 = vpop.f32.mrb[0].mxu0
        %v822 = vadd.f32 0.0, %v821
        %v823 = vpop.f32.mrb[0].mxu0
        %v824 = vpop.f32.mrb[0].mxu0
        %v825 = vpop.f32.mrb[0].mxu0
        %826 = vdwg.mxu0
        %828 = vrot.lane.b32.xlu0 %v822, 32
        %v829 = vpop.permute.xlu0 %828
        %vm831 = vcmask 523520
        %832 = vst.msk [vmem:[#allocation2] sm:$0xff] %vm831, %v829
        %833 = vrot.lane.b32.xlu0 %v601, 64
        %v834 = vpop.permute.xlu0 %833
        %835 = vrot.lane.b32.xlu0 %v602, 64
        %v836 = vpop.permute.xlu0 %835
        %v838 = vsel %vm604, %v834, 0
        %v841 = vsel %vm604, %v836, 0
        %843 = vmatprep.subr.bf16.mxu0 0
        %844 = vmatpush1.bf16.xpose.msra.mxu0 %v841
        %845 = vmatprep.subr.bf16.mxu0 0
        %846 = vmatpush1.bf16.xpose.msra.mxu0 0
        %847 = vmatprep.subr.bf16.mxu0 0
        %848 = vmatpush1.bf16.xpose.msra.mxu0 0
        %849 = vmatprep.subr.bf16.mxu0 0
        %850 = vmatpush1.bf16.xpose.msra.mxu0 0
        %851 = vmatprep.subr.bf16.mxu0 0
        %852 = vmatpush1.bf16.xpose.msra.mxu0 0
        %853 = vmatprep.subr.bf16.mxu0 0
        %854 = vmatpush1.bf16.xpose.msra.mxu0 0
        %855 = vmatprep.subr.bf16.mxu0 0
        %856 = vmatpush1.bf16.xpose.msra.mxu0 0
        %857 = vmatprep.subr.bf16.mxu0 0
        %858 = vmatpush1.bf16.xpose.msra.mxu0 0
        %859 = vmatprep.subr.bf16.mxu0 0
        %860 = vmatpush1.bf16.xpose.msra.mxu0 0
        %861 = vmatprep.subr.bf16.mxu0 0
        %862 = vmatpush1.bf16.xpose.msra.mxu0 0
        %863 = vmatprep.subr.bf16.mxu0 0
        %864 = vmatpush1.bf16.xpose.msra.mxu0 0
        %865 = vmatprep.subr.bf16.mxu0 0
        %866 = vmatpush1.bf16.xpose.msra.mxu0 0
        %867 = vmatprep.subr.bf16.mxu0 0
        %868 = vmatpush1.bf16.xpose.msra.mxu0 0
        %869 = vmatprep.subr.bf16.mxu0 0
        %870 = vmatpush1.bf16.xpose.msra.mxu0 0
        %871 = vmatprep.subr.bf16.mxu0 0
        %872 = vmatpush1.bf16.xpose.msra.mxu0 0
        %873 = vmatprep.subr.bf16.mxu0 0
        %874 = vmatpush1.bf16.xpose.msra.mxu0 0
        %875 = vmatprep.mubr.bf16.mxu0 0
        %876 = vmatmul.mubr.bf16.gmra.mrb[0].mxu0 %v838
        %v877 = vpop.f32.mrb[0].mxu0
        %v878 = vadd.f32 0.0, %v877
        %v879 = vpop.f32.mrb[0].mxu0
        %v880 = vpop.f32.mrb[0].mxu0
        %v881 = vpop.f32.mrb[0].mxu0
        %882 = vdwg.mxu0
        %v883 = vsel %vm600, %v878, -1e+09
        %v884 = vsel %vm652, %v883, -inf
        %885 = vmax.xlane.f32.xlu0 %v884
        %v886 = vpop.xlane.xlu0 %885
        %v887 = vsub.f32 %v883, %v886
        %v888 = vmul.f32 %v887, 1.442695
        %v889 = vpow.pop %v888
        %v890 = vsel %vm652, %v889, 0.0
        %891 = vadd.xlane.f32.xlu0 %v890
        %v892 = vpop.xlane.xlu0 %891
        %v893 = vrcp.pop %v892
        %v894 = vmul.f32 %v889, %v893
        %v895 = vpack.c.bf16 %v894, %v894
        %896 = vrot.lane.b32.xlu0 %v603, 64
        %v897 = vpop.permute.xlu0 %896
        %v899 = vsel %vm652, %v895, 0
        %v902 = vsel %vm668, %v897, 0
        %904 = vmatprep.subr.bf16.mxu0 0
        %905 = vmatpush1.bf16.msra.mxu0 %v902
        %906 = vmatprep.subr.bf16.mxu0 0
        %907 = vmatpush1.bf16.msra.mxu0 0
        %908 = vmatprep.subr.bf16.mxu0 0
        %909 = vmatpush1.bf16.msra.mxu0 0
        %910 = vmatprep.subr.bf16.mxu0 0
        %911 = vmatpush1.bf16.msra.mxu0 0
        %912 = vmatprep.subr.bf16.mxu0 0
        %913 = vmatpush1.bf16.msra.mxu0 0
        %914 = vmatprep.subr.bf16.mxu0 0
        %915 = vmatpush1.bf16.msra.mxu0 0
        %916 = vmatprep.subr.bf16.mxu0 0
        %917 = vmatpush1.bf16.msra.mxu0 0
        %918 = vmatprep.subr.bf16.mxu0 0
        %919 = vmatpush1.bf16.msra.mxu0 0
        %920 = vmatprep.subr.bf16.mxu0 0
        %921 = vmatpush1.bf16.msra.mxu0 0
        %922 = vmatprep.subr.bf16.mxu0 0
        %923 = vmatpush1.bf16.msra.mxu0 0
        %924 = vmatprep.subr.bf16.mxu0 0
        %925 = vmatpush1.bf16.msra.mxu0 0
        %926 = vmatprep.subr.bf16.mxu0 0
        %927 = vmatpush1.bf16.msra.mxu0 0
        %928 = vmatprep.subr.bf16.mxu0 0
        %929 = vmatpush1.bf16.msra.mxu0 0
        %930 = vmatprep.subr.bf16.mxu0 0
        %931 = vmatpush1.bf16.msra.mxu0 0
        %932 = vmatprep.subr.bf16.mxu0 0
        %933 = vmatpush1.bf16.msra.mxu0 0
        %934 = vmatprep.subr.bf16.mxu0 0
        %935 = vmatpush1.bf16.msra.mxu0 0
        %936 = vmatprep.mubr.bf16.mxu0 0
        %937 = vmatmul.mubr.bf16.gmra.mrb[0].mxu0 %v899
        %v938 = vpop.f32.mrb[0].mxu0
        %v939 = vadd.f32 0.0, %v938
        %v940 = vpop.f32.mrb[0].mxu0
        %v941 = vpop.f32.mrb[0].mxu0
        %v942 = vpop.f32.mrb[0].mxu0
        %943 = vdwg.mxu0
        %945 = vrot.lane.b32.xlu0 %v939, 64
        %v946 = vpop.permute.xlu0 %945
        %vm948 = vcmask 785920
        %949 = vst.msk [vmem:[#allocation2] sm:$0xff] %vm948, %v946
        %950 = vrot.lane.b32.xlu0 %v601, 32
        %v951 = vpop.permute.xlu0 %950
        %952 = vrot.lane.b32.xlu0 %v602, 32
        %v953 = vpop.permute.xlu0 %952
        %v955 = vsel %vm604, %v951, 0
        %v958 = vsel %vm604, %v953, 0
        %960 = vmatprep.subr.bf16.mxu0 0
        %961 = vmatpush1.bf16.xpose.msra.mxu0 %v958
        %962 = vmatprep.subr.bf16.mxu0 0
        %963 = vmatpush1.bf16.xpose.msra.mxu0 0
        %964 = vmatprep.subr.bf16.mxu0 0
        %965 = vmatpush1.bf16.xpose.msra.mxu0 0
        %966 = vmatprep.subr.bf16.mxu0 0
        %967 = vmatpush1.bf16.xpose.msra.mxu0 0
        %968 = vmatprep.subr.bf16.mxu0 0
        %969 = vmatpush1.bf16.xpose.msra.mxu0 0
        %970 = vmatprep.subr.bf16.mxu0 0
        %971 = vmatpush1.bf16.xpose.msra.mxu0 0
        %972 = vmatprep.subr.bf16.mxu0 0
        %973 = vmatpush1.bf16.xpose.msra.mxu0 0
        %974 = vmatprep.subr.bf16.mxu0 0
        %975 = vmatpush1.bf16.xpose.msra.mxu0 0
        %976 = vmatprep.subr.bf16.mxu0 0
        %977 = vmatpush1.bf16.xpose.msra.mxu0 0
        %978 = vmatprep.subr.bf16.mxu0 0
        %979 = vmatpush1.bf16.xpose.msra.mxu0 0
        %980 = vmatprep.subr.bf16.mxu0 0
        %981 = vmatpush1.bf16.xpose.msra.mxu0 0
        %982 = vmatprep.subr.bf16.mxu0 0
        %983 = vmatpush1.bf16.xpose.msra.mxu0 0
        %984 = vmatprep.subr.bf16.mxu0 0
        %985 = vmatpush1.bf16.xpose.msra.mxu0 0
        %986 = vmatprep.subr.bf16.mxu0 0
        %987 = vmatpush1.bf16.xpose.msra.mxu0 0
        %988 = vmatprep.subr.bf16.mxu0 0
        %989 = vmatpush1.bf16.xpose.msra.mxu0 0
        %990 = vmatprep.subr.bf16.mxu0 0
        %991 = vmatpush1.bf16.xpose.msra.mxu0 0
        %992 = vmatprep.mubr.bf16.mxu0 0
        %993 = vmatmul.mubr.bf16.gmra.mrb[0].mxu0 %v955
        %v994 = vpop.f32.mrb[0].mxu0
        %v995 = vadd.f32 0.0, %v994
        %v996 = vpop.f32.mrb[0].mxu0
        %v997 = vpop.f32.mrb[0].mxu0
        %v998 = vpop.f32.mrb[0].mxu0
        %999 = vdwg.mxu0
        %v1000 = vsel %vm600, %v995, -1e+09
        %v1001 = vsel %vm652, %v1000, -inf
        %1002 = vmax.xlane.f32.xlu0 %v1001
        %v1003 = vpop.xlane.xlu0 %1002
        %v1004 = vsub.f32 %v1000, %v1003
        %v1005 = vmul.f32 %v1004, 1.442695
        %v1006 = vpow.pop %v1005
        %v1007 = vsel %vm652, %v1006, 0.0
        %1008 = vadd.xlane.f32.xlu0 %v1007
        %v1009 = vpop.xlane.xlu0 %1008
        %v1010 = vrcp.pop %v1009
        %v1011 = vmul.f32 %v1006, %v1010
        %v1012 = vpack.c.bf16 %v1011, %v1011
        %1013 = vrot.lane.b32.xlu0 %v603, 32
        %v1014 = vpop.permute.xlu0 %1013
        %v1016 = vsel %vm652, %v1012, 0
        %v1019 = vsel %vm668, %v1014, 0
        %1021 = vmatprep.subr.bf16.mxu0 0
        %1022 = vmatpush1.bf16.msra.mxu0 %v1019
        %1023 = vmatprep.subr.bf16.mxu0 0
        %1024 = vmatpush1.bf16.msra.mxu0 0
        %1025 = vmatprep.subr.bf16.mxu0 0
        %1026 = vmatpush1.bf16.msra.mxu0 0
        %1027 = vmatprep.subr.bf16.mxu0 0
        %1028 = vmatpush1.bf16.msra.mxu0 0
        %1029 = vmatprep.subr.bf16.mxu0 0
        %1030 = vmatpush1.bf16.msra.mxu0 0
        %1031 = vmatprep.subr.bf16.mxu0 0
        %1032 = vmatpush1.bf16.msra.mxu0 0
        %1033 = vmatprep.subr.bf16.mxu0 0
        %1034 = vmatpush1.bf16.msra.mxu0 0
        %1035 = vmatprep.subr.bf16.mxu0 0
        %1036 = vmatpush1.bf16.msra.mxu0 0
        %1037 = vmatprep.subr.bf16.mxu0 0
        %1038 = vmatpush1.bf16.msra.mxu0 0
        %1039 = vmatprep.subr.bf16.mxu0 0
        %1040 = vmatpush1.bf16.msra.mxu0 0
        %1041 = vmatprep.subr.bf16.mxu0 0
        %1042 = vmatpush1.bf16.msra.mxu0 0
        %1043 = vmatprep.subr.bf16.mxu0 0
        %1044 = vmatpush1.bf16.msra.mxu0 0
        %1045 = vmatprep.subr.bf16.mxu0 0
        %1046 = vmatpush1.bf16.msra.mxu0 0
        %1047 = vmatprep.subr.bf16.mxu0 0
        %1048 = vmatpush1.bf16.msra.mxu0 0
        %1049 = vmatprep.subr.bf16.mxu0 0
        %1050 = vmatpush1.bf16.msra.mxu0 0
        %1051 = vmatprep.subr.bf16.mxu0 0
        %1052 = vmatpush1.bf16.msra.mxu0 0
        %1053 = vmatprep.mubr.bf16.mxu0 0
        %1054 = vmatmul.mubr.bf16.gmra.mrb[0].mxu0 %v1016
        %v1055 = vpop.f32.mrb[0].mxu0
        %v1056 = vadd.f32 0.0, %v1055
        %v1057 = vpop.f32.mrb[0].mxu0
        %v1058 = vpop.f32.mrb[0].mxu0
        %v1059 = vpop.f32.mrb[0].mxu0
        %1060 = vdwg.mxu0
        %1062 = vrot.lane.b32.xlu0 %v1056, 96
        %v1063 = vpop.permute.xlu0 %1062
        %vm1065 = vcmask 1048320
        %1066 = vst.msk [vmem:[#allocation2] sm:$0xff] %vm1065, %v1063
        %v1067 = vld [vmem:[#allocation2] sm:$0xff]
        %v1068 = vpack.c.bf16 %v1067, %v1067
        %v1069 = vld [vmem:[#allocation5] sm:$0xf]
        %v1070 = vld [vmem:[#allocation5 + $0x4] sm:$0xf]
        %v1071 = vld [vmem:[#allocation5 + $0x8] sm:$0xf]
        %v1072 = vld [vmem:[#allocation5 + $0xc] sm:$0xf]
        %v1073 = vld [vmem:[#allocation5 + $0x10] sm:$0xf]
        %v1074 = vld [vmem:[#allocation5 + $0x14] sm:$0xf]
        %v1075 = vld [vmem:[#allocation5 + $0x18] sm:$0xf]
        %v1076 = vld [vmem:[#allocation5 + $0x1c] sm:$0xf]
        %v1077 = vld [vmem:[#allocation5 + $0x20] sm:$0xf]
        %v1078 = vld [vmem:[#allocation5 + $0x24] sm:$0xf]
        %v1079 = vld [vmem:[#allocation5 + $0x28] sm:$0xf]
        %v1080 = vld [vmem:[#allocation5 + $0x2c] sm:$0xf]
        %v1081 = vld [vmem:[#allocation5 + $0x30] sm:$0xf]
        %v1082 = vld [vmem:[#allocation5 + $0x34] sm:$0xf]
        %v1083 = vld [vmem:[#allocation5 + $0x38] sm:$0xf]
        %v1084 = vld [vmem:[#allocation5 + $0x3c] sm:$0xf]
        %v1085 = vld [vmem:[#allocation7] sm:$0x1]
        %v1087 = vlaneseq
        %v1088 = vshrl.u32 %v1087, 7
        %v1089 = vsub.s32 0, %v1088
        %v1090 = vrot.slane %v1085, %v1089
        %v1108 = vunpack.c.l.b16 %v1069
        %v1109 = vunpack.c.l.b16 %v1070
        %v1110 = vunpack.c.l.b16 %v1071
        %v1111 = vunpack.c.l.b16 %v1072
        %v1112 = vunpack.c.l.b16 %v1073
        %v1113 = vunpack.c.l.b16 %v1074
        %v1114 = vunpack.c.l.b16 %v1075
        %v1115 = vunpack.c.l.b16 %v1076
        %v1116 = vunpack.c.l.b16 %v1077
        %v1117 = vunpack.c.l.b16 %v1078
        %v1118 = vunpack.c.l.b16 %v1079
        %v1119 = vunpack.c.l.b16 %v1080
        %v1120 = vunpack.c.l.b16 %v1081
        %v1121 = vunpack.c.l.b16 %v1082
        %v1122 = vunpack.c.l.b16 %v1083
        %v1123 = vunpack.c.l.b16 %v1084
        %v1124 = vpack.c.b16 %v1109, %v1108
        %v1125 = vpack.c.b16 %v1111, %v1110
        %v1126 = vpack.c.b16 %v1113, %v1112
        %v1127 = vpack.c.b16 %v1115, %v1114
        %v1128 = vpack.c.b16 %v1117, %v1116
        %v1129 = vpack.c.b16 %v1119, %v1118
        %v1130 = vpack.c.b16 %v1121, %v1120
        %v1131 = vpack.c.b16 %v1123, %v1122
        %1140 = vmatprep.subr.bf16.mxu0 0
        %1141 = vmatpush1.bf16.msra.mxu0 %v1124
        %1142 = vmatprep.subr.bf16.mxu0 0
        %1143 = vmatpush1.bf16.msra.mxu0 %v1125
        %1144 = vmatprep.subr.bf16.mxu0 0
        %1145 = vmatpush1.bf16.msra.mxu0 %v1126
        %1146 = vmatprep.subr.bf16.mxu0 0
        %1147 = vmatpush1.bf16.msra.mxu0 %v1127
        %1148 = vmatprep.subr.bf16.mxu0 0
        %1149 = vmatpush1.bf16.msra.mxu0 %v1128
        %1150 = vmatprep.subr.bf16.mxu0 0
        %1151 = vmatpush1.bf16.msra.mxu0 %v1129
        %1152 = vmatprep.subr.bf16.mxu0 0
        %1153 = vmatpush1.bf16.msra.mxu0 %v1130
        %1154 = vmatprep.subr.bf16.mxu0 0
        %1155 = vmatpush1.bf16.msra.mxu0 %v1131
        %1156 = vmatprep.subr.bf16.mxu0 0
        %1157 = vmatpush1.bf16.msra.mxu0 0
        %1158 = vmatprep.subr.bf16.mxu0 0
        %1159 = vmatpush1.bf16.msra.mxu0 0
        %1160 = vmatprep.subr.bf16.mxu0 0
        %1161 = vmatpush1.bf16.msra.mxu0 0
        %1162 = vmatprep.subr.bf16.mxu0 0
        %1163 = vmatpush1.bf16.msra.mxu0 0
        %1164 = vmatprep.subr.bf16.mxu0 0
        %1165 = vmatpush1.bf16.msra.mxu0 0
        %1166 = vmatprep.subr.bf16.mxu0 0
        %1167 = vmatpush1.bf16.msra.mxu0 0
        %1168 = vmatprep.subr.bf16.mxu0 0
        %1169 = vmatpush1.bf16.msra.mxu0 0
        %1170 = vmatprep.subr.bf16.mxu0 0
        %1171 = vmatpush1.bf16.msra.mxu0 0
        %1172 = vmatprep.mubr.bf16.mxu0 0
        %1173 = vmatmul.mubr.bf16.gmra.mrb[0].mxu0 %v1068
        %v1174 = vpop.f32.mrb[0].mxu0
        %v1175 = vadd.f32 %v1090, %v1174
        %v1176 = vpop.f32.mrb[0].mxu0
        %v1177 = vpop.f32.mrb[0].mxu0
        %v1178 = vpop.f32.mrb[0].mxu0
        %1179 = vdwg.mxu0
        %v1180 = vadd.f32 %v1175, %v336
        %v1181 = vld [vmem:[#allocation9] sm:$0x1]
        %v1182 = vld [vmem:[#allocation10] sm:$0x1]
        %1183 = vadd.xlane.f32.xlu0 %v1180
        %v1184 = vpop.xlane.xlu0 %1183
        %v1185 = vrcp.pop 128.0
        %v1186 = vmul.f32 %v1184, %v1185
        %v1187 = vsub.f32 %v1180, %v1186
        %v1188 = vmul.f32 %v1187, %v1187
        %1189 = vadd.xlane.f32.xlu0 %v1188
        %v1190 = vpop.xlane.xlu0 %1189
        %v1191 = vmul.f32 %v1190, %v1185
        %v1192 = vadd.f32 %v1191, 1e-05
        %v1193 = vrsqrt.pop %v1192
        %v1194 = vmul.f32 %v1187, %v1193
        %v1196 = vlaneseq
        %v1197 = vshrl.u32 %v1196, 7
        %v1198 = vsub.s32 0, %v1197
        %v1199 = vrot.slane %v1181, %v1198
        %v1201 = vmul.f32 %v1194, %v1199
        %v1203 = vlaneseq
        %v1204 = vshrl.u32 %v1203, 7
        %v1205 = vsub.s32 0, %v1204
        %v1206 = vrot.slane %v1182, %v1205
        %v1208 = vadd.f32 %v1201, %v1206
        %v1209 = vpack.c.bf16 %v1208, %v1208
        %1210 = vst [vmem:[%s333] sm:$0xf] %v1209
        %p1211 = scmp.lt.s32.totalorder %s28, 1
        %s1212 = scalar_select %p1211, %s28, 1
        %s1213 = smul.addr %s1212, 4
        %s1214 = scalar_lea.vmem %s8, %s1213
        // Predicated region
        $region65: #{tts_forward.12} parent=47 // pred_check
          %p1215 = pneg %p198
        $region66: #{tts_forward.12} parent=47 // pred_check_branch
          %1217 = sbr.rel (%p1215) target = $region68
        $region67: #{tts_forward.12} parent=47 // pred_region
          _
        $region68: #{tts_forward.12} parent=47 // pred_fallthru
          _
      $region48: #{tts_forward.12} parent=5 // pred_fallthru
        _
      %p1218 = scmp.le.s32.totalorder 2, %s23
      // Predicated region
      $region69: #{tts_forward.12} parent=5 // pred_check
        %p1219 = pneg %p1218
      $region70: #{tts_forward.12} parent=5 // pred_check_branch
        %1221 = sbr.rel (%p1219) target = $region72
      $region71: #{tts_forward.12} parent=5 // pred_region
        %s1222 = ssub.s32 %s23, 2
        // Predicated region
        $region73: #{tts_forward.12} parent=71 // pred_check
          %p1223 = pneg %p204
        $region74: #{tts_forward.12} parent=71 // pred_check_branch
          %1225 = sbr.rel (%p1223) target = $region76
        $region75: #{tts_forward.12} parent=71 // pred_region
          %p1226 = scmp.lt.s32.totalorder %s29, 1
          %s1227 = scalar_select %p1226, %s29, 1
          %s1228 = smul.addr %s1227, 4
          %s1229 = scalar_lea.vmem %s8, %s1228
        $region76: #{tts_forward.12} parent=71 // pred_fallthru
          _
      $region72: #{tts_forward.12} parent=5 // pred_fallthru
        _
    $region6: #{tts_forward.12} parent=1 // loop_footer
      %s27 = sadd.s32 1, %s23
    $region7: #{tts_forward.12} parent=1 // loop_footer_branch
      %22 = sbr.rel target = $region3
    $region8: #{tts_forward.12} parent=1 // loop_exit
      _
    %1230 = vsyncpa [#allocation6], 1
    %s1231 = scalar_lea.sflag [#allocation6], 1
    %1232 = vsyncpa %s1231, 1
    %1233 = vsyncpa [#allocation8], 1
    %1234 = vsyncpa [#allocation11], 1

// kernel: tts_forward.14
$region0: #{tts_forward.14}
  #allocation0 [shape = 'u32[]', space=smem, size = 0x4, offset = 0x4, fixed_abs, tag = 'smem constant byte address 0x4 - core index']
  #allocation1 [shape = 'u32[144,128]{1,0:T(1,128)}', space=vmem, size = 0x12000, scoped, tag = 'internal scratch']
  #allocation2 [shape = 'f32[8,128]{1,0:T(8,128)}', space=vmem, size = 0x1000, scoped, tag = 'scratch operand']
  #allocation3 [shape = 's32[1]{0}', space=sflag, size = 0x4, scoped, tag = 'scoped memory for tts_forward.14']
  #allocation4 [shape = 'u8[512]{0}', space=smem, size = 0x200, scoped, tag = 'prefetched SMEM operand 0']
  %s0 = inlined_call_operand.vmem [shape: s32[2], index: 0, kind: input, shape index: {}]
  %s1 = inlined_call_operand.vmem [shape: bf16[2,8,128], index: 1, kind: input, shape index: {}]
  %s2 = inlined_call_operand.vmem [shape: bf16[128,384], index: 2, kind: input, shape index: {}]
  %s3 = inlined_call_operand.vmem [shape: f32[1,384], index: 3, kind: input, shape index: {}]
  %s4 = inlined_call_operand.vmem [shape: bf16[128,128], index: 4, kind: input, shape index: {}]
  %s5 = inlined_call_operand.vmem [shape: f32[1,128], index: 5, kind: input, shape index: {}]
  %s6 = inlined_call_operand.vmem [shape: f32[1,128], index: 6, kind: input, shape index: {}]
  %s7 = inlined_call_operand.vmem [shape: f32[1,128], index: 7, kind: input, shape index: {}]
  %s8 = inlined_call_operand.vmem [shape: bf16[2,8,128], index: 8, kind: output, shape index: {}]
  %s9 = sld [smem:[#allocation0]]
  $region61: #{tts_forward.14} parent=0
    _
  %s11 = ssub.s32 1, %s9
  %s12 = scalar_select 0, %s11, %s9
  %s13 = sshll.u32 %s0, 4
  %s14 = int_to_ptr.vmem [resolvable:$true] %s13
  %16 = dma.vmem_to_smem %s14, 16, [#allocation4], [#allocation3]
  %17 = dma.done [#allocation3], 16
  %18 = sfence
  loop: start=0, step=1, limit=4
  $region2: #{tts_forward.14} parent=0 // loop_pre_header
    _
  $region3: #{tts_forward.14} parent=0 // loop_header
    %s20 = sphi 0, %s24
    %p21 = scmp.ge.s32.totalorder %s20, 4
    %s30 = sphi 0, %s32
    %s33 = sphi 0, %s30
    %s34 = sphi 0, %s33
    %s50 = sphi 0, %s34
    %s54 = sphi 0, %s54
    %s56 = sphi 0, %s54
    %s57 = sphi 0, %s56
    %s71 = sphi 0, %s57
    %s75 = sphi 0, %s75
    %s77 = sphi 0, %s75
    %s78 = sphi 0, %s77
    %s92 = sphi 0, %s78
    %s96 = sphi 0, %s96
    %s98 = sphi 0, %s96
    %s99 = sphi 0, %s98
    %s113 = sphi 0, %s99
    %s117 = sphi 0, %s117
    %s119 = sphi 0, %s117
    %s120 = sphi 0, %s119
    %s134 = sphi 0, %s120
    %s138 = sphi 0, %s138
    %s140 = sphi 0, %s138
    %s141 = sphi 0, %s140
    %s155 = sphi 0, %s141
    %s159 = sphi 0, %s159
    %s161 = sphi 0, %s159
    %s162 = sphi 0, %s161
    %s176 = sphi 0, %s162
    %s182 = sphi 0, %s184
    %s185 = sphi 0, %s182
    %s186 = sphi 0, %s185
    %s202 = sphi 0, %s186
  $region4: #{tts_forward.14} parent=0 // loop_header_branch
    %23 = sbr.rel (%p21) target = $region8
  $region5: #{tts_forward.14} parent=0 // loop_body
    %s25 = ssub.s32 %s20, 1
    %s26 = ssub.s32 %s20, 2
    %s27 = sadd.s32 %s20, 1
    %s28 = ssub.s32 %s20, %s27
    %p29 = scmp.eq.s32.totalorder %s28, 0
    %s31 = sadd.s32 %s30, 1
    %s32 = scalar_select %p29, %s30, %s31
    %p35 = pneg %p29
    %p36 = scmp.eq.s32.totalorder %s20, 1
    %p37 = por %p35, %p36
    %p38 = scmp.ne.s32.totalorder %s30, %s33
    %p39 = scmp.eq.s32.totalorder %s20, 0
    %p40 = por %p38, %p39
    %p41 = scmp.ne.s32.totalorder %s30, %s33
    %p42 = scmp.eq.s32.totalorder %s25, 1
    %p43 = por %p41, %p42
    %p44 = scmp.ne.s32.totalorder %s33, %s34
    %p45 = scmp.eq.s32.totalorder %s25, 0
    %p46 = por %p44, %p45
    %p47 = scmp.ne.s32.totalorder %s33, %s34
    %p48 = scmp.eq.s32.totalorder %s26, 1
    %p49 = por %p47, %p48
    %p51 = scmp.ne.s32.totalorder %s34, %s50
    %p52 = scmp.eq.s32.totalorder %s26, 0
    %p53 = por %p51, %p52
    %s55 = sadd.s32 %s54, 1
    %p58 = scmp.eq.s32.totalorder %s20, 1
    %p59 = scmp.ne.s32.totalorder %s54, %s56
    %p60 = scmp.eq.s32.totalorder %s20, 0
    %p61 = por %p59, %p60
    %p62 = scmp.ne.s32.totalorder %s54, %s56
    %p63 = scmp.eq.s32.totalorder %s25, 1
    %p64 = por %p62, %p63
    %p65 = scmp.ne.s32.totalorder %s56, %s57
    %p66 = scmp.eq.s32.totalorder %s25, 0
    %p67 = por %p65, %p66
    %p68 = scmp.ne.s32.totalorder %s56, %s57
    %p69 = scmp.eq.s32.totalorder %s26, 1
    %p70 = por %p68, %p69
    %p72 = scmp.ne.s32.totalorder %s57, %s71
    %p73 = scmp.eq.s32.totalorder %s26, 0
    %p74 = por %p72, %p73
    %s76 = sadd.s32 %s75, 1
    %p79 = scmp.eq.s32.totalorder %s20, 1
    %p80 = scmp.ne.s32.totalorder %s75, %s77
    %p81 = scmp.eq.s32.totalorder %s20, 0
    %p82 = por %p80, %p81
    %p83 = scmp.ne.s32.totalorder %s75, %s77
    %p84 = scmp.eq.s32.totalorder %s25, 1
    %p85 = por %p83, %p84
    %p86 = scmp.ne.s32.totalorder %s77, %s78
    %p87 = scmp.eq.s32.totalorder %s25, 0
    %p88 = por %p86, %p87
    %p89 = scmp.ne.s32.totalorder %s77, %s78
    %p90 = scmp.eq.s32.totalorder %s26, 1
    %p91 = por %p89, %p90
    %p93 = scmp.ne.s32.totalorder %s78, %s92
    %p94 = scmp.eq.s32.totalorder %s26, 0
    %p95 = por %p93, %p94
    %s97 = sadd.s32 %s96, 1
    %p100 = scmp.eq.s32.totalorder %s20, 1
    %p101 = scmp.ne.s32.totalorder %s96, %s98
    %p102 = scmp.eq.s32.totalorder %s20, 0
    %p103 = por %p101, %p102
    %p104 = scmp.ne.s32.totalorder %s96, %s98
    %p105 = scmp.eq.s32.totalorder %s25, 1
    %p106 = por %p104, %p105
    %p107 = scmp.ne.s32.totalorder %s98, %s99
    %p108 = scmp.eq.s32.totalorder %s25, 0
    %p109 = por %p107, %p108
    %p110 = scmp.ne.s32.totalorder %s98, %s99
    %p111 = scmp.eq.s32.totalorder %s26, 1
    %p112 = por %p110, %p111
    %p114 = scmp.ne.s32.totalorder %s99, %s113
    %p115 = scmp.eq.s32.totalorder %s26, 0
    %p116 = por %p114, %p115
    %s118 = sadd.s32 %s117, 1
    %p121 = scmp.eq.s32.totalorder %s20, 1
    %p122 = scmp.ne.s32.totalorder %s117, %s119
    %p123 = scmp.eq.s32.totalorder %s20, 0
    %p124 = por %p122, %p123
    %p125 = scmp.ne.s32.totalorder %s117, %s119
    %p126 = scmp.eq.s32.totalorder %s25, 1
    %p127 = por %p125, %p126
    %p128 = scmp.ne.s32.totalorder %s119, %s120
    %p129 = scmp.eq.s32.totalorder %s25, 0
    %p130 = por %p128, %p129
    %p131 = scmp.ne.s32.totalorder %s119, %s120
    %p132 = scmp.eq.s32.totalorder %s26, 1
    %p133 = por %p131, %p132
    %p135 = scmp.ne.s32.totalorder %s120, %s134
    %p136 = scmp.eq.s32.totalorder %s26, 0
    %p137 = por %p135, %p136
    %s139 = sadd.s32 %s138, 1
    %p142 = scmp.eq.s32.totalorder %s20, 1
    %p143 = scmp.ne.s32.totalorder %s138, %s140
    %p144 = scmp.eq.s32.totalorder %s20, 0
    %p145 = por %p143, %p144
    %p146 = scmp.ne.s32.totalorder %s138, %s140
    %p147 = scmp.eq.s32.totalorder %s25, 1
    %p148 = por %p146, %p147
    %p149 = scmp.ne.s32.totalorder %s140, %s141
    %p150 = scmp.eq.s32.totalorder %s25, 0
    %p151 = por %p149, %p150
    %p152 = scmp.ne.s32.totalorder %s140, %s141
    %p153 = scmp.eq.s32.totalorder %s26, 1
    %p154 = por %p152, %p153
    %p156 = scmp.ne.s32.totalorder %s141, %s155
    %p157 = scmp.eq.s32.totalorder %s26, 0
    %p158 = por %p156, %p157
    %s160 = sadd.s32 %s159, 1
    %p163 = scmp.eq.s32.totalorder %s20, 1
    %p164 = scmp.ne.s32.totalorder %s159, %s161
    %p165 = scmp.eq.s32.totalorder %s20, 0
    %p166 = por %p164, %p165
    %p167 = scmp.ne.s32.totalorder %s159, %s161
    %p168 = scmp.eq.s32.totalorder %s25, 1
    %p169 = por %p167, %p168
    %p170 = scmp.ne.s32.totalorder %s161, %s162
    %p171 = scmp.eq.s32.totalorder %s25, 0
    %p172 = por %p170, %p171
    %p173 = scmp.ne.s32.totalorder %s161, %s162
    %p174 = scmp.eq.s32.totalorder %s26, 1
    %p175 = por %p173, %p174
    %p177 = scmp.ne.s32.totalorder %s162, %s176
    %p178 = scmp.eq.s32.totalorder %s26, 0
    %p179 = por %p177, %p178
    %s180 = ssub.s32 %s20, %s27
    %p181 = scmp.eq.s32.totalorder %s180, 0
    %s183 = sadd.s32 %s182, 1
    %s184 = scalar_select %p181, %s182, %s183
    %p187 = pneg %p181
    %p188 = scmp.eq.s32.totalorder %s20, 1
    %p189 = por %p187, %p188
    %p190 = scmp.ne.s32.totalorder %s182, %s185
    %p191 = scmp.eq.s32.totalorder %s20, 0
    %p192 = por %p190, %p191
    %p193 = scmp.ne.s32.totalorder %s182, %s185
    %p194 = scmp.eq.s32.totalorder %s25, 1
    %p195 = por %p193, %p194
    %p196 = scmp.ne.s32.totalorder %s185, %s186
    %p197 = scmp.eq.s32.totalorder %s25, 0
    %p198 = por %p196, %p197
    %p199 = scmp.ne.s32.totalorder %s185, %s186
    %p200 = scmp.eq.s32.totalorder %s26, 1
    %p201 = por %p199, %p200
    %p203 = scmp.ne.s32.totalorder %s186, %s202
    %p204 = scmp.eq.s32.totalorder %s26, 0
    %p205 = por %p203, %p204
    %p206 = scmp.le.s32.totalorder 1, %s20
    %p207 = scmp.lt.s32.totalorder %s20, 3
    %p208 = pnand %p206, %p207
    %p209 = pneg %p208
    // Predicated region
    $region9: #{tts_forward.14} parent=5 // pred_check
      _
    $region10: #{tts_forward.14} parent=5 // pred_check_branch
      %211 = sbr.rel (%p208) target = $region12
    $region11: #{tts_forward.14} parent=5 // pred_region
      %s212 = ssub.s32 %s20, 1
      // Predicated region
      $region13: #{tts_forward.14} parent=11 // pred_check
        %p213 = pneg %p67
      $region14: #{tts_forward.14} parent=11 // pred_check_branch
        %215 = sbr.rel (%p213) target = $region16
      $region15: #{tts_forward.14} parent=11 // pred_region
        _
      $region16: #{tts_forward.14} parent=11 // pred_fallthru
        _
      // Predicated region
      $region17: #{tts_forward.14} parent=11 // pred_check
        %p216 = pneg %p88
      $region18: #{tts_forward.14} parent=11 // pred_check_branch
        %218 = sbr.rel (%p216) target = $region20
      $region19: #{tts_forward.14} parent=11 // pred_region
        _
      $region20: #{tts_forward.14} parent=11 // pred_fallthru
        _
      // Predicated region
      $region21: #{tts_forward.14} parent=11 // pred_check
        %p219 = pneg %p109
      $region22: #{tts_forward.14} parent=11 // pred_check_branch
        %221 = sbr.rel (%p219) target = $region24
      $region23: #{tts_forward.14} parent=11 // pred_region
        _
      $region24: #{tts_forward.14} parent=11 // pred_fallthru
        _
      // Predicated region
      $region25: #{tts_forward.14} parent=11 // pred_check
        %p222 = pneg %p130
      $region26: #{tts_forward.14} parent=11 // pred_check_branch
        %224 = sbr.rel (%p222) target = $region28
      $region27: #{tts_forward.14} parent=11 // pred_region
        _
      $region28: #{tts_forward.14} parent=11 // pred_fallthru
        _
      // Predicated region
      $region29: #{tts_forward.14} parent=11 // pred_check
        %p225 = pneg %p151
      $region30: #{tts_forward.14} parent=11 // pred_check_branch
        %227 = sbr.rel (%p225) target = $region32
      $region31: #{tts_forward.14} parent=11 // pred_region
        _
      $region32: #{tts_forward.14} parent=11 // pred_fallthru
        _
      // Predicated region
      $region33: #{tts_forward.14} parent=11 // pred_check
        %p228 = pneg %p172
      $region34: #{tts_forward.14} parent=11 // pred_check_branch
        %230 = sbr.rel (%p228) target = $region36
      $region35: #{tts_forward.14} parent=11 // pred_region
        _
      $region36: #{tts_forward.14} parent=11 // pred_fallthru
        _
    $region12: #{tts_forward.14} parent=5 // pred_fallthru
      _
    %p231 = scmp.lt.s32.totalorder %s20, 2
    // Predicated region
    $region37: #{tts_forward.14} parent=5 // pred_check
      %p232 = pneg %p231
    $region38: #{tts_forward.14} parent=5 // pred_check_branch
      %234 = sbr.rel (%p232) target = $region40
    $region39: #{tts_forward.14} parent=5 // pred_region
      // Predicated region
      $region41: #{tts_forward.14} parent=39 // pred_check
        %p235 = pneg %p40
      $region42: #{tts_forward.14} parent=39 // pred_check_branch
        %237 = sbr.rel (%p235) target = $region44
      $region43: #{tts_forward.14} parent=39 // pred_region
        %p238 = scmp.lt.s32.totalorder %s20, 1
        %s239 = scalar_select %p238, %s20, 1
        %s240 = smul.addr %s239, 4
        %s241 = scalar_lea.vmem %s1, %s240
      $region44: #{tts_forward.14} parent=39 // pred_fallthru
        _
    $region40: #{tts_forward.14} parent=5 // pred_fallthru
      _
    %p242 = scmp.le.s32.totalorder 1, %s20
    %p243 = scmp.lt.s32.totalorder %s20, 3
    %p244 = pnand %p242, %p243
    %p245 = pneg %p244
    // Predicated region
    $region45: #{tts_forward.14} parent=5 // pred_check
      _
    $region46: #{tts_forward.14} parent=5 // pred_check_branch
      %247 = sbr.rel (%p244) target = $region48
    $region47: #{tts_forward.14} parent=5 // pred_region
      %s248 = ssub.s32 %s20, 1
      %p249 = scmp.lt.s32.totalorder %s25, 1
      %s250 = scalar_select %p249, %s25, 1
      %s251 = smul.addr %s250, 4
      %s252 = scalar_lea.vmem %s1, %s251
      %p253 = pneg %p46
      %p254 = pneg %p43
      %p255 = pneg %p67
      %p256 = pneg %p64
      %p257 = pneg %p88
      %p258 = pneg %p85
      %p259 = pneg %p109
      %p260 = pneg %p106
      %p261 = pneg %p130
      %p262 = pneg %p127
      %p263 = pneg %p151
      %p264 = pneg %p148
      %p265 = pneg %p172
      %p266 = pneg %p169
      %p267 = pneg %p198
      %p268 = pneg %p195
      %p269 = scmp.lt.s32.totalorder %s25, 1
      %s270 = scalar_select %p269, %s25, 1
      %s271 = smul.addr %s270, 4
      %s272 = scalar_lea.vmem %s8, %s271
      %p273 = scmp.lt.s32.totalorder %s25, 1
      %s274 = scalar_select %p273, %s25, 1
      %s275 = smul.addr %s274, 4
      %s276 = scalar_lea.vmem %s1, %s275
      %p277 = scmp.lt.s32.totalorder %s25, 1
      %s278 = scalar_select %p277, %s25, 1
      %s279 = smul.addr %s278, 4
      %s280 = scalar_lea.vmem %s8, %s279
      %v282 = vld [vmem:[%s276] sm:$0xf]
      %v283 = vunpack.c.l.bf16 %v282
      %v284 = vld [vmem:[%s2] sm:$0xff]
      %v285 = vld [vmem:[%s2 + $0x8] sm:$0xf]
      %v286 = vld [vmem:[%s2 + $0xc] sm:$0xff]
      %v287 = vld [vmem:[%s2 + $0x14] sm:$0xf]
      %v288 = vld [vmem:[%s2 + $0x18] sm:$0xff]
      %v289 = vld [vmem:[%s2 + $0x20] sm:$0xf]
      %v290 = vld [vmem:[%s2 + $0x24] sm:$0xff]
      %v291 = vld [vmem:[%s2 + $0x2c] sm:$0xf]
      %v292 = vld [vmem:[%s2 + $0x30] sm:$0xff]
      %v293 = vld [vmem:[%s2 + $0x38] sm:$0xf]
      %v294 = vld [vmem:[%s2 + $0x3c] sm:$0xff]
      %v295 = vld [vmem:[%s2 + $0x44] sm:$0xf]
      %v296 = vld [vmem:[%s2 + $0x48] sm:$0xff]
      %v297 = vld [vmem:[%s2 + $0x50] sm:$0xf]
      %v298 = vld [vmem:[%s2 + $0x54] sm:$0xff]
      %v299 = vld [vmem:[%s2 + $0x5c] sm:$0xf]
      %v300 = vld [vmem:[%s2 + $0x60] sm:$0xff]
      %v301 = vld [vmem:[%s2 + $0x68] sm:$0xf]
      %v302 = vld [vmem:[%s2 + $0x6c] sm:$0xff]
      %v303 = vld [vmem:[%s2 + $0x74] sm:$0xf]
      %v304 = vld [vmem:[%s2 + $0x78] sm:$0xff]
      %v305 = vld [vmem:[%s2 + $0x80] sm:$0xf]
      %v306 = vld [vmem:[%s2 + $0x84] sm:$0xff]
      %v307 = vld [vmem:[%s2 + $0x8c] sm:$0xf]
      %v308 = vld [vmem:[%s2 + $0x90] sm:$0xff]
      %v309 = vld [vmem:[%s2 + $0x98] sm:$0xf]
      %v310 = vld [vmem:[%s2 + $0x9c] sm:$0xff]
      %v311 = vld [vmem:[%s2 + $0xa4] sm:$0xf]
      %v312 = vld [vmem:[%s2 + $0xa8] sm:$0xff]
      %v313 = vld [vmem:[%s2 + $0xb0] sm:$0xf]
      %v314 = vld [vmem:[%s2 + $0xb4] sm:$0xff]
      %v315 = vld [vmem:[%s2 + $0xbc] sm:$0xf]
      %v316 = vld [vmem:[%s3] sm:$0x7]
      %v318 = vlaneseq
      %v319 = vshrl.u32 %v318, 7
      %v320 = vsub.s32 0, %v319
      %v321 = vrot.slane %v316, %v320
      %v322 = vlaneseq
      %v323 = vshrl.u32 %v322, 7
      %v324 = vsub.s32 1, %v323
      %v325 = vrot.slane %v316, %v324
      %v326 = vlaneseq
      %v327 = vshrl.u32 %v326, 7
      %v328 = vsub.s32 2, %v327
      %v329 = vrot.slane %v316, %v328
      %v365 = vunpack.c.l.b16 %v284
      %v366 = vunpack.c.h.b16 %v284
      %v367 = vunpack.c.l.b16 %v285
      %v368 = vunpack.c.l.b16 %v286
      %v369 = vunpack.c.h.b16 %v286
      %v370 = vunpack.c.l.b16 %v287
      %v371 = vunpack.c.l.b16 %v288
      %v372 = vunpack.c.h.b16 %v288
      %v373 = vunpack.c.l.b16 %v289
      %v374 = vunpack.c.l.b16 %v290
      %v375 = vunpack.c.h.b16 %v290
      %v376 = vunpack.c.l.b16 %v291
      %v377 = vunpack.c.l.b16 %v292
      %v378 = vunpack.c.h.b16 %v292
      %v379 = vunpack.c.l.b16 %v293
      %v380 = vunpack.c.l.b16 %v294
      %v381 = vunpack.c.h.b16 %v294
      %v382 = vunpack.c.l.b16 %v295
      %v383 = vunpack.c.l.b16 %v296
      %v384 = vunpack.c.h.b16 %v296
      %v385 = vunpack.c.l.b16 %v297
      %v386 = vunpack.c.l.b16 %v298
      %v387 = vunpack.c.h.b16 %v298
      %v388 = vunpack.c.l.b16 %v299
      %v389 = vunpack.c.l.b16 %v300
      %v390 = vunpack.c.h.b16 %v300
      %v391 = vunpack.c.l.b16 %v301
      %v392 = vunpack.c.l.b16 %v302
      %v393 = vunpack.c.h.b16 %v302
      %v394 = vunpack.c.l.b16 %v303
      %v395 = vunpack.c.l.b16 %v304
      %v396 = vunpack.c.h.b16 %v304
      %v397 = vunpack.c.l.b16 %v305
      %v398 = vunpack.c.l.b16 %v306
      %v399 = vunpack.c.h.b16 %v306
      %v400 = vunpack.c.l.b16 %v307
      %v401 = vunpack.c.l.b16 %v308
      %v402 = vunpack.c.h.b16 %v308
      %v403 = vunpack.c.l.b16 %v309
      %v404 = vunpack.c.l.b16 %v310
      %v405 = vunpack.c.h.b16 %v310
      %v406 = vunpack.c.l.b16 %v311
      %v407 = vunpack.c.l.b16 %v312
      %v408 = vunpack.c.h.b16 %v312
      %v409 = vunpack.c.l.b16 %v313
      %v410 = vunpack.c.l.b16 %v314
      %v411 = vunpack.c.h.b16 %v314
      %v412 = vunpack.c.l.b16 %v315
      %v413 = vpack.c.b16 %v368, %v365
      %v414 = vpack.c.b16 %v369, %v366
      %v415 = vpack.c.b16 %v370, %v367
      %v416 = vpack.c.b16 %v374, %v371
      %v417 = vpack.c.b16 %v375, %v372
      %v418 = vpack.c.b16 %v376, %v373
      %v419 = vpack.c.b16 %v380, %v377
      %v420 = vpack.c.b16 %v381, %v378
      %v421 = vpack.c.b16 %v382, %v379
      %v422 = vpack.c.b16 %v386, %v383
      %v423 = vpack.c.b16 %v387, %v384
      %v424 = vpack.c.b16 %v388, %v385
      %v425 = vpack.c.b16 %v392, %v389
      %v426 = vpack.c.b16 %v393, %v390
      %v427 = vpack.c.b16 %v394, %v391
      %v428 = vpack.c.b16 %v398, %v395
      %v429 = vpack.c.b16 %v399, %v396
      %v430 = vpack.c.b16 %v400, %v397
      %v431 = vpack.c.b16 %v404, %v401
      %v432 = vpack.c.b16 %v405, %v402
      %v433 = vpack.c.b16 %v406, %v403
      %v434 = vpack.c.b16 %v410, %v407
      %v435 = vpack.c.b16 %v411, %v408
      %v436 = vpack.c.b16 %v412, %v409
      %461 = vmatprep.subr.bf16.mxu0 %v414
      %462 = vmatpush1.bf16.msra.mxu0 %v413
      %463 = vmatprep.subr.bf16.mxu0 %v417
      %464 = vmatpush1.bf16.msra.mxu0 %v416
      %465 = vmatprep.subr.bf16.mxu0 %v420
      %466 = vmatpush1.bf16.msra.mxu0 %v419
      %467 = vmatprep.subr.bf16.mxu0 %v423
      %468 = vmatpush1.bf16.msra.mxu0 %v422
      %469 = vmatprep.subr.bf16.mxu0 %v426
      %470 = vmatpush1.bf16.msra.mxu0 %v425
      %471 = vmatprep.subr.bf16.mxu0 %v429
      %472 = vmatpush1.bf16.msra.mxu0 %v428
      %473 = vmatprep.subr.bf16.mxu0 %v432
      %474 = vmatpush1.bf16.msra.mxu0 %v431
      %475 = vmatprep.subr.bf16.mxu0 %v435
      %476 = vmatpush1.bf16.msra.mxu0 %v434
      %477 = vmatprep.subr.bf16.mxu0 0
      %478 = vmatpush1.bf16.msra.mxu0 0
      %479 = vmatprep.subr.bf16.mxu0 0
      %480 = vmatpush1.bf16.msra.mxu0 0
      %481 = vmatprep.subr.bf16.mxu0 0
      %482 = vmatpush1.bf16.msra.mxu0 0
      %483 = vmatprep.subr.bf16.mxu0 0
      %484 = vmatpush1.bf16.msra.mxu0 0
      %485 = vmatprep.subr.bf16.mxu0 0
      %486 = vmatpush1.bf16.msra.mxu0 0
      %487 = vmatprep.subr.bf16.mxu0 0
      %488 = vmatpush1.bf16.msra.mxu0 0
      %489 = vmatprep.subr.bf16.mxu0 0
      %490 = vmatpush1.bf16.msra.mxu0 0
      %491 = vmatprep.subr.bf16.mxu0 0
      %492 = vmatpush1.bf16.msra.mxu0 0
      %493 = vmatprep.mubr.bf16.mxu0 0
      %494 = vmatmul.mubr.bf16.gmra.mrb[0].mxu0 %v282
      %v495 = vpop.f32.mrb[0].mxu0
      %v496 = vadd.f32 %v321, %v495
      %v497 = vpop.f32.mrb[0].mxu0
      %v498 = vadd.f32 %v325, %v497
      %v499 = vpop.f32.mrb[0].mxu0
      %v500 = vpop.f32.mrb[0].mxu0
      %501 = vdwg.mxu0
      %502 = vmatprep.subr.bf16.mxu0 0
      %503 = vmatpush1.bf16.msra.mxu0 %v415
      %504 = vmatprep.subr.bf16.mxu0 0
      %505 = vmatpush1.bf16.msra.mxu0 %v418
      %506 = vmatprep.subr.bf16.mxu0 0
      %507 = vmatpush1.bf16.msra.mxu0 %v421
      %508 = vmatprep.subr.bf16.mxu0 0
      %509 = vmatpush1.bf16.msra.mxu0 %v424
      %510 = vmatprep.subr.bf16.mxu0 0
      %511 = vmatpush1.bf16.msra.mxu0 %v427
      %512 = vmatprep.subr.bf16.mxu0 0
      %513 = vmatpush1.bf16.msra.mxu0 %v430
      %514 = vmatprep.subr.bf16.mxu0 0
      %515 = vmatpush1.bf16.msra.mxu0 %v433
      %516 = vmatprep.subr.bf16.mxu0 0
      %517 = vmatpush1.bf16.msra.mxu0 %v436
      %518 = vmatprep.subr.bf16.mxu0 0
      %519 = vmatpush1.bf16.msra.mxu0 0
      %520 = vmatprep.subr.bf16.mxu0 0
      %521 = vmatpush1.bf16.msra.mxu0 0
      %522 = vmatprep.subr.bf16.mxu0 0
      %523 = vmatpush1.bf16.msra.mxu0 0
      %524 = vmatprep.subr.bf16.mxu0 0
      %525 = vmatpush1.bf16.msra.mxu0 0
      %526 = vmatprep.subr.bf16.mxu0 0
      %527 = vmatpush1.bf16.msra.mxu0 0
      %528 = vmatprep.subr.bf16.mxu0 0
      %529 = vmatpush1.bf16.msra.mxu0 0
      %530 = vmatprep.subr.bf16.mxu0 0
      %531 = vmatpush1.bf16.msra.mxu0 0
      %532 = vmatprep.subr.bf16.mxu0 0
      %533 = vmatpush1.bf16.msra.mxu0 0
      %534 = vmatprep.mubr.bf16.mxu0 0
      %535 = vmatmul.mubr.bf16.gmra.mrb[0].mxu0 %v282
      %v536 = vpop.f32.mrb[0].mxu0
      %v537 = vadd.f32 %v329, %v536
      %v538 = vpop.f32.mrb[0].mxu0
      %v539 = vpop.f32.mrb[0].mxu0
      %v540 = vpop.f32.mrb[0].mxu0
      %541 = vdwg.mxu0
      %v542 = vmul.f32 %v496, 0.17677669
      %s543 = sld [smem:[#allocation4 + %s25]]
      %v544 = vlaneseq
      %v545 = vand.u32 %v544, 127
      %v546 = vstv %s543
      %vm547 = vcmp.lt.s32.totalorder %v545, %v546
      %v548 = vpack.c.bf16 %v542, %v542
      %v549 = vpack.c.bf16 %v498, %v498
      %v550 = vpack.c.bf16 %v537, %v537
      %vm551 = vcmask 261120
      %v553 = vsel %vm551, %v548, 0
      %v556 = vsel %vm551, %v549, 0
      %558 = vmatprep.subr.bf16.mxu0 0
      %559 = vmatpush1.bf16.xpose.msra.mxu0 %v556
      %560 = vmatprep.subr.bf16.mxu0 0
      %561 = vmatpush1.bf16.xpose.msra.mxu0 0
      %562 = vmatprep.subr.bf16.mxu0 0
      %563 = vmatpush1.bf16.xpose.msra.mxu0 0
      %564 = vmatprep.subr.bf16.mxu0 0
      %565 = vmatpush1.bf16.xpose.msra.mxu0 0
      %566 = vmatprep.subr.bf16.mxu0 0
      %567 = vmatpush1.bf16.xpose.msra.mxu0 0
      %568 = vmatprep.subr.bf16.mxu0 0
      %569 = vmatpush1.bf16.xpose.msra.mxu0 0
      %570 = vmatprep.subr.bf16.mxu0 0
      %571 = vmatpush1.bf16.xpose.msra.mxu0 0
      %572 = vmatprep.subr.bf16.mxu0 0
      %573 = vmatpush1.bf16.xpose.msra.mxu0 0
      %574 = vmatprep.subr.bf16.mxu0 0
      %575 = vmatpush1.bf16.xpose.msra.mxu0 0
      %576 = vmatprep.subr.bf16.mxu0 0
      %577 = vmatpush1.bf16.xpose.msra.mxu0 0
      %578 = vmatprep.subr.bf16.mxu0 0
      %579 = vmatpush1.bf16.xpose.msra.mxu0 0
      %580 = vmatprep.subr.bf16.mxu0 0
      %581 = vmatpush1.bf16.xpose.msra.mxu0 0
      %582 = vmatprep.subr.bf16.mxu0 0
      %583 = vmatpush1.bf16.xpose.msra.mxu0 0
      %584 = vmatprep.subr.bf16.mxu0 0
      %585 = vmatpush1.bf16.xpose.msra.mxu0 0
      %586 = vmatprep.subr.bf16.mxu0 0
      %587 = vmatpush1.bf16.xpose.msra.mxu0 0
      %588 = vmatprep.subr.bf16.mxu0 0
      %589 = vmatpush1.bf16.xpose.msra.mxu0 0
      %590 = vmatprep.mubr.bf16.mxu0 0
      %591 = vmatmul.mubr.bf16.gmra.mrb[0].mxu0 %v553
      %v592 = vpop.f32.mrb[0].mxu0
      %v593 = vadd.f32 0.0, %v592
      %v594 = vpop.f32.mrb[0].mxu0
      %v595 = vpop.f32.mrb[0].mxu0
      %v596 = vpop.f32.mrb[0].mxu0
      %597 = vdwg.mxu0
      %v598 = vsel %vm547, %v593, -1e+09
      %vm599 = vcmask 64512
      %v600 = vsel %vm599, %v598, -inf
      %601 = vmax.xlane.f32.xlu0 %v600
      %v602 = vpop.xlane.xlu0 %601
      %v603 = vsub.f32 %v598, %v602
      %v604 = vmul.f32 %v603, 1.442695
      %v605 = vpow.pop %v604
      %v606 = vsel %vm599, %v605, 0.0
      %607 = vadd.xlane.f32.xlu0 %v606
      %v608 = vpop.xlane.xlu0 %607
      %v609 = vrcp.pop %v608
      %v610 = vmul.f32 %v605, %v609
      %v611 = vpack.c.bf16 %v610, %v610
      %v613 = vsel %vm599, %v611, 0
      %vm615 = vcmask 1043456
      %v617 = vsel %vm615, %v550, 0
      %619 = vmatprep.subr.bf16.mxu0 0
      %620 = vmatpush1.bf16.msra.mxu0 %v617
      %621 = vmatprep.subr.bf16.mxu0 0
      %622 = vmatpush1.bf16.msra.mxu0 0
      %623 = vmatprep.subr.bf16.mxu0 0
      %624 = vmatpush1.bf16.msra.mxu0 0
      %625 = vmatprep.subr.bf16.mxu0 0
      %626 = vmatpush1.bf16.msra.mxu0 0
      %627 = vmatprep.subr.bf16.mxu0 0
      %628 = vmatpush1.bf16.msra.mxu0 0
      %629 = vmatprep.subr.bf16.mxu0 0
      %630 = vmatpush1.bf16.msra.mxu0 0
      %631 = vmatprep.subr.bf16.mxu0 0
      %632 = vmatpush1.bf16.msra.mxu0 0
      %633 = vmatprep.subr.bf16.mxu0 0
      %634 = vmatpush1.bf16.msra.mxu0 0
      %635 = vmatprep.subr.bf16.mxu0 0
      %636 = vmatpush1.bf16.msra.mxu0 0
      %637 = vmatprep.subr.bf16.mxu0 0
      %638 = vmatpush1.bf16.msra.mxu0 0
      %639 = vmatprep.subr.bf16.mxu0 0
      %640 = vmatpush1.bf16.msra.mxu0 0
      %641 = vmatprep.subr.bf16.mxu0 0
      %642 = vmatpush1.bf16.msra.mxu0 0
      %643 = vmatprep.subr.bf16.mxu0 0
      %644 = vmatpush1.bf16.msra.mxu0 0
      %645 = vmatprep.subr.bf16.mxu0 0
      %646 = vmatpush1.bf16.msra.mxu0 0
      %647 = vmatprep.subr.bf16.mxu0 0
      %648 = vmatpush1.bf16.msra.mxu0 0
      %649 = vmatprep.subr.bf16.mxu0 0
      %650 = vmatpush1.bf16.msra.mxu0 0
      %651 = vmatprep.mubr.bf16.mxu0 0
      %652 = vmatmul.mubr.bf16.gmra.mrb[0].mxu0 %v613
      %v653 = vpop.f32.mrb[0].mxu0
      %v654 = vadd.f32 0.0, %v653
      %v655 = vpop.f32.mrb[0].mxu0
      %v656 = vpop.f32.mrb[0].mxu0
      %v657 = vpop.f32.mrb[0].mxu0
      %658 = vdwg.mxu0
      %659 = vst.msk [vmem:[#allocation2] sm:$0xff] %vm551, %v654
      %661 = vrot.lane.b32.xlu0 %v548, 96
      %v662 = vpop.permute.xlu0 %661
      %664 = vrot.lane.b32.xlu0 %v549, 96
      %v665 = vpop.permute.xlu0 %664
      %v667 = vsel %vm551, %v662, 0
      %v670 = vsel %vm551, %v665, 0
      %672 = vmatprep.subr.bf16.mxu0 0
      %673 = vmatpush1.bf16.xpose.msra.mxu0 %v670
      %674 = vmatprep.subr.bf16.mxu0 0
      %675 = vmatpush1.bf16.xpose.msra.mxu0 0
      %676 = vmatprep.subr.bf16.mxu0 0
      %677 = vmatpush1.bf16.xpose.msra.mxu0 0
      %678 = vmatprep.subr.bf16.mxu0 0
      %679 = vmatpush1.bf16.xpose.msra.mxu0 0
      %680 = vmatprep.subr.bf16.mxu0 0
      %681 = vmatpush1.bf16.xpose.msra.mxu0 0
      %682 = vmatprep.subr.bf16.mxu0 0
      %683 = vmatpush1.bf16.xpose.msra.mxu0 0
      %684 = vmatprep.subr.bf16.mxu0 0
      %685 = vmatpush1.bf16.xpose.msra.mxu0 0
      %686 = vmatprep.subr.bf16.mxu0 0
      %687 = vmatpush1.bf16.xpose.msra.mxu0 0
      %688 = vmatprep.subr.bf16.mxu0 0
      %689 = vmatpush1.bf16.xpose.msra.mxu0 0
      %690 = vmatprep.subr.bf16.mxu0 0
      %691 = vmatpush1.bf16.xpose.msra.mxu0 0
      %692 = vmatprep.subr.bf16.mxu0 0
      %693 = vmatpush1.bf16.xpose.msra.mxu0 0
      %694 = vmatprep.subr.bf16.mxu0 0
      %695 = vmatpush1.bf16.xpose.msra.mxu0 0
      %696 = vmatprep.subr.bf16.mxu0 0
      %697 = vmatpush1.bf16.xpose.msra.mxu0 0
      %698 = vmatprep.subr.bf16.mxu0 0
      %699 = vmatpush1.bf16.xpose.msra.mxu0 0
      %700 = vmatprep.subr.bf16.mxu0 0
      %701 = vmatpush1.bf16.xpose.msra.mxu0 0
      %702 = vmatprep.subr.bf16.mxu0 0
      %703 = vmatpush1.bf16.xpose.msra.mxu0 0
      %704 = vmatprep.mubr.bf16.mxu0 0
      %705 = vmatmul.mubr.bf16.gmra.mrb[0].mxu0 %v667
      %v706 = vpop.f32.mrb[0].mxu0
      %v707 = vadd.f32 0.0, %v706
      %v708 = vpop.f32.mrb[0].mxu0
      %v709 = vpop.f32.mrb[0].mxu0
      %v710 = vpop.f32.mrb[0].mxu0
      %711 = vdwg.mxu0
      %v712 = vsel %vm547, %v707, -1e+09
      %v713 = vsel %vm599, %v712, -inf
      %714 = vmax.xlane.f32.xlu0 %v713
      %v715 = vpop.xlane.xlu0 %714
      %v716 = vsub.f32 %v712, %v715
      %v717 = vmul.f32 %v716, 1.442695
      %v718 = vpow.pop %v717
      %v719 = vsel %vm599, %v718, 0.0
      %720 = vadd.xlane.f32.xlu0 %v719
      %v721 = vpop.xlane.xlu0 %720
      %v722 = vrcp.pop %v721
      %v723 = vmul.f32 %v718, %v722
      %v724 = vpack.c.bf16 %v723, %v723
      %726 = vrot.lane.b32.xlu0 %v550, 96
      %v727 = vpop.permute.xlu0 %726
      %v729 = vsel %vm599, %v724, 0
      %v732 = vsel %vm615, %v727, 0
      %734 = vmatprep.subr.bf16.mxu0 0
      %735 = vmatpush1.bf16.msra.mxu0 %v732
      %736 = vmatprep.subr.bf16.mxu0 0
      %737 = vmatpush1.bf16.msra.mxu0 0
      %738 = vmatprep.subr.bf16.mxu0 0
      %739 = vmatpush1.bf16.msra.mxu0 0
      %740 = vmatprep.subr.bf16.mxu0 0
      %741 = vmatpush1.bf16.msra.mxu0 0
      %742 = vmatprep.subr.bf16.mxu0 0
      %743 = vmatpush1.bf16.msra.mxu0 0
      %744 = vmatprep.subr.bf16.mxu0 0
      %745 = vmatpush1.bf16.msra.mxu0 0
      %746 = vmatprep.subr.bf16.mxu0 0
      %747 = vmatpush1.bf16.msra.mxu0 0
      %748 = vmatprep.subr.bf16.mxu0 0
      %749 = vmatpush1.bf16.msra.mxu0 0
      %750 = vmatprep.subr.bf16.mxu0 0
      %751 = vmatpush1.bf16.msra.mxu0 0
      %752 = vmatprep.subr.bf16.mxu0 0
      %753 = vmatpush1.bf16.msra.mxu0 0
      %754 = vmatprep.subr.bf16.mxu0 0
      %755 = vmatpush1.bf16.msra.mxu0 0
      %756 = vmatprep.subr.bf16.mxu0 0
      %757 = vmatpush1.bf16.msra.mxu0 0
      %758 = vmatprep.subr.bf16.mxu0 0
      %759 = vmatpush1.bf16.msra.mxu0 0
      %760 = vmatprep.subr.bf16.mxu0 0
      %761 = vmatpush1.bf16.msra.mxu0 0
      %762 = vmatprep.subr.bf16.mxu0 0
      %763 = vmatpush1.bf16.msra.mxu0 0
      %764 = vmatprep.subr.bf16.mxu0 0
      %765 = vmatpush1.bf16.msra.mxu0 0
      %766 = vmatprep.mubr.bf16.mxu0 0
      %767 = vmatmul.mubr.bf16.gmra.mrb[0].mxu0 %v729
      %v768 = vpop.f32.mrb[0].mxu0
      %v769 = vadd.f32 0.0, %v768
      %v770 = vpop.f32.mrb[0].mxu0
      %v771 = vpop.f32.mrb[0].mxu0
      %v772 = vpop.f32.mrb[0].mxu0
      %773 = vdwg.mxu0
      %775 = vrot.lane.b32.xlu0 %v769, 32
      %v776 = vpop.permute.xlu0 %775
      %vm778 = vcmask 523520
      %779 = vst.msk [vmem:[#allocation2] sm:$0xff] %vm778, %v776
      %780 = vrot.lane.b32.xlu0 %v548, 64
      %v781 = vpop.permute.xlu0 %780
      %782 = vrot.lane.b32.xlu0 %v549, 64
      %v783 = vpop.permute.xlu0 %782
      %v785 = vsel %vm551, %v781, 0
      %v788 = vsel %vm551, %v783, 0
      %790 = vmatprep.subr.bf16.mxu0 0
      %791 = vmatpush1.bf16.xpose.msra.mxu0 %v788
      %792 = vmatprep.subr.bf16.mxu0 0
      %793 = vmatpush1.bf16.xpose.msra.mxu0 0
      %794 = vmatprep.subr.bf16.mxu0 0
      %795 = vmatpush1.bf16.xpose.msra.mxu0 0
      %796 = vmatprep.subr.bf16.mxu0 0
      %797 = vmatpush1.bf16.xpose.msra.mxu0 0
      %798 = vmatprep.subr.bf16.mxu0 0
      %799 = vmatpush1.bf16.xpose.msra.mxu0 0
      %800 = vmatprep.subr.bf16.mxu0 0
      %801 = vmatpush1.bf16.xpose.msra.mxu0 0
      %802 = vmatprep.subr.bf16.mxu0 0
      %803 = vmatpush1.bf16.xpose.msra.mxu0 0
      %804 = vmatprep.subr.bf16.mxu0 0
      %805 = vmatpush1.bf16.xpose.msra.mxu0 0
      %806 = vmatprep.subr.bf16.mxu0 0
      %807 = vmatpush1.bf16.xpose.msra.mxu0 0
      %808 = vmatprep.subr.bf16.mxu0 0
      %809 = vmatpush1.bf16.xpose.msra.mxu0 0
      %810 = vmatprep.subr.bf16.mxu0 0
      %811 = vmatpush1.bf16.xpose.msra.mxu0 0
      %812 = vmatprep.subr.bf16.mxu0 0
      %813 = vmatpush1.bf16.xpose.msra.mxu0 0
      %814 = vmatprep.subr.bf16.mxu0 0
      %815 = vmatpush1.bf16.xpose.msra.mxu0 0
      %816 = vmatprep.subr.bf16.mxu0 0
      %817 = vmatpush1.bf16.xpose.msra.mxu0 0
      %818 = vmatprep.subr.bf16.mxu0 0
      %819 = vmatpush1.bf16.xpose.msra.mxu0 0
      %820 = vmatprep.subr.bf16.mxu0 0
      %821 = vmatpush1.bf16.xpose.msra.mxu0 0
      %822 = vmatprep.mubr.bf16.mxu0 0
      %823 = vmatmul.mubr.bf16.gmra.mrb[0].mxu0 %v785
      %v824 = vpop.f32.mrb[0].mxu0
      %v825 = vadd.f32 0.0, %v824
      %v826 = vpop.f32.mrb[0].mxu0
      %v827 = vpop.f32.mrb[0].mxu0
      %v828 = vpop.f32.mrb[0].mxu0
      %829 = vdwg.mxu0
      %v830 = vsel %vm547, %v825, -1e+09
      %v831 = vsel %vm599, %v830, -inf
      %832 = vmax.xlane.f32.xlu0 %v831
      %v833 = vpop.xlane.xlu0 %832
      %v834 = vsub.f32 %v830, %v833
      %v835 = vmul.f32 %v834, 1.442695
      %v836 = vpow.pop %v835
      %v837 = vsel %vm599, %v836, 0.0
      %838 = vadd.xlane.f32.xlu0 %v837
      %v839 = vpop.xlane.xlu0 %838
      %v840 = vrcp.pop %v839
      %v841 = vmul.f32 %v836, %v840
      %v842 = vpack.c.bf16 %v841, %v841
      %843 = vrot.lane.b32.xlu0 %v550, 64
      %v844 = vpop.permute.xlu0 %843
      %v846 = vsel %vm599, %v842, 0
      %v849 = vsel %vm615, %v844, 0
      %851 = vmatprep.subr.bf16.mxu0 0
      %852 = vmatpush1.bf16.msra.mxu0 %v849
      %853 = vmatprep.subr.bf16.mxu0 0
      %854 = vmatpush1.bf16.msra.mxu0 0
      %855 = vmatprep.subr.bf16.mxu0 0
      %856 = vmatpush1.bf16.msra.mxu0 0
      %857 = vmatprep.subr.bf16.mxu0 0
      %858 = vmatpush1.bf16.msra.mxu0 0
      %859 = vmatprep.subr.bf16.mxu0 0
      %860 = vmatpush1.bf16.msra.mxu0 0
      %861 = vmatprep.subr.bf16.mxu0 0
      %862 = vmatpush1.bf16.msra.mxu0 0
      %863 = vmatprep.subr.bf16.mxu0 0
      %864 = vmatpush1.bf16.msra.mxu0 0
      %865 = vmatprep.subr.bf16.mxu0 0
      %866 = vmatpush1.bf16.msra.mxu0 0
      %867 = vmatprep.subr.bf16.mxu0 0
      %868 = vmatpush1.bf16.msra.mxu0 0
      %869 = vmatprep.subr.bf16.mxu0 0
      %870 = vmatpush1.bf16.msra.mxu0 0
      %871 = vmatprep.subr.bf16.mxu0 0
      %872 = vmatpush1.bf16.msra.mxu0 0
      %873 = vmatprep.subr.bf16.mxu0 0
      %874 = vmatpush1.bf16.msra.mxu0 0
      %875 = vmatprep.subr.bf16.mxu0 0
      %876 = vmatpush1.bf16.msra.mxu0 0
      %877 = vmatprep.subr.bf16.mxu0 0
      %878 = vmatpush1.bf16.msra.mxu0 0
      %879 = vmatprep.subr.bf16.mxu0 0
      %880 = vmatpush1.bf16.msra.mxu0 0
      %881 = vmatprep.subr.bf16.mxu0 0
      %882 = vmatpush1.bf16.msra.mxu0 0
      %883 = vmatprep.mubr.bf16.mxu0 0
      %884 = vmatmul.mubr.bf16.gmra.mrb[0].mxu0 %v846
      %v885 = vpop.f32.mrb[0].mxu0
      %v886 = vadd.f32 0.0, %v885
      %v887 = vpop.f32.mrb[0].mxu0
      %v888 = vpop.f32.mrb[0].mxu0
      %v889 = vpop.f32.mrb[0].mxu0
      %890 = vdwg.mxu0
      %892 = vrot.lane.b32.xlu0 %v886, 64
      %v893 = vpop.permute.xlu0 %892
      %vm895 = vcmask 785920
      %896 = vst.msk [vmem:[#allocation2] sm:$0xff] %vm895, %v893
      %897 = vrot.lane.b32.xlu0 %v548, 32
      %v898 = vpop.permute.xlu0 %897
      %899 = vrot.lane.b32.xlu0 %v549, 32
      %v900 = vpop.permute.xlu0 %899
      %v902 = vsel %vm551, %v898, 0
      %v905 = vsel %vm551, %v900, 0
      %907 = vmatprep.subr.bf16.mxu0 0
      %908 = vmatpush1.bf16.xpose.msra.mxu0 %v905
      %909 = vmatprep.subr.bf16.mxu0 0
      %910 = vmatpush1.bf16.xpose.msra.mxu0 0
      %911 = vmatprep.subr.bf16.mxu0 0
      %912 = vmatpush1.bf16.xpose.msra.mxu0 0
      %913 = vmatprep.subr.bf16.mxu0 0
      %914 = vmatpush1.bf16.xpose.msra.mxu0 0
      %915 = vmatprep.subr.bf16.mxu0 0
      %916 = vmatpush1.bf16.xpose.msra.mxu0 0
      %917 = vmatprep.subr.bf16.mxu0 0
      %918 = vmatpush1.bf16.xpose.msra.mxu0 0
      %919 = vmatprep.subr.bf16.mxu0 0
      %920 = vmatpush1.bf16.xpose.msra.mxu0 0
      %921 = vmatprep.subr.bf16.mxu0 0
      %922 = vmatpush1.bf16.xpose.msra.mxu0 0
      %923 = vmatprep.subr.bf16.mxu0 0
      %924 = vmatpush1.bf16.xpose.msra.mxu0 0
      %925 = vmatprep.subr.bf16.mxu0 0
      %926 = vmatpush1.bf16.xpose.msra.mxu0 0
      %927 = vmatprep.subr.bf16.mxu0 0
      %928 = vmatpush1.bf16.xpose.msra.mxu0 0
      %929 = vmatprep.subr.bf16.mxu0 0
      %930 = vmatpush1.bf16.xpose.msra.mxu0 0
      %931 = vmatprep.subr.bf16.mxu0 0
      %932 = vmatpush1.bf16.xpose.msra.mxu0 0
      %933 = vmatprep.subr.bf16.mxu0 0
      %934 = vmatpush1.bf16.xpose.msra.mxu0 0
      %935 = vmatprep.subr.bf16.mxu0 0
      %936 = vmatpush1.bf16.xpose.msra.mxu0 0
      %937 = vmatprep.subr.bf16.mxu0 0
      %938 = vmatpush1.bf16.xpose.msra.mxu0 0
      %939 = vmatprep.mubr.bf16.mxu0 0
      %940 = vmatmul.mubr.bf16.gmra.mrb[0].mxu0 %v902
      %v941 = vpop.f32.mrb[0].mxu0
      %v942 = vadd.f32 0.0, %v941
      %v943 = vpop.f32.mrb[0].mxu0
      %v944 = vpop.f32.mrb[0].mxu0
      %v945 = vpop.f32.mrb[0].mxu0
      %946 = vdwg.mxu0
      %v947 = vsel %vm547, %v942, -1e+09
      %v948 = vsel %vm599, %v947, -inf
      %949 = vmax.xlane.f32.xlu0 %v948
      %v950 = vpop.xlane.xlu0 %949
      %v951 = vsub.f32 %v947, %v950
      %v952 = vmul.f32 %v951, 1.442695
      %v953 = vpow.pop %v952
      %v954 = vsel %vm599, %v953, 0.0
      %955 = vadd.xlane.f32.xlu0 %v954
      %v956 = vpop.xlane.xlu0 %955
      %v957 = vrcp.pop %v956
      %v958 = vmul.f32 %v953, %v957
      %v959 = vpack.c.bf16 %v958, %v958
      %960 = vrot.lane.b32.xlu0 %v550, 32
      %v961 = vpop.permute.xlu0 %960
      %v963 = vsel %vm599, %v959, 0
      %v966 = vsel %vm615, %v961, 0
      %968 = vmatprep.subr.bf16.mxu0 0
      %969 = vmatpush1.bf16.msra.mxu0 %v966
      %970 = vmatprep.subr.bf16.mxu0 0
      %971 = vmatpush1.bf16.msra.mxu0 0
      %972 = vmatprep.subr.bf16.mxu0 0
      %973 = vmatpush1.bf16.msra.mxu0 0
      %974 = vmatprep.subr.bf16.mxu0 0
      %975 = vmatpush1.bf16.msra.mxu0 0
      %976 = vmatprep.subr.bf16.mxu0 0
      %977 = vmatpush1.bf16.msra.mxu0 0
      %978 = vmatprep.subr.bf16.mxu0 0
      %979 = vmatpush1.bf16.msra.mxu0 0
      %980 = vmatprep.subr.bf16.mxu0 0
      %981 = vmatpush1.bf16.msra.mxu0 0
      %982 = vmatprep.subr.bf16.mxu0 0
      %983 = vmatpush1.bf16.msra.mxu0 0
      %984 = vmatprep.subr.bf16.mxu0 0
      %985 = vmatpush1.bf16.msra.mxu0 0
      %986 = vmatprep.subr.bf16.mxu0 0
      %987 = vmatpush1.bf16.msra.mxu0 0
      %988 = vmatprep.subr.bf16.mxu0 0
      %989 = vmatpush1.bf16.msra.mxu0 0
      %990 = vmatprep.subr.bf16.mxu0 0
      %991 = vmatpush1.bf16.msra.mxu0 0
      %992 = vmatprep.subr.bf16.mxu0 0
      %993 = vmatpush1.bf16.msra.mxu0 0
      %994 = vmatprep.subr.bf16.mxu0 0
      %995 = vmatpush1.bf16.msra.mxu0 0
      %996 = vmatprep.subr.bf16.mxu0 0
      %997 = vmatpush1.bf16.msra.mxu0 0
      %998 = vmatprep.subr.bf16.mxu0 0
      %999 = vmatpush1.bf16.msra.mxu0 0
      %1000 = vmatprep.mubr.bf16.mxu0 0
      %1001 = vmatmul.mubr.bf16.gmra.mrb[0].mxu0 %v963
      %v1002 = vpop.f32.mrb[0].mxu0
      %v1003 = vadd.f32 0.0, %v1002
      %v1004 = vpop.f32.mrb[0].mxu0
      %v1005 = vpop.f32.mrb[0].mxu0
      %v1006 = vpop.f32.mrb[0].mxu0
      %1007 = vdwg.mxu0
      %1009 = vrot.lane.b32.xlu0 %v1003, 96
      %v1010 = vpop.permute.xlu0 %1009
      %vm1012 = vcmask 1048320
      %1013 = vst.msk [vmem:[#allocation2] sm:$0xff] %vm1012, %v1010
      %v1014 = vld [vmem:[#allocation2] sm:$0xff]
      %v1015 = vpack.c.bf16 %v1014, %v1014
      %v1016 = vld [vmem:[%s4] sm:$0xf]
      %v1017 = vld [vmem:[%s4 + $0x4] sm:$0xf]
      %v1018 = vld [vmem:[%s4 + $0x8] sm:$0xf]
      %v1019 = vld [vmem:[%s4 + $0xc] sm:$0xf]
      %v1020 = vld [vmem:[%s4 + $0x10] sm:$0xf]
      %v1021 = vld [vmem:[%s4 + $0x14] sm:$0xf]
      %v1022 = vld [vmem:[%s4 + $0x18] sm:$0xf]
      %v1023 = vld [vmem:[%s4 + $0x1c] sm:$0xf]
      %v1024 = vld [vmem:[%s4 + $0x20] sm:$0xf]
      %v1025 = vld [vmem:[%s4 + $0x24] sm:$0xf]
      %v1026 = vld [vmem:[%s4 + $0x28] sm:$0xf]
      %v1027 = vld [vmem:[%s4 + $0x2c] sm:$0xf]
      %v1028 = vld [vmem:[%s4 + $0x30] sm:$0xf]
      %v1029 = vld [vmem:[%s4 + $0x34] sm:$0xf]
      %v1030 = vld [vmem:[%s4 + $0x38] sm:$0xf]
      %v1031 = vld [vmem:[%s4 + $0x3c] sm:$0xf]
      %v1032 = vld [vmem:[%s5] sm:$0x1]
      %v1034 = vlaneseq
      %v1035 = vshrl.u32 %v1034, 7
      %v1036 = vsub.s32 0, %v1035
      %v1037 = vrot.slane %v1032, %v1036
      %v1055 = vunpack.c.l.b16 %v1016
      %v1056 = vunpack.c.l.b16 %v1017
      %v1057 = vunpack.c.l.b16 %v1018
      %v1058 = vunpack.c.l.b16 %v1019
      %v1059 = vunpack.c.l.b16 %v1020
      %v1060 = vunpack.c.l.b16 %v1021
      %v1061 = vunpack.c.l.b16 %v1022
      %v1062 = vunpack.c.l.b16 %v1023
      %v1063 = vunpack.c.l.b16 %v1024
      %v1064 = vunpack.c.l.b16 %v1025
      %v1065 = vunpack.c.l.b16 %v1026
      %v1066 = vunpack.c.l.b16 %v1027
      %v1067 = vunpack.c.l.b16 %v1028
      %v1068 = vunpack.c.l.b16 %v1029
      %v1069 = vunpack.c.l.b16 %v1030
      %v1070 = vunpack.c.l.b16 %v1031
      %v1071 = vpack.c.b16 %v1056, %v1055
      %v1072 = vpack.c.b16 %v1058, %v1057
      %v1073 = vpack.c.b16 %v1060, %v1059
      %v1074 = vpack.c.b16 %v1062, %v1061
      %v1075 = vpack.c.b16 %v1064, %v1063
      %v1076 = vpack.c.b16 %v1066, %v1065
      %v1077 = vpack.c.b16 %v1068, %v1067
      %v1078 = vpack.c.b16 %v1070, %v1069
      %1087 = vmatprep.subr.bf16.mxu0 0
      %1088 = vmatpush1.bf16.msra.mxu0 %v1071
      %1089 = vmatprep.subr.bf16.mxu0 0
      %1090 = vmatpush1.bf16.msra.mxu0 %v1072
      %1091 = vmatprep.subr.bf16.mxu0 0
      %1092 = vmatpush1.bf16.msra.mxu0 %v1073
      %1093 = vmatprep.subr.bf16.mxu0 0
      %1094 = vmatpush1.bf16.msra.mxu0 %v1074
      %1095 = vmatprep.subr.bf16.mxu0 0
      %1096 = vmatpush1.bf16.msra.mxu0 %v1075
      %1097 = vmatprep.subr.bf16.mxu0 0
      %1098 = vmatpush1.bf16.msra.mxu0 %v1076
      %1099 = vmatprep.subr.bf16.mxu0 0
      %1100 = vmatpush1.bf16.msra.mxu0 %v1077
      %1101 = vmatprep.subr.bf16.mxu0 0
      %1102 = vmatpush1.bf16.msra.mxu0 %v1078
      %1103 = vmatprep.subr.bf16.mxu0 0
      %1104 = vmatpush1.bf16.msra.mxu0 0
      %1105 = vmatprep.subr.bf16.mxu0 0
      %1106 = vmatpush1.bf16.msra.mxu0 0
      %1107 = vmatprep.subr.bf16.mxu0 0
      %1108 = vmatpush1.bf16.msra.mxu0 0
      %1109 = vmatprep.subr.bf16.mxu0 0
      %1110 = vmatpush1.bf16.msra.mxu0 0
      %1111 = vmatprep.subr.bf16.mxu0 0
      %1112 = vmatpush1.bf16.msra.mxu0 0
      %1113 = vmatprep.subr.bf16.mxu0 0
      %1114 = vmatpush1.bf16.msra.mxu0 0
      %1115 = vmatprep.subr.bf16.mxu0 0
      %1116 = vmatpush1.bf16.msra.mxu0 0
      %1117 = vmatprep.subr.bf16.mxu0 0
      %1118 = vmatpush1.bf16.msra.mxu0 0
      %1119 = vmatprep.mubr.bf16.mxu0 0
      %1120 = vmatmul.mubr.bf16.gmra.mrb[0].mxu0 %v1015
      %v1121 = vpop.f32.mrb[0].mxu0
      %v1122 = vadd.f32 %v1037, %v1121
      %v1123 = vpop.f32.mrb[0].mxu0
      %v1124 = vpop.f32.mrb[0].mxu0
      %v1125 = vpop.f32.mrb[0].mxu0
      %1126 = vdwg.mxu0
      %v1127 = vadd.f32 %v1122, %v283
      %v1128 = vld [vmem:[%s6] sm:$0x1]
      %v1129 = vld [vmem:[%s7] sm:$0x1]
      %1130 = vadd.xlane.f32.xlu0 %v1127
      %v1131 = vpop.xlane.xlu0 %1130
      %v1132 = vrcp.pop 128.0
      %v1133 = vmul.f32 %v1131, %v1132
      %v1134 = vsub.f32 %v1127, %v1133
      %v1135 = vmul.f32 %v1134, %v1134
      %1136 = vadd.xlane.f32.xlu0 %v1135
      %v1137 = vpop.xlane.xlu0 %1136
      %v1138 = vmul.f32 %v1137, %v1132
      %v1139 = vadd.f32 %v1138, 1e-05
      %v1140 = vrsqrt.pop %v1139
      %v1141 = vmul.f32 %v1134, %v1140
      %v1143 = vlaneseq
      %v1144 = vshrl.u32 %v1143, 7
      %v1145 = vsub.s32 0, %v1144
      %v1146 = vrot.slane %v1128, %v1145
      %v1148 = vmul.f32 %v1141, %v1146
      %v1150 = vlaneseq
      %v1151 = vshrl.u32 %v1150, 7
      %v1152 = vsub.s32 0, %v1151
      %v1153 = vrot.slane %v1129, %v1152
      %v1155 = vadd.f32 %v1148, %v1153
      %v1156 = vpack.c.bf16 %v1155, %v1155
      %1157 = vst [vmem:[%s280] sm:$0xf] %v1156
      %p1158 = scmp.lt.s32.totalorder %s25, 1
      %s1159 = scalar_select %p1158, %s25, 1
      %s1160 = smul.addr %s1159, 4
      %s1161 = scalar_lea.vmem %s8, %s1160
      // Predicated region
      $region49: #{tts_forward.14} parent=47 // pred_check
        %p1162 = pneg %p195
      $region50: #{tts_forward.14} parent=47 // pred_check_branch
        %1164 = sbr.rel (%p1162) target = $region52
      $region51: #{tts_forward.14} parent=47 // pred_region
        _
      $region52: #{tts_forward.14} parent=47 // pred_fallthru
        _
    $region48: #{tts_forward.14} parent=5 // pred_fallthru
      _
    %p1165 = scmp.le.s32.totalorder 2, %s20
    // Predicated region
    $region53: #{tts_forward.14} parent=5 // pred_check
      %p1166 = pneg %p1165
    $region54: #{tts_forward.14} parent=5 // pred_check_branch
      %1168 = sbr.rel (%p1166) target = $region56
    $region55: #{tts_forward.14} parent=5 // pred_region
      %s1169 = ssub.s32 %s20, 2
      // Predicated region
      $region57: #{tts_forward.14} parent=55 // pred_check
        %p1170 = pneg %p201
      $region58: #{tts_forward.14} parent=55 // pred_check_branch
        %1172 = sbr.rel (%p1170) target = $region60
      $region59: #{tts_forward.14} parent=55 // pred_region
        %p1173 = scmp.lt.s32.totalorder %s26, 1
        %s1174 = scalar_select %p1173, %s26, 1
        %s1175 = smul.addr %s1174, 4
        %s1176 = scalar_lea.vmem %s8, %s1175
      $region60: #{tts_forward.14} parent=55 // pred_fallthru
        _
    $region56: #{tts_forward.14} parent=5 // pred_fallthru
      _
  $region6: #{tts_forward.14} parent=0 // loop_footer
    %s24 = sadd.s32 1, %s20
  $region7: #{tts_forward.14} parent=0 // loop_footer_branch
    %19 = sbr.rel target = $region3
  $region8: #{tts_forward.14} parent=0 // loop_exit
    _

// kernel: tts_forward.15
$region0: #{tts_forward.15}
  #allocation0 [shape = 'u32[]', space=smem, size = 0x4, offset = 0x4, fixed_abs, tag = 'smem constant byte address 0x4 - core index']
  #allocation1 [shape = 'u32[144,128]{1,0:T(1,128)}', space=vmem, size = 0x12000, scoped, tag = 'internal scratch']
  %s0 = inlined_call_operand.vmem [shape: bf16[16,128], index: 0, kind: input, shape index: {}]
  %s1 = inlined_call_operand.vmem [shape: bf16[128,512], index: 1, kind: input, shape index: {}]
  %s2 = inlined_call_operand.vmem [shape: f32[1,512], index: 2, kind: input, shape index: {}]
  %s3 = inlined_call_operand.vmem [shape: bf16[512,128], index: 3, kind: input, shape index: {}]
  %s4 = inlined_call_operand.vmem [shape: f32[1,128], index: 4, kind: input, shape index: {}]
  %s5 = inlined_call_operand.vmem [shape: f32[1,128], index: 5, kind: input, shape index: {}]
  %s6 = inlined_call_operand.vmem [shape: f32[1,128], index: 6, kind: input, shape index: {}]
  %s7 = inlined_call_operand.vmem [shape: bf16[16,128], index: 7, kind: output, shape index: {}]
  %s8 = sld [smem:[#allocation0]]
  $region38: #{tts_forward.15} parent=0
    _
  %s10 = ssub.s32 1, %s8
  %s11 = scalar_select 0, %s10, %s8
  // Predicated region
  $region2: #{tts_forward.15} parent=0 // pred_check
    _
  $region3: #{tts_forward.15} parent=0 // pred_check_branch
    %13 = sbr.rel (0) target = $region5
  $region4: #{tts_forward.15} parent=0 // pred_region
    _
  $region5: #{tts_forward.15} parent=0 // pred_fallthru
    _
  // Predicated region
  $region6: #{tts_forward.15} parent=0 // pred_check
    _
  $region7: #{tts_forward.15} parent=0 // pred_check_branch
    %15 = sbr.rel (0) target = $region9
  $region8: #{tts_forward.15} parent=0 // pred_region
    _
  $region9: #{tts_forward.15} parent=0 // pred_fallthru
    _
  // Predicated region
  $region10: #{tts_forward.15} parent=0 // pred_check
    _
  $region11: #{tts_forward.15} parent=0 // pred_check_branch
    %17 = sbr.rel (0) target = $region13
  $region12: #{tts_forward.15} parent=0 // pred_region
    _
  $region13: #{tts_forward.15} parent=0 // pred_fallthru
    _
  // Predicated region
  $region14: #{tts_forward.15} parent=0 // pred_check
    _
  $region15: #{tts_forward.15} parent=0 // pred_check_branch
    %19 = sbr.rel (0) target = $region17
  $region16: #{tts_forward.15} parent=0 // pred_region
    _
  $region17: #{tts_forward.15} parent=0 // pred_fallthru
    _
  // Predicated region
  $region18: #{tts_forward.15} parent=0 // pred_check
    _
  $region19: #{tts_forward.15} parent=0 // pred_check_branch
    %21 = sbr.rel (0) target = $region21
  $region20: #{tts_forward.15} parent=0 // pred_region
    _
  $region21: #{tts_forward.15} parent=0 // pred_fallthru
    _
  // Predicated region
  $region22: #{tts_forward.15} parent=0 // pred_check
    _
  $region23: #{tts_forward.15} parent=0 // pred_check_branch
    %23 = sbr.rel (0) target = $region25
  $region24: #{tts_forward.15} parent=0 // pred_region
    _
  $region25: #{tts_forward.15} parent=0 // pred_fallthru
    _
  // Predicated region
  $region26: #{tts_forward.15} parent=0 // pred_check
    _
  $region27: #{tts_forward.15} parent=0 // pred_check_branch
    %25 = sbr.rel (0) target = $region29
  $region28: #{tts_forward.15} parent=0 // pred_region
    _
  $region29: #{tts_forward.15} parent=0 // pred_fallthru
    _
  %v27 = vld [vmem:[%s0] sm:$0xf]
  %v28 = vld [vmem:[%s0 + $0x4] sm:$0xf]
  %v29 = vunpack.c.l.bf16 %v27
  %v30 = vunpack.c.l.bf16 %v28
  %v31 = vld [vmem:[%s1] sm:$0xff]
  %v32 = vld [vmem:[%s1 + $0x8] sm:$0xff]
  %v33 = vld [vmem:[%s1 + $0x10] sm:$0xff]
  %v34 = vld [vmem:[%s1 + $0x18] sm:$0xff]
  %v35 = vld [vmem:[%s1 + $0x20] sm:$0xff]
  %v36 = vld [vmem:[%s1 + $0x28] sm:$0xff]
  %v37 = vld [vmem:[%s1 + $0x30] sm:$0xff]
  %v38 = vld [vmem:[%s1 + $0x38] sm:$0xff]
  %v39 = vld [vmem:[%s1 + $0x40] sm:$0xff]
  %v40 = vld [vmem:[%s1 + $0x48] sm:$0xff]
  %v41 = vld [vmem:[%s1 + $0x50] sm:$0xff]
  %v42 = vld [vmem:[%s1 + $0x58] sm:$0xff]
  %v43 = vld [vmem:[%s1 + $0x60] sm:$0xff]
  %v44 = vld [vmem:[%s1 + $0x68] sm:$0xff]
  %v45 = vld [vmem:[%s1 + $0x70] sm:$0xff]
  %v46 = vld [vmem:[%s1 + $0x78] sm:$0xff]
  %v47 = vld [vmem:[%s1 + $0x80] sm:$0xff]
  %v48 = vld [vmem:[%s1 + $0x88] sm:$0xff]
  %v49 = vld [vmem:[%s1 + $0x90] sm:$0xff]
  %v50 = vld [vmem:[%s1 + $0x98] sm:$0xff]
  %v51 = vld [vmem:[%s1 + $0xa0] sm:$0xff]
  %v52 = vld [vmem:[%s1 + $0xa8] sm:$0xff]
  %v53 = vld [vmem:[%s1 + $0xb0] sm:$0xff]
  %v54 = vld [vmem:[%s1 + $0xb8] sm:$0xff]
  %v55 = vld [vmem:[%s1 + $0xc0] sm:$0xff]
  %v56 = vld [vmem:[%s1 + $0xc8] sm:$0xff]
  %v57 = vld [vmem:[%s1 + $0xd0] sm:$0xff]
  %v58 = vld [vmem:[%s1 + $0xd8] sm:$0xff]
  %v59 = vld [vmem:[%s1 + $0xe0] sm:$0xff]
  %v60 = vld [vmem:[%s1 + $0xe8] sm:$0xff]
  %v61 = vld [vmem:[%s1 + $0xf0] sm:$0xff]
  %v62 = vld [vmem:[%s1 + $0xf8] sm:$0xff]
  %v63 = vld [vmem:[%s2] sm:$0xf]
  %v65 = vlaneseq
  %v66 = vshrl.u32 %v65, 7
  %v67 = vsub.s32 0, %v66
  %v68 = vrot.slane %v63, %v67
  %v69 = vlaneseq
  %v70 = vshrl.u32 %v69, 7
  %v71 = vsub.s32 1, %v70
  %v72 = vrot.slane %v63, %v71
  %v73 = vlaneseq
  %v74 = vshrl.u32 %v73, 7
  %v75 = vsub.s32 2, %v74
  %v76 = vrot.slane %v63, %v75
  %v77 = vlaneseq
  %v78 = vshrl.u32 %v77, 7
  %v79 = vsub.s32 3, %v78
  %v80 = vrot.slane %v63, %v79
  %v87 = vunpack.c.l.b16 %v27
  %v88 = vunpack.c.l.b16 %v28
  %v89 = vpack.c.b16 %v88, %v87
  %v123 = vunpack.c.l.b16 %v31
  %v124 = vunpack.c.h.b16 %v31
  %v125 = vunpack.c.l.b16 %v32
  %v126 = vunpack.c.h.b16 %v32
  %v127 = vunpack.c.l.b16 %v33
  %v128 = vunpack.c.h.b16 %v33
  %v129 = vunpack.c.l.b16 %v34
  %v130 = vunpack.c.h.b16 %v34
  %v131 = vunpack.c.l.b16 %v35
  %v132 = vunpack.c.h.b16 %v35
  %v133 = vunpack.c.l.b16 %v36
  %v134 = vunpack.c.h.b16 %v36
  %v135 = vunpack.c.l.b16 %v37
  %v136 = vunpack.c.h.b16 %v37
  %v137 = vunpack.c.l.b16 %v38
  %v138 = vunpack.c.h.b16 %v38
  %v139 = vunpack.c.l.b16 %v39
  %v140 = vunpack.c.h.b16 %v39
  %v141 = vunpack.c.l.b16 %v40
  %v142 = vunpack.c.h.b16 %v40
  %v143 = vunpack.c.l.b16 %v41
  %v144 = vunpack.c.h.b16 %v41
  %v145 = vunpack.c.l.b16 %v42
  %v146 = vunpack.c.h.b16 %v42
  %v147 = vunpack.c.l.b16 %v43
  %v148 = vunpack.c.h.b16 %v43
  %v149 = vunpack.c.l.b16 %v44
  %v150 = vunpack.c.h.b16 %v44
  %v151 = vunpack.c.l.b16 %v45
  %v152 = vunpack.c.h.b16 %v45
  %v153 = vunpack.c.l.b16 %v46
  %v154 = vunpack.c.h.b16 %v46
  %v155 = vunpack.c.l.b16 %v47
  %v156 = vunpack.c.h.b16 %v47
  %v157 = vunpack.c.l.b16 %v48
  %v158 = vunpack.c.h.b16 %v48
  %v159 = vunpack.c.l.b16 %v49
  %v160 = vunpack.c.h.b16 %v49
  %v161 = vunpack.c.l.b16 %v50
  %v162 = vunpack.c.h.b16 %v50
  %v163 = vunpack.c.l.b16 %v51
  %v164 = vunpack.c.h.b16 %v51
  %v165 = vunpack.c.l.b16 %v52
  %v166 = vunpack.c.h.b16 %v52
  %v167 = vunpack.c.l.b16 %v53
  %v168 = vunpack.c.h.b16 %v53
  %v169 = vunpack.c.l.b16 %v54
  %v170 = vunpack.c.h.b16 %v54
  %v171 = vunpack.c.l.b16 %v55
  %v172 = vunpack.c.h.b16 %v55
  %v173 = vunpack.c.l.b16 %v56
  %v174 = vunpack.c.h.b16 %v56
  %v175 = vunpack.c.l.b16 %v57
  %v176 = vunpack.c.h.b16 %v57
  %v177 = vunpack.c.l.b16 %v58
  %v178 = vunpack.c.h.b16 %v58
  %v179 = vunpack.c.l.b16 %v59
  %v180 = vunpack.c.h.b16 %v59
  %v181 = vunpack.c.l.b16 %v60
  %v182 = vunpack.c.h.b16 %v60
  %v183 = vunpack.c.l.b16 %v61
  %v184 = vunpack.c.h.b16 %v61
  %v185 = vunpack.c.l.b16 %v62
  %v186 = vunpack.c.h.b16 %v62
  %v187 = vpack.c.b16 %v127, %v123
  %v188 = vpack.c.b16 %v128, %v124
  %v189 = vpack.c.b16 %v129, %v125
  %v190 = vpack.c.b16 %v130, %v126
  %v191 = vpack.c.b16 %v135, %v131
  %v192 = vpack.c.b16 %v136, %v132
  %v193 = vpack.c.b16 %v137, %v133
  %v194 = vpack.c.b16 %v138, %v134
  %v195 = vpack.c.b16 %v143, %v139
  %v196 = vpack.c.b16 %v144, %v140
  %v197 = vpack.c.b16 %v145, %v141
  %v198 = vpack.c.b16 %v146, %v142
  %v199 = vpack.c.b16 %v151, %v147
  %v200 = vpack.c.b16 %v152, %v148
  %v201 = vpack.c.b16 %v153, %v149
  %v202 = vpack.c.b16 %v154, %v150
  %v203 = vpack.c.b16 %v159, %v155
  %v204 = vpack.c.b16 %v160, %v156
  %v205 = vpack.c.b16 %v161, %v157
  %v206 = vpack.c.b16 %v162, %v158
  %v207 = vpack.c.b16 %v167, %v163
  %v208 = vpack.c.b16 %v168, %v164
  %v209 = vpack.c.b16 %v169, %v165
  %v210 = vpack.c.b16 %v170, %v166
  %v211 = vpack.c.b16 %v175, %v171
  %v212 = vpack.c.b16 %v176, %v172
  %v213 = vpack.c.b16 %v177, %v173
  %v214 = vpack.c.b16 %v178, %v174
  %v215 = vpack.c.b16 %v183, %v179
  %v216 = vpack.c.b16 %v184, %v180
  %v217 = vpack.c.b16 %v185, %v181
  %v218 = vpack.c.b16 %v186, %v182
  %251 = vmatprep.subr.bf16.mxu0 %v188
  %252 = vmatpush1.bf16.msra.mxu0 %v187
  %253 = vmatprep.subr.bf16.mxu0 %v192
  %254 = vmatpush1.bf16.msra.mxu0 %v191
  %255 = vmatprep.subr.bf16.mxu0 %v196
  %256 = vmatpush1.bf16.msra.mxu0 %v195
  %257 = vmatprep.subr.bf16.mxu0 %v200
  %258 = vmatpush1.bf16.msra.mxu0 %v199
  %259 = vmatprep.subr.bf16.mxu0 %v204
  %260 = vmatpush1.bf16.msra.mxu0 %v203
  %261 = vmatprep.subr.bf16.mxu0 %v208
  %262 = vmatpush1.bf16.msra.mxu0 %v207
  %263 = vmatprep.subr.bf16.mxu0 %v212
  %264 = vmatpush1.bf16.msra.mxu0 %v211
  %265 = vmatprep.subr.bf16.mxu0 %v216
  %266 = vmatpush1.bf16.msra.mxu0 %v215
  %267 = vmatprep.subr.bf16.mxu0 0
  %268 = vmatpush1.bf16.msra.mxu0 0
  %269 = vmatprep.subr.bf16.mxu0 0
  %270 = vmatpush1.bf16.msra.mxu0 0
  %271 = vmatprep.subr.bf16.mxu0 0
  %272 = vmatpush1.bf16.msra.mxu0 0
  %273 = vmatprep.subr.bf16.mxu0 0
  %274 = vmatpush1.bf16.msra.mxu0 0
  %275 = vmatprep.subr.bf16.mxu0 0
  %276 = vmatpush1.bf16.msra.mxu0 0
  %277 = vmatprep.subr.bf16.mxu0 0
  %278 = vmatpush1.bf16.msra.mxu0 0
  %279 = vmatprep.subr.bf16.mxu0 0
  %280 = vmatpush1.bf16.msra.mxu0 0
  %281 = vmatprep.subr.bf16.mxu0 0
  %282 = vmatpush1.bf16.msra.mxu0 0
  %283 = vmatprep.mubr.bf16.mxu0 0
  %284 = vmatmul.mubr.bf16.gmra.mrb[0].mxu0 %v89
  %v285 = vpop.f32.mrb[0].mxu0
  %v286 = vadd.f32 %v68, %v285
  %v287 = vpop.f32.mrb[0].mxu0
  %v288 = vadd.f32 %v72, %v287
  %v289 = vpop.f32.mrb[0].mxu0
  %v290 = vadd.f32 %v68, %v289
  %v291 = vpop.f32.mrb[0].mxu0
  %v292 = vadd.f32 %v72, %v291
  %293 = vdwg.mxu0
  %294 = vmatprep.subr.bf16.mxu0 %v190
  %295 = vmatpush1.bf16.msra.mxu0 %v189
  %296 = vmatprep.subr.bf16.mxu0 %v194
  %297 = vmatpush1.bf16.msra.mxu0 %v193
  %298 = vmatprep.subr.bf16.mxu0 %v198
  %299 = vmatpush1.bf16.msra.mxu0 %v197
  %300 = vmatprep.subr.bf16.mxu0 %v202
  %301 = vmatpush1.bf16.msra.mxu0 %v201
  %302 = vmatprep.subr.bf16.mxu0 %v206
  %303 = vmatpush1.bf16.msra.mxu0 %v205
  %304 = vmatprep.subr.bf16.mxu0 %v210
  %305 = vmatpush1.bf16.msra.mxu0 %v209
  %306 = vmatprep.subr.bf16.mxu0 %v214
  %307 = vmatpush1.bf16.msra.mxu0 %v213
  %308 = vmatprep.subr.bf16.mxu0 %v218
  %309 = vmatpush1.bf16.msra.mxu0 %v217
  %310 = vmatprep.subr.bf16.mxu0 0
  %311 = vmatpush1.bf16.msra.mxu0 0
  %312 = vmatprep.subr.bf16.mxu0 0
  %313 = vmatpush1.bf16.msra.mxu0 0
  %314 = vmatprep.subr.bf16.mxu0 0
  %315 = vmatpush1.bf16.msra.mxu0 0
  %316 = vmatprep.subr.bf16.mxu0 0
  %317 = vmatpush1.bf16.msra.mxu0 0
  %318 = vmatprep.subr.bf16.mxu0 0
  %319 = vmatpush1.bf16.msra.mxu0 0
  %320 = vmatprep.subr.bf16.mxu0 0
  %321 = vmatpush1.bf16.msra.mxu0 0
  %322 = vmatprep.subr.bf16.mxu0 0
  %323 = vmatpush1.bf16.msra.mxu0 0
  %324 = vmatprep.subr.bf16.mxu0 0
  %325 = vmatpush1.bf16.msra.mxu0 0
  %326 = vmatprep.mubr.bf16.mxu0 0
  %327 = vmatmul.mubr.bf16.gmra.mrb[0].mxu0 %v89
  %v328 = vpop.f32.mrb[0].mxu0
  %v329 = vadd.f32 %v76, %v328
  %v330 = vpop.f32.mrb[0].mxu0
  %v331 = vadd.f32 %v80, %v330
  %v332 = vpop.f32.mrb[0].mxu0
  %v333 = vadd.f32 %v76, %v332
  %v334 = vpop.f32.mrb[0].mxu0
  %v335 = vadd.f32 %v80, %v334
  %336 = vdwg.mxu0
  %v337 = vmax.f32 %v286, 0.0
  %v338 = vmax.f32 %v288, 0.0
  %v339 = vmax.f32 %v329, 0.0
  %v340 = vmax.f32 %v331, 0.0
  %v341 = vmax.f32 %v290, 0.0
  %v342 = vmax.f32 %v292, 0.0
  %v343 = vmax.f32 %v333, 0.0
  %v344 = vmax.f32 %v335, 0.0
  %v345 = vpack.c.bf16 %v341, %v337
  %v346 = vpack.c.bf16 %v342, %v338
  %v347 = vpack.c.bf16 %v343, %v339
  %v348 = vpack.c.bf16 %v344, %v340
  %v349 = vld [vmem:[%s3] sm:$0xf]
  %v350 = vld [vmem:[%s3 + $0x4] sm:$0xf]
  %v351 = vld [vmem:[%s3 + $0x8] sm:$0xf]
  %v352 = vld [vmem:[%s3 + $0xc] sm:$0xf]
  %v353 = vld [vmem:[%s3 + $0x10] sm:$0xf]
  %v354 = vld [vmem:[%s3 + $0x14] sm:$0xf]
  %v355 = vld [vmem:[%s3 + $0x18] sm:$0xf]
  %v356 = vld [vmem:[%s3 + $0x1c] sm:$0xf]
  %v357 = vld [vmem:[%s3 + $0x20] sm:$0xf]
  %v358 = vld [vmem:[%s3 + $0x24] sm:$0xf]
  %v359 = vld [vmem:[%s3 + $0x28] sm:$0xf]
  %v360 = vld [vmem:[%s3 + $0x2c] sm:$0xf]
  %v361 = vld [vmem:[%s3 + $0x30] sm:$0xf]
  %v362 = vld [vmem:[%s3 + $0x34] sm:$0xf]
  %v363 = vld [vmem:[%s3 + $0x38] sm:$0xf]
  %v364 = vld [vmem:[%s3 + $0x3c] sm:$0xf]
  %v365 = vld [vmem:[%s3 + $0x40] sm:$0xf]
  %v366 = vld [vmem:[%s3 + $0x44] sm:$0xf]
  %v367 = vld [vmem:[%s3 + $0x48] sm:$0xf]
  %v368 = vld [vmem:[%s3 + $0x4c] sm:$0xf]
  %v369 = vld [vmem:[%s3 + $0x50] sm:$0xf]
  %v370 = vld [vmem:[%s3 + $0x54] sm:$0xf]
  %v371 = vld [vmem:[%s3 + $0x58] sm:$0xf]
  %v372 = vld [vmem:[%s3 + $0x5c] sm:$0xf]
  %v373 = vld [vmem:[%s3 + $0x60] sm:$0xf]
  %v374 = vld [vmem:[%s3 + $0x64] sm:$0xf]
  %v375 = vld [vmem:[%s3 + $0x68] sm:$0xf]
  %v376 = vld [vmem:[%s3 + $0x6c] sm:$0xf]
  %v377 = vld [vmem:[%s3 + $0x70] sm:$0xf]
  %v378 = vld [vmem:[%s3 + $0x74] sm:$0xf]
  %v379 = vld [vmem:[%s3 + $0x78] sm:$0xf]
  %v380 = vld [vmem:[%s3 + $0x7c] sm:$0xf]
  %v381 = vld [vmem:[%s3 + $0x80] sm:$0xf]
  %v382 = vld [vmem:[%s3 + $0x84] sm:$0xf]
  %v383 = vld [vmem:[%s3 + $0x88] sm:$0xf]
  %v384 = vld [vmem:[%s3 + $0x8c] sm:$0xf]
  %v385 = vld [vmem:[%s3 + $0x90] sm:$0xf]
  %v386 = vld [vmem:[%s3 + $0x94] sm:$0xf]
  %v387 = vld [vmem:[%s3 + $0x98] sm:$0xf]
  %v388 = vld [vmem:[%s3 + $0x9c] sm:$0xf]
  %v389 = vld [vmem:[%s3 + $0xa0] sm:$0xf]
  %v390 = vld [vmem:[%s3 + $0xa4] sm:$0xf]
  %v391 = vld [vmem:[%s3 + $0xa8] sm:$0xf]
  %v392 = vld [vmem:[%s3 + $0xac] sm:$0xf]
  %v393 = vld [vmem:[%s3 + $0xb0] sm:$0xf]
  %v394 = vld [vmem:[%s3 + $0xb4] sm:$0xf]
  %v395 = vld [vmem:[%s3 + $0xb8] sm:$0xf]
  %v396 = vld [vmem:[%s3 + $0xbc] sm:$0xf]
  %v397 = vld [vmem:[%s3 + $0xc0] sm:$0xf]
  %v398 = vld [vmem:[%s3 + $0xc4] sm:$0xf]
  %v399 = vld [vmem:[%s3 + $0xc8] sm:$0xf]
  %v400 = vld [vmem:[%s3 + $0xcc] sm:$0xf]
  %v401 = vld [vmem:[%s3 + $0xd0] sm:$0xf]
  %v402 = vld [vmem:[%s3 + $0xd4] sm:$0xf]
  %v403 = vld [vmem:[%s3 + $0xd8] sm:$0xf]
  %v404 = vld [vmem:[%s3 + $0xdc] sm:$0xf]
  %v405 = vld [vmem:[%s3 + $0xe0] sm:$0xf]
  %v406 = vld [vmem:[%s3 + $0xe4] sm:$0xf]
  %v407 = vld [vmem:[%s3 + $0xe8] sm:$0xf]
  %v408 = vld [vmem:[%s3 + $0xec] sm:$0xf]
  %v409 = vld [vmem:[%s3 + $0xf0] sm:$0xf]
  %v410 = vld [vmem:[%s3 + $0xf4] sm:$0xf]
  %v411 = vld [vmem:[%s3 + $0xf8] sm:$0xf]
  %v412 = vld [vmem:[%s3 + $0xfc] sm:$0xf]
  %v413 = vld [vmem:[%s4] sm:$0x1]
  %v415 = vlaneseq
  %v416 = vshrl.u32 %v415, 7
  %v417 = vsub.s32 0, %v416
  %v418 = vrot.slane %v413, %v417
  %v484 = vunpack.c.l.b16 %v349
  %v485 = vunpack.c.l.b16 %v350
  %v486 = vunpack.c.l.b16 %v351
  %v487 = vunpack.c.l.b16 %v352
  %v488 = vunpack.c.l.b16 %v353
  %v489 = vunpack.c.l.b16 %v354
  %v490 = vunpack.c.l.b16 %v355
  %v491 = vunpack.c.l.b16 %v356
  %v492 = vunpack.c.l.b16 %v357
  %v493 = vunpack.c.l.b16 %v358
  %v494 = vunpack.c.l.b16 %v359
  %v495 = vunpack.c.l.b16 %v360
  %v496 = vunpack.c.l.b16 %v361
  %v497 = vunpack.c.l.b16 %v362
  %v498 = vunpack.c.l.b16 %v363
  %v499 = vunpack.c.l.b16 %v364
  %v500 = vunpack.c.l.b16 %v365
  %v501 = vunpack.c.l.b16 %v366
  %v502 = vunpack.c.l.b16 %v367
  %v503 = vunpack.c.l.b16 %v368
  %v504 = vunpack.c.l.b16 %v369
  %v505 = vunpack.c.l.b16 %v370
  %v506 = vunpack.c.l.b16 %v371
  %v507 = vunpack.c.l.b16 %v372
  %v508 = vunpack.c.l.b16 %v373
  %v509 = vunpack.c.l.b16 %v374
  %v510 = vunpack.c.l.b16 %v375
  %v511 = vunpack.c.l.b16 %v376
  %v512 = vunpack.c.l.b16 %v377
  %v513 = vunpack.c.l.b16 %v378
  %v514 = vunpack.c.l.b16 %v379
  %v515 = vunpack.c.l.b16 %v380
  %v516 = vunpack.c.l.b16 %v381
  %v517 = vunpack.c.l.b16 %v382
  %v518 = vunpack.c.l.b16 %v383
  %v519 = vunpack.c.l.b16 %v384
  %v520 = vunpack.c.l.b16 %v385
  %v521 = vunpack.c.l.b16 %v386
  %v522 = vunpack.c.l.b16 %v387
  %v523 = vunpack.c.l.b16 %v388
  %v524 = vunpack.c.l.b16 %v389
  %v525 = vunpack.c.l.b16 %v390
  %v526 = vunpack.c.l.b16 %v391
  %v527 = vunpack.c.l.b16 %v392
  %v528 = vunpack.c.l.b16 %v393
  %v529 = vunpack.c.l.b16 %v394
  %v530 = vunpack.c.l.b16 %v395
  %v531 = vunpack.c.l.b16 %v396
  %v532 = vunpack.c.l.b16 %v397
  %v533 = vunpack.c.l.b16 %v398
  %v534 = vunpack.c.l.b16 %v399
  %v535 = vunpack.c.l.b16 %v400
  %v536 = vunpack.c.l.b16 %v401
  %v537 = vunpack.c.l.b16 %v402
  %v538 = vunpack.c.l.b16 %v403
  %v539 = vunpack.c.l.b16 %v404
  %v540 = vunpack.c.l.b16 %v405
  %v541 = vunpack.c.l.b16 %v406
  %v542 = vunpack.c.l.b16 %v407
  %v543 = vunpack.c.l.b16 %v408
  %v544 = vunpack.c.l.b16 %v409
  %v545 = vunpack.c.l.b16 %v410
  %v546 = vunpack.c.l.b16 %v411
  %v547 = vunpack.c.l.b16 %v412
  %v548 = vpack.c.b16 %v485, %v484
  %v549 = vpack.c.b16 %v487, %v486
  %v550 = vpack.c.b16 %v489, %v488
  %v551 = vpack.c.b16 %v491, %v490
  %v552 = vpack.c.b16 %v493, %v492
  %v553 = vpack.c.b16 %v495, %v494
  %v554 = vpack.c.b16 %v497, %v496
  %v555 = vpack.c.b16 %v499, %v498
  %v556 = vpack.c.b16 %v501, %v500
  %v557 = vpack.c.b16 %v503, %v502
  %v558 = vpack.c.b16 %v505, %v504
  %v559 = vpack.c.b16 %v507, %v506
  %v560 = vpack.c.b16 %v509, %v508
  %v561 = vpack.c.b16 %v511, %v510
  %v562 = vpack.c.b16 %v513, %v512
  %v563 = vpack.c.b16 %v515, %v514
  %v564 = vpack.c.b16 %v517, %v516
  %v565 = vpack.c.b16 %v519, %v518
  %v566 = vpack.c.b16 %v521, %v520
  %v567 = vpack.c.b16 %v523, %v522
  %v568 = vpack.c.b16 %v525, %v524
  %v569 = vpack.c.b16 %v527, %v526
  %v570 = vpack.c.b16 %v529, %v528
  %v571 = vpack.c.b16 %v531, %v530
  %v572 = vpack.c.b16 %v533, %v532
  %v573 = vpack.c.b16 %v535, %v534
  %v574 = vpack.c.b16 %v537, %v536
  %v575 = vpack.c.b16 %v539, %v538
  %v576 = vpack.c.b16 %v541, %v540
  %v577 = vpack.c.b16 %v543, %v542
  %v578 = vpack.c.b16 %v545, %v544
  %v579 = vpack.c.b16 %v547, %v546
  %612 = vmatprep.subr.bf16.mxu0 0
  %613 = vmatpush1.bf16.msra.mxu0 %v548
  %614 = vmatprep.subr.bf16.mxu0 0
  %615 = vmatpush1.bf16.msra.mxu0 %v549
  %616 = vmatprep.subr.bf16.mxu0 0
  %617 = vmatpush1.bf16.msra.mxu0 %v550
  %618 = vmatprep.subr.bf16.mxu0 0
  %619 = vmatpush1.bf16.msra.mxu0 %v551
  %620 = vmatprep.subr.bf16.mxu0 0
  %621 = vmatpush1.bf16.msra.mxu0 %v552
  %622 = vmatprep.subr.bf16.mxu0 0
  %623 = vmatpush1.bf16.msra.mxu0 %v553
  %624 = vmatprep.subr.bf16.mxu0 0
  %625 = vmatpush1.bf16.msra.mxu0 %v554
  %626 = vmatprep.subr.bf16.mxu0 0
  %627 = vmatpush1.bf16.msra.mxu0 %v555
  %628 = vmatprep.subr.bf16.mxu0 0
  %629 = vmatpush1.bf16.msra.mxu0 %v556
  %630 = vmatprep.subr.bf16.mxu0 0
  %631 = vmatpush1.bf16.msra.mxu0 %v557
  %632 = vmatprep.subr.bf16.mxu0 0
  %633 = vmatpush1.bf16.msra.mxu0 %v558
  %634 = vmatprep.subr.bf16.mxu0 0
  %635 = vmatpush1.bf16.msra.mxu0 %v559
  %636 = vmatprep.subr.bf16.mxu0 0
  %637 = vmatpush1.bf16.msra.mxu0 %v560
  %638 = vmatprep.subr.bf16.mxu0 0
  %639 = vmatpush1.bf16.msra.mxu0 %v561
  %640 = vmatprep.subr.bf16.mxu0 0
  %641 = vmatpush1.bf16.msra.mxu0 %v562
  %642 = vmatprep.subr.bf16.mxu0 0
  %643 = vmatpush1.bf16.msra.mxu0 %v563
  %644 = vmatprep.mubr.bf16.mxu0 %v346
  %645 = vmatmul.mubr.bf16.gmra.mrb[0].mxu0 %v345
  %v646 = vpop.f32.mrb[0].mxu0
  %v647 = vadd.f32 %v418, %v646
  %v648 = vpop.f32.mrb[0].mxu0
  %v649 = vpop.f32.mrb[0].mxu0
  %v650 = vadd.f32 %v418, %v649
  %v651 = vpop.f32.mrb[0].mxu0
  %652 = vdwg.mxu0
  %653 = vmatprep.subr.bf16.mxu0 0
  %654 = vmatpush1.bf16.msra.mxu0 %v564
  %655 = vmatprep.subr.bf16.mxu0 0
  %656 = vmatpush1.bf16.msra.mxu0 %v565
  %657 = vmatprep.subr.bf16.mxu0 0
  %658 = vmatpush1.bf16.msra.mxu0 %v566
  %659 = vmatprep.subr.bf16.mxu0 0
  %660 = vmatpush1.bf16.msra.mxu0 %v567
  %661 = vmatprep.subr.bf16.mxu0 0
  %662 = vmatpush1.bf16.msra.mxu0 %v568
  %663 = vmatprep.subr.bf16.mxu0 0
  %664 = vmatpush1.bf16.msra.mxu0 %v569
  %665 = vmatprep.subr.bf16.mxu0 0
  %666 = vmatpush1.bf16.msra.mxu0 %v570
  %667 = vmatprep.subr.bf16.mxu0 0
  %668 = vmatpush1.bf16.msra.mxu0 %v571
  %669 = vmatprep.subr.bf16.mxu0 0
  %670 = vmatpush1.bf16.msra.mxu0 %v572
  %671 = vmatprep.subr.bf16.mxu0 0
  %672 = vmatpush1.bf16.msra.mxu0 %v573
  %673 = vmatprep.subr.bf16.mxu0 0
  %674 = vmatpush1.bf16.msra.mxu0 %v574
  %675 = vmatprep.subr.bf16.mxu0 0
  %676 = vmatpush1.bf16.msra.mxu0 %v575
  %677 = vmatprep.subr.bf16.mxu0 0
  %678 = vmatpush1.bf16.msra.mxu0 %v576
  %679 = vmatprep.subr.bf16.mxu0 0
  %680 = vmatpush1.bf16.msra.mxu0 %v577
  %681 = vmatprep.subr.bf16.mxu0 0
  %682 = vmatpush1.bf16.msra.mxu0 %v578
  %683 = vmatprep.subr.bf16.mxu0 0
  %684 = vmatpush1.bf16.msra.mxu0 %v579
  %685 = vmatprep.mubr.bf16.mxu0 %v348
  %686 = vmatmul.mubr.bf16.gmra.mrb[0].mxu0 %v347
  %v687 = vpop.f32.mrb[0].mxu0
  %v688 = vadd.f32 %v647, %v687
  %v689 = vpop.f32.mrb[0].mxu0
  %v690 = vpop.f32.mrb[0].mxu0
  %v691 = vadd.f32 %v650, %v690
  %v692 = vpop.f32.mrb[0].mxu0
  %693 = vdwg.mxu0
  %v694 = vadd.f32 %v688, %v29
  %v695 = vadd.f32 %v691, %v30
  %v696 = vld [vmem:[%s5] sm:$0x1]
  %v697 = vld [vmem:[%s6] sm:$0x1]
  %698 = vadd.xlane.f32.xlu0 %v694
  %v699 = vpop.xlane.xlu0 %698
  %700 = vadd.xlane.f32.xlu0 %v695
  %v701 = vpop.xlane.xlu0 %700
  %v702 = vrcp.pop 128.0
  %v703 = vmul.f32 %v699, %v702
  %v704 = vmul.f32 %v701, %v702
  %v705 = vsub.f32 %v694, %v703
  %v706 = vsub.f32 %v695, %v704
  %v707 = vmul.f32 %v705, %v705
  %v708 = vmul.f32 %v706, %v706
  %709 = vadd.xlane.f32.xlu0 %v707
  %v710 = vpop.xlane.xlu0 %709
  %711 = vadd.xlane.f32.xlu0 %v708
  %v712 = vpop.xlane.xlu0 %711
  %v713 = vmul.f32 %v710, %v702
  %v714 = vmul.f32 %v712, %v702
  %v715 = vadd.f32 %v713, 1e-05
  %v716 = vadd.f32 %v714, 1e-05
  %v717 = vrsqrt.pop %v715
  %v718 = vrsqrt.pop %v716
  %v719 = vmul.f32 %v705, %v717
  %v720 = vmul.f32 %v706, %v718
  %v722 = vlaneseq
  %v723 = vshrl.u32 %v722, 7
  %v724 = vsub.s32 0, %v723
  %v725 = vrot.slane %v696, %v724
  %v727 = vmul.f32 %v719, %v725
  %v728 = vmul.f32 %v720, %v725
  %v730 = vlaneseq
  %v731 = vshrl.u32 %v730, 7
  %v732 = vsub.s32 0, %v731
  %v733 = vrot.slane %v697, %v732
  %v735 = vadd.f32 %v727, %v733
  %v736 = vadd.f32 %v728, %v733
  %v737 = vpack.c.bf16 %v736, %v735
  %v739 = vunpack.c.l.b16 %v737
  %v740 = vunpack.c.h.b16 %v737
  %v741 = vpack.c.b16 %v739, %v739
  %v742 = vpack.c.b16 %v740, %v740
  %745 = vst [vmem:[%s7] sm:$0xf] %v741
  %746 = vst [vmem:[%s7 + $0x4] sm:$0xf] %v742
  // Predicated region
  $region30: #{tts_forward.15} parent=0 // pred_check
    _
  $region31: #{tts_forward.15} parent=0 // pred_check_branch
    %748 = sbr.rel (0) target = $region33
  $region32: #{tts_forward.15} parent=0 // pred_region
    _
  $region33: #{tts_forward.15} parent=0 // pred_fallthru
    _
  // Predicated region
  $region34: #{tts_forward.15} parent=0 // pred_check
    _
  $region35: #{tts_forward.15} parent=0 // pred_check_branch
    %750 = sbr.rel (0) target = $region37
  $region36: #{tts_forward.15} parent=0 // pred_region
    _
  $region37: #{tts_forward.15} parent=0 // pred_fallthru
    _

// kernel: tts_forward.23
$region0: #{tts_forward.23}
  #allocation0 [shape = 'u32[]', space=smem, size = 0x4, offset = 0x4, fixed_abs, tag = 'smem constant byte address 0x4 - core index']
  #allocation1 [shape = 'u32[144,128]{1,0:T(1,128)}', space=vmem, size = 0x12000, scoped, tag = 'internal scratch']
  %s0 = inlined_call_operand.vmem [shape: bf16[32,128], index: 0, kind: input, shape index: {}]
  %s1 = inlined_call_operand.vmem [shape: f32[1,128], index: 1, kind: input, shape index: {}]
  %s2 = inlined_call_operand.vmem [shape: f32[1,128], index: 2, kind: input, shape index: {}]
  %s3 = inlined_call_operand.vmem [shape: bf16[128,128], index: 3, kind: input, shape index: {}]
  %s4 = inlined_call_operand.vmem [shape: f32[1,128], index: 4, kind: input, shape index: {}]
  %s5 = inlined_call_operand.hbm [shape: f32[32,128], index: 5, kind: output, shape index: {}]
  %s6 = sld [smem:[#allocation0]]
  $region30: #{tts_forward.23} parent=0
    _
  %s8 = ssub.s32 1, %s6
  %s9 = scalar_select 0, %s8, %s6
  $region1: #{tts_forward.23} parent=0
    #allocation2 [shape = 'u8[16384]{0}', space=vmem, size = 0x4000, scoped, tag = 'output window, operand 0, single buffered']
    #allocation3 [shape = 's32[1]{0}', space=sflag, size = 0x4, scoped, tag = 'scoped memory for tts_forward.23']
    %10 = vsyncpa [#allocation3], 0
    // Predicated region
    $region2: #{tts_forward.23} parent=1 // pred_check
      _
    $region3: #{tts_forward.23} parent=1 // pred_check_branch
      %12 = sbr.rel (0) target = $region5
    $region4: #{tts_forward.23} parent=1 // pred_region
      _
    $region5: #{tts_forward.23} parent=1 // pred_fallthru
      _
    // Predicated region
    $region6: #{tts_forward.23} parent=1 // pred_check
      _
    $region7: #{tts_forward.23} parent=1 // pred_check_branch
      %14 = sbr.rel (0) target = $region9
    $region8: #{tts_forward.23} parent=1 // pred_region
      _
    $region9: #{tts_forward.23} parent=1 // pred_fallthru
      _
    // Predicated region
    $region10: #{tts_forward.23} parent=1 // pred_check
      _
    $region11: #{tts_forward.23} parent=1 // pred_check_branch
      %16 = sbr.rel (0) target = $region13
    $region12: #{tts_forward.23} parent=1 // pred_region
      _
    $region13: #{tts_forward.23} parent=1 // pred_fallthru
      _
    // Predicated region
    $region14: #{tts_forward.23} parent=1 // pred_check
      _
    $region15: #{tts_forward.23} parent=1 // pred_check_branch
      %18 = sbr.rel (0) target = $region17
    $region16: #{tts_forward.23} parent=1 // pred_region
      _
    $region17: #{tts_forward.23} parent=1 // pred_fallthru
      _
    // Predicated region
    $region18: #{tts_forward.23} parent=1 // pred_check
      _
    $region19: #{tts_forward.23} parent=1 // pred_check_branch
      %20 = sbr.rel (0) target = $region21
    $region20: #{tts_forward.23} parent=1 // pred_region
      _
    $region21: #{tts_forward.23} parent=1 // pred_fallthru
      _
    %v22 = vld [vmem:[%s0] sm:$0xf]
    %v23 = vld [vmem:[%s0 + $0x4] sm:$0xf]
    %v24 = vld [vmem:[%s0 + $0x8] sm:$0xf]
    %v25 = vld [vmem:[%s0 + $0xc] sm:$0xf]
    %v26 = vunpack.c.l.bf16 %v22
    %v27 = vunpack.c.l.bf16 %v23
    %v28 = vunpack.c.l.bf16 %v24
    %v29 = vunpack.c.l.bf16 %v25
    %v30 = vld [vmem:[%s1] sm:$0x1]
    %v31 = vld [vmem:[%s2] sm:$0x1]
    %32 = vadd.xlane.f32.xlu0 %v26
    %v33 = vpop.xlane.xlu0 %32
    %34 = vadd.xlane.f32.xlu0 %v27
    %v35 = vpop.xlane.xlu0 %34
    %36 = vadd.xlane.f32.xlu0 %v28
    %v37 = vpop.xlane.xlu0 %36
    %38 = vadd.xlane.f32.xlu0 %v29
    %v39 = vpop.xlane.xlu0 %38
    %v40 = vrcp.pop 128.0
    %v41 = vmul.f32 %v33, %v40
    %v42 = vmul.f32 %v35, %v40
    %v43 = vmul.f32 %v37, %v40
    %v44 = vmul.f32 %v39, %v40
    %v45 = vsub.f32 %v26, %v41
    %v46 = vsub.f32 %v27, %v42
    %v47 = vsub.f32 %v28, %v43
    %v48 = vsub.f32 %v29, %v44
    %v49 = vmul.f32 %v45, %v45
    %v50 = vmul.f32 %v46, %v46
    %v51 = vmul.f32 %v47, %v47
    %v52 = vmul.f32 %v48, %v48
    %53 = vadd.xlane.f32.xlu0 %v49
    %v54 = vpop.xlane.xlu0 %53
    %55 = vadd.xlane.f32.xlu0 %v50
    %v56 = vpop.xlane.xlu0 %55
    %57 = vadd.xlane.f32.xlu0 %v51
    %v58 = vpop.xlane.xlu0 %57
    %59 = vadd.xlane.f32.xlu0 %v52
    %v60 = vpop.xlane.xlu0 %59
    %v61 = vmul.f32 %v54, %v40
    %v62 = vmul.f32 %v56, %v40
    %v63 = vmul.f32 %v58, %v40
    %v64 = vmul.f32 %v60, %v40
    %v65 = vadd.f32 %v61, 1e-05
    %v66 = vadd.f32 %v62, 1e-05
    %v67 = vadd.f32 %v63, 1e-05
    %v68 = vadd.f32 %v64, 1e-05
    %v69 = vrsqrt.pop %v65
    %v70 = vrsqrt.pop %v66
    %v71 = vrsqrt.pop %v67
    %v72 = vrsqrt.pop %v68
    %v73 = vmul.f32 %v45, %v69
    %v74 = vmul.f32 %v46, %v70
    %v75 = vmul.f32 %v47, %v71
    %v76 = vmul.f32 %v48, %v72
    %v78 = vlaneseq
    %v79 = vshrl.u32 %v78, 7
    %v80 = vsub.s32 0, %v79
    %v81 = vrot.slane %v30, %v80
    %v83 = vmul.f32 %v73, %v81
    %v84 = vmul.f32 %v74, %v81
    %v85 = vmul.f32 %v75, %v81
    %v86 = vmul.f32 %v76, %v81
    %v88 = vlaneseq
    %v89 = vshrl.u32 %v88, 7
    %v90 = vsub.s32 0, %v89
    %v91 = vrot.slane %v31, %v90
    %v93 = vadd.f32 %v83, %v91
    %v94 = vadd.f32 %v84, %v91
    %v95 = vadd.f32 %v85, %v91
    %v96 = vadd.f32 %v86, %v91
    %v97 = vpack.c.bf16 %v94, %v93
    %v98 = vpack.c.bf16 %v96, %v95
    %v99 = vld [vmem:[%s3] sm:$0xf]
    %v100 = vld [vmem:[%s3 + $0x4] sm:$0xf]
    %v101 = vld [vmem:[%s3 + $0x8] sm:$0xf]
    %v102 = vld [vmem:[%s3 + $0xc] sm:$0xf]
    %v103 = vld [vmem:[%s3 + $0x10] sm:$0xf]
    %v104 = vld [vmem:[%s3 + $0x14] sm:$0xf]
    %v105 = vld [vmem:[%s3 + $0x18] sm:$0xf]
    %v106 = vld [vmem:[%s3 + $0x1c] sm:$0xf]
    %v107 = vld [vmem:[%s3 + $0x20] sm:$0xf]
    %v108 = vld [vmem:[%s3 + $0x24] sm:$0xf]
    %v109 = vld [vmem:[%s3 + $0x28] sm:$0xf]
    %v110 = vld [vmem:[%s3 + $0x2c] sm:$0xf]
    %v111 = vld [vmem:[%s3 + $0x30] sm:$0xf]
    %v112 = vld [vmem:[%s3 + $0x34] sm:$0xf]
    %v113 = vld [vmem:[%s3 + $0x38] sm:$0xf]
    %v114 = vld [vmem:[%s3 + $0x3c] sm:$0xf]
    %v115 = vld [vmem:[%s4] sm:$0x1]
    %v117 = vlaneseq
    %v118 = vshrl.u32 %v117, 7
    %v119 = vsub.s32 0, %v118
    %v120 = vrot.slane %v115, %v119
    %v138 = vunpack.c.l.b16 %v99
    %v139 = vunpack.c.l.b16 %v100
    %v140 = vunpack.c.l.b16 %v101
    %v141 = vunpack.c.l.b16 %v102
    %v142 = vunpack.c.l.b16 %v103
    %v143 = vunpack.c.l.b16 %v104
    %v144 = vunpack.c.l.b16 %v105
    %v145 = vunpack.c.l.b16 %v106
    %v146 = vunpack.c.l.b16 %v107
    %v147 = vunpack.c.l.b16 %v108
    %v148 = vunpack.c.l.b16 %v109
    %v149 = vunpack.c.l.b16 %v110
    %v150 = vunpack.c.l.b16 %v111
    %v151 = vunpack.c.l.b16 %v112
    %v152 = vunpack.c.l.b16 %v113
    %v153 = vunpack.c.l.b16 %v114
    %v154 = vpack.c.b16 %v139, %v138
    %v155 = vpack.c.b16 %v141, %v140
    %v156 = vpack.c.b16 %v143, %v142
    %v157 = vpack.c.b16 %v145, %v144
    %v158 = vpack.c.b16 %v147, %v146
    %v159 = vpack.c.b16 %v149, %v148
    %v160 = vpack.c.b16 %v151, %v150
    %v161 = vpack.c.b16 %v153, %v152
    %170 = vmatprep.subr.bf16.mxu0 0
    %171 = vmatpush1.bf16.msra.mxu0 %v154
    %172 = vmatprep.subr.bf16.mxu0 0
    %173 = vmatpush1.bf16.msra.mxu0 %v155
    %174 = vmatprep.subr.bf16.mxu0 0
    %175 = vmatpush1.bf16.msra.mxu0 %v156
    %176 = vmatprep.subr.bf16.mxu0 0
    %177 = vmatpush1.bf16.msra.mxu0 %v157
    %178 = vmatprep.subr.bf16.mxu0 0
    %179 = vmatpush1.bf16.msra.mxu0 %v158
    %180 = vmatprep.subr.bf16.mxu0 0
    %181 = vmatpush1.bf16.msra.mxu0 %v159
    %182 = vmatprep.subr.bf16.mxu0 0
    %183 = vmatpush1.bf16.msra.mxu0 %v160
    %184 = vmatprep.subr.bf16.mxu0 0
    %185 = vmatpush1.bf16.msra.mxu0 %v161
    %186 = vmatprep.subr.bf16.mxu0 0
    %187 = vmatpush1.bf16.msra.mxu0 0
    %188 = vmatprep.subr.bf16.mxu0 0
    %189 = vmatpush1.bf16.msra.mxu0 0
    %190 = vmatprep.subr.bf16.mxu0 0
    %191 = vmatpush1.bf16.msra.mxu0 0
    %192 = vmatprep.subr.bf16.mxu0 0
    %193 = vmatpush1.bf16.msra.mxu0 0
    %194 = vmatprep.subr.bf16.mxu0 0
    %195 = vmatpush1.bf16.msra.mxu0 0
    %196 = vmatprep.subr.bf16.mxu0 0
    %197 = vmatpush1.bf16.msra.mxu0 0
    %198 = vmatprep.subr.bf16.mxu0 0
    %199 = vmatpush1.bf16.msra.mxu0 0
    %200 = vmatprep.subr.bf16.mxu0 0
    %201 = vmatpush1.bf16.msra.mxu0 0
    %202 = vmatprep.mubr.bf16.mxu0 0
    %203 = vmatmul.mubr.bf16.gmra.mrb[0].mxu0 %v97
    %v204 = vpop.f32.mrb[0].mxu0
    %v205 = vadd.f32 %v120, %v204
    %v206 = vpop.f32.mrb[0].mxu0
    %v207 = vpop.f32.mrb[0].mxu0
    %v208 = vadd.f32 %v120, %v207
    %v209 = vpop.f32.mrb[0].mxu0
    %210 = vmatprep.mubr.bf16.mxu0 0
    %211 = vmatmul.mubr.bf16.gmra.mrb[0].mxu0 %v98
    %v212 = vpop.f32.mrb[0].mxu0
    %v213 = vadd.f32 %v120, %v212
    %v214 = vpop.f32.mrb[0].mxu0
    %v215 = vpop.f32.mrb[0].mxu0
    %v216 = vadd.f32 %v120, %v215
    %v217 = vpop.f32.mrb[0].mxu0
    %218 = vdwg.mxu0
    %219 = vst [vmem:[#allocation2] sm:$0xff] %v205
    %220 = vst [vmem:[#allocation2 + $0x8] sm:$0xff] %v208
    %221 = vst [vmem:[#allocation2 + $0x10] sm:$0xff] %v213
    %222 = vst [vmem:[#allocation2 + $0x18] sm:$0xff] %v216
    // Predicated region
    $region22: #{tts_forward.23} parent=1 // pred_check
      _
    $region23: #{tts_forward.23} parent=1 // pred_check_branch
      %224 = sbr.rel (0) target = $region25
    $region24: #{tts_forward.23} parent=1 // pred_region
      %s226 = ssub.s32 512, 512
      %227 = vsyncadd [#allocation3], %s226
      %s228 = sshll.u32 [#allocation2], 4
      %s229 = int_to_ptr.vmem [resolvable:$true] %s228
      %234 = dma.vmem_to_hbm [thread:$0]  %s229, 512, %s5, [#allocation3], 128, 128, 8
    $region25: #{tts_forward.23} parent=1 // pred_fallthru
      _
    // Predicated region
    $region26: #{tts_forward.23} parent=1 // pred_check
      _
    $region27: #{tts_forward.23} parent=1 // pred_check_branch
      %236 = sbr.rel (0) target = $region29
    $region28: #{tts_forward.23} parent=1 // pred_region
      %237 = dma.done [#allocation3], 512
    $region29: #{tts_forward.23} parent=1 // pred_fallthru
      _
    %238 = vsyncpa [#allocation3], 1

// kernel: tts_forward.19
$region0: #{tts_forward.19}
  #allocation0 [shape = 'u32[]', space=smem, size = 0x4, offset = 0x4, fixed_abs, tag = 'smem constant byte address 0x4 - core index']
  #allocation1 [shape = 'u32[144,128]{1,0:T(1,128)}', space=vmem, size = 0x12000, scoped, tag = 'internal scratch']
  %s0 = inlined_call_operand.vmem [shape: bf16[32,128], index: 0, kind: input, shape index: {}]
  %s1 = inlined_call_operand.vmem [shape: bf16[128,512], index: 1, kind: input, shape index: {}]
  %s2 = inlined_call_operand.vmem [shape: f32[1,512], index: 2, kind: input, shape index: {}]
  %s3 = inlined_call_operand.vmem [shape: bf16[512,128], index: 3, kind: input, shape index: {}]
  %s4 = inlined_call_operand.vmem [shape: f32[1,128], index: 4, kind: input, shape index: {}]
  %s5 = inlined_call_operand.vmem [shape: f32[1,128], index: 5, kind: input, shape index: {}]
  %s6 = inlined_call_operand.vmem [shape: f32[1,128], index: 6, kind: input, shape index: {}]
  %s7 = inlined_call_operand.vmem [shape: bf16[32,128], index: 7, kind: output, shape index: {}]
  %s8 = sld [smem:[#allocation0]]
  $region38: #{tts_forward.19} parent=0
    _
  %s10 = ssub.s32 1, %s8
  %s11 = scalar_select 0, %s10, %s8
  // Predicated region
  $region2: #{tts_forward.19} parent=0 // pred_check
    _
  $region3: #{tts_forward.19} parent=0 // pred_check_branch
    %13 = sbr.rel (0) target = $region5
  $region4: #{tts_forward.19} parent=0 // pred_region
    _
  $region5: #{tts_forward.19} parent=0 // pred_fallthru
    _
  // Predicated region
  $region6: #{tts_forward.19} parent=0 // pred_check
    _
  $region7: #{tts_forward.19} parent=0 // pred_check_branch
    %15 = sbr.rel (0) target = $region9
  $region8: #{tts_forward.19} parent=0 // pred_region
    _
  $region9: #{tts_forward.19} parent=0 // pred_fallthru
    _
  // Predicated region
  $region10: #{tts_forward.19} parent=0 // pred_check
    _
  $region11: #{tts_forward.19} parent=0 // pred_check_branch
    %17 = sbr.rel (0) target = $region13
  $region12: #{tts_forward.19} parent=0 // pred_region
    _
  $region13: #{tts_forward.19} parent=0 // pred_fallthru
    _
  // Predicated region
  $region14: #{tts_forward.19} parent=0 // pred_check
    _
  $region15: #{tts_forward.19} parent=0 // pred_check_branch
    %19 = sbr.rel (0) target = $region17
  $region16: #{tts_forward.19} parent=0 // pred_region
    _
  $region17: #{tts_forward.19} parent=0 // pred_fallthru
    _
  // Predicated region
  $region18: #{tts_forward.19} parent=0 // pred_check
    _
  $region19: #{tts_forward.19} parent=0 // pred_check_branch
    %21 = sbr.rel (0) target = $region21
  $region20: #{tts_forward.19} parent=0 // pred_region
    _
  $region21: #{tts_forward.19} parent=0 // pred_fallthru
    _
  // Predicated region
  $region22: #{tts_forward.19} parent=0 // pred_check
    _
  $region23: #{tts_forward.19} parent=0 // pred_check_branch
    %23 = sbr.rel (0) target = $region25
  $region24: #{tts_forward.19} parent=0 // pred_region
    _
  $region25: #{tts_forward.19} parent=0 // pred_fallthru
    _
  // Predicated region
  $region26: #{tts_forward.19} parent=0 // pred_check
    _
  $region27: #{tts_forward.19} parent=0 // pred_check_branch
    %25 = sbr.rel (0) target = $region29
  $region28: #{tts_forward.19} parent=0 // pred_region
    _
  $region29: #{tts_forward.19} parent=0 // pred_fallthru
    _
  %v27 = vld [vmem:[%s0] sm:$0xf]
  %v28 = vld [vmem:[%s0 + $0x4] sm:$0xf]
  %v29 = vld [vmem:[%s0 + $0x8] sm:$0xf]
  %v30 = vld [vmem:[%s0 + $0xc] sm:$0xf]
  %v31 = vunpack.c.l.bf16 %v27
  %v32 = vunpack.c.l.bf16 %v28
  %v33 = vunpack.c.l.bf16 %v29
  %v34 = vunpack.c.l.bf16 %v30
  %v35 = vld [vmem:[%s1] sm:$0xff]
  %v36 = vld [vmem:[%s1 + $0x8] sm:$0xff]
  %v37 = vld [vmem:[%s1 + $0x10] sm:$0xff]
  %v38 = vld [vmem:[%s1 + $0x18] sm:$0xff]
  %v39 = vld [vmem:[%s1 + $0x20] sm:$0xff]
  %v40 = vld [vmem:[%s1 + $0x28] sm:$0xff]
  %v41 = vld [vmem:[%s1 + $0x30] sm:$0xff]
  %v42 = vld [vmem:[%s1 + $0x38] sm:$0xff]
  %v43 = vld [vmem:[%s1 + $0x40] sm:$0xff]
  %v44 = vld [vmem:[%s1 + $0x48] sm:$0xff]
  %v45 = vld [vmem:[%s1 + $0x50] sm:$0xff]
  %v46 = vld [vmem:[%s1 + $0x58] sm:$0xff]
  %v47 = vld [vmem:[%s1 + $0x60] sm:$0xff]
  %v48 = vld [vmem:[%s1 + $0x68] sm:$0xff]
  %v49 = vld [vmem:[%s1 + $0x70] sm:$0xff]
  %v50 = vld [vmem:[%s1 + $0x78] sm:$0xff]
  %v51 = vld [vmem:[%s1 + $0x80] sm:$0xff]
  %v52 = vld [vmem:[%s1 + $0x88] sm:$0xff]
  %v53 = vld [vmem:[%s1 + $0x90] sm:$0xff]
  %v54 = vld [vmem:[%s1 + $0x98] sm:$0xff]
  %v55 = vld [vmem:[%s1 + $0xa0] sm:$0xff]
  %v56 = vld [vmem:[%s1 + $0xa8] sm:$0xff]
  %v57 = vld [vmem:[%s1 + $0xb0] sm:$0xff]
  %v58 = vld [vmem:[%s1 + $0xb8] sm:$0xff]
  %v59 = vld [vmem:[%s1 + $0xc0] sm:$0xff]
  %v60 = vld [vmem:[%s1 + $0xc8] sm:$0xff]
  %v61 = vld [vmem:[%s1 + $0xd0] sm:$0xff]
  %v62 = vld [vmem:[%s1 + $0xd8] sm:$0xff]
  %v63 = vld [vmem:[%s1 + $0xe0] sm:$0xff]
  %v64 = vld [vmem:[%s1 + $0xe8] sm:$0xff]
  %v65 = vld [vmem:[%s1 + $0xf0] sm:$0xff]
  %v66 = vld [vmem:[%s1 + $0xf8] sm:$0xff]
  %v67 = vld [vmem:[%s2] sm:$0xf]
  %v69 = vlaneseq
  %v70 = vshrl.u32 %v69, 7
  %v71 = vsub.s32 0, %v70
  %v72 = vrot.slane %v67, %v71
  %v73 = vlaneseq
  %v74 = vshrl.u32 %v73, 7
  %v75 = vsub.s32 1, %v74
  %v76 = vrot.slane %v67, %v75
  %v77 = vlaneseq
  %v78 = vshrl.u32 %v77, 7
  %v79 = vsub.s32 2, %v78
  %v80 = vrot.slane %v67, %v79
  %v81 = vlaneseq
  %v82 = vshrl.u32 %v81, 7
  %v83 = vsub.s32 3, %v82
  %v84 = vrot.slane %v67, %v83
  %v93 = vunpack.c.l.b16 %v27
  %v94 = vunpack.c.l.b16 %v28
  %v95 = vunpack.c.l.b16 %v29
  %v96 = vunpack.c.l.b16 %v30
  %v97 = vpack.c.b16 %v94, %v93
  %v98 = vpack.c.b16 %v96, %v95
  %v133 = vunpack.c.l.b16 %v35
  %v134 = vunpack.c.h.b16 %v35
  %v135 = vunpack.c.l.b16 %v36
  %v136 = vunpack.c.h.b16 %v36
  %v137 = vunpack.c.l.b16 %v37
  %v138 = vunpack.c.h.b16 %v37
  %v139 = vunpack.c.l.b16 %v38
  %v140 = vunpack.c.h.b16 %v38
  %v141 = vunpack.c.l.b16 %v39
  %v142 = vunpack.c.h.b16 %v39
  %v143 = vunpack.c.l.b16 %v40
  %v144 = vunpack.c.h.b16 %v40
  %v145 = vunpack.c.l.b16 %v41
  %v146 = vunpack.c.h.b16 %v41
  %v147 = vunpack.c.l.b16 %v42
  %v148 = vunpack.c.h.b16 %v42
  %v149 = vunpack.c.l.b16 %v43
  %v150 = vunpack.c.h.b16 %v43
  %v151 = vunpack.c.l.b16 %v44
  %v152 = vunpack.c.h.b16 %v44
  %v153 = vunpack.c.l.b16 %v45
  %v154 = vunpack.c.h.b16 %v45
  %v155 = vunpack.c.l.b16 %v46
  %v156 = vunpack.c.h.b16 %v46
  %v157 = vunpack.c.l.b16 %v47
  %v158 = vunpack.c.h.b16 %v47
  %v159 = vunpack.c.l.b16 %v48
  %v160 = vunpack.c.h.b16 %v48
  %v161 = vunpack.c.l.b16 %v49
  %v162 = vunpack.c.h.b16 %v49
  %v163 = vunpack.c.l.b16 %v50
  %v164 = vunpack.c.h.b16 %v50
  %v165 = vunpack.c.l.b16 %v51
  %v166 = vunpack.c.h.b16 %v51
  %v167 = vunpack.c.l.b16 %v52
  %v168 = vunpack.c.h.b16 %v52
  %v169 = vunpack.c.l.b16 %v53
  %v170 = vunpack.c.h.b16 %v53
  %v171 = vunpack.c.l.b16 %v54
  %v172 = vunpack.c.h.b16 %v54
  %v173 = vunpack.c.l.b16 %v55
  %v174 = vunpack.c.h.b16 %v55
  %v175 = vunpack.c.l.b16 %v56
  %v176 = vunpack.c.h.b16 %v56
  %v177 = vunpack.c.l.b16 %v57
  %v178 = vunpack.c.h.b16 %v57
  %v179 = vunpack.c.l.b16 %v58
  %v180 = vunpack.c.h.b16 %v58
  %v181 = vunpack.c.l.b16 %v59
  %v182 = vunpack.c.h.b16 %v59
  %v183 = vunpack.c.l.b16 %v60
  %v184 = vunpack.c.h.b16 %v60
  %v185 = vunpack.c.l.b16 %v61
  %v186 = vunpack.c.h.b16 %v61
  %v187 = vunpack.c.l.b16 %v62
  %v188 = vunpack.c.h.b16 %v62
  %v189 = vunpack.c.l.b16 %v63
  %v190 = vunpack.c.h.b16 %v63
  %v191 = vunpack.c.l.b16 %v64
  %v192 = vunpack.c.h.b16 %v64
  %v193 = vunpack.c.l.b16 %v65
  %v194 = vunpack.c.h.b16 %v65
  %v195 = vunpack.c.l.b16 %v66
  %v196 = vunpack.c.h.b16 %v66
  %v197 = vpack.c.b16 %v137, %v133
  %v198 = vpack.c.b16 %v138, %v134
  %v199 = vpack.c.b16 %v139, %v135
  %v200 = vpack.c.b16 %v140, %v136
  %v201 = vpack.c.b16 %v145, %v141
  %v202 = vpack.c.b16 %v146, %v142
  %v203 = vpack.c.b16 %v147, %v143
  %v204 = vpack.c.b16 %v148, %v144
  %v205 = vpack.c.b16 %v153, %v149
  %v206 = vpack.c.b16 %v154, %v150
  %v207 = vpack.c.b16 %v155, %v151
  %v208 = vpack.c.b16 %v156, %v152
  %v209 = vpack.c.b16 %v161, %v157
  %v210 = vpack.c.b16 %v162, %v158
  %v211 = vpack.c.b16 %v163, %v159
  %v212 = vpack.c.b16 %v164, %v160
  %v213 = vpack.c.b16 %v169, %v165
  %v214 = vpack.c.b16 %v170, %v166
  %v215 = vpack.c.b16 %v171, %v167
  %v216 = vpack.c.b16 %v172, %v168
  %v217 = vpack.c.b16 %v177, %v173
  %v218 = vpack.c.b16 %v178, %v174
  %v219 = vpack.c.b16 %v179, %v175
  %v220 = vpack.c.b16 %v180, %v176
  %v221 = vpack.c.b16 %v185, %v181
  %v222 = vpack.c.b16 %v186, %v182
  %v223 = vpack.c.b16 %v187, %v183
  %v224 = vpack.c.b16 %v188, %v184
  %v225 = vpack.c.b16 %v193, %v189
  %v226 = vpack.c.b16 %v194, %v190
  %v227 = vpack.c.b16 %v195, %v191
  %v228 = vpack.c.b16 %v196, %v192
  %261 = vmatprep.subr.bf16.mxu0 %v198
  %262 = vmatpush1.bf16.msra.mxu0 %v197
  %263 = vmatprep.subr.bf16.mxu0 %v202
  %264 = vmatpush1.bf16.msra.mxu0 %v201
  %265 = vmatprep.subr.bf16.mxu0 %v206
  %266 = vmatpush1.bf16.msra.mxu0 %v205
  %267 = vmatprep.subr.bf16.mxu0 %v210
  %268 = vmatpush1.bf16.msra.mxu0 %v209
  %269 = vmatprep.subr.bf16.mxu0 %v214
  %270 = vmatpush1.bf16.msra.mxu0 %v213
  %271 = vmatprep.subr.bf16.mxu0 %v218
  %272 = vmatpush1.bf16.msra.mxu0 %v217
  %273 = vmatprep.subr.bf16.mxu0 %v222
  %274 = vmatpush1.bf16.msra.mxu0 %v221
  %275 = vmatprep.subr.bf16.mxu0 %v226
  %276 = vmatpush1.bf16.msra.mxu0 %v225
  %277 = vmatprep.subr.bf16.mxu0 0
  %278 = vmatpush1.bf16.msra.mxu0 0
  %279 = vmatprep.subr.bf16.mxu0 0
  %280 = vmatpush1.bf16.msra.mxu0 0
  %281 = vmatprep.subr.bf16.mxu0 0
  %282 = vmatpush1.bf16.msra.mxu0 0
  %283 = vmatprep.subr.bf16.mxu0 0
  %284 = vmatpush1.bf16.msra.mxu0 0
  %285 = vmatprep.subr.bf16.mxu0 0
  %286 = vmatpush1.bf16.msra.mxu0 0
  %287 = vmatprep.subr.bf16.mxu0 0
  %288 = vmatpush1.bf16.msra.mxu0 0
  %289 = vmatprep.subr.bf16.mxu0 0
  %290 = vmatpush1.bf16.msra.mxu0 0
  %291 = vmatprep.subr.bf16.mxu0 0
  %292 = vmatpush1.bf16.msra.mxu0 0
  %293 = vmatprep.mubr.bf16.mxu0 0
  %294 = vmatmul.mubr.bf16.gmra.mrb[0].mxu0 %v97
  %v295 = vpop.f32.mrb[0].mxu0
  %v296 = vadd.f32 %v72, %v295
  %v297 = vpop.f32.mrb[0].mxu0
  %v298 = vadd.f32 %v76, %v297
  %v299 = vpop.f32.mrb[0].mxu0
  %v300 = vadd.f32 %v72, %v299
  %v301 = vpop.f32.mrb[0].mxu0
  %v302 = vadd.f32 %v76, %v301
  %303 = vmatprep.mubr.bf16.mxu0 0
  %304 = vmatmul.mubr.bf16.gmra.mrb[0].mxu0 %v98
  %v305 = vpop.f32.mrb[0].mxu0
  %v306 = vadd.f32 %v72, %v305
  %v307 = vpop.f32.mrb[0].mxu0
  %v308 = vadd.f32 %v76, %v307
  %v309 = vpop.f32.mrb[0].mxu0
  %v310 = vadd.f32 %v72, %v309
  %v311 = vpop.f32.mrb[0].mxu0
  %v312 = vadd.f32 %v76, %v311
  %313 = vdwg.mxu0
  %314 = vmatprep.subr.bf16.mxu0 %v200
  %315 = vmatpush1.bf16.msra.mxu0 %v199
  %316 = vmatprep.subr.bf16.mxu0 %v204
  %317 = vmatpush1.bf16.msra.mxu0 %v203
  %318 = vmatprep.subr.bf16.mxu0 %v208
  %319 = vmatpush1.bf16.msra.mxu0 %v207
  %320 = vmatprep.subr.bf16.mxu0 %v212
  %321 = vmatpush1.bf16.msra.mxu0 %v211
  %322 = vmatprep.subr.bf16.mxu0 %v216
  %323 = vmatpush1.bf16.msra.mxu0 %v215
  %324 = vmatprep.subr.bf16.mxu0 %v220
  %325 = vmatpush1.bf16.msra.mxu0 %v219
  %326 = vmatprep.subr.bf16.mxu0 %v224
  %327 = vmatpush1.bf16.msra.mxu0 %v223
  %328 = vmatprep.subr.bf16.mxu0 %v228
  %329 = vmatpush1.bf16.msra.mxu0 %v227
  %330 = vmatprep.subr.bf16.mxu0 0
  %331 = vmatpush1.bf16.msra.mxu0 0
  %332 = vmatprep.subr.bf16.mxu0 0
  %333 = vmatpush1.bf16.msra.mxu0 0
  %334 = vmatprep.subr.bf16.mxu0 0
  %335 = vmatpush1.bf16.msra.mxu0 0
  %336 = vmatprep.subr.bf16.mxu0 0
  %337 = vmatpush1.bf16.msra.mxu0 0
  %338 = vmatprep.subr.bf16.mxu0 0
  %339 = vmatpush1.bf16.msra.mxu0 0
  %340 = vmatprep.subr.bf16.mxu0 0
  %341 = vmatpush1.bf16.msra.mxu0 0
  %342 = vmatprep.subr.bf16.mxu0 0
  %343 = vmatpush1.bf16.msra.mxu0 0
  %344 = vmatprep.subr.bf16.mxu0 0
  %345 = vmatpush1.bf16.msra.mxu0 0
  %346 = vmatprep.mubr.bf16.mxu0 0
  %347 = vmatmul.mubr.bf16.gmra.mrb[0].mxu0 %v97
  %v348 = vpop.f32.mrb[0].mxu0
  %v349 = vadd.f32 %v80, %v348
  %v350 = vpop.f32.mrb[0].mxu0
  %v351 = vadd.f32 %v84, %v350
  %v352 = vpop.f32.mrb[0].mxu0
  %v353 = vadd.f32 %v80, %v352
  %v354 = vpop.f32.mrb[0].mxu0
  %v355 = vadd.f32 %v84, %v354
  %356 = vmatprep.mubr.bf16.mxu0 0
  %357 = vmatmul.mubr.bf16.gmra.mrb[0].mxu0 %v98
  %v358 = vpop.f32.mrb[0].mxu0
  %v359 = vadd.f32 %v80, %v358
  %v360 = vpop.f32.mrb[0].mxu0
  %v361 = vadd.f32 %v84, %v360
  %v362 = vpop.f32.mrb[0].mxu0
  %v363 = vadd.f32 %v80, %v362
  %v364 = vpop.f32.mrb[0].mxu0
  %v365 = vadd.f32 %v84, %v364
  %366 = vdwg.mxu0
  %v367 = vmax.f32 %v296, 0.0
  %v368 = vmax.f32 %v298, 0.0
  %v369 = vmax.f32 %v349, 0.0
  %v370 = vmax.f32 %v351, 0.0
  %v371 = vmax.f32 %v300, 0.0
  %v372 = vmax.f32 %v302, 0.0
  %v373 = vmax.f32 %v353, 0.0
  %v374 = vmax.f32 %v355, 0.0
  %v375 = vmax.f32 %v306, 0.0
  %v376 = vmax.f32 %v308, 0.0
  %v377 = vmax.f32 %v359, 0.0
  %v378 = vmax.f32 %v361, 0.0
  %v379 = vmax.f32 %v310, 0.0
  %v380 = vmax.f32 %v312, 0.0
  %v381 = vmax.f32 %v363, 0.0
  %v382 = vmax.f32 %v365, 0.0
  %v383 = vpack.c.bf16 %v371, %v367
  %v384 = vpack.c.bf16 %v372, %v368
  %v385 = vpack.c.bf16 %v373, %v369
  %v386 = vpack.c.bf16 %v374, %v370
  %v387 = vpack.c.bf16 %v379, %v375
  %v388 = vpack.c.bf16 %v380, %v376
  %v389 = vpack.c.bf16 %v381, %v377
  %v390 = vpack.c.bf16 %v382, %v378
  %v391 = vld [vmem:[%s3] sm:$0xf]
  %v392 = vld [vmem:[%s3 + $0x4] sm:$0xf]
  %v393 = vld [vmem:[%s3 + $0x8] sm:$0xf]
  %v394 = vld [vmem:[%s3 + $0xc] sm:$0xf]
  %v395 = vld [vmem:[%s3 + $0x10] sm:$0xf]
  %v396 = vld [vmem:[%s3 + $0x14] sm:$0xf]
  %v397 = vld [vmem:[%s3 + $0x18] sm:$0xf]
  %v398 = vld [vmem:[%s3 + $0x1c] sm:$0xf]
  %v399 = vld [vmem:[%s3 + $0x20] sm:$0xf]
  %v400 = vld [vmem:[%s3 + $0x24] sm:$0xf]
  %v401 = vld [vmem:[%s3 + $0x28] sm:$0xf]
  %v402 = vld [vmem:[%s3 + $0x2c] sm:$0xf]
  %v403 = vld [vmem:[%s3 + $0x30] sm:$0xf]
  %v404 = vld [vmem:[%s3 + $0x34] sm:$0xf]
  %v405 = vld [vmem:[%s3 + $0x38] sm:$0xf]
  %v406 = vld [vmem:[%s3 + $0x3c] sm:$0xf]
  %v407 = vld [vmem:[%s3 + $0x40] sm:$0xf]
  %v408 = vld [vmem:[%s3 + $0x44] sm:$0xf]
  %v409 = vld [vmem:[%s3 + $0x48] sm:$0xf]
  %v410 = vld [vmem:[%s3 + $0x4c] sm:$0xf]
  %v411 = vld [vmem:[%s3 + $0x50] sm:$0xf]
  %v412 = vld [vmem:[%s3 + $0x54] sm:$0xf]
  %v413 = vld [vmem:[%s3 + $0x58] sm:$0xf]
  %v414 = vld [vmem:[%s3 + $0x5c] sm:$0xf]
  %v415 = vld [vmem:[%s3 + $0x60] sm:$0xf]
  %v416 = vld [vmem:[%s3 + $0x64] sm:$0xf]
  %v417 = vld [vmem:[%s3 + $0x68] sm:$0xf]
  %v418 = vld [vmem:[%s3 + $0x6c] sm:$0xf]
  %v419 = vld [vmem:[%s3 + $0x70] sm:$0xf]
  %v420 = vld [vmem:[%s3 + $0x74] sm:$0xf]
  %v421 = vld [vmem:[%s3 + $0x78] sm:$0xf]
  %v422 = vld [vmem:[%s3 + $0x7c] sm:$0xf]
  %v423 = vld [vmem:[%s3 + $0x80] sm:$0xf]
  %v424 = vld [vmem:[%s3 + $0x84] sm:$0xf]
  %v425 = vld [vmem:[%s3 + $0x88] sm:$0xf]
  %v426 = vld [vmem:[%s3 + $0x8c] sm:$0xf]
  %v427 = vld [vmem:[%s3 + $0x90] sm:$0xf]
  %v428 = vld [vmem:[%s3 + $0x94] sm:$0xf]
  %v429 = vld [vmem:[%s3 + $0x98] sm:$0xf]
  %v430 = vld [vmem:[%s3 + $0x9c] sm:$0xf]
  %v431 = vld [vmem:[%s3 + $0xa0] sm:$0xf]
  %v432 = vld [vmem:[%s3 + $0xa4] sm:$0xf]
  %v433 = vld [vmem:[%s3 + $0xa8] sm:$0xf]
  %v434 = vld [vmem:[%s3 + $0xac] sm:$0xf]
  %v435 = vld [vmem:[%s3 + $0xb0] sm:$0xf]
  %v436 = vld [vmem:[%s3 + $0xb4] sm:$0xf]
  %v437 = vld [vmem:[%s3 + $0xb8] sm:$0xf]
  %v438 = vld [vmem:[%s3 + $0xbc] sm:$0xf]
  %v439 = vld [vmem:[%s3 + $0xc0] sm:$0xf]
  %v440 = vld [vmem:[%s3 + $0xc4] sm:$0xf]
  %v441 = vld [vmem:[%s3 + $0xc8] sm:$0xf]
  %v442 = vld [vmem:[%s3 + $0xcc] sm:$0xf]
  %v443 = vld [vmem:[%s3 + $0xd0] sm:$0xf]
  %v444 = vld [vmem:[%s3 + $0xd4] sm:$0xf]
  %v445 = vld [vmem:[%s3 + $0xd8] sm:$0xf]
  %v446 = vld [vmem:[%s3 + $0xdc] sm:$0xf]
  %v447 = vld [vmem:[%s3 + $0xe0] sm:$0xf]
  %v448 = vld [vmem:[%s3 + $0xe4] sm:$0xf]
  %v449 = vld [vmem:[%s3 + $0xe8] sm:$0xf]
  %v450 = vld [vmem:[%s3 + $0xec] sm:$0xf]
  %v451 = vld [vmem:[%s3 + $0xf0] sm:$0xf]
  %v452 = vld [vmem:[%s3 + $0xf4] sm:$0xf]
  %v453 = vld [vmem:[%s3 + $0xf8] sm:$0xf]
  %v454 = vld [vmem:[%s3 + $0xfc] sm:$0xf]
  %v455 = vld [vmem:[%s4] sm:$0x1]
  %v457 = vlaneseq
  %v458 = vshrl.u32 %v457, 7
  %v459 = vsub.s32 0, %v458
  %v460 = vrot.slane %v455, %v459
  %v526 = vunpack.c.l.b16 %v391
  %v527 = vunpack.c.l.b16 %v392
  %v528 = vunpack.c.l.b16 %v393
  %v529 = vunpack.c.l.b16 %v394
  %v530 = vunpack.c.l.b16 %v395
  %v531 = vunpack.c.l.b16 %v396
  %v532 = vunpack.c.l.b16 %v397
  %v533 = vunpack.c.l.b16 %v398
  %v534 = vunpack.c.l.b16 %v399
  %v535 = vunpack.c.l.b16 %v400
  %v536 = vunpack.c.l.b16 %v401
  %v537 = vunpack.c.l.b16 %v402
  %v538 = vunpack.c.l.b16 %v403
  %v539 = vunpack.c.l.b16 %v404
  %v540 = vunpack.c.l.b16 %v405
  %v541 = vunpack.c.l.b16 %v406
  %v542 = vunpack.c.l.b16 %v407
  %v543 = vunpack.c.l.b16 %v408
  %v544 = vunpack.c.l.b16 %v409
  %v545 = vunpack.c.l.b16 %v410
  %v546 = vunpack.c.l.b16 %v411
  %v547 = vunpack.c.l.b16 %v412
  %v548 = vunpack.c.l.b16 %v413
  %v549 = vunpack.c.l.b16 %v414
  %v550 = vunpack.c.l.b16 %v415
  %v551 = vunpack.c.l.b16 %v416
  %v552 = vunpack.c.l.b16 %v417
  %v553 = vunpack.c.l.b16 %v418
  %v554 = vunpack.c.l.b16 %v419
  %v555 = vunpack.c.l.b16 %v420
  %v556 = vunpack.c.l.b16 %v421
  %v557 = vunpack.c.l.b16 %v422
  %v558 = vunpack.c.l.b16 %v423
  %v559 = vunpack.c.l.b16 %v424
  %v560 = vunpack.c.l.b16 %v425
  %v561 = vunpack.c.l.b16 %v426
  %v562 = vunpack.c.l.b16 %v427
  %v563 = vunpack.c.l.b16 %v428
  %v564 = vunpack.c.l.b16 %v429
  %v565 = vunpack.c.l.b16 %v430
  %v566 = vunpack.c.l.b16 %v431
  %v567 = vunpack.c.l.b16 %v432
  %v568 = vunpack.c.l.b16 %v433
  %v569 = vunpack.c.l.b16 %v434
  %v570 = vunpack.c.l.b16 %v435
  %v571 = vunpack.c.l.b16 %v436
  %v572 = vunpack.c.l.b16 %v437
  %v573 = vunpack.c.l.b16 %v438
  %v574 = vunpack.c.l.b16 %v439
  %v575 = vunpack.c.l.b16 %v440
  %v576 = vunpack.c.l.b16 %v441
  %v577 = vunpack.c.l.b16 %v442
  %v578 = vunpack.c.l.b16 %v443
  %v579 = vunpack.c.l.b16 %v444
  %v580 = vunpack.c.l.b16 %v445
  %v581 = vunpack.c.l.b16 %v446
  %v582 = vunpack.c.l.b16 %v447
  %v583 = vunpack.c.l.b16 %v448
  %v584 = vunpack.c.l.b16 %v449
  %v585 = vunpack.c.l.b16 %v450
  %v586 = vunpack.c.l.b16 %v451
  %v587 = vunpack.c.l.b16 %v452
  %v588 = vunpack.c.l.b16 %v453
  %v589 = vunpack.c.l.b16 %v454
  %v590 = vpack.c.b16 %v527, %v526
  %v591 = vpack.c.b16 %v529, %v528
  %v592 = vpack.c.b16 %v531, %v530
  %v593 = vpack.c.b16 %v533, %v532
  %v594 = vpack.c.b16 %v535, %v534
  %v595 = vpack.c.b16 %v537, %v536
  %v596 = vpack.c.b16 %v539, %v538
  %v597 = vpack.c.b16 %v541, %v540
  %v598 = vpack.c.b16 %v543, %v542
  %v599 = vpack.c.b16 %v545, %v544
  %v600 = vpack.c.b16 %v547, %v546
  %v601 = vpack.c.b16 %v549, %v548
  %v602 = vpack.c.b16 %v551, %v550
  %v603 = vpack.c.b16 %v553, %v552
  %v604 = vpack.c.b16 %v555, %v554
  %v605 = vpack.c.b16 %v557, %v556
  %v606 = vpack.c.b16 %v559, %v558
  %v607 = vpack.c.b16 %v561, %v560
  %v608 = vpack.c.b16 %v563, %v562
  %v609 = vpack.c.b16 %v565, %v564
  %v610 = vpack.c.b16 %v567, %v566
  %v611 = vpack.c.b16 %v569, %v568
  %v612 = vpack.c.b16 %v571, %v570
  %v613 = vpack.c.b16 %v573, %v572
  %v614 = vpack.c.b16 %v575, %v574
  %v615 = vpack.c.b16 %v577, %v576
  %v616 = vpack.c.b16 %v579, %v578
  %v617 = vpack.c.b16 %v581, %v580
  %v618 = vpack.c.b16 %v583, %v582
  %v619 = vpack.c.b16 %v585, %v584
  %v620 = vpack.c.b16 %v587, %v586
  %v621 = vpack.c.b16 %v589, %v588
  %654 = vmatprep.subr.bf16.mxu0 0
  %655 = vmatpush1.bf16.msra.mxu0 %v590
  %656 = vmatprep.subr.bf16.mxu0 0
  %657 = vmatpush1.bf16.msra.mxu0 %v591
  %658 = vmatprep.subr.bf16.mxu0 0
  %659 = vmatpush1.bf16.msra.mxu0 %v592
  %660 = vmatprep.subr.bf16.mxu0 0
  %661 = vmatpush1.bf16.msra.mxu0 %v593
  %662 = vmatprep.subr.bf16.mxu0 0
  %663 = vmatpush1.bf16.msra.mxu0 %v594
  %664 = vmatprep.subr.bf16.mxu0 0
  %665 = vmatpush1.bf16.msra.mxu0 %v595
  %666 = vmatprep.subr.bf16.mxu0 0
  %667 = vmatpush1.bf16.msra.mxu0 %v596
  %668 = vmatprep.subr.bf16.mxu0 0
  %669 = vmatpush1.bf16.msra.mxu0 %v597
  %670 = vmatprep.subr.bf16.mxu0 0
  %671 = vmatpush1.bf16.msra.mxu0 %v598
  %672 = vmatprep.subr.bf16.mxu0 0
  %673 = vmatpush1.bf16.msra.mxu0 %v599
  %674 = vmatprep.subr.bf16.mxu0 0
  %675 = vmatpush1.bf16.msra.mxu0 %v600
  %676 = vmatprep.subr.bf16.mxu0 0
  %677 = vmatpush1.bf16.msra.mxu0 %v601
  %678 = vmatprep.subr.bf16.mxu0 0
  %679 = vmatpush1.bf16.msra.mxu0 %v602
  %680 = vmatprep.subr.bf16.mxu0 0
  %681 = vmatpush1.bf16.msra.mxu0 %v603
  %682 = vmatprep.subr.bf16.mxu0 0
  %683 = vmatpush1.bf16.msra.mxu0 %v604
  %684 = vmatprep.subr.bf16.mxu0 0
  %685 = vmatpush1.bf16.msra.mxu0 %v605
  %686 = vmatprep.mubr.bf16.mxu0 %v384
  %687 = vmatmul.mubr.bf16.gmra.mrb[0].mxu0 %v383
  %v688 = vpop.f32.mrb[0].mxu0
  %v689 = vadd.f32 %v460, %v688
  %v690 = vpop.f32.mrb[0].mxu0
  %v691 = vpop.f32.mrb[0].mxu0
  %v692 = vadd.f32 %v460, %v691
  %v693 = vpop.f32.mrb[0].mxu0
  %694 = vmatprep.mubr.bf16.mxu0 %v388
  %695 = vmatmul.mubr.bf16.gmra.mrb[0].mxu0 %v387
  %v696 = vpop.f32.mrb[0].mxu0
  %v697 = vadd.f32 %v460, %v696
  %v698 = vpop.f32.mrb[0].mxu0
  %v699 = vpop.f32.mrb[0].mxu0
  %v700 = vadd.f32 %v460, %v699
  %v701 = vpop.f32.mrb[0].mxu0
  %702 = vdwg.mxu0
  %703 = vmatprep.subr.bf16.mxu0 0
  %704 = vmatpush1.bf16.msra.mxu0 %v606
  %705 = vmatprep.subr.bf16.mxu0 0
  %706 = vmatpush1.bf16.msra.mxu0 %v607
  %707 = vmatprep.subr.bf16.mxu0 0
  %708 = vmatpush1.bf16.msra.mxu0 %v608
  %709 = vmatprep.subr.bf16.mxu0 0
  %710 = vmatpush1.bf16.msra.mxu0 %v609
  %711 = vmatprep.subr.bf16.mxu0 0
  %712 = vmatpush1.bf16.msra.mxu0 %v610
  %713 = vmatprep.subr.bf16.mxu0 0
  %714 = vmatpush1.bf16.msra.mxu0 %v611
  %715 = vmatprep.subr.bf16.mxu0 0
  %716 = vmatpush1.bf16.msra.mxu0 %v612
  %717 = vmatprep.subr.bf16.mxu0 0
  %718 = vmatpush1.bf16.msra.mxu0 %v613
  %719 = vmatprep.subr.bf16.mxu0 0
  %720 = vmatpush1.bf16.msra.mxu0 %v614
  %721 = vmatprep.subr.bf16.mxu0 0
  %722 = vmatpush1.bf16.msra.mxu0 %v615
  %723 = vmatprep.subr.bf16.mxu0 0
  %724 = vmatpush1.bf16.msra.mxu0 %v616
  %725 = vmatprep.subr.bf16.mxu0 0
  %726 = vmatpush1.bf16.msra.mxu0 %v617
  %727 = vmatprep.subr.bf16.mxu0 0
  %728 = vmatpush1.bf16.msra.mxu0 %v618
  %729 = vmatprep.subr.bf16.mxu0 0
  %730 = vmatpush1.bf16.msra.mxu0 %v619
  %731 = vmatprep.subr.bf16.mxu0 0
  %732 = vmatpush1.bf16.msra.mxu0 %v620
  %733 = vmatprep.subr.bf16.mxu0 0
  %734 = vmatpush1.bf16.msra.mxu0 %v621
  %735 = vmatprep.mubr.bf16.mxu0 %v386
  %736 = vmatmul.mubr.bf16.gmra.mrb[0].mxu0 %v385
  %v737 = vpop.f32.mrb[0].mxu0
  %v738 = vadd.f32 %v689, %v737
  %v739 = vpop.f32.mrb[0].mxu0
  %v740 = vpop.f32.mrb[0].mxu0
  %v741 = vadd.f32 %v692, %v740
  %v742 = vpop.f32.mrb[0].mxu0
  %743 = vmatprep.mubr.bf16.mxu0 %v390
  %744 = vmatmul.mubr.bf16.gmra.mrb[0].mxu0 %v389
  %v745 = vpop.f32.mrb[0].mxu0
  %v746 = vadd.f32 %v697, %v745
  %v747 = vpop.f32.mrb[0].mxu0
  %v748 = vpop.f32.mrb[0].mxu0
  %v749 = vadd.f32 %v700, %v748
  %v750 = vpop.f32.mrb[0].mxu0
  %751 = vdwg.mxu0
  %v752 = vadd.f32 %v738, %v31
  %v753 = vadd.f32 %v741, %v32
  %v754 = vadd.f32 %v746, %v33
  %v755 = vadd.f32 %v749, %v34
  %v756 = vld [vmem:[%s5] sm:$0x1]
  %v757 = vld [vmem:[%s6] sm:$0x1]
  %758 = vadd.xlane.f32.xlu0 %v752
  %v759 = vpop.xlane.xlu0 %758
  %760 = vadd.xlane.f32.xlu0 %v753
  %v761 = vpop.xlane.xlu0 %760
  %762 = vadd.xlane.f32.xlu0 %v754
  %v763 = vpop.xlane.xlu0 %762
  %764 = vadd.xlane.f32.xlu0 %v755
  %v765 = vpop.xlane.xlu0 %764
  %v766 = vrcp.pop 128.0
  %v767 = vmul.f32 %v759, %v766
  %v768 = vmul.f32 %v761, %v766
  %v769 = vmul.f32 %v763, %v766
  %v770 = vmul.f32 %v765, %v766
  %v771 = vsub.f32 %v752, %v767
  %v772 = vsub.f32 %v753, %v768
  %v773 = vsub.f32 %v754, %v769
  %v774 = vsub.f32 %v755, %v770
  %v775 = vmul.f32 %v771, %v771
  %v776 = vmul.f32 %v772, %v772
  %v777 = vmul.f32 %v773, %v773
  %v778 = vmul.f32 %v774, %v774
  %779 = vadd.xlane.f32.xlu0 %v775
  %v780 = vpop.xlane.xlu0 %779
  %781 = vadd.xlane.f32.xlu0 %v776
  %v782 = vpop.xlane.xlu0 %781
  %783 = vadd.xlane.f32.xlu0 %v777
  %v784 = vpop.xlane.xlu0 %783
  %785 = vadd.xlane.f32.xlu0 %v778
  %v786 = vpop.xlane.xlu0 %785
  %v787 = vmul.f32 %v780, %v766
  %v788 = vmul.f32 %v782, %v766
  %v789 = vmul.f32 %v784, %v766
  %v790 = vmul.f32 %v786, %v766
  %v791 = vadd.f32 %v787, 1e-05
  %v792 = vadd.f32 %v788, 1e-05
  %v793 = vadd.f32 %v789, 1e-05
  %v794 = vadd.f32 %v790, 1e-05
  %v795 = vrsqrt.pop %v791
  %v796 = vrsqrt.pop %v792
  %v797 = vrsqrt.pop %v793
  %v798 = vrsqrt.pop %v794
  %v799 = vmul.f32 %v771, %v795
  %v800 = vmul.f32 %v772, %v796
  %v801 = vmul.f32 %v773, %v797
  %v802 = vmul.f32 %v774, %v798
  %v804 = vlaneseq
  %v805 = vshrl.u32 %v804, 7
  %v806 = vsub.s32 0, %v805
  %v807 = vrot.slane %v756, %v806
  %v809 = vmul.f32 %v799, %v807
  %v810 = vmul.f32 %v800, %v807
  %v811 = vmul.f32 %v801, %v807
  %v812 = vmul.f32 %v802, %v807
  %v814 = vlaneseq
  %v815 = vshrl.u32 %v814, 7
  %v816 = vsub.s32 0, %v815
  %v817 = vrot.slane %v757, %v816
  %v819 = vadd.f32 %v809, %v817
  %v820 = vadd.f32 %v810, %v817
  %v821 = vadd.f32 %v811, %v817
  %v822 = vadd.f32 %v812, %v817
  %v823 = vpack.c.bf16 %v820, %v819
  %v824 = vpack.c.bf16 %v822, %v821
  %v827 = vunpack.c.l.b16 %v823
  %v828 = vunpack.c.h.b16 %v823
  %v829 = vunpack.c.l.b16 %v824
  %v830 = vunpack.c.h.b16 %v824
  %v831 = vpack.c.b16 %v827, %v827
  %v832 = vpack.c.b16 %v828, %v828
  %v833 = vpack.c.b16 %v829, %v829
  %v834 = vpack.c.b16 %v830, %v830
  %839 = vst [vmem:[%s7] sm:$0xf] %v831
  %840 = vst [vmem:[%s7 + $0x4] sm:$0xf] %v832
  %841 = vst [vmem:[%s7 + $0x8] sm:$0xf] %v833
  %842 = vst [vmem:[%s7 + $0xc] sm:$0xf] %v834
  // Predicated region
  $region30: #{tts_forward.19} parent=0 // pred_check
    _
  $region31: #{tts_forward.19} parent=0 // pred_check_branch
    %844 = sbr.rel (0) target = $region33
  $region32: #{tts_forward.19} parent=0 // pred_region
    _
  $region33: #{tts_forward.19} parent=0 // pred_fallthru
    _
  // Predicated region
  $region34: #{tts_forward.19} parent=0 // pred_check
    _
  $region35: #{tts_forward.19} parent=0 // pred_check_branch
    %846 = sbr.rel (0) target = $region37
  $region36: #{tts_forward.19} parent=0 // pred_region
    _
  $region37: #{tts_forward.19} parent=0 // pred_fallthru
    _

// kernel: tts_forward.18
$region0: #{tts_forward.18}
  #allocation0 [shape = 'u32[]', space=smem, size = 0x4, offset = 0x4, fixed_abs, tag = 'smem constant byte address 0x4 - core index']
  #allocation1 [shape = 'u32[144,128]{1,0:T(1,128)}', space=vmem, size = 0x12000, scoped, tag = 'internal scratch']
  #allocation2 [shape = 'f32[16,128]{1,0:T(8,128)}', space=vmem, size = 0x2000, scoped, tag = 'scratch operand']
  #allocation3 [shape = 's32[1]{0}', space=sflag, size = 0x4, scoped, tag = 'scoped memory for tts_forward.18']
  #allocation4 [shape = 'u8[512]{0}', space=smem, size = 0x200, scoped, tag = 'prefetched SMEM operand 0']
  %s0 = inlined_call_operand.vmem [shape: s32[2], index: 0, kind: input, shape index: {}]
  %s1 = inlined_call_operand.vmem [shape: bf16[2,16,128], index: 1, kind: input, shape index: {}]
  %s2 = inlined_call_operand.vmem [shape: bf16[2,8,128], index: 2, kind: input, shape index: {}]
  %s3 = inlined_call_operand.vmem [shape: bf16[128,128], index: 3, kind: input, shape index: {}]
  %s4 = inlined_call_operand.vmem [shape: f32[1,128], index: 4, kind: input, shape index: {}]
  %s5 = inlined_call_operand.vmem [shape: bf16[128,256], index: 5, kind: input, shape index: {}]
  %s6 = inlined_call_operand.vmem [shape: f32[1,256], index: 6, kind: input, shape index: {}]
  %s7 = inlined_call_operand.vmem [shape: bf16[128,128], index: 7, kind: input, shape index: {}]
  %s8 = inlined_call_operand.vmem [shape: f32[1,128], index: 8, kind: input, shape index: {}]
  %s9 = inlined_call_operand.vmem [shape: f32[1,128], index: 9, kind: input, shape index: {}]
  %s10 = inlined_call_operand.vmem [shape: f32[1,128], index: 10, kind: input, shape index: {}]
  %s11 = inlined_call_operand.vmem [shape: bf16[2,16,128], index: 11, kind: output, shape index: {}]
  %s12 = sld [smem:[#allocation0]]
  $region73: #{tts_forward.18} parent=0
    _
  %s14 = ssub.s32 1, %s12
  %s15 = scalar_select 0, %s14, %s12
  %s16 = sshll.u32 %s0, 4
  %s17 = int_to_ptr.vmem [resolvable:$true] %s16
  %19 = dma.vmem_to_smem %s17, 16, [#allocation4], [#allocation3]
  %20 = dma.done [#allocation3], 16
  %21 = sfence
  loop: start=0, step=1, limit=4
  $region2: #{tts_forward.18} parent=0 // loop_pre_header
    _
  $region3: #{tts_forward.18} parent=0 // loop_header
    %s23 = sphi 0, %s27
    %p24 = scmp.ge.s32.totalorder %s23, 4
    %s33 = sphi 0, %s35
    %s36 = sphi 0, %s33
    %s37 = sphi 0, %s36
    %s53 = sphi 0, %s37
    %s59 = sphi 0, %s61
    %s62 = sphi 0, %s59
    %s63 = sphi 0, %s62
    %s79 = sphi 0, %s63
    %s83 = sphi 0, %s83
    %s85 = sphi 0, %s83
    %s86 = sphi 0, %s85
    %s100 = sphi 0, %s86
    %s104 = sphi 0, %s104
    %s106 = sphi 0, %s104
    %s107 = sphi 0, %s106
    %s121 = sphi 0, %s107
    %s125 = sphi 0, %s125
    %s127 = sphi 0, %s125
    %s128 = sphi 0, %s127
    %s142 = sphi 0, %s128
    %s146 = sphi 0, %s146
    %s148 = sphi 0, %s146
    %s149 = sphi 0, %s148
    %s163 = sphi 0, %s149
    %s167 = sphi 0, %s167
    %s169 = sphi 0, %s167
    %s170 = sphi 0, %s169
    %s184 = sphi 0, %s170
    %s188 = sphi 0, %s188
    %s190 = sphi 0, %s188
    %s191 = sphi 0, %s190
    %s205 = sphi 0, %s191
    %s209 = sphi 0, %s209
    %s211 = sphi 0, %s209
    %s212 = sphi 0, %s211
    %s226 = sphi 0, %s212
    %s230 = sphi 0, %s230
    %s232 = sphi 0, %s230
    %s233 = sphi 0, %s232
    %s247 = sphi 0, %s233
    %s253 = sphi 0, %s255
    %s256 = sphi 0, %s253
    %s257 = sphi 0, %s256
    %s273 = sphi 0, %s257
  $region4: #{tts_forward.18} parent=0 // loop_header_branch
    %26 = sbr.rel (%p24) target = $region8
  $region5: #{tts_forward.18} parent=0 // loop_body
    %s28 = ssub.s32 %s23, 1
    %s29 = ssub.s32 %s23, 2
    %s30 = sadd.s32 %s23, 1
    %s31 = ssub.s32 %s23, %s30
    %p32 = scmp.eq.s32.totalorder %s31, 0
    %s34 = sadd.s32 %s33, 1
    %s35 = scalar_select %p32, %s33, %s34
    %p38 = pneg %p32
    %p39 = scmp.eq.s32.totalorder %s23, 1
    %p40 = por %p38, %p39
    %p41 = scmp.ne.s32.totalorder %s33, %s36
    %p42 = scmp.eq.s32.totalorder %s23, 0
    %p43 = por %p41, %p42
    %p44 = scmp.ne.s32.totalorder %s33, %s36
    %p45 = scmp.eq.s32.totalorder %s28, 1
    %p46 = por %p44, %p45
    %p47 = scmp.ne.s32.totalorder %s36, %s37
    %p48 = scmp.eq.s32.totalorder %s28, 0
    %p49 = por %p47, %p48
    %p50 = scmp.ne.s32.totalorder %s36, %s37
    %p51 = scmp.eq.s32.totalorder %s29, 1
    %p52 = por %p50, %p51
    %p54 = scmp.ne.s32.totalorder %s37, %s53
    %p55 = scmp.eq.s32.totalorder %s29, 0
    %p56 = por %p54, %p55
    %s57 = ssub.s32 %s23, %s30
    %p58 = scmp.eq.s32.totalorder %s57, 0
    %s60 = sadd.s32 %s59, 1
    %s61 = scalar_select %p58, %s59, %s60
    %p64 = pneg %p58
    %p65 = scmp.eq.s32.totalorder %s23, 1
    %p66 = por %p64, %p65
    %p67 = scmp.ne.s32.totalorder %s59, %s62
    %p68 = scmp.eq.s32.totalorder %s23, 0
    %p69 = por %p67, %p68
    %p70 = scmp.ne.s32.totalorder %s59, %s62
    %p71 = scmp.eq.s32.totalorder %s28, 1
    %p72 = por %p70, %p71
    %p73 = scmp.ne.s32.totalorder %s62, %s63
    %p74 = scmp.eq.s32.totalorder %s28, 0
    %p75 = por %p73, %p74
    %p76 = scmp.ne.s32.totalorder %s62, %s63
    %p77 = scmp.eq.s32.totalorder %s29, 1
    %p78 = por %p76, %p77
    %p80 = scmp.ne.s32.totalorder %s63, %s79
    %p81 = scmp.eq.s32.totalorder %s29, 0
    %p82 = por %p80, %p81
    %s84 = sadd.s32 %s83, 1
    %p87 = scmp.eq.s32.totalorder %s23, 1
    %p88 = scmp.ne.s32.totalorder %s83, %s85
    %p89 = scmp.eq.s32.totalorder %s23, 0
    %p90 = por %p88, %p89
    %p91 = scmp.ne.s32.totalorder %s83, %s85
    %p92 = scmp.eq.s32.totalorder %s28, 1
    %p93 = por %p91, %p92
    %p94 = scmp.ne.s32.totalorder %s85, %s86
    %p95 = scmp.eq.s32.totalorder %s28, 0
    %p96 = por %p94, %p95
    %p97 = scmp.ne.s32.totalorder %s85, %s86
    %p98 = scmp.eq.s32.totalorder %s29, 1
    %p99 = por %p97, %p98
    %p101 = scmp.ne.s32.totalorder %s86, %s100
    %p102 = scmp.eq.s32.totalorder %s29, 0
    %p103 = por %p101, %p102
    %s105 = sadd.s32 %s104, 1
    %p108 = scmp.eq.s32.totalorder %s23, 1
    %p109 = scmp.ne.s32.totalorder %s104, %s106
    %p110 = scmp.eq.s32.totalorder %s23, 0
    %p111 = por %p109, %p110
    %p112 = scmp.ne.s32.totalorder %s104, %s106
    %p113 = scmp.eq.s32.totalorder %s28, 1
    %p114 = por %p112, %p113
    %p115 = scmp.ne.s32.totalorder %s106, %s107
    %p116 = scmp.eq.s32.totalorder %s28, 0
    %p117 = por %p115, %p116
    %p118 = scmp.ne.s32.totalorder %s106, %s107
    %p119 = scmp.eq.s32.totalorder %s29, 1
    %p120 = por %p118, %p119
    %p122 = scmp.ne.s32.totalorder %s107, %s121
    %p123 = scmp.eq.s32.totalorder %s29, 0
    %p124 = por %p122, %p123
    %s126 = sadd.s32 %s125, 1
    %p129 = scmp.eq.s32.totalorder %s23, 1
    %p130 = scmp.ne.s32.totalorder %s125, %s127
    %p131 = scmp.eq.s32.totalorder %s23, 0
    %p132 = por %p130, %p131
    %p133 = scmp.ne.s32.totalorder %s125, %s127
    %p134 = scmp.eq.s32.totalorder %s28, 1
    %p135 = por %p133, %p134
    %p136 = scmp.ne.s32.totalorder %s127, %s128
    %p137 = scmp.eq.s32.totalorder %s28, 0
    %p138 = por %p136, %p137
    %p139 = scmp.ne.s32.totalorder %s127, %s128
    %p140 = scmp.eq.s32.totalorder %s29, 1
    %p141 = por %p139, %p140
    %p143 = scmp.ne.s32.totalorder %s128, %s142
    %p144 = scmp.eq.s32.totalorder %s29, 0
    %p145 = por %p143, %p144
    %s147 = sadd.s32 %s146, 1
    %p150 = scmp.eq.s32.totalorder %s23, 1
    %p151 = scmp.ne.s32.totalorder %s146, %s148
    %p152 = scmp.eq.s32.totalorder %s23, 0
    %p153 = por %p151, %p152
    %p154 = scmp.ne.s32.totalorder %s146, %s148
    %p155 = scmp.eq.s32.totalorder %s28, 1
    %p156 = por %p154, %p155
    %p157 = scmp.ne.s32.totalorder %s148, %s149
    %p158 = scmp.eq.s32.totalorder %s28, 0
    %p159 = por %p157, %p158
    %p160 = scmp.ne.s32.totalorder %s148, %s149
    %p161 = scmp.eq.s32.totalorder %s29, 1
    %p162 = por %p160, %p161
    %p164 = scmp.ne.s32.totalorder %s149, %s163
    %p165 = scmp.eq.s32.totalorder %s29, 0
    %p166 = por %p164, %p165
    %s168 = sadd.s32 %s167, 1
    %p171 = scmp.eq.s32.totalorder %s23, 1
    %p172 = scmp.ne.s32.totalorder %s167, %s169
    %p173 = scmp.eq.s32.totalorder %s23, 0
    %p174 = por %p172, %p173
    %p175 = scmp.ne.s32.totalorder %s167, %s169
    %p176 = scmp.eq.s32.totalorder %s28, 1
    %p177 = por %p175, %p176
    %p178 = scmp.ne.s32.totalorder %s169, %s170
    %p179 = scmp.eq.s32.totalorder %s28, 0
    %p180 = por %p178, %p179
    %p181 = scmp.ne.s32.totalorder %s169, %s170
    %p182 = scmp.eq.s32.totalorder %s29, 1
    %p183 = por %p181, %p182
    %p185 = scmp.ne.s32.totalorder %s170, %s184
    %p186 = scmp.eq.s32.totalorder %s29, 0
    %p187 = por %p185, %p186
    %s189 = sadd.s32 %s188, 1
    %p192 = scmp.eq.s32.totalorder %s23, 1
    %p193 = scmp.ne.s32.totalorder %s188, %s190
    %p194 = scmp.eq.s32.totalorder %s23, 0
    %p195 = por %p193, %p194
    %p196 = scmp.ne.s32.totalorder %s188, %s190
    %p197 = scmp.eq.s32.totalorder %s28, 1
    %p198 = por %p196, %p197
    %p199 = scmp.ne.s32.totalorder %s190, %s191
    %p200 = scmp.eq.s32.totalorder %s28, 0
    %p201 = por %p199, %p200
    %p202 = scmp.ne.s32.totalorder %s190, %s191
    %p203 = scmp.eq.s32.totalorder %s29, 1
    %p204 = por %p202, %p203
    %p206 = scmp.ne.s32.totalorder %s191, %s205
    %p207 = scmp.eq.s32.totalorder %s29, 0
    %p208 = por %p206, %p207
    %s210 = sadd.s32 %s209, 1
    %p213 = scmp.eq.s32.totalorder %s23, 1
    %p214 = scmp.ne.s32.totalorder %s209, %s211
    %p215 = scmp.eq.s32.totalorder %s23, 0
    %p216 = por %p214, %p215
    %p217 = scmp.ne.s32.totalorder %s209, %s211
    %p218 = scmp.eq.s32.totalorder %s28, 1
    %p219 = por %p217, %p218
    %p220 = scmp.ne.s32.totalorder %s211, %s212
    %p221 = scmp.eq.s32.totalorder %s28, 0
    %p222 = por %p220, %p221
    %p223 = scmp.ne.s32.totalorder %s211, %s212
    %p224 = scmp.eq.s32.totalorder %s29, 1
    %p225 = por %p223, %p224
    %p227 = scmp.ne.s32.totalorder %s212, %s226
    %p228 = scmp.eq.s32.totalorder %s29, 0
    %p229 = por %p227, %p228
    %s231 = sadd.s32 %s230, 1
    %p234 = scmp.eq.s32.totalorder %s23, 1
    %p235 = scmp.ne.s32.totalorder %s230, %s232
    %p236 = scmp.eq.s32.totalorder %s23, 0
    %p237 = por %p235, %p236
    %p238 = scmp.ne.s32.totalorder %s230, %s232
    %p239 = scmp.eq.s32.totalorder %s28, 1
    %p240 = por %p238, %p239
    %p241 = scmp.ne.s32.totalorder %s232, %s233
    %p242 = scmp.eq.s32.totalorder %s28, 0
    %p243 = por %p241, %p242
    %p244 = scmp.ne.s32.totalorder %s232, %s233
    %p245 = scmp.eq.s32.totalorder %s29, 1
    %p246 = por %p244, %p245
    %p248 = scmp.ne.s32.totalorder %s233, %s247
    %p249 = scmp.eq.s32.totalorder %s29, 0
    %p250 = por %p248, %p249
    %s251 = ssub.s32 %s23, %s30
    %p252 = scmp.eq.s32.totalorder %s251, 0
    %s254 = sadd.s32 %s253, 1
    %s255 = scalar_select %p252, %s253, %s254
    %p258 = pneg %p252
    %p259 = scmp.eq.s32.totalorder %s23, 1
    %p260 = por %p258, %p259
    %p261 = scmp.ne.s32.totalorder %s253, %s256
    %p262 = scmp.eq.s32.totalorder %s23, 0
    %p263 = por %p261, %p262
    %p264 = scmp.ne.s32.totalorder %s253, %s256
    %p265 = scmp.eq.s32.totalorder %s28, 1
    %p266 = por %p264, %p265
    %p267 = scmp.ne.s32.totalorder %s256, %s257
    %p268 = scmp.eq.s32.totalorder %s28, 0
    %p269 = por %p267, %p268
    %p270 = scmp.ne.s32.totalorder %s256, %s257
    %p271 = scmp.eq.s32.totalorder %s29, 1
    %p272 = por %p270, %p271
    %p274 = scmp.ne.s32.totalorder %s257, %s273
    %p275 = scmp.eq.s32.totalorder %s29, 0
    %p276 = por %p274, %p275
    %p277 = scmp.le.s32.totalorder 1, %s23
    %p278 = scmp.lt.s32.totalorder %s23, 3
    %p279 = pnand %p277, %p278
    %p280 = pneg %p279
    // Predicated region
    $region9: #{tts_forward.18} parent=5 // pred_check
      _
    $region10: #{tts_forward.18} parent=5 // pred_check_branch
      %282 = sbr.rel (%p279) target = $region12
    $region11: #{tts_forward.18} parent=5 // pred_region
      %s283 = ssub.s32 %s23, 1
      // Predicated region
      $region13: #{tts_forward.18} parent=11 // pred_check
        %p284 = pneg %p96
      $region14: #{tts_forward.18} parent=11 // pred_check_branch
        %286 = sbr.rel (%p284) target = $region16
      $region15: #{tts_forward.18} parent=11 // pred_region
        _
      $region16: #{tts_forward.18} parent=11 // pred_fallthru
        _
      // Predicated region
      $region17: #{tts_forward.18} parent=11 // pred_check
        %p287 = pneg %p117
      $region18: #{tts_forward.18} parent=11 // pred_check_branch
        %289 = sbr.rel (%p287) target = $region20
      $region19: #{tts_forward.18} parent=11 // pred_region
        _
      $region20: #{tts_forward.18} parent=11 // pred_fallthru
        _
      // Predicated region
      $region21: #{tts_forward.18} parent=11 // pred_check
        %p290 = pneg %p138
      $region22: #{tts_forward.18} parent=11 // pred_check_branch
        %292 = sbr.rel (%p290) target = $region24
      $region23: #{tts_forward.18} parent=11 // pred_region
        _
      $region24: #{tts_forward.18} parent=11 // pred_fallthru
        _
      // Predicated region
      $region25: #{tts_forward.18} parent=11 // pred_check
        %p293 = pneg %p159
      $region26: #{tts_forward.18} parent=11 // pred_check_branch
        %295 = sbr.rel (%p293) target = $region28
      $region27: #{tts_forward.18} parent=11 // pred_region
        _
      $region28: #{tts_forward.18} parent=11 // pred_fallthru
        _
      // Predicated region
      $region29: #{tts_forward.18} parent=11 // pred_check
        %p296 = pneg %p180
      $region30: #{tts_forward.18} parent=11 // pred_check_branch
        %298 = sbr.rel (%p296) target = $region32
      $region31: #{tts_forward.18} parent=11 // pred_region
        _
      $region32: #{tts_forward.18} parent=11 // pred_fallthru
        _
      // Predicated region
      $region33: #{tts_forward.18} parent=11 // pred_check
        %p299 = pneg %p201
      $region34: #{tts_forward.18} parent=11 // pred_check_branch
        %301 = sbr.rel (%p299) target = $region36
      $region35: #{tts_forward.18} parent=11 // pred_region
        _
      $region36: #{tts_forward.18} parent=11 // pred_fallthru
        _
      // Predicated region
      $region37: #{tts_forward.18} parent=11 // pred_check
        %p302 = pneg %p222
      $region38: #{tts_forward.18} parent=11 // pred_check_branch
        %304 = sbr.rel (%p302) target = $region40
      $region39: #{tts_forward.18} parent=11 // pred_region
        _
      $region40: #{tts_forward.18} parent=11 // pred_fallthru
        _
      // Predicated region
      $region41: #{tts_forward.18} parent=11 // pred_check
        %p305 = pneg %p243
      $region42: #{tts_forward.18} parent=11 // pred_check_branch
        %307 = sbr.rel (%p305) target = $region44
      $region43: #{tts_forward.18} parent=11 // pred_region
        _
      $region44: #{tts_forward.18} parent=11 // pred_fallthru
        _
    $region12: #{tts_forward.18} parent=5 // pred_fallthru
      _
    %p308 = scmp.lt.s32.totalorder %s23, 2
    // Predicated region
    $region45: #{tts_forward.18} parent=5 // pred_check
      %p309 = pneg %p308
    $region46: #{tts_forward.18} parent=5 // pred_check_branch
      %311 = sbr.rel (%p309) target = $region48
    $region47: #{tts_forward.18} parent=5 // pred_region
      // Predicated region
      $region49: #{tts_forward.18} parent=47 // pred_check
        %p312 = pneg %p43
      $region50: #{tts_forward.18} parent=47 // pred_check_branch
        %314 = sbr.rel (%p312) target = $region52
      $region51: #{tts_forward.18} parent=47 // pred_region
        %p315 = scmp.lt.s32.totalorder %s23, 1
        %s316 = scalar_select %p315, %s23, 1
        %s317 = smul.addr %s316, 2
        %s318 = smul.addr %s317, 4
        %s319 = scalar_lea.vmem %s1, %s318
      $region52: #{tts_forward.18} parent=47 // pred_fallthru
        _
      // Predicated region
      $region53: #{tts_forward.18} parent=47 // pred_check
        %p320 = pneg %p69
      $region54: #{tts_forward.18} parent=47 // pred_check_branch
        %322 = sbr.rel (%p320) target = $region56
      $region55: #{tts_forward.18} parent=47 // pred_region
        %p323 = scmp.lt.s32.totalorder %s23, 1
        %s324 = scalar_select %p323, %s23, 1
        %s325 = smul.addr %s324, 4
        %s326 = scalar_lea.vmem %s2, %s325
      $region56: #{tts_forward.18} parent=47 // pred_fallthru
        _
    $region48: #{tts_forward.18} parent=5 // pred_fallthru
      _
    %p327 = scmp.le.s32.totalorder 1, %s23
    %p328 = scmp.lt.s32.totalorder %s23, 3
    %p329 = pnand %p327, %p328
    %p330 = pneg %p329
    // Predicated region
    $region57: #{tts_forward.18} parent=5 // pred_check
      _
    $region58: #{tts_forward.18} parent=5 // pred_check_branch
      %332 = sbr.rel (%p329) target = $region60
    $region59: #{tts_forward.18} parent=5 // pred_region
      %s333 = ssub.s32 %s23, 1
      %p334 = scmp.lt.s32.totalorder %s28, 1
      %s335 = scalar_select %p334, %s28, 1
      %s336 = smul.addr %s335, 2
      %s337 = smul.addr %s336, 4
      %s338 = scalar_lea.vmem %s1, %s337
      %p339 = pneg %p49
      %p340 = pneg %p46
      %p341 = scmp.lt.s32.totalorder %s28, 1
      %s342 = scalar_select %p341, %s28, 1
      %s343 = smul.addr %s342, 4
      %s344 = scalar_lea.vmem %s2, %s343
      %p345 = pneg %p75
      %p346 = pneg %p72
      %p347 = pneg %p96
      %p348 = pneg %p93
      %p349 = pneg %p117
      %p350 = pneg %p114
      %p351 = pneg %p138
      %p352 = pneg %p135
      %p353 = pneg %p159
      %p354 = pneg %p156
      %p355 = pneg %p180
      %p356 = pneg %p177
      %p357 = pneg %p201
      %p358 = pneg %p198
      %p359 = pneg %p222
      %p360 = pneg %p219
      %p361 = pneg %p243
      %p362 = pneg %p240
      %p363 = pneg %p269
      %p364 = pneg %p266
      %p365 = scmp.lt.s32.totalorder %s28, 1
      %s366 = scalar_select %p365, %s28, 1
      %s367 = smul.addr %s366, 2
      %s368 = smul.addr %s367, 4
      %s369 = scalar_lea.vmem %s11, %s368
      %p370 = scmp.lt.s32.totalorder %s28, 1
      %s371 = scalar_select %p370, %s28, 1
      %s372 = smul.addr %s371, 2
      %s373 = smul.addr %s372, 4
      %s374 = scalar_lea.vmem %s1, %s373
      %p375 = scmp.lt.s32.totalorder %s28, 1
      %s376 = scalar_select %p375, %s28, 1
      %s377 = smul.addr %s376, 4
      %s378 = scalar_lea.vmem %s2, %s377
      %p379 = scmp.lt.s32.totalorder %s28, 1
      %s380 = scalar_select %p379, %s28, 1
      %s381 = smul.addr %s380, 2
      %s382 = smul.addr %s381, 4
      %s383 = scalar_lea.vmem %s11, %s382
      %v385 = vld [vmem:[%s374] sm:$0xf]
      %v386 = vld [vmem:[%s374 + $0x4] sm:$0xf]
      %v387 = vunpack.c.l.bf16 %v385
      %v388 = vunpack.c.l.bf16 %v386
      %v389 = vld [vmem:[%s378] sm:$0xf]
      %v390 = vld [vmem:[%s3] sm:$0xf]
      %v391 = vld [vmem:[%s3 + $0x4] sm:$0xf]
      %v392 = vld [vmem:[%s3 + $0x8] sm:$0xf]
      %v393 = vld [vmem:[%s3 + $0xc] sm:$0xf]
      %v394 = vld [vmem:[%s3 + $0x10] sm:$0xf]
      %v395 = vld [vmem:[%s3 + $0x14] sm:$0xf]
      %v396 = vld [vmem:[%s3 + $0x18] sm:$0xf]
      %v397 = vld [vmem:[%s3 + $0x1c] sm:$0xf]
      %v398 = vld [vmem:[%s3 + $0x20] sm:$0xf]
      %v399 = vld [vmem:[%s3 + $0x24] sm:$0xf]
      %v400 = vld [vmem:[%s3 + $0x28] sm:$0xf]
      %v401 = vld [vmem:[%s3 + $0x2c] sm:$0xf]
      %v402 = vld [vmem:[%s3 + $0x30] sm:$0xf]
      %v403 = vld [vmem:[%s3 + $0x34] sm:$0xf]
      %v404 = vld [vmem:[%s3 + $0x38] sm:$0xf]
      %v405 = vld [vmem:[%s3 + $0x3c] sm:$0xf]
      %v406 = vld [vmem:[%s4] sm:$0x1]
      %v408 = vlaneseq
      %v409 = vshrl.u32 %v408, 7
      %v410 = vsub.s32 0, %v409
      %v411 = vrot.slane %v406, %v410
      %v415 = vunpack.c.l.b16 %v385
      %v416 = vunpack.c.l.b16 %v386
      %v417 = vpack.c.b16 %v416, %v415
      %v435 = vunpack.c.l.b16 %v390
      %v436 = vunpack.c.l.b16 %v391
      %v437 = vunpack.c.l.b16 %v392
      %v438 = vunpack.c.l.b16 %v393
      %v439 = vunpack.c.l.b16 %v394
      %v440 = vunpack.c.l.b16 %v395
      %v441 = vunpack.c.l.b16 %v396
      %v442 = vunpack.c.l.b16 %v397
      %v443 = vunpack.c.l.b16 %v398
      %v444 = vunpack.c.l.b16 %v399
      %v445 = vunpack.c.l.b16 %v400
      %v446 = vunpack.c.l.b16 %v401
      %v447 = vunpack.c.l.b16 %v402
      %v448 = vunpack.c.l.b16 %v403
      %v449 = vunpack.c.l.b16 %v404
      %v450 = vunpack.c.l.b16 %v405
      %v451 = vpack.c.b16 %v436, %v435
      %v452 = vpack.c.b16 %v438, %v437
      %v453 = vpack.c.b16 %v440, %v439
      %v454 = vpack.c.b16 %v442, %v441
      %v455 = vpack.c.b16 %v444, %v443
      %v456 = vpack.c.b16 %v446, %v445
      %v457 = vpack.c.b16 %v448, %v447
      %v458 = vpack.c.b16 %v450, %v449
      %467 = vmatprep.subr.bf16.mxu0 0
      %468 = vmatpush1.bf16.msra.mxu0 %v451
      %469 = vmatprep.subr.bf16.mxu0 0
      %470 = vmatpush1.bf16.msra.mxu0 %v452
      %471 = vmatprep.subr.bf16.mxu0 0
      %472 = vmatpush1.bf16.msra.mxu0 %v453
      %473 = vmatprep.subr.bf16.mxu0 0
      %474 = vmatpush1.bf16.msra.mxu0 %v454
      %475 = vmatprep.subr.bf16.mxu0 0
      %476 = vmatpush1.bf16.msra.mxu0 %v455
      %477 = vmatprep.subr.bf16.mxu0 0
      %478 = vmatpush1.bf16.msra.mxu0 %v456
      %479 = vmatprep.subr.bf16.mxu0 0
      %480 = vmatpush1.bf16.msra.mxu0 %v457
      %481 = vmatprep.subr.bf16.mxu0 0
      %482 = vmatpush1.bf16.msra.mxu0 %v458
      %483 = vmatprep.subr.bf16.mxu0 0
      %484 = vmatpush1.bf16.msra.mxu0 0
      %485 = vmatprep.subr.bf16.mxu0 0
      %486 = vmatpush1.bf16.msra.mxu0 0
      %487 = vmatprep.subr.bf16.mxu0 0
      %488 = vmatpush1.bf16.msra.mxu0 0
      %489 = vmatprep.subr.bf16.mxu0 0
      %490 = vmatpush1.bf16.msra.mxu0 0
      %491 = vmatprep.subr.bf16.mxu0 0
      %492 = vmatpush1.bf16.msra.mxu0 0
      %493 = vmatprep.subr.bf16.mxu0 0
      %494 = vmatpush1.bf16.msra.mxu0 0
      %495 = vmatprep.subr.bf16.mxu0 0
      %496 = vmatpush1.bf16.msra.mxu0 0
      %497 = vmatprep.subr.bf16.mxu0 0
      %498 = vmatpush1.bf16.msra.mxu0 0
      %499 = vmatprep.mubr.bf16.mxu0 0
      %500 = vmatmul.mubr.bf16.gmra.mrb[0].mxu0 %v417
      %v501 = vpop.f32.mrb[0].mxu0
      %v502 = vadd.f32 %v411, %v501
      %v503 = vpop.f32.mrb[0].mxu0
      %v504 = vpop.f32.mrb[0].mxu0
      %v505 = vadd.f32 %v411, %v504
      %v506 = vpop.f32.mrb[0].mxu0
      %507 = vdwg.mxu0
      %v508 = vmul.f32 %v502, 0.17677669
      %v509 = vmul.f32 %v505, 0.17677669
      %v510 = vld [vmem:[%s5] sm:$0xff]
      %v511 = vld [vmem:[%s5 + $0x8] sm:$0xff]
      %v512 = vld [vmem:[%s5 + $0x10] sm:$0xff]
      %v513 = vld [vmem:[%s5 + $0x18] sm:$0xff]
      %v514 = vld [vmem:[%s5 + $0x20] sm:$0xff]
      %v515 = vld [vmem:[%s5 + $0x28] sm:$0xff]
      %v516 = vld [vmem:[%s5 + $0x30] sm:$0xff]
      %v517 = vld [vmem:[%s5 + $0x38] sm:$0xff]
      %v518 = vld [vmem:[%s5 + $0x40] sm:$0xff]
      %v519 = vld [vmem:[%s5 + $0x48] sm:$0xff]
      %v520 = vld [vmem:[%s5 + $0x50] sm:$0xff]
      %v521 = vld [vmem:[%s5 + $0x58] sm:$0xff]
      %v522 = vld [vmem:[%s5 + $0x60] sm:$0xff]
      %v523 = vld [vmem:[%s5 + $0x68] sm:$0xff]
      %v524 = vld [vmem:[%s5 + $0x70] sm:$0xff]
      %v525 = vld [vmem:[%s5 + $0x78] sm:$0xff]
      %v526 = vld [vmem:[%s6] sm:$0x3]
      %v528 = vlaneseq
      %v529 = vshrl.u32 %v528, 7
      %v530 = vsub.s32 0, %v529
      %v531 = vrot.slane %v526, %v530
      %v532 = vlaneseq
      %v533 = vshrl.u32 %v532, 7
      %v534 = vsub.s32 1, %v533
      %v535 = vrot.slane %v526, %v534
      %v554 = vunpack.c.l.b16 %v510
      %v555 = vunpack.c.h.b16 %v510
      %v556 = vunpack.c.l.b16 %v511
      %v557 = vunpack.c.h.b16 %v511
      %v558 = vunpack.c.l.b16 %v512
      %v559 = vunpack.c.h.b16 %v512
      %v560 = vunpack.c.l.b16 %v513
      %v561 = vunpack.c.h.b16 %v513
      %v562 = vunpack.c.l.b16 %v514
      %v563 = vunpack.c.h.b16 %v514
      %v564 = vunpack.c.l.b16 %v515
      %v565 = vunpack.c.h.b16 %v515
      %v566 = vunpack.c.l.b16 %v516
      %v567 = vunpack.c.h.b16 %v516
      %v568 = vunpack.c.l.b16 %v517
      %v569 = vunpack.c.h.b16 %v517
      %v570 = vunpack.c.l.b16 %v518
      %v571 = vunpack.c.h.b16 %v518
      %v572 = vunpack.c.l.b16 %v519
      %v573 = vunpack.c.h.b16 %v519
      %v574 = vunpack.c.l.b16 %v520
      %v575 = vunpack.c.h.b16 %v520
      %v576 = vunpack.c.l.b16 %v521
      %v577 = vunpack.c.h.b16 %v521
      %v578 = vunpack.c.l.b16 %v522
      %v579 = vunpack.c.h.b16 %v522
      %v580 = vunpack.c.l.b16 %v523
      %v581 = vunpack.c.h.b16 %v523
      %v582 = vunpack.c.l.b16 %v524
      %v583 = vunpack.c.h.b16 %v524
      %v584 = vunpack.c.l.b16 %v525
      %v585 = vunpack.c.h.b16 %v525
      %v586 = vpack.c.b16 %v556, %v554
      %v587 = vpack.c.b16 %v557, %v555
      %v588 = vpack.c.b16 %v560, %v558
      %v589 = vpack.c.b16 %v561, %v559
      %v590 = vpack.c.b16 %v564, %v562
      %v591 = vpack.c.b16 %v565, %v563
      %v592 = vpack.c.b16 %v568, %v566
      %v593 = vpack.c.b16 %v569, %v567
      %v594 = vpack.c.b16 %v572, %v570
      %v595 = vpack.c.b16 %v573, %v571
      %v596 = vpack.c.b16 %v576, %v574
      %v597 = vpack.c.b16 %v577, %v575
      %v598 = vpack.c.b16 %v580, %v578
      %v599 = vpack.c.b16 %v581, %v579
      %v600 = vpack.c.b16 %v584, %v582
      %v601 = vpack.c.b16 %v585, %v583
      %618 = vmatprep.subr.bf16.mxu0 %v587
      %619 = vmatpush1.bf16.msra.mxu0 %v586
      %620 = vmatprep.subr.bf16.mxu0 %v589
      %621 = vmatpush1.bf16.msra.mxu0 %v588
      %622 = vmatprep.subr.bf16.mxu0 %v591
      %623 = vmatpush1.bf16.msra.mxu0 %v590
      %624 = vmatprep.subr.bf16.mxu0 %v593
      %625 = vmatpush1.bf16.msra.mxu0 %v592
      %626 = vmatprep.subr.bf16.mxu0 %v595
      %627 = vmatpush1.bf16.msra.mxu0 %v594
      %628 = vmatprep.subr.bf16.mxu0 %v597
      %629 = vmatpush1.bf16.msra.mxu0 %v596
      %630 = vmatprep.subr.bf16.mxu0 %v599
      %631 = vmatpush1.bf16.msra.mxu0 %v598
      %632 = vmatprep.subr.bf16.mxu0 %v601
      %633 = vmatpush1.bf16.msra.mxu0 %v600
      %634 = vmatprep.subr.bf16.mxu0 0
      %635 = vmatpush1.bf16.msra.mxu0 0
      %636 = vmatprep.subr.bf16.mxu0 0
      %637 = vmatpush1.bf16.msra.mxu0 0
      %638 = vmatprep.subr.bf16.mxu0 0
      %639 = vmatpush1.bf16.msra.mxu0 0
      %640 = vmatprep.subr.bf16.mxu0 0
      %641 = vmatpush1.bf16.msra.mxu0 0
      %642 = vmatprep.subr.bf16.mxu0 0
      %643 = vmatpush1.bf16.msra.mxu0 0
      %644 = vmatprep.subr.bf16.mxu0 0
      %645 = vmatpush1.bf16.msra.mxu0 0
      %646 = vmatprep.subr.bf16.mxu0 0
      %647 = vmatpush1.bf16.msra.mxu0 0
      %648 = vmatprep.subr.bf16.mxu0 0
      %649 = vmatpush1.bf16.msra.mxu0 0
      %650 = vmatprep.mubr.bf16.mxu0 0
      %651 = vmatmul.mubr.bf16.gmra.mrb[0].mxu0 %v389
      %v652 = vpop.f32.mrb[0].mxu0
      %v653 = vadd.f32 %v531, %v652
      %v654 = vpop.f32.mrb[0].mxu0
      %v655 = vadd.f32 %v535, %v654
      %v656 = vpop.f32.mrb[0].mxu0
      %v657 = vpop.f32.mrb[0].mxu0
      %658 = vdwg.mxu0
      %s659 = sld [smem:[#allocation4 + %s28]]
      %v660 = vlaneseq
      %v661 = vand.u32 %v660, 127
      %v662 = vstv %s659
      %vm663 = vcmp.lt.s32.totalorder %v661, %v662
      %v664 = vpack.c.bf16 %v509, %v508
      %v665 = vpack.c.bf16 %v653, %v653
      %v666 = vpack.c.bf16 %v655, %v655
      %vm667 = vcmask 261120
      %v669 = vsel %vm667, %v664, 0
      %v672 = vsel %vm667, %v665, 0
      %674 = vmatprep.subr.bf16.mxu0 0
      %675 = vmatpush1.bf16.xpose.msra.mxu0 %v672
      %676 = vmatprep.subr.bf16.mxu0 0
      %677 = vmatpush1.bf16.xpose.msra.mxu0 0
      %678 = vmatprep.subr.bf16.mxu0 0
      %679 = vmatpush1.bf16.xpose.msra.mxu0 0
      %680 = vmatprep.subr.bf16.mxu0 0
      %681 = vmatpush1.bf16.xpose.msra.mxu0 0
      %682 = vmatprep.subr.bf16.mxu0 0
      %683 = vmatpush1.bf16.xpose.msra.mxu0 0
      %684 = vmatprep.subr.bf16.mxu0 0
      %685 = vmatpush1.bf16.xpose.msra.mxu0 0
      %686 = vmatprep.subr.bf16.mxu0 0
      %687 = vmatpush1.bf16.xpose.msra.mxu0 0
      %688 = vmatprep.subr.bf16.mxu0 0
      %689 = vmatpush1.bf16.xpose.msra.mxu0 0
      %690 = vmatprep.subr.bf16.mxu0 0
      %691 = vmatpush1.bf16.xpose.msra.mxu0 0
      %692 = vmatprep.subr.bf16.mxu0 0
      %693 = vmatpush1.bf16.xpose.msra.mxu0 0
      %694 = vmatprep.subr.bf16.mxu0 0
      %695 = vmatpush1.bf16.xpose.msra.mxu0 0
      %696 = vmatprep.subr.bf16.mxu0 0
      %697 = vmatpush1.bf16.xpose.msra.mxu0 0
      %698 = vmatprep.subr.bf16.mxu0 0
      %699 = vmatpush1.bf16.xpose.msra.mxu0 0
      %700 = vmatprep.subr.bf16.mxu0 0
      %701 = vmatpush1.bf16.xpose.msra.mxu0 0
      %702 = vmatprep.subr.bf16.mxu0 0
      %703 = vmatpush1.bf16.xpose.msra.mxu0 0
      %704 = vmatprep.subr.bf16.mxu0 0
      %705 = vmatpush1.bf16.xpose.msra.mxu0 0
      %706 = vmatprep.mubr.bf16.mxu0 0
      %707 = vmatmul.mubr.bf16.gmra.mrb[0].mxu0 %v669
      %v708 = vpop.f32.mrb[0].mxu0
      %v709 = vadd.f32 0.0, %v708
      %v710 = vpop.f32.mrb[0].mxu0
      %v711 = vpop.f32.mrb[0].mxu0
      %v712 = vadd.f32 0.0, %v711
      %v713 = vpop.f32.mrb[0].mxu0
      %714 = vdwg.mxu0
      %v715 = vsel %vm663, %v709, -1e+09
      %v716 = vsel %vm663, %v712, -1e+09
      %vm717 = vcmask 64512
      %v718 = vsel %vm717, %v715, -inf
      %719 = vmax.xlane.f32.xlu0 %v718
      %v720 = vpop.xlane.xlu0 %719
      %v721 = vsel %vm717, %v716, -inf
      %722 = vmax.xlane.f32.xlu0 %v721
      %v723 = vpop.xlane.xlu0 %722
      %v724 = vsub.f32 %v715, %v720
      %v725 = vsub.f32 %v716, %v723
      %v726 = vmul.f32 %v724, 1.442695
      %v727 = vpow.pop %v726
      %v728 = vmul.f32 %v725, 1.442695
      %v729 = vpow.pop %v728
      %v730 = vsel %vm717, %v727, 0.0
      %731 = vadd.xlane.f32.xlu0 %v730
      %v732 = vpop.xlane.xlu0 %731
      %v733 = vsel %vm717, %v729, 0.0
      %734 = vadd.xlane.f32.xlu0 %v733
      %v735 = vpop.xlane.xlu0 %734
      %v736 = vrcp.pop %v732
      %v737 = vrcp.pop %v735
      %v738 = vmul.f32 %v727, %v736
      %v739 = vmul.f32 %v729, %v737
      %v740 = vpack.c.bf16 %v739, %v738
      %v742 = vsel %vm717, %v740, 0
      %vm744 = vcmask 1043456
      %v746 = vsel %vm744, %v666, 0
      %748 = vmatprep.subr.bf16.mxu0 0
      %749 = vmatpush1.bf16.msra.mxu0 %v746
      %750 = vmatprep.subr.bf16.mxu0 0
      %751 = vmatpush1.bf16.msra.mxu0 0
      %752 = vmatprep.subr.bf16.mxu0 0
      %753 = vmatpush1.bf16.msra.mxu0 0
      %754 = vmatprep.subr.bf16.mxu0 0
      %755 = vmatpush1.bf16.msra.mxu0 0
      %756 = vmatprep.subr.bf16.mxu0 0
      %757 = vmatpush1.bf16.msra.mxu0 0
      %758 = vmatprep.subr.bf16.mxu0 0
      %759 = vmatpush1.bf16.msra.mxu0 0
      %760 = vmatprep.subr.bf16.mxu0 0
      %761 = vmatpush1.bf16.msra.mxu0 0
      %762 = vmatprep.subr.bf16.mxu0 0
      %763 = vmatpush1.bf16.msra.mxu0 0
      %764 = vmatprep.subr.bf16.mxu0 0
      %765 = vmatpush1.bf16.msra.mxu0 0
      %766 = vmatprep.subr.bf16.mxu0 0
      %767 = vmatpush1.bf16.msra.mxu0 0
      %768 = vmatprep.subr.bf16.mxu0 0
      %769 = vmatpush1.bf16.msra.mxu0 0
      %770 = vmatprep.subr.bf16.mxu0 0
      %771 = vmatpush1.bf16.msra.mxu0 0
      %772 = vmatprep.subr.bf16.mxu0 0
      %773 = vmatpush1.bf16.msra.mxu0 0
      %774 = vmatprep.subr.bf16.mxu0 0
      %775 = vmatpush1.bf16.msra.mxu0 0
      %776 = vmatprep.subr.bf16.mxu0 0
      %777 = vmatpush1.bf16.msra.mxu0 0
      %778 = vmatprep.subr.bf16.mxu0 0
      %779 = vmatpush1.bf16.msra.mxu0 0
      %780 = vmatprep.mubr.bf16.mxu0 0
      %781 = vmatmul.mubr.bf16.gmra.mrb[0].mxu0 %v742
      %v782 = vpop.f32.mrb[0].mxu0
      %v783 = vadd.f32 0.0, %v782
      %v784 = vpop.f32.mrb[0].mxu0
      %v785 = vpop.f32.mrb[0].mxu0
      %v786 = vadd.f32 0.0, %v785
      %v787 = vpop.f32.mrb[0].mxu0
      %788 = vdwg.mxu0
      %789 = vst.msk [vmem:[#allocation2] sm:$0xff] %vm667, %v783
      %790 = vst.msk [vmem:[#allocation2 + $0x8] sm:$0xff] %vm667, %v786
      %792 = vrot.lane.b32.xlu0 %v664, 96
      %v793 = vpop.permute.xlu0 %792
      %795 = vrot.lane.b32.xlu0 %v665, 96
      %v796 = vpop.permute.xlu0 %795
      %v798 = vsel %vm667, %v793, 0
      %v801 = vsel %vm667, %v796, 0
      %803 = vmatprep.subr.bf16.mxu0 0
      %804 = vmatpush1.bf16.xpose.msra.mxu0 %v801
      %805 = vmatprep.subr.bf16.mxu0 0
      %806 = vmatpush1.bf16.xpose.msra.mxu0 0
      %807 = vmatprep.subr.bf16.mxu0 0
      %808 = vmatpush1.bf16.xpose.msra.mxu0 0
      %809 = vmatprep.subr.bf16.mxu0 0
      %810 = vmatpush1.bf16.xpose.msra.mxu0 0
      %811 = vmatprep.subr.bf16.mxu0 0
      %812 = vmatpush1.bf16.xpose.msra.mxu0 0
      %813 = vmatprep.subr.bf16.mxu0 0
      %814 = vmatpush1.bf16.xpose.msra.mxu0 0
      %815 = vmatprep.subr.bf16.mxu0 0
      %816 = vmatpush1.bf16.xpose.msra.mxu0 0
      %817 = vmatprep.subr.bf16.mxu0 0
      %818 = vmatpush1.bf16.xpose.msra.mxu0 0
      %819 = vmatprep.subr.bf16.mxu0 0
      %820 = vmatpush1.bf16.xpose.msra.mxu0 0
      %821 = vmatprep.subr.bf16.mxu0 0
      %822 = vmatpush1.bf16.xpose.msra.mxu0 0
      %823 = vmatprep.subr.bf16.mxu0 0
      %824 = vmatpush1.bf16.xpose.msra.mxu0 0
      %825 = vmatprep.subr.bf16.mxu0 0
      %826 = vmatpush1.bf16.xpose.msra.mxu0 0
      %827 = vmatprep.subr.bf16.mxu0 0
      %828 = vmatpush1.bf16.xpose.msra.mxu0 0
      %829 = vmatprep.subr.bf16.mxu0 0
      %830 = vmatpush1.bf16.xpose.msra.mxu0 0
      %831 = vmatprep.subr.bf16.mxu0 0
      %832 = vmatpush1.bf16.xpose.msra.mxu0 0
      %833 = vmatprep.subr.bf16.mxu0 0
      %834 = vmatpush1.bf16.xpose.msra.mxu0 0
      %835 = vmatprep.mubr.bf16.mxu0 0
      %836 = vmatmul.mubr.bf16.gmra.mrb[0].mxu0 %v798
      %v837 = vpop.f32.mrb[0].mxu0
      %v838 = vadd.f32 0.0, %v837
      %v839 = vpop.f32.mrb[0].mxu0
      %v840 = vpop.f32.mrb[0].mxu0
      %v841 = vadd.f32 0.0, %v840
      %v842 = vpop.f32.mrb[0].mxu0
      %843 = vdwg.mxu0
      %v844 = vsel %vm663, %v838, -1e+09
      %v845 = vsel %vm663, %v841, -1e+09
      %v846 = vsel %vm717, %v844, -inf
      %847 = vmax.xlane.f32.xlu0 %v846
      %v848 = vpop.xlane.xlu0 %847
      %v849 = vsel %vm717, %v845, -inf
      %850 = vmax.xlane.f32.xlu0 %v849
      %v851 = vpop.xlane.xlu0 %850
      %v852 = vsub.f32 %v844, %v848
      %v853 = vsub.f32 %v845, %v851
      %v854 = vmul.f32 %v852, 1.442695
      %v855 = vpow.pop %v854
      %v856 = vmul.f32 %v853, 1.442695
      %v857 = vpow.pop %v856
      %v858 = vsel %vm717, %v855, 0.0
      %859 = vadd.xlane.f32.xlu0 %v858
      %v860 = vpop.xlane.xlu0 %859
      %v861 = vsel %vm717, %v857, 0.0
      %862 = vadd.xlane.f32.xlu0 %v861
      %v863 = vpop.xlane.xlu0 %862
      %v864 = vrcp.pop %v860
      %v865 = vrcp.pop %v863
      %v866 = vmul.f32 %v855, %v864
      %v867 = vmul.f32 %v857, %v865
      %v868 = vpack.c.bf16 %v867, %v866
      %870 = vrot.lane.b32.xlu0 %v666, 96
      %v871 = vpop.permute.xlu0 %870
      %v873 = vsel %vm717, %v868, 0
      %v876 = vsel %vm744, %v871, 0
      %878 = vmatprep.subr.bf16.mxu0 0
      %879 = vmatpush1.bf16.msra.mxu0 %v876
      %880 = vmatprep.subr.bf16.mxu0 0
      %881 = vmatpush1.bf16.msra.mxu0 0
      %882 = vmatprep.subr.bf16.mxu0 0
      %883 = vmatpush1.bf16.msra.mxu0 0
      %884 = vmatprep.subr.bf16.mxu0 0
      %885 = vmatpush1.bf16.msra.mxu0 0
      %886 = vmatprep.subr.bf16.mxu0 0
      %887 = vmatpush1.bf16.msra.mxu0 0
      %888 = vmatprep.subr.bf16.mxu0 0
      %889 = vmatpush1.bf16.msra.mxu0 0
      %890 = vmatprep.subr.bf16.mxu0 0
      %891 = vmatpush1.bf16.msra.mxu0 0
      %892 = vmatprep.subr.bf16.mxu0 0
      %893 = vmatpush1.bf16.msra.mxu0 0
      %894 = vmatprep.subr.bf16.mxu0 0
      %895 = vmatpush1.bf16.msra.mxu0 0
      %896 = vmatprep.subr.bf16.mxu0 0
      %897 = vmatpush1.bf16.msra.mxu0 0
      %898 = vmatprep.subr.bf16.mxu0 0
      %899 = vmatpush1.bf16.msra.mxu0 0
      %900 = vmatprep.subr.bf16.mxu0 0
      %901 = vmatpush1.bf16.msra.mxu0 0
      %902 = vmatprep.subr.bf16.mxu0 0
      %903 = vmatpush1.bf16.msra.mxu0 0
      %904 = vmatprep.subr.bf16.mxu0 0
      %905 = vmatpush1.bf16.msra.mxu0 0
      %906 = vmatprep.subr.bf16.mxu0 0
      %907 = vmatpush1.bf16.msra.mxu0 0
      %908 = vmatprep.subr.bf16.mxu0 0
      %909 = vmatpush1.bf16.msra.mxu0 0
      %910 = vmatprep.mubr.bf16.mxu0 0
      %911 = vmatmul.mubr.bf16.gmra.mrb[0].mxu0 %v873
      %v912 = vpop.f32.mrb[0].mxu0
      %v913 = vadd.f32 0.0, %v912
      %v914 = vpop.f32.mrb[0].mxu0
      %v915 = vpop.f32.mrb[0].mxu0
      %v916 = vadd.f32 0.0, %v915
      %v917 = vpop.f32.mrb[0].mxu0
      %918 = vdwg.mxu0
      %921 = vrot.lane.b32.xlu0 %v913, 32
      %v922 = vpop.permute.xlu0 %921
      %923 = vrot.lane.b32.xlu0 %v916, 32
      %v924 = vpop.permute.xlu0 %923
      %vm927 = vcmask 523520
      %928 = vst.msk [vmem:[#allocation2] sm:$0xff] %vm927, %v922
      %929 = vst.msk [vmem:[#allocation2 + $0x8] sm:$0xff] %vm927, %v924
      %930 = vrot.lane.b32.xlu0 %v664, 64
      %v931 = vpop.permute.xlu0 %930
      %932 = vrot.lane.b32.xlu0 %v665, 64
      %v933 = vpop.permute.xlu0 %932
      %v935 = vsel %vm667, %v931, 0
      %v938 = vsel %vm667, %v933, 0
      %940 = vmatprep.subr.bf16.mxu0 0
      %941 = vmatpush1.bf16.xpose.msra.mxu0 %v938
      %942 = vmatprep.subr.bf16.mxu0 0
      %943 = vmatpush1.bf16.xpose.msra.mxu0 0
      %944 = vmatprep.subr.bf16.mxu0 0
      %945 = vmatpush1.bf16.xpose.msra.mxu0 0
      %946 = vmatprep.subr.bf16.mxu0 0
      %947 = vmatpush1.bf16.xpose.msra.mxu0 0
      %948 = vmatprep.subr.bf16.mxu0 0
      %949 = vmatpush1.bf16.xpose.msra.mxu0 0
      %950 = vmatprep.subr.bf16.mxu0 0
      %951 = vmatpush1.bf16.xpose.msra.mxu0 0
      %952 = vmatprep.subr.bf16.mxu0 0
      %953 = vmatpush1.bf16.xpose.msra.mxu0 0
      %954 = vmatprep.subr.bf16.mxu0 0
      %955 = vmatpush1.bf16.xpose.msra.mxu0 0
      %956 = vmatprep.subr.bf16.mxu0 0
      %957 = vmatpush1.bf16.xpose.msra.mxu0 0
      %958 = vmatprep.subr.bf16.mxu0 0
      %959 = vmatpush1.bf16.xpose.msra.mxu0 0
      %960 = vmatprep.subr.bf16.mxu0 0
      %961 = vmatpush1.bf16.xpose.msra.mxu0 0
      %962 = vmatprep.subr.bf16.mxu0 0
      %963 = vmatpush1.bf16.xpose.msra.mxu0 0
      %964 = vmatprep.subr.bf16.mxu0 0
      %965 = vmatpush1.bf16.xpose.msra.mxu0 0
      %966 = vmatprep.subr.bf16.mxu0 0
      %967 = vmatpush1.bf16.xpose.msra.mxu0 0
      %968 = vmatprep.subr.bf16.mxu0 0
      %969 = vmatpush1.bf16.xpose.msra.mxu0 0
      %970 = vmatprep.subr.bf16.mxu0 0
      %971 = vmatpush1.bf16.xpose.msra.mxu0 0
      %972 = vmatprep.mubr.bf16.mxu0 0
      %973 = vmatmul.mubr.bf16.gmra.mrb[0].mxu0 %v935
      %v974 = vpop.f32.mrb[0].mxu0
      %v975 = vadd.f32 0.0, %v974
      %v976 = vpop.f32.mrb[0].mxu0
      %v977 = vpop.f32.mrb[0].mxu0
      %v978 = vadd.f32 0.0, %v977
      %v979 = vpop.f32.mrb[0].mxu0
      %980 = vdwg.mxu0
      %v981 = vsel %vm663, %v975, -1e+09
      %v982 = vsel %vm663, %v978, -1e+09
      %v983 = vsel %vm717, %v981, -inf
      %984 = vmax.xlane.f32.xlu0 %v983
      %v985 = vpop.xlane.xlu0 %984
      %v986 = vsel %vm717, %v982, -inf
      %987 = vmax.xlane.f32.xlu0 %v986
      %v988 = vpop.xlane.xlu0 %987
      %v989 = vsub.f32 %v981, %v985
      %v990 = vsub.f32 %v982, %v988
      %v991 = vmul.f32 %v989, 1.442695
      %v992 = vpow.pop %v991
      %v993 = vmul.f32 %v990, 1.442695
      %v994 = vpow.pop %v993
      %v995 = vsel %vm717, %v992, 0.0
      %996 = vadd.xlane.f32.xlu0 %v995
      %v997 = vpop.xlane.xlu0 %996
      %v998 = vsel %vm717, %v994, 0.0
      %999 = vadd.xlane.f32.xlu0 %v998
      %v1000 = vpop.xlane.xlu0 %999
      %v1001 = vrcp.pop %v997
      %v1002 = vrcp.pop %v1000
      %v1003 = vmul.f32 %v992, %v1001
      %v1004 = vmul.f32 %v994, %v1002
      %v1005 = vpack.c.bf16 %v1004, %v1003
      %1006 = vrot.lane.b32.xlu0 %v666, 64
      %v1007 = vpop.permute.xlu0 %1006
      %v1009 = vsel %vm717, %v1005, 0
      %v1012 = vsel %vm744, %v1007, 0
      %1014 = vmatprep.subr.bf16.mxu0 0
      %1015 = vmatpush1.bf16.msra.mxu0 %v1012
      %1016 = vmatprep.subr.bf16.mxu0 0
      %1017 = vmatpush1.bf16.msra.mxu0 0
      %1018 = vmatprep.subr.bf16.mxu0 0
      %1019 = vmatpush1.bf16.msra.mxu0 0
      %1020 = vmatprep.subr.bf16.mxu0 0
      %1021 = vmatpush1.bf16.msra.mxu0 0
      %1022 = vmatprep.subr.bf16.mxu0 0
      %1023 = vmatpush1.bf16.msra.mxu0 0
      %1024 = vmatprep.subr.bf16.mxu0 0
      %1025 = vmatpush1.bf16.msra.mxu0 0
      %1026 = vmatprep.subr.bf16.mxu0 0
      %1027 = vmatpush1.bf16.msra.mxu0 0
      %1028 = vmatprep.subr.bf16.mxu0 0
      %1029 = vmatpush1.bf16.msra.mxu0 0
      %1030 = vmatprep.subr.bf16.mxu0 0
      %1031 = vmatpush1.bf16.msra.mxu0 0
      %1032 = vmatprep.subr.bf16.mxu0 0
      %1033 = vmatpush1.bf16.msra.mxu0 0
      %1034 = vmatprep.subr.bf16.mxu0 0
      %1035 = vmatpush1.bf16.msra.mxu0 0
      %1036 = vmatprep.subr.bf16.mxu0 0
      %1037 = vmatpush1.bf16.msra.mxu0 0
      %1038 = vmatprep.subr.bf16.mxu0 0
      %1039 = vmatpush1.bf16.msra.mxu0 0
      %1040 = vmatprep.subr.bf16.mxu0 0
      %1041 = vmatpush1.bf16.msra.mxu0 0
      %1042 = vmatprep.subr.bf16.mxu0 0
      %1043 = vmatpush1.bf16.msra.mxu0 0
      %1044 = vmatprep.subr.bf16.mxu0 0
      %1045 = vmatpush1.bf16.msra.mxu0 0
      %1046 = vmatprep.mubr.bf16.mxu0 0
      %1047 = vmatmul.mubr.bf16.gmra.mrb[0].mxu0 %v1009
      %v1048 = vpop.f32.mrb[0].mxu0
      %v1049 = vadd.f32 0.0, %v1048
      %v1050 = vpop.f32.mrb[0].mxu0
      %v1051 = vpop.f32.mrb[0].mxu0
      %v1052 = vadd.f32 0.0, %v1051
      %v1053 = vpop.f32.mrb[0].mxu0
      %1054 = vdwg.mxu0
      %1057 = vrot.lane.b32.xlu0 %v1049, 64
      %v1058 = vpop.permute.xlu0 %1057
      %1059 = vrot.lane.b32.xlu0 %v1052, 64
      %v1060 = vpop.permute.xlu0 %1059
      %vm1063 = vcmask 785920
      %1064 = vst.msk [vmem:[#allocation2] sm:$0xff] %vm1063, %v1058
      %1065 = vst.msk [vmem:[#allocation2 + $0x8] sm:$0xff] %vm1063, %v1060
      %1066 = vrot.lane.b32.xlu0 %v664, 32
      %v1067 = vpop.permute.xlu0 %1066
      %1068 = vrot.lane.b32.xlu0 %v665, 32
      %v1069 = vpop.permute.xlu0 %1068
      %v1071 = vsel %vm667, %v1067, 0
      %v1074 = vsel %vm667, %v1069, 0
      %1076 = vmatprep.subr.bf16.mxu0 0
      %1077 = vmatpush1.bf16.xpose.msra.mxu0 %v1074
      %1078 = vmatprep.subr.bf16.mxu0 0
      %1079 = vmatpush1.bf16.xpose.msra.mxu0 0
      %1080 = vmatprep.subr.bf16.mxu0 0
      %1081 = vmatpush1.bf16.xpose.msra.mxu0 0
      %1082 = vmatprep.subr.bf16.mxu0 0
      %1083 = vmatpush1.bf16.xpose.msra.mxu0 0
      %1084 = vmatprep.subr.bf16.mxu0 0
      %1085 = vmatpush1.bf16.xpose.msra.mxu0 0
      %1086 = vmatprep.subr.bf16.mxu0 0
      %1087 = vmatpush1.bf16.xpose.msra.mxu0 0
      %1088 = vmatprep.subr.bf16.mxu0 0
      %1089 = vmatpush1.bf16.xpose.msra.mxu0 0
      %1090 = vmatprep.subr.bf16.mxu0 0
      %1091 = vmatpush1.bf16.xpose.msra.mxu0 0
      %1092 = vmatprep.subr.bf16.mxu0 0
      %1093 = vmatpush1.bf16.xpose.msra.mxu0 0
      %1094 = vmatprep.subr.bf16.mxu0 0
      %1095 = vmatpush1.bf16.xpose.msra.mxu0 0
      %1096 = vmatprep.subr.bf16.mxu0 0
      %1097 = vmatpush1.bf16.xpose.msra.mxu0 0
      %1098 = vmatprep.subr.bf16.mxu0 0
      %1099 = vmatpush1.bf16.xpose.msra.mxu0 0
      %1100 = vmatprep.subr.bf16.mxu0 0
      %1101 = vmatpush1.bf16.xpose.msra.mxu0 0
      %1102 = vmatprep.subr.bf16.mxu0 0
      %1103 = vmatpush1.bf16.xpose.msra.mxu0 0
      %1104 = vmatprep.subr.bf16.mxu0 0
      %1105 = vmatpush1.bf16.xpose.msra.mxu0 0
      %1106 = vmatprep.subr.bf16.mxu0 0
      %1107 = vmatpush1.bf16.xpose.msra.mxu0 0
      %1108 = vmatprep.mubr.bf16.mxu0 0
      %1109 = vmatmul.mubr.bf16.gmra.mrb[0].mxu0 %v1071
      %v1110 = vpop.f32.mrb[0].mxu0
      %v1111 = vadd.f32 0.0, %v1110
      %v1112 = vpop.f32.mrb[0].mxu0
      %v1113 = vpop.f32.mrb[0].mxu0
      %v1114 = vadd.f32 0.0, %v1113
      %v1115 = vpop.f32.mrb[0].mxu0
      %1116 = vdwg.mxu0
      %v1117 = vsel %vm663, %v1111, -1e+09
      %v1118 = vsel %vm663, %v1114, -1e+09
      %v1119 = vsel %vm717, %v1117, -inf
      %1120 = vmax.xlane.f32.xlu0 %v1119
      %v1121 = vpop.xlane.xlu0 %1120
      %v1122 = vsel %vm717, %v1118, -inf
      %1123 = vmax.xlane.f32.xlu0 %v1122
      %v1124 = vpop.xlane.xlu0 %1123
      %v1125 = vsub.f32 %v1117, %v1121
      %v1126 = vsub.f32 %v1118, %v1124
      %v1127 = vmul.f32 %v1125, 1.442695
      %v1128 = vpow.pop %v1127
      %v1129 = vmul.f32 %v1126, 1.442695
      %v1130 = vpow.pop %v1129
      %v1131 = vsel %vm717, %v1128, 0.0
      %1132 = vadd.xlane.f32.xlu0 %v1131
      %v1133 = vpop.xlane.xlu0 %1132
      %v1134 = vsel %vm717, %v1130, 0.0
      %1135 = vadd.xlane.f32.xlu0 %v1134
      %v1136 = vpop.xlane.xlu0 %1135
      %v1137 = vrcp.pop %v1133
      %v1138 = vrcp.pop %v1136
      %v1139 = vmul.f32 %v1128, %v1137
      %v1140 = vmul.f32 %v1130, %v1138
      %v1141 = vpack.c.bf16 %v1140, %v1139
      %1142 = vrot.lane.b32.xlu0 %v666, 32
      %v1143 = vpop.permute.xlu0 %1142
      %v1145 = vsel %vm717, %v1141, 0
      %v1148 = vsel %vm744, %v1143, 0
      %1150 = vmatprep.subr.bf16.mxu0 0
      %1151 = vmatpush1.bf16.msra.mxu0 %v1148
      %1152 = vmatprep.subr.bf16.mxu0 0
      %1153 = vmatpush1.bf16.msra.mxu0 0
      %1154 = vmatprep.subr.bf16.mxu0 0
      %1155 = vmatpush1.bf16.msra.mxu0 0
      %1156 = vmatprep.subr.bf16.mxu0 0
      %1157 = vmatpush1.bf16.msra.mxu0 0
      %1158 = vmatprep.subr.bf16.mxu0 0
      %1159 = vmatpush1.bf16.msra.mxu0 0
      %1160 = vmatprep.subr.bf16.mxu0 0
      %1161 = vmatpush1.bf16.msra.mxu0 0
      %1162 = vmatprep.subr.bf16.mxu0 0
      %1163 = vmatpush1.bf16.msra.mxu0 0
      %1164 = vmatprep.subr.bf16.mxu0 0
      %1165 = vmatpush1.bf16.msra.mxu0 0
      %1166 = vmatprep.subr.bf16.mxu0 0
      %1167 = vmatpush1.bf16.msra.mxu0 0
      %1168 = vmatprep.subr.bf16.mxu0 0
      %1169 = vmatpush1.bf16.msra.mxu0 0
      %1170 = vmatprep.subr.bf16.mxu0 0
      %1171 = vmatpush1.bf16.msra.mxu0 0
      %1172 = vmatprep.subr.bf16.mxu0 0
      %1173 = vmatpush1.bf16.msra.mxu0 0
      %1174 = vmatprep.subr.bf16.mxu0 0
      %1175 = vmatpush1.bf16.msra.mxu0 0
      %1176 = vmatprep.subr.bf16.mxu0 0
      %1177 = vmatpush1.bf16.msra.mxu0 0
      %1178 = vmatprep.subr.bf16.mxu0 0
      %1179 = vmatpush1.bf16.msra.mxu0 0
      %1180 = vmatprep.subr.bf16.mxu0 0
      %1181 = vmatpush1.bf16.msra.mxu0 0
      %1182 = vmatprep.mubr.bf16.mxu0 0
      %1183 = vmatmul.mubr.bf16.gmra.mrb[0].mxu0 %v1145
      %v1184 = vpop.f32.mrb[0].mxu0
      %v1185 = vadd.f32 0.0, %v1184
      %v1186 = vpop.f32.mrb[0].mxu0
      %v1187 = vpop.f32.mrb[0].mxu0
      %v1188 = vadd.f32 0.0, %v1187
      %v1189 = vpop.f32.mrb[0].mxu0
      %1190 = vdwg.mxu0
      %1193 = vrot.lane.b32.xlu0 %v1185, 96
      %v1194 = vpop.permute.xlu0 %1193
      %1195 = vrot.lane.b32.xlu0 %v1188, 96
      %v1196 = vpop.permute.xlu0 %1195
      %vm1199 = vcmask 1048320
      %1200 = vst.msk [vmem:[#allocation2] sm:$0xff] %vm1199, %v1194
      %1201 = vst.msk [vmem:[#allocation2 + $0x8] sm:$0xff] %vm1199, %v1196
      %v1202 = vld [vmem:[#allocation2] sm:$0xff]
      %v1203 = vld [vmem:[#allocation2 + $0x8] sm:$0xff]
      %v1204 = vpack.c.bf16 %v1203, %v1202
      %v1205 = vld [vmem:[%s7] sm:$0xf]
      %v1206 = vld [vmem:[%s7 + $0x4] sm:$0xf]
      %v1207 = vld [vmem:[%s7 + $0x8] sm:$0xf]
      %v1208 = vld [vmem:[%s7 + $0xc] sm:$0xf]
      %v1209 = vld [vmem:[%s7 + $0x10] sm:$0xf]
      %v1210 = vld [vmem:[%s7 + $0x14] sm:$0xf]
      %v1211 = vld [vmem:[%s7 + $0x18] sm:$0xf]
      %v1212 = vld [vmem:[%s7 + $0x1c] sm:$0xf]
      %v1213 = vld [vmem:[%s7 + $0x20] sm:$0xf]
      %v1214 = vld [vmem:[%s7 + $0x24] sm:$0xf]
      %v1215 = vld [vmem:[%s7 + $0x28] sm:$0xf]
      %v1216 = vld [vmem:[%s7 + $0x2c] sm:$0xf]
      %v1217 = vld [vmem:[%s7 + $0x30] sm:$0xf]
      %v1218 = vld [vmem:[%s7 + $0x34] sm:$0xf]
      %v1219 = vld [vmem:[%s7 + $0x38] sm:$0xf]
      %v1220 = vld [vmem:[%s7 + $0x3c] sm:$0xf]
      %v1221 = vld [vmem:[%s8] sm:$0x1]
      %v1223 = vlaneseq
      %v1224 = vshrl.u32 %v1223, 7
      %v1225 = vsub.s32 0, %v1224
      %v1226 = vrot.slane %v1221, %v1225
      %v1244 = vunpack.c.l.b16 %v1205
      %v1245 = vunpack.c.l.b16 %v1206
      %v1246 = vunpack.c.l.b16 %v1207
      %v1247 = vunpack.c.l.b16 %v1208
      %v1248 = vunpack.c.l.b16 %v1209
      %v1249 = vunpack.c.l.b16 %v1210
      %v1250 = vunpack.c.l.b16 %v1211
      %v1251 = vunpack.c.l.b16 %v1212
      %v1252 = vunpack.c.l.b16 %v1213
      %v1253 = vunpack.c.l.b16 %v1214
      %v1254 = vunpack.c.l.b16 %v1215
      %v1255 = vunpack.c.l.b16 %v1216
      %v1256 = vunpack.c.l.b16 %v1217
      %v1257 = vunpack.c.l.b16 %v1218
      %v1258 = vunpack.c.l.b16 %v1219
      %v1259 = vunpack.c.l.b16 %v1220
      %v1260 = vpack.c.b16 %v1245, %v1244
      %v1261 = vpack.c.b16 %v1247, %v1246
      %v1262 = vpack.c.b16 %v1249, %v1248
      %v1263 = vpack.c.b16 %v1251, %v1250
      %v1264 = vpack.c.b16 %v1253, %v1252
      %v1265 = vpack.c.b16 %v1255, %v1254
      %v1266 = vpack.c.b16 %v1257, %v1256
      %v1267 = vpack.c.b16 %v1259, %v1258
      %1276 = vmatprep.subr.bf16.mxu0 0
      %1277 = vmatpush1.bf16.msra.mxu0 %v1260
      %1278 = vmatprep.subr.bf16.mxu0 0
      %1279 = vmatpush1.bf16.msra.mxu0 %v1261
      %1280 = vmatprep.subr.bf16.mxu0 0
      %1281 = vmatpush1.bf16.msra.mxu0 %v1262
      %1282 = vmatprep.subr.bf16.mxu0 0
      %1283 = vmatpush1.bf16.msra.mxu0 %v1263
      %1284 = vmatprep.subr.bf16.mxu0 0
      %1285 = vmatpush1.bf16.msra.mxu0 %v1264
      %1286 = vmatprep.subr.bf16.mxu0 0
      %1287 = vmatpush1.bf16.msra.mxu0 %v1265
      %1288 = vmatprep.subr.bf16.mxu0 0
      %1289 = vmatpush1.bf16.msra.mxu0 %v1266
      %1290 = vmatprep.subr.bf16.mxu0 0
      %1291 = vmatpush1.bf16.msra.mxu0 %v1267
      %1292 = vmatprep.subr.bf16.mxu0 0
      %1293 = vmatpush1.bf16.msra.mxu0 0
      %1294 = vmatprep.subr.bf16.mxu0 0
      %1295 = vmatpush1.bf16.msra.mxu0 0
      %1296 = vmatprep.subr.bf16.mxu0 0
      %1297 = vmatpush1.bf16.msra.mxu0 0
      %1298 = vmatprep.subr.bf16.mxu0 0
      %1299 = vmatpush1.bf16.msra.mxu0 0
      %1300 = vmatprep.subr.bf16.mxu0 0
      %1301 = vmatpush1.bf16.msra.mxu0 0
      %1302 = vmatprep.subr.bf16.mxu0 0
      %1303 = vmatpush1.bf16.msra.mxu0 0
      %1304 = vmatprep.subr.bf16.mxu0 0
      %1305 = vmatpush1.bf16.msra.mxu0 0
      %1306 = vmatprep.subr.bf16.mxu0 0
      %1307 = vmatpush1.bf16.msra.mxu0 0
      %1308 = vmatprep.mubr.bf16.mxu0 0
      %1309 = vmatmul.mubr.bf16.gmra.mrb[0].mxu0 %v1204
      %v1310 = vpop.f32.mrb[0].mxu0
      %v1311 = vadd.f32 %v1226, %v1310
      %v1312 = vpop.f32.mrb[0].mxu0
      %v1313 = vpop.f32.mrb[0].mxu0
      %v1314 = vadd.f32 %v1226, %v1313
      %v1315 = vpop.f32.mrb[0].mxu0
      %1316 = vdwg.mxu0
      %v1317 = vadd.f32 %v1311, %v387
      %v1318 = vadd.f32 %v1314, %v388
      %v1319 = vld [vmem:[%s9] sm:$0x1]
      %v1320 = vld [vmem:[%s10] sm:$0x1]
      %1321 = vadd.xlane.f32.xlu0 %v1317
      %v1322 = vpop.xlane.xlu0 %1321
      %1323 = vadd.xlane.f32.xlu0 %v1318
      %v1324 = vpop.xlane.xlu0 %1323
      %v1325 = vrcp.pop 128.0
      %v1326 = vmul.f32 %v1322, %v1325
      %v1327 = vmul.f32 %v1324, %v1325
      %v1328 = vsub.f32 %v1317, %v1326
      %v1329 = vsub.f32 %v1318, %v1327
      %v1330 = vmul.f32 %v1328, %v1328
      %v1331 = vmul.f32 %v1329, %v1329
      %1332 = vadd.xlane.f32.xlu0 %v1330
      %v1333 = vpop.xlane.xlu0 %1332
      %1334 = vadd.xlane.f32.xlu0 %v1331
      %v1335 = vpop.xlane.xlu0 %1334
      %v1336 = vmul.f32 %v1333, %v1325
      %v1337 = vmul.f32 %v1335, %v1325
      %v1338 = vadd.f32 %v1336, 1e-05
      %v1339 = vadd.f32 %v1337, 1e-05
      %v1340 = vrsqrt.pop %v1338
      %v1341 = vrsqrt.pop %v1339
      %v1342 = vmul.f32 %v1328, %v1340
      %v1343 = vmul.f32 %v1329, %v1341
      %v1345 = vlaneseq
      %v1346 = vshrl.u32 %v1345, 7
      %v1347 = vsub.s32 0, %v1346
      %v1348 = vrot.slane %v1319, %v1347
      %v1350 = vmul.f32 %v1342, %v1348
      %v1351 = vmul.f32 %v1343, %v1348
      %v1353 = vlaneseq
      %v1354 = vshrl.u32 %v1353, 7
      %v1355 = vsub.s32 0, %v1354
      %v1356 = vrot.slane %v1320, %v1355
      %v1358 = vadd.f32 %v1350, %v1356
      %v1359 = vadd.f32 %v1351, %v1356
      %v1360 = vpack.c.bf16 %v1359, %v1358
      %v1362 = vunpack.c.l.b16 %v1360
      %v1363 = vunpack.c.h.b16 %v1360
      %v1364 = vpack.c.b16 %v1362, %v1362
      %v1365 = vpack.c.b16 %v1363, %v1363
      %1368 = vst [vmem:[%s383] sm:$0xf] %v1364
      %1369 = vst [vmem:[%s383 + $0x4] sm:$0xf] %v1365
      %p1370 = scmp.lt.s32.totalorder %s28, 1
      %s1371 = scalar_select %p1370, %s28, 1
      %s1372 = smul.addr %s1371, 2
      %s1373 = smul.addr %s1372, 4
      %s1374 = scalar_lea.vmem %s11, %s1373
      // Predicated region
      $region61: #{tts_forward.18} parent=59 // pred_check
        %p1375 = pneg %p266
      $region62: #{tts_forward.18} parent=59 // pred_check_branch
        %1377 = sbr.rel (%p1375) target = $region64
      $region63: #{tts_forward.18} parent=59 // pred_region
        _
      $region64: #{tts_forward.18} parent=59 // pred_fallthru
        _
    $region60: #{tts_forward.18} parent=5 // pred_fallthru
      _
    %p1378 = scmp.le.s32.totalorder 2, %s23
    // Predicated region
    $region65: #{tts_forward.18} parent=5 // pred_check
      %p1379 = pneg %p1378
    $region66: #{tts_forward.18} parent=5 // pred_check_branch
      %1381 = sbr.rel (%p1379) target = $region68
    $region67: #{tts_forward.18} parent=5 // pred_region
      %s1382 = ssub.s32 %s23, 2
      // Predicated region
      $region69: #{tts_forward.18} parent=67 // pred_check
        %p1383 = pneg %p272
      $region70: #{tts_forward.18} parent=67 // pred_check_branch
        %1385 = sbr.rel (%p1383) target = $region72
      $region71: #{tts_forward.18} parent=67 // pred_region
        %p1386 = scmp.lt.s32.totalorder %s29, 1
        %s1387 = scalar_select %p1386, %s29, 1
        %s1388 = smul.addr %s1387, 2
        %s1389 = smul.addr %s1388, 4
        %s1390 = scalar_lea.vmem %s11, %s1389
      $region72: #{tts_forward.18} parent=67 // pred_fallthru
        _
    $region68: #{tts_forward.18} parent=5 // pred_fallthru
      _
  $region6: #{tts_forward.18} parent=0 // loop_footer
    %s27 = sadd.s32 1, %s23
  $region7: #{tts_forward.18} parent=0 // loop_footer_branch
    %22 = sbr.rel target = $region3
  $region8: #{tts_forward.18} parent=0 // loop_exit
    _

</llo_original>
